<compile_context>
chip_gen: v7x
topology: tpu7x:2x2x1
jax: 0.10.0
libtpu: 0.0.40
codegen_flags: <defaults>
</compile_context>

<pallas_src>
import jax
import jax.numpy as jnp
from jax.experimental import pallas as pl
from jax.experimental.pallas import tpu as pltpu

PAD_IDX = 1
_LN_EPS = 1e-5
_VMEM_LIMIT = 32 * 1024 * 1024   # safe on v5e/v6e (128 MiB) and v7x (64 MiB)


def _ln(x, g, b):
    mu = jnp.mean(x, axis=-1, keepdims=True)
    var = jnp.mean((x - mu) ** 2, axis=-1, keepdims=True)
    return (x - mu) * jax.lax.rsqrt(var + _LN_EPS) * g + b


# ----------------------------- Pallas kernels -----------------------------

def _make_bilstm_kernel(S, B, H, apply_ln, batch_major_out):
    """One bidirectional encoder layer: whole sequence, both directions, one launch."""
    def kernel(*refs):
        if apply_ln:
            x_ref, g_ref, beta_ref, w_ref, u_ref, b_ref, hs_ref, hT_ref, cT_ref = refs
        else:
            x_ref, w_ref, u_ref, b_ref, hs_ref, hT_ref, cT_ref = refs
        x = x_ref[...]                                           # [S*B, In] f32
        if apply_ln:                                             # fused emb LayerNorm
            x = _ln(x, g_ref[...], beta_ref[...])
        # Hoisted input projection for BOTH directions (one MXU call):
        #   zx[:, :4H] = x @ Wf + bf ;  zx[:, 4H:] = x @ Wb + bb
        zx = jnp.dot(x.astype(jnp.bfloat16), w_ref[...],
                     preferred_element_type=jnp.float32) + b_ref[...]
        u = u_ref[...]                                           # [2H, 4H] bf16 (Uf over Ub)
        # Static mask turning [hf|hf ; hb|hb] into block-diag [hf|0 ; 0|hb] so a
        # single dot produces both directions' recurrent pre-activations.
        one = jnp.ones((B, H), jnp.bfloat16)
        zero = jnp.zeros((B, H), jnp.bfloat16)
        diag = jnp.concatenate(
            [jnp.concatenate([one, zero], axis=1),
             jnp.concatenate([zero, one], axis=1)], axis=0)      # [2B, 2H]
        h = jnp.zeros((2 * B, H), jnp.float32)                   # rows: [fwd ; bwd]
        c = jnp.zeros((2 * B, H), jnp.float32)
        hf_steps, hb_steps = [], []
        for t in range(S):                                       # static unroll (small S)
            tb = S - 1 - t
            zx_t = jnp.concatenate(
                [zx[t * B:(t + 1) * B, 0:4 * H],
                 zx[tb * B:(tb + 1) * B, 4 * H:8 * H]], axis=0)  # [2B, 4H]
            h_blk = jnp.concatenate([h, h], axis=-1).astype(jnp.bfloat16) * diag
            z = jnp.dot(h_blk, u, preferred_element_type=jnp.float32) + zx_t
            sig = jax.nn.sigmoid(z)            # one full-width EUP op (i, f, ., o)
            tg = jnp.tanh(z)                   # one full-width EUP op (., ., g, .)
            c = sig[:, H:2 * H] * c + sig[:, 0:H] * tg[:, 2 * H:3 * H]
            h = sig[:, 3 * H:4 * H] * jnp.tanh(c)
            hf_steps.append(h[0:B])
            hb_steps.append(h[B:2 * B])
        ax = 1 if batch_major_out else 0
        hs_fwd = jnp.stack(hf_steps, axis=ax)
        hs_bwd = jnp.stack(hb_steps[::-1], axis=ax)              # back to time order
        hs_ref[...] = jnp.concatenate([hs_fwd, hs_bwd], axis=-1)  # single batched store
        hT_ref[...] = jnp.concatenate([h[0:B], h[B:2 * B]], axis=-1)
        cT_ref[...] = jnp.concatenate([c[0:B], c[B:2 * B]], axis=-1)
    return kernel


def bilstm_layer(x_flat, lp, S, B, H, ln=None, batch_major_out=False):
    # x_flat: [S*B, In] time-major rows -> hs ([S,B,2H] or [B,S,2H]), hT [B,2H], cT [B,2H]
    kernel = _make_bilstm_kernel(S, B, H, ln is not None, batch_major_out)
    hs_shape = (B, S, 2 * H) if batch_major_out else (S, B, 2 * H)
    args = [x_flat]
    if ln is not None:
        args += [ln['g'], ln['b']]
    args += [lp['W'], lp['U'], lp['b']]
    return pl.pallas_call(
        kernel,
        out_shape=(jax.ShapeDtypeStruct(hs_shape, jnp.float32),
                   jax.ShapeDtypeStruct((B, 2 * H), jnp.float32),
                   jax.ShapeDtypeStruct((B, 2 * H), jnp.float32)),
        compiler_params=pltpu.CompilerParams(vmem_limit_bytes=_VMEM_LIMIT),
    )(*args)


def _make_lstm_kernel(S, B, H, apply_ln, batch_major_out):
    """One unidirectional decoder layer with initial state; whole sequence, one launch."""
    def kernel(*refs):
        if apply_ln:
            x_ref, g_ref, beta_ref, w_ref, u_ref, b_ref, h0_ref, c0_ref, hs_ref = refs
        else:
            x_ref, w_ref, u_ref, b_ref, h0_ref, c0_ref, hs_ref = refs
        x = x_ref[...]                                           # [S*B, In] f32
        if apply_ln:
            x = _ln(x, g_ref[...], beta_ref[...])
        zx = jnp.dot(x.astype(jnp.bfloat16), w_ref[...],
                     preferred_element_type=jnp.float32) + b_ref[...]   # [S*B, 4H]
        u = u_ref[...]                                           # [H, 4H] bf16
        h = h0_ref[...]
        c = c0_ref[...]
        steps = []
        for t in range(S):
            z = (jnp.dot(h.astype(jnp.bfloat16), u, preferred_element_type=jnp.float32)
                 + zx[t * B:(t + 1) * B, :])
            sig = jax.nn.sigmoid(z)
            tg = jnp.tanh(z)
            c = sig[:, H:2 * H] * c + sig[:, 0:H] * tg[:, 2 * H:3 * H]
            h = sig[:, 3 * H:4 * H] * jnp.tanh(c)
            steps.append(h)
        hs_ref[...] = jnp.stack(steps, axis=1 if batch_major_out else 0)
    return kernel


def lstm_layer(x_flat, lp, h0, c0, S, B, H, ln=None, batch_major_out=False):
    kernel = _make_lstm_kernel(S, B, H, ln is not None, batch_major_out)
    hs_shape = (B, S, H) if batch_major_out else (S, B, H)
    args = [x_flat]
    if ln is not None:
        args += [ln['g'], ln['b']]
    args += [lp['W'], lp['U'], lp['b'], h0, c0]
    return pl.pallas_call(
        kernel,
        out_shape=jax.ShapeDtypeStruct(hs_shape, jnp.float32),
        compiler_params=pltpu.CompilerParams(vmem_limit_bytes=_VMEM_LIMIT),
    )(*args)


def _linear_ln_kernel(x_ref, w_ref, b_ref, g_ref, beta_ref, o_ref):
    # fused (x @ W + b) -> LayerNorm
    y = jnp.dot(x_ref[...].astype(jnp.bfloat16), w_ref[...],
                preferred_element_type=jnp.float32) + b_ref[...]
    o_ref[...] = _ln(y, g_ref[...], beta_ref[...])


def linear_layernorm(x, proj, norm):
    M = x.shape[0]
    N = proj['W'].shape[1]
    return pl.pallas_call(
        _linear_ln_kernel,
        out_shape=jax.ShapeDtypeStruct((M, N), jnp.float32),
    )(x, proj['W'], proj['b'], norm['g'], norm['b'])


def _make_proj_ln_kernel(G):
    # all 2L hidden/cell projections (+ shared proj LayerNorm) in one launch
    def kernel(x_ref, w_ref, b_ref, g_ref, beta_ref, o_ref):
        g = g_ref[...]
        beta = beta_ref[...]
        for gi in range(G):
            y = (jnp.dot(x_ref[gi].astype(jnp.bfloat16), w_ref[gi],
                         preferred_element_type=jnp.float32) + b_ref[gi])
            o_ref[gi] = _ln(y, g, beta)
    return kernel


def proj_layernorm_stack(x, w, b, norm):
    # x: [G, B, 2H], w: [G, 2H, H] bf16, b: [G, 1, H] -> [G, B, H]
    G, Bsz, _ = x.shape
    Hh = w.shape[2]
    return pl.pallas_call(
        _make_proj_ln_kernel(G),
        out_shape=jax.ShapeDtypeStruct((G, Bsz, Hh), jnp.float32),
    )(x, w, b, norm['g'], norm['b'])


def _make_attn_fc_kernel(B):
    # fused decoder-output LayerNorm + masked attention + context + final FC, one launch
    def kernel(dec_ref, enc_ref, mask_ref, g_ref, beta_ref,
               wd_ref, wc_ref, b_ref, out_ref):
        dec = _ln(dec_ref[...], g_ref[...], beta_ref[...])       # [B, T, H]
        enc = enc_ref[...]                                       # [B, S, H]
        mask = mask_ref[...]                                     # [B, 1, S]
        wd = wd_ref[...]
        wc = wc_ref[...]
        bias = b_ref[...]
        for b in range(B):                                       # static; no per-step grid
            dec_b = dec[b]                                       # [T, H]
            enc_b = enc[b].astype(jnp.bfloat16)                  # [S, H]
            energy = jax.lax.dot_general(
                dec_b.astype(jnp.bfloat16), enc_b,
                (((1,), (1,)), ((), ())),
                preferred_element_type=jnp.float32)              # [T, S]
            energy = jnp.where(mask[b] > 0.5, energy, -1e10)     # mask fill in f32
            m = jnp.max(energy, axis=-1, keepdims=True)
            e = jnp.exp(energy - m)
            attn = e / jnp.sum(e, axis=-1, keepdims=True)        # softmax in f32
            ctx = jnp.dot(attn.astype(jnp.bfloat16), enc_b,
                          preferred_element_type=jnp.float32)    # [T, H]
            out_ref[b] = (
                jnp.dot(dec_b.astype(jnp.bfloat16), wd,
                        preferred_element_type=jnp.float32)
                + jnp.dot(ctx.astype(jnp.bfloat16), wc,
                          preferred_element_type=jnp.float32)
                + bias)                                          # lane-dense [T, Vp] store
    return kernel


def attention_fc(dec_bm, enc_bm, mask, dec_norm, fc):
    # dec_bm: [B, T, H], enc_bm: [B, S, H], mask: [B, 1, S] -> [B, T, Vp]
    B, T, _ = dec_bm.shape
    Vp = fc['Wd'].shape[1]
    return pl.pallas_call(
        _make_attn_fc_kernel(B),
        out_shape=jax.ShapeDtypeStruct((B, T, Vp), jnp.float32),
    )(dec_bm, enc_bm, mask, dec_norm['g'], dec_norm['b'],
      fc['Wd'], fc['Wc'], fc['b'])


# ----------------------------- Parameter init / prep -----------------------------

def init_params(key, src_vocab, trg_vocab, E, H, L):
    keys = iter(jax.random.split(key, 256))

    def nk():
        return next(keys)

    def xavier(shape):             # PyTorch weight shape (out, in)
        fan_out, fan_in = shape
        bound = (6.0 / (fan_in + fan_out)) ** 0.5
        return jax.random.uniform(nk(), shape, jnp.float32, -bound, bound)

    def ln(d):
        return dict(g=jnp.ones((1, d), jnp.float32), b=jnp.zeros((1, d), jnp.float32))

    p = {}
    src_emb = jax.random.normal(nk(), (src_vocab, E), jnp.float32).at[PAD_IDX].set(0.0)
    trg_emb = jax.random.normal(nk(), (trg_vocab, E), jnp.float32).at[PAD_IDX].set(0.0)
    p['src_emb'], p['trg_emb'] = src_emb, trg_emb

    enc = []
    for l in range(L):
        in_dim = E if l == 0 else 2 * H
        layer = {}
        for d in ('fwd', 'bwd'):
            layer[d] = dict(Wih=xavier((4 * H, in_dim)),
                            Whh=xavier((4 * H, H)),
                            bih=jnp.zeros((4 * H,), jnp.float32),
                            bhh=jnp.zeros((4 * H,), jnp.float32))
        enc.append(layer)
    p['enc_lstm'] = enc

    dec = []
    for l in range(L):
        in_dim = E if l == 0 else H
        dec.append(dict(Wih=xavier((4 * H, in_dim)),
                        Whh=xavier((4 * H, H)),
                        bih=jnp.zeros((4 * H,), jnp.float32),
                        bhh=jnp.zeros((4 * H,), jnp.float32)))
    p['dec_lstm'] = dec

    p['enc_out_proj'] = dict(W=xavier((H, 2 * H)), b=jnp.zeros((H,), jnp.float32))
    p['enc_hidden_proj'] = [dict(W=xavier((H, 2 * H)), b=jnp.zeros((H,), jnp.float32))
                            for _ in range(L)]
    p['enc_cell_proj'] = [dict(W=xavier((H, 2 * H)), b=jnp.zeros((H,), jnp.float32))
                          for _ in range(L)]
    p['fc'] = dict(W=xavier((trg_vocab, 2 * H)), b=jnp.zeros((trg_vocab,), jnp.float32))
    p['emb_ln'] = ln(E)
    p['enc_out_norm'] = ln(H)
    p['dec_out_norm'] = ln(H)
    p['proj_ln'] = ln(H)      # NOTE: shared between hidden & cell projections (matches torch)
    return p


def prepare_params(p, num_layers):
    """One-time weight transposition / fusion / bf16 cast (kernel-ready layout)."""
    bf = jnp.bfloat16
    H = p['dec_lstm'][0]['Whh'].shape[1]
    prep = {'src_emb': p['src_emb'], 'trg_emb': p['trg_emb'],
            'emb_ln': p['emb_ln'], 'proj_ln': p['proj_ln'],
            'enc_out_norm': p['enc_out_norm'], 'dec_out_norm': p['dec_out_norm']}

    enc = []
    for l in range(num_layers):
        f = p['enc_lstm'][l]['fwd']
        bwd = p['enc_lstm'][l]['bwd']
        W = jnp.concatenate([f['Wih'].T, bwd['Wih'].T], axis=1).astype(bf)   # [In, 8H]
        U = jnp.concatenate([f['Whh'].T, bwd['Whh'].T], axis=0).astype(bf)   # [2H, 4H]
        bias = jnp.concatenate([f['bih'] + f['bhh'],
                                bwd['bih'] + bwd['bhh']])[None, :]           # [1, 8H] f32
        enc.append({'W': W, 'U': U, 'b': bias})
    prep['enc'] = enc

    dec = []
    for l in range(num_layers):
        d = p['dec_lstm'][l]
        dec.append({'W': d['Wih'].T.astype(bf),                 # [In, 4H]
                    'U': d['Whh'].T.astype(bf),                 # [H, 4H]
                    'b': (d['bih'] + d['bhh'])[None, :]})       # [1, 4H] f32
    prep['dec'] = dec

    prep['enc_out_proj'] = {'W': p['enc_out_proj']['W'].T.astype(bf),        # [2H, H]
                            'b': p['enc_out_proj']['b'][None, :]}            # [1, H]

    hw = jnp.stack([p['enc_hidden_proj'][l]['W'].T for l in range(num_layers)]
                   + [p['enc_cell_proj'][l]['W'].T for l in range(num_layers)],
                   axis=0).astype(bf)                                         # [2L, 2H, H]
    hb = jnp.stack([p['enc_hidden_proj'][l]['b'][None, :] for l in range(num_layers)]
                   + [p['enc_cell_proj'][l]['b'][None, :] for l in range(num_layers)],
                   axis=0)                                                    # [2L, 1, H]
    prep['hc_proj'] = {'W': hw, 'b': hb}

    V = p['fc']['W'].shape[0]
    Vp = ((V + 127) // 128) * 128
    w_fc = jnp.pad(p['fc']['W'].T, ((0, 0), (0, Vp - V)))                     # [2H, Vp]
    prep['fc'] = {'Wd': w_fc[:H].astype(bf),                                  # dec half
                  'Wc': w_fc[H:].astype(bf),                                  # ctx half
                  'b': jnp.pad(p['fc']['b'], (0, Vp - V))[None, :]}           # [1, Vp]
    return prep


# ----------------------------- Model (glue + kernels) -----------------------------

def forward(prep, src_seq, trg_seq, *, num_layers, trg_vocab):
    B, S = src_seq.shape
    T = trg_seq.shape[1]
    E = prep['src_emb'].shape[1]
    H = prep['dec'][0]['U'].shape[0]

    # embeddings (XLA gather), time-major rows [S*B, E]; emb LN fused into layer-0 kernels
    src_x = prep['src_emb'][src_seq.T].reshape(S * B, E)
    trg_x = prep['trg_emb'][trg_seq.T].reshape(T * B, E)

    # --- bidirectional multi-layer encoder: 1 pallas_call per layer ---
    x = src_x
    enc_last_bm = None
    hT_list, cT_list = [], []
    for l in range(num_layers):
        last = (l == num_layers - 1)
        hs, hT, cT = bilstm_layer(x, prep['enc'][l], S, B, H,
                                  ln=prep['emb_ln'] if l == 0 else None,
                                  batch_major_out=last)
        hT_list.append(hT)
        cT_list.append(cT)
        if last:
            enc_last_bm = hs                             # [B, S, 2H]
        else:
            x = hs.reshape(S * B, 2 * H)                 # time-major rows for next layer

    # encoder output projection + LayerNorm (fused, row-order independent)
    enc_out = linear_layernorm(enc_last_bm.reshape(B * S, 2 * H),
                               prep['enc_out_proj'], prep['enc_out_norm'])
    enc_out_bm = enc_out.reshape(B, S, H)                # batch-major, no transpose needed

    # decoder initial states: all 2L linear+LN projections in ONE kernel
    hc = jnp.stack(hT_list + cT_list, axis=0)            # [2L, B, 2H]
    proj = proj_layernorm_stack(hc, prep['hc_proj']['W'], prep['hc_proj']['b'],
                                prep['proj_ln'])         # [2L, B, H]

    # --- unidirectional multi-layer decoder: 1 pallas_call per layer ---
    x = trg_x
    dec_last_bm = None
    for l in range(num_layers):
        last = (l == num_layers - 1)
        hs = lstm_layer(x, prep['dec'][l], proj[l], proj[num_layers + l], T, B, H,
                        ln=prep['emb_ln'] if l == 0 else None,
                        batch_major_out=last)
        if last:
            dec_last_bm = hs                             # [B, T, H]
        else:
            x = hs.reshape(T * B, H)

    # --- fused dec LayerNorm + masked attention + context + final FC (one launch) ---
    mask = (src_seq != PAD_IDX).astype(jnp.float32)[:, None, :]   # [B, 1, S]
    logits = attention_fc(dec_last_bm, enc_out_bm, mask,
                          prep['dec_out_norm'], prep['fc'])       # [B, T, Vp]
    return logits[:, :, :trg_vocab]


# ----------------------------- Main -----------------------------

if __name__ == "__main__":
    B, S_SRC, S_TRG = 2, 8, 8
    E = 32
    H = 32
    NUM_LAYERS = 2
    SRC_VOCAB, TRG_VOCAB = 50, 60

    root = jax.random.PRNGKey(0)
    k_params, k_src, k_trg = jax.random.split(root, 3)

    params = init_params(k_params, SRC_VOCAB, TRG_VOCAB, E, H, NUM_LAYERS)
    prep = prepare_params(params, NUM_LAYERS)

    src_seq = jax.random.randint(k_src, (B, S_SRC), 0, SRC_VOCAB, dtype=jnp.int32)
    trg_seq = jax.random.randint(k_trg, (B, S_TRG), 0, TRG_VOCAB, dtype=jnp.int32)

    fwd = jax.jit(forward, static_argnames=("num_layers", "trg_vocab"))
    logits = fwd(prep, src_seq, trg_seq, num_layers=NUM_LAYERS, trg_vocab=TRG_VOCAB)
    logits = jax.block_until_ready(logits)

    assert logits.shape == (B, S_TRG, TRG_VOCAB)
    assert bool(jnp.all(jnp.isfinite(logits)))
    print("KERNEL_OK")
</pallas_src>

<mosaic_0001>
module attributes {stable_mosaic.version = 11 : i64} {
  func.func @kernel(%arg0: memref<16x32xf32, #tpu.memory_space<vmem>>, %arg1: memref<1x32xf32, #tpu.memory_space<vmem>>, %arg2: memref<1x32xf32, #tpu.memory_space<vmem>>, %arg3: memref<32x256xbf16, #tpu.memory_space<vmem>>, %arg4: memref<64x128xbf16, #tpu.memory_space<vmem>>, %arg5: memref<1x256xf32, #tpu.memory_space<vmem>>, %arg6: memref<8x2x64xf32, #tpu.memory_space<vmem>>, %arg7: memref<2x64xf32, #tpu.memory_space<vmem>>, %arg8: memref<2x64xf32, #tpu.memory_space<vmem>>) attributes {dimension_semantics = [], scalar_prefetch = 0 : i64, scratch_operands = 0 : i64, tpu.core_type = #tpu.core_type<tc>} {
    %c0 = arith.constant 0 : index
    %c0_0 = arith.constant 0 : index
    %0 = vector.load %arg0[%c0, %c0_0] : memref<16x32xf32, #tpu.memory_space<vmem>>, vector<16x32xf32>
    %c0_1 = arith.constant 0 : index
    %c0_2 = arith.constant 0 : index
    %1 = vector.load %arg1[%c0_1, %c0_2] : memref<1x32xf32, #tpu.memory_space<vmem>>, vector<1x32xf32>
    %c0_3 = arith.constant 0 : index
    %c0_4 = arith.constant 0 : index
    %2 = vector.load %arg2[%c0_3, %c0_4] : memref<1x32xf32, #tpu.memory_space<vmem>>, vector<1x32xf32>
    %cst = arith.constant dense<0.000000e+00> : vector<16xf32>
    %3 = vector.multi_reduction <add>, %0, %cst [1] : vector<16x32xf32> to vector<16xf32>
    %4 = vector.shape_cast %3 : vector<16xf32> to vector<16x1xf32>
    %cst_5 = arith.constant 3.200000e+01 : f32
    %5 = vector.broadcast %cst_5 : f32 to vector<16x1xf32>
    %6 = arith.divf %4, %5 : vector<16x1xf32>
    %7 = vector.broadcast %6 : vector<16x1xf32> to vector<16x32xf32>
    %8 = arith.subf %0, %7 : vector<16x32xf32>
    %9 = arith.mulf %8, %8 : vector<16x32xf32>
    %cst_6 = arith.constant dense<0.000000e+00> : vector<16xf32>
    %10 = vector.multi_reduction <add>, %9, %cst_6 [1] : vector<16x32xf32> to vector<16xf32>
    %11 = vector.shape_cast %10 : vector<16xf32> to vector<16x1xf32>
    %cst_7 = arith.constant 3.200000e+01 : f32
    %12 = vector.broadcast %cst_7 : f32 to vector<16x1xf32>
    %13 = arith.divf %11, %12 : vector<16x1xf32>
    %14 = vector.broadcast %6 : vector<16x1xf32> to vector<16x32xf32>
    %15 = arith.subf %0, %14 : vector<16x32xf32>
    %cst_8 = arith.constant 9.99999974E-6 : f32
    %16 = vector.broadcast %cst_8 : f32 to vector<16x1xf32>
    %17 = arith.addf %13, %16 : vector<16x1xf32>
    %18 = math.rsqrt %17 : vector<16x1xf32>
    %19 = vector.broadcast %18 : vector<16x1xf32> to vector<16x32xf32>
    %20 = arith.mulf %15, %19 : vector<16x32xf32>
    %21 = vector.broadcast %1 : vector<1x32xf32> to vector<16x32xf32>
    %22 = arith.mulf %20, %21 : vector<16x32xf32>
    %23 = vector.broadcast %2 : vector<1x32xf32> to vector<16x32xf32>
    %24 = arith.addf %22, %23 : vector<16x32xf32>
    %25 = arith.truncf %24 : vector<16x32xf32> to vector<16x32xbf16>
    %c0_9 = arith.constant 0 : index
    %c0_10 = arith.constant 0 : index
    %26 = vector.load %arg3[%c0_9, %c0_10] : memref<32x256xbf16, #tpu.memory_space<vmem>>, vector<32x256xbf16>
    %cst_11 = arith.constant dense<0.000000e+00> : vector<16x256xf32>
    %27 = tpu.matmul %25, %26, %cst_11 {dimension_numbers = #tpu.dot_dimension_numbers<[1], [0], [0], [1], [0, 0, 1, 1], [], []>} : vector<16x32xbf16>, vector<32x256xbf16>, vector<16x256xf32> -> vector<16x256xf32>
    %c0_12 = arith.constant 0 : index
    %c0_13 = arith.constant 0 : index
    %28 = vector.load %arg5[%c0_12, %c0_13] : memref<1x256xf32, #tpu.memory_space<vmem>>, vector<1x256xf32>
    %29 = vector.broadcast %28 : vector<1x256xf32> to vector<16x256xf32>
    %30 = arith.addf %27, %29 : vector<16x256xf32>
    %c0_14 = arith.constant 0 : index
    %c0_15 = arith.constant 0 : index
    %31 = vector.load %arg4[%c0_14, %c0_15] : memref<64x128xbf16, #tpu.memory_space<vmem>>, vector<64x128xbf16>
    %cst_16 = arith.constant 1.000000e+00 : bf16
    %32 = vector.broadcast %cst_16 : bf16 to vector<2x32xbf16>
    %cst_17 = arith.constant 0.000000e+00 : bf16
    %33 = vector.broadcast %cst_17 : bf16 to vector<2x32xbf16>
    %34 = tpu.concatenate %32, %33 in 1 : vector<2x32xbf16>, vector<2x32xbf16> -> vector<2x64xbf16>
    %35 = tpu.concatenate %33, %32 in 1 : vector<2x32xbf16>, vector<2x32xbf16> -> vector<2x64xbf16>
    %36 = tpu.concatenate %34, %35 in 0 : vector<2x64xbf16>, vector<2x64xbf16> -> vector<4x64xbf16>
    %cst_18 = arith.constant 0.000000e+00 : f32
    %37 = vector.broadcast %cst_18 : f32 to vector<4x32xf32>
    %cst_19 = arith.constant 0.000000e+00 : f32
    %38 = vector.broadcast %cst_19 : f32 to vector<4x32xf32>
    %39 = vector.extract_strided_slice %30 {offsets = [0, 0], sizes = [2, 128], strides = [1, 1]} : vector<16x256xf32> to vector<2x128xf32>
    %40 = vector.extract_strided_slice %30 {offsets = [14, 128], sizes = [2, 128], strides = [1, 1]} : vector<16x256xf32> to vector<2x128xf32>
    %41 = tpu.concatenate %39, %40 in 0 : vector<2x128xf32>, vector<2x128xf32> -> vector<4x128xf32>
    %42 = tpu.concatenate %37, %37 in 1 : vector<4x32xf32>, vector<4x32xf32> -> vector<4x64xf32>
    %43 = arith.truncf %42 : vector<4x64xf32> to vector<4x64xbf16>
    %44 = arith.mulf %43, %36 : vector<4x64xbf16>
    %cst_20 = arith.constant dense<0.000000e+00> : vector<4x128xf32>
    %45 = tpu.matmul %44, %31, %cst_20 {dimension_numbers = #tpu.dot_dimension_numbers<[1], [0], [0], [1], [0, 0, 1, 1], [], []>} : vector<4x64xbf16>, vector<64x128xbf16>, vector<4x128xf32> -> vector<4x128xf32>
    %46 = arith.addf %45, %41 : vector<4x128xf32>
    %47 = arith.negf %46 : vector<4x128xf32>
    %48 = math.exp %47 : vector<4x128xf32>
    %cst_21 = arith.constant 1.000000e+00 : f32
    %49 = vector.broadcast %cst_21 : f32 to vector<4x128xf32>
    %50 = arith.addf %49, %48 : vector<4x128xf32>
    %51 = arith.divf %49, %50 : vector<4x128xf32>
    %52 = math.tanh %46 : vector<4x128xf32>
    %53 = vector.extract_strided_slice %51 {offsets = [0, 32], sizes = [4, 32], strides = [1, 1]} : vector<4x128xf32> to vector<4x32xf32>
    %54 = arith.mulf %53, %38 : vector<4x32xf32>
    %55 = vector.extract_strided_slice %51 {offsets = [0, 0], sizes = [4, 32], strides = [1, 1]} : vector<4x128xf32> to vector<4x32xf32>
    %56 = vector.extract_strided_slice %52 {offsets = [0, 64], sizes = [4, 32], strides = [1, 1]} : vector<4x128xf32> to vector<4x32xf32>
    %57 = arith.mulf %55, %56 : vector<4x32xf32>
    %58 = arith.addf %54, %57 : vector<4x32xf32>
    %59 = vector.extract_strided_slice %51 {offsets = [0, 96], sizes = [4, 32], strides = [1, 1]} : vector<4x128xf32> to vector<4x32xf32>
    %60 = math.tanh %58 : vector<4x32xf32>
    %61 = arith.mulf %59, %60 : vector<4x32xf32>
    %62 = vector.extract_strided_slice %61 {offsets = [0, 0], sizes = [2, 32], strides = [1, 1]} : vector<4x32xf32> to vector<2x32xf32>
    %63 = vector.extract_strided_slice %61 {offsets = [2, 0], sizes = [2, 32], strides = [1, 1]} : vector<4x32xf32> to vector<2x32xf32>
    %64 = vector.extract_strided_slice %30 {offsets = [2, 0], sizes = [2, 128], strides = [1, 1]} : vector<16x256xf32> to vector<2x128xf32>
    %65 = vector.extract_strided_slice %30 {offsets = [12, 128], sizes = [2, 128], strides = [1, 1]} : vector<16x256xf32> to vector<2x128xf32>
    %66 = tpu.concatenate %64, %65 in 0 : vector<2x128xf32>, vector<2x128xf32> -> vector<4x128xf32>
    %67 = tpu.concatenate %61, %61 in 1 : vector<4x32xf32>, vector<4x32xf32> -> vector<4x64xf32>
    %68 = arith.truncf %67 : vector<4x64xf32> to vector<4x64xbf16>
    %69 = arith.mulf %68, %36 : vector<4x64xbf16>
    %cst_22 = arith.constant dense<0.000000e+00> : vector<4x128xf32>
    %70 = tpu.matmul %69, %31, %cst_22 {dimension_numbers = #tpu.dot_dimension_numbers<[1], [0], [0], [1], [0, 0, 1, 1], [], []>} : vector<4x64xbf16>, vector<64x128xbf16>, vector<4x128xf32> -> vector<4x128xf32>
    %71 = arith.addf %70, %66 : vector<4x128xf32>
    %72 = arith.negf %71 : vector<4x128xf32>
    %73 = math.exp %72 : vector<4x128xf32>
    %cst_23 = arith.constant 1.000000e+00 : f32
    %74 = vector.broadcast %cst_23 : f32 to vector<4x128xf32>
    %75 = arith.addf %74, %73 : vector<4x128xf32>
    %76 = arith.divf %74, %75 : vector<4x128xf32>
    %77 = math.tanh %71 : vector<4x128xf32>
    %78 = vector.extract_strided_slice %76 {offsets = [0, 32], sizes = [4, 32], strides = [1, 1]} : vector<4x128xf32> to vector<4x32xf32>
    %79 = arith.mulf %78, %58 : vector<4x32xf32>
    %80 = vector.extract_strided_slice %76 {offsets = [0, 0], sizes = [4, 32], strides = [1, 1]} : vector<4x128xf32> to vector<4x32xf32>
    %81 = vector.extract_strided_slice %77 {offsets = [0, 64], sizes = [4, 32], strides = [1, 1]} : vector<4x128xf32> to vector<4x32xf32>
    %82 = arith.mulf %80, %81 : vector<4x32xf32>
    %83 = arith.addf %79, %82 : vector<4x32xf32>
    %84 = vector.extract_strided_slice %76 {offsets = [0, 96], sizes = [4, 32], strides = [1, 1]} : vector<4x128xf32> to vector<4x32xf32>
    %85 = math.tanh %83 : vector<4x32xf32>
    %86 = arith.mulf %84, %85 : vector<4x32xf32>
    %87 = vector.extract_strided_slice %86 {offsets = [0, 0], sizes = [2, 32], strides = [1, 1]} : vector<4x32xf32> to vector<2x32xf32>
    %88 = vector.extract_strided_slice %86 {offsets = [2, 0], sizes = [2, 32], strides = [1, 1]} : vector<4x32xf32> to vector<2x32xf32>
    %89 = vector.extract_strided_slice %30 {offsets = [4, 0], sizes = [2, 128], strides = [1, 1]} : vector<16x256xf32> to vector<2x128xf32>
    %90 = vector.extract_strided_slice %30 {offsets = [10, 128], sizes = [2, 128], strides = [1, 1]} : vector<16x256xf32> to vector<2x128xf32>
    %91 = tpu.concatenate %89, %90 in 0 : vector<2x128xf32>, vector<2x128xf32> -> vector<4x128xf32>
    %92 = tpu.concatenate %86, %86 in 1 : vector<4x32xf32>, vector<4x32xf32> -> vector<4x64xf32>
    %93 = arith.truncf %92 : vector<4x64xf32> to vector<4x64xbf16>
    %94 = arith.mulf %93, %36 : vector<4x64xbf16>
    %cst_24 = arith.constant dense<0.000000e+00> : vector<4x128xf32>
    %95 = tpu.matmul %94, %31, %cst_24 {dimension_numbers = #tpu.dot_dimension_numbers<[1], [0], [0], [1], [0, 0, 1, 1], [], []>} : vector<4x64xbf16>, vector<64x128xbf16>, vector<4x128xf32> -> vector<4x128xf32>
    %96 = arith.addf %95, %91 : vector<4x128xf32>
    %97 = arith.negf %96 : vector<4x128xf32>
    %98 = math.exp %97 : vector<4x128xf32>
    %cst_25 = arith.constant 1.000000e+00 : f32
    %99 = vector.broadcast %cst_25 : f32 to vector<4x128xf32>
    %100 = arith.addf %99, %98 : vector<4x128xf32>
    %101 = arith.divf %99, %100 : vector<4x128xf32>
    %102 = math.tanh %96 : vector<4x128xf32>
    %103 = vector.extract_strided_slice %101 {offsets = [0, 32], sizes = [4, 32], strides = [1, 1]} : vector<4x128xf32> to vector<4x32xf32>
    %104 = arith.mulf %103, %83 : vector<4x32xf32>
    %105 = vector.extract_strided_slice %101 {offsets = [0, 0], sizes = [4, 32], strides = [1, 1]} : vector<4x128xf32> to vector<4x32xf32>
    %106 = vector.extract_strided_slice %102 {offsets = [0, 64], sizes = [4, 32], strides = [1, 1]} : vector<4x128xf32> to vector<4x32xf32>
    %107 = arith.mulf %105, %106 : vector<4x32xf32>
    %108 = arith.addf %104, %107 : vector<4x32xf32>
    %109 = vector.extract_strided_slice %101 {offsets = [0, 96], sizes = [4, 32], strides = [1, 1]} : vector<4x128xf32> to vector<4x32xf32>
    %110 = math.tanh %108 : vector<4x32xf32>
    %111 = arith.mulf %109, %110 : vector<4x32xf32>
    %112 = vector.extract_strided_slice %111 {offsets = [0, 0], sizes = [2, 32], strides = [1, 1]} : vector<4x32xf32> to vector<2x32xf32>
    %113 = vector.extract_strided_slice %111 {offsets = [2, 0], sizes = [2, 32], strides = [1, 1]} : vector<4x32xf32> to vector<2x32xf32>
    %114 = vector.extract_strided_slice %30 {offsets = [6, 0], sizes = [2, 128], strides = [1, 1]} : vector<16x256xf32> to vector<2x128xf32>
    %115 = vector.extract_strided_slice %30 {offsets = [8, 128], sizes = [2, 128], strides = [1, 1]} : vector<16x256xf32> to vector<2x128xf32>
    %116 = tpu.concatenate %114, %115 in 0 : vector<2x128xf32>, vector<2x128xf32> -> vector<4x128xf32>
    %117 = tpu.concatenate %111, %111 in 1 : vector<4x32xf32>, vector<4x32xf32> -> vector<4x64xf32>
    %118 = arith.truncf %117 : vector<4x64xf32> to vector<4x64xbf16>
    %119 = arith.mulf %118, %36 : vector<4x64xbf16>
    %cst_26 = arith.constant dense<0.000000e+00> : vector<4x128xf32>
    %120 = tpu.matmul %119, %31, %cst_26 {dimension_numbers = #tpu.dot_dimension_numbers<[1], [0], [0], [1], [0, 0, 1, 1], [], []>} : vector<4x64xbf16>, vector<64x128xbf16>, vector<4x128xf32> -> vector<4x128xf32>
    %121 = arith.addf %120, %116 : vector<4x128xf32>
    %122 = arith.negf %121 : vector<4x128xf32>
    %123 = math.exp %122 : vector<4x128xf32>
    %cst_27 = arith.constant 1.000000e+00 : f32
    %124 = vector.broadcast %cst_27 : f32 to vector<4x128xf32>
    %125 = arith.addf %124, %123 : vector<4x128xf32>
    %126 = arith.divf %124, %125 : vector<4x128xf32>
    %127 = math.tanh %121 : vector<4x128xf32>
    %128 = vector.extract_strided_slice %126 {offsets = [0, 32], sizes = [4, 32], strides = [1, 1]} : vector<4x128xf32> to vector<4x32xf32>
    %129 = arith.mulf %128, %108 : vector<4x32xf32>
    %130 = vector.extract_strided_slice %126 {offsets = [0, 0], sizes = [4, 32], strides = [1, 1]} : vector<4x128xf32> to vector<4x32xf32>
    %131 = vector.extract_strided_slice %127 {offsets = [0, 64], sizes = [4, 32], strides = [1, 1]} : vector<4x128xf32> to vector<4x32xf32>
    %132 = arith.mulf %130, %131 : vector<4x32xf32>
    %133 = arith.addf %129, %132 : vector<4x32xf32>
    %134 = vector.extract_strided_slice %126 {offsets = [0, 96], sizes = [4, 32], strides = [1, 1]} : vector<4x128xf32> to vector<4x32xf32>
    %135 = math.tanh %133 : vector<4x32xf32>
    %136 = arith.mulf %134, %135 : vector<4x32xf32>
    %137 = vector.extract_strided_slice %136 {offsets = [0, 0], sizes = [2, 32], strides = [1, 1]} : vector<4x32xf32> to vector<2x32xf32>
    %138 = vector.extract_strided_slice %136 {offsets = [2, 0], sizes = [2, 32], strides = [1, 1]} : vector<4x32xf32> to vector<2x32xf32>
    %139 = vector.extract_strided_slice %30 {offsets = [8, 0], sizes = [2, 128], strides = [1, 1]} : vector<16x256xf32> to vector<2x128xf32>
    %140 = vector.extract_strided_slice %30 {offsets = [6, 128], sizes = [2, 128], strides = [1, 1]} : vector<16x256xf32> to vector<2x128xf32>
    %141 = tpu.concatenate %139, %140 in 0 : vector<2x128xf32>, vector<2x128xf32> -> vector<4x128xf32>
    %142 = tpu.concatenate %136, %136 in 1 : vector<4x32xf32>, vector<4x32xf32> -> vector<4x64xf32>
    %143 = arith.truncf %142 : vector<4x64xf32> to vector<4x64xbf16>
    %144 = arith.mulf %143, %36 : vector<4x64xbf16>
    %cst_28 = arith.constant dense<0.000000e+00> : vector<4x128xf32>
    %145 = tpu.matmul %144, %31, %cst_28 {dimension_numbers = #tpu.dot_dimension_numbers<[1], [0], [0], [1], [0, 0, 1, 1], [], []>} : vector<4x64xbf16>, vector<64x128xbf16>, vector<4x128xf32> -> vector<4x128xf32>
    %146 = arith.addf %145, %141 : vector<4x128xf32>
    %147 = arith.negf %146 : vector<4x128xf32>
    %148 = math.exp %147 : vector<4x128xf32>
    %cst_29 = arith.constant 1.000000e+00 : f32
    %149 = vector.broadcast %cst_29 : f32 to vector<4x128xf32>
    %150 = arith.addf %149, %148 : vector<4x128xf32>
    %151 = arith.divf %149, %150 : vector<4x128xf32>
    %152 = math.tanh %146 : vector<4x128xf32>
    %153 = vector.extract_strided_slice %151 {offsets = [0, 32], sizes = [4, 32], strides = [1, 1]} : vector<4x128xf32> to vector<4x32xf32>
    %154 = arith.mulf %153, %133 : vector<4x32xf32>
    %155 = vector.extract_strided_slice %151 {offsets = [0, 0], sizes = [4, 32], strides = [1, 1]} : vector<4x128xf32> to vector<4x32xf32>
    %156 = vector.extract_strided_slice %152 {offsets = [0, 64], sizes = [4, 32], strides = [1, 1]} : vector<4x128xf32> to vector<4x32xf32>
    %157 = arith.mulf %155, %156 : vector<4x32xf32>
    %158 = arith.addf %154, %157 : vector<4x32xf32>
    %159 = vector.extract_strided_slice %151 {offsets = [0, 96], sizes = [4, 32], strides = [1, 1]} : vector<4x128xf32> to vector<4x32xf32>
    %160 = math.tanh %158 : vector<4x32xf32>
    %161 = arith.mulf %159, %160 : vector<4x32xf32>
    %162 = vector.extract_strided_slice %161 {offsets = [0, 0], sizes = [2, 32], strides = [1, 1]} : vector<4x32xf32> to vector<2x32xf32>
    %163 = vector.extract_strided_slice %161 {offsets = [2, 0], sizes = [2, 32], strides = [1, 1]} : vector<4x32xf32> to vector<2x32xf32>
    %164 = vector.extract_strided_slice %30 {offsets = [10, 0], sizes = [2, 128], strides = [1, 1]} : vector<16x256xf32> to vector<2x128xf32>
    %165 = vector.extract_strided_slice %30 {offsets = [4, 128], sizes = [2, 128], strides = [1, 1]} : vector<16x256xf32> to vector<2x128xf32>
    %166 = tpu.concatenate %164, %165 in 0 : vector<2x128xf32>, vector<2x128xf32> -> vector<4x128xf32>
    %167 = tpu.concatenate %161, %161 in 1 : vector<4x32xf32>, vector<4x32xf32> -> vector<4x64xf32>
    %168 = arith.truncf %167 : vector<4x64xf32> to vector<4x64xbf16>
    %169 = arith.mulf %168, %36 : vector<4x64xbf16>
    %cst_30 = arith.constant dense<0.000000e+00> : vector<4x128xf32>
    %170 = tpu.matmul %169, %31, %cst_30 {dimension_numbers = #tpu.dot_dimension_numbers<[1], [0], [0], [1], [0, 0, 1, 1], [], []>} : vector<4x64xbf16>, vector<64x128xbf16>, vector<4x128xf32> -> vector<4x128xf32>
    %171 = arith.addf %170, %166 : vector<4x128xf32>
    %172 = arith.negf %171 : vector<4x128xf32>
    %173 = math.exp %172 : vector<4x128xf32>
    %cst_31 = arith.constant 1.000000e+00 : f32
    %174 = vector.broadcast %cst_31 : f32 to vector<4x128xf32>
    %175 = arith.addf %174, %173 : vector<4x128xf32>
    %176 = arith.divf %174, %175 : vector<4x128xf32>
    %177 = math.tanh %171 : vector<4x128xf32>
    %178 = vector.extract_strided_slice %176 {offsets = [0, 32], sizes = [4, 32], strides = [1, 1]} : vector<4x128xf32> to vector<4x32xf32>
    %179 = arith.mulf %178, %158 : vector<4x32xf32>
    %180 = vector.extract_strided_slice %176 {offsets = [0, 0], sizes = [4, 32], strides = [1, 1]} : vector<4x128xf32> to vector<4x32xf32>
    %181 = vector.extract_strided_slice %177 {offsets = [0, 64], sizes = [4, 32], strides = [1, 1]} : vector<4x128xf32> to vector<4x32xf32>
    %182 = arith.mulf %180, %181 : vector<4x32xf32>
    %183 = arith.addf %179, %182 : vector<4x32xf32>
    %184 = vector.extract_strided_slice %176 {offsets = [0, 96], sizes = [4, 32], strides = [1, 1]} : vector<4x128xf32> to vector<4x32xf32>
    %185 = math.tanh %183 : vector<4x32xf32>
    %186 = arith.mulf %184, %185 : vector<4x32xf32>
    %187 = vector.extract_strided_slice %186 {offsets = [0, 0], sizes = [2, 32], strides = [1, 1]} : vector<4x32xf32> to vector<2x32xf32>
    %188 = vector.extract_strided_slice %186 {offsets = [2, 0], sizes = [2, 32], strides = [1, 1]} : vector<4x32xf32> to vector<2x32xf32>
    %189 = vector.extract_strided_slice %30 {offsets = [12, 0], sizes = [2, 128], strides = [1, 1]} : vector<16x256xf32> to vector<2x128xf32>
    %190 = vector.extract_strided_slice %30 {offsets = [2, 128], sizes = [2, 128], strides = [1, 1]} : vector<16x256xf32> to vector<2x128xf32>
    %191 = tpu.concatenate %189, %190 in 0 : vector<2x128xf32>, vector<2x128xf32> -> vector<4x128xf32>
    %192 = tpu.concatenate %186, %186 in 1 : vector<4x32xf32>, vector<4x32xf32> -> vector<4x64xf32>
    %193 = arith.truncf %192 : vector<4x64xf32> to vector<4x64xbf16>
    %194 = arith.mulf %193, %36 : vector<4x64xbf16>
    %cst_32 = arith.constant dense<0.000000e+00> : vector<4x128xf32>
    %195 = tpu.matmul %194, %31, %cst_32 {dimension_numbers = #tpu.dot_dimension_numbers<[1], [0], [0], [1], [0, 0, 1, 1], [], []>} : vector<4x64xbf16>, vector<64x128xbf16>, vector<4x128xf32> -> vector<4x128xf32>
    %196 = arith.addf %195, %191 : vector<4x128xf32>
    %197 = arith.negf %196 : vector<4x128xf32>
    %198 = math.exp %197 : vector<4x128xf32>
    %cst_33 = arith.constant 1.000000e+00 : f32
    %199 = vector.broadcast %cst_33 : f32 to vector<4x128xf32>
    %200 = arith.addf %199, %198 : vector<4x128xf32>
    %201 = arith.divf %199, %200 : vector<4x128xf32>
    %202 = math.tanh %196 : vector<4x128xf32>
    %203 = vector.extract_strided_slice %201 {offsets = [0, 32], sizes = [4, 32], strides = [1, 1]} : vector<4x128xf32> to vector<4x32xf32>
    %204 = arith.mulf %203, %183 : vector<4x32xf32>
    %205 = vector.extract_strided_slice %201 {offsets = [0, 0], sizes = [4, 32], strides = [1, 1]} : vector<4x128xf32> to vector<4x32xf32>
    %206 = vector.extract_strided_slice %202 {offsets = [0, 64], sizes = [4, 32], strides = [1, 1]} : vector<4x128xf32> to vector<4x32xf32>
    %207 = arith.mulf %205, %206 : vector<4x32xf32>
    %208 = arith.addf %204, %207 : vector<4x32xf32>
    %209 = vector.extract_strided_slice %201 {offsets = [0, 96], sizes = [4, 32], strides = [1, 1]} : vector<4x128xf32> to vector<4x32xf32>
    %210 = math.tanh %208 : vector<4x32xf32>
    %211 = arith.mulf %209, %210 : vector<4x32xf32>
    %212 = vector.extract_strided_slice %211 {offsets = [0, 0], sizes = [2, 32], strides = [1, 1]} : vector<4x32xf32> to vector<2x32xf32>
    %213 = vector.extract_strided_slice %211 {offsets = [2, 0], sizes = [2, 32], strides = [1, 1]} : vector<4x32xf32> to vector<2x32xf32>
    %214 = vector.extract_strided_slice %30 {offsets = [14, 0], sizes = [2, 128], strides = [1, 1]} : vector<16x256xf32> to vector<2x128xf32>
    %215 = vector.extract_strided_slice %30 {offsets = [0, 128], sizes = [2, 128], strides = [1, 1]} : vector<16x256xf32> to vector<2x128xf32>
    %216 = tpu.concatenate %214, %215 in 0 : vector<2x128xf32>, vector<2x128xf32> -> vector<4x128xf32>
    %217 = tpu.concatenate %211, %211 in 1 : vector<4x32xf32>, vector<4x32xf32> -> vector<4x64xf32>
    %218 = arith.truncf %217 : vector<4x64xf32> to vector<4x64xbf16>
    %219 = arith.mulf %218, %36 : vector<4x64xbf16>
    %cst_34 = arith.constant dense<0.000000e+00> : vector<4x128xf32>
    %220 = tpu.matmul %219, %31, %cst_34 {dimension_numbers = #tpu.dot_dimension_numbers<[1], [0], [0], [1], [0, 0, 1, 1], [], []>} : vector<4x64xbf16>, vector<64x128xbf16>, vector<4x128xf32> -> vector<4x128xf32>
    %221 = arith.addf %220, %216 : vector<4x128xf32>
    %222 = arith.negf %221 : vector<4x128xf32>
    %223 = math.exp %222 : vector<4x128xf32>
    %cst_35 = arith.constant 1.000000e+00 : f32
    %224 = vector.broadcast %cst_35 : f32 to vector<4x128xf32>
    %225 = arith.addf %224, %223 : vector<4x128xf32>
    %226 = arith.divf %224, %225 : vector<4x128xf32>
    %227 = math.tanh %221 : vector<4x128xf32>
    %228 = vector.extract_strided_slice %226 {offsets = [0, 32], sizes = [4, 32], strides = [1, 1]} : vector<4x128xf32> to vector<4x32xf32>
    %229 = arith.mulf %228, %208 : vector<4x32xf32>
    %230 = vector.extract_strided_slice %226 {offsets = [0, 0], sizes = [4, 32], strides = [1, 1]} : vector<4x128xf32> to vector<4x32xf32>
    %231 = vector.extract_strided_slice %227 {offsets = [0, 64], sizes = [4, 32], strides = [1, 1]} : vector<4x128xf32> to vector<4x32xf32>
    %232 = arith.mulf %230, %231 : vector<4x32xf32>
    %233 = arith.addf %229, %232 : vector<4x32xf32>
    %234 = vector.extract_strided_slice %226 {offsets = [0, 96], sizes = [4, 32], strides = [1, 1]} : vector<4x128xf32> to vector<4x32xf32>
    %235 = math.tanh %233 : vector<4x32xf32>
    %236 = arith.mulf %234, %235 : vector<4x32xf32>
    %237 = vector.extract_strided_slice %236 {offsets = [0, 0], sizes = [2, 32], strides = [1, 1]} : vector<4x32xf32> to vector<2x32xf32>
    %238 = vector.extract_strided_slice %236 {offsets = [2, 0], sizes = [2, 32], strides = [1, 1]} : vector<4x32xf32> to vector<2x32xf32>
    %239 = vector.shape_cast %62 : vector<2x32xf32> to vector<1x2x32xf32>
    %240 = vector.shape_cast %87 : vector<2x32xf32> to vector<1x2x32xf32>
    %241 = vector.shape_cast %112 : vector<2x32xf32> to vector<1x2x32xf32>
    %242 = vector.shape_cast %137 : vector<2x32xf32> to vector<1x2x32xf32>
    %243 = vector.shape_cast %162 : vector<2x32xf32> to vector<1x2x32xf32>
    %244 = vector.shape_cast %187 : vector<2x32xf32> to vector<1x2x32xf32>
    %245 = vector.shape_cast %212 : vector<2x32xf32> to vector<1x2x32xf32>
    %246 = vector.shape_cast %237 : vector<2x32xf32> to vector<1x2x32xf32>
    %247 = tpu.concatenate %239, %240, %241, %242, %243, %244, %245, %246 in 0 : vector<1x2x32xf32>, vector<1x2x32xf32>, vector<1x2x32xf32>, vector<1x2x32xf32>, vector<1x2x32xf32>, vector<1x2x32xf32>, vector<1x2x32xf32>, vector<1x2x32xf32> -> vector<8x2x32xf32>
    %248 = vector.shape_cast %238 : vector<2x32xf32> to vector<1x2x32xf32>
    %249 = vector.shape_cast %213 : vector<2x32xf32> to vector<1x2x32xf32>
    %250 = vector.shape_cast %188 : vector<2x32xf32> to vector<1x2x32xf32>
    %251 = vector.shape_cast %163 : vector<2x32xf32> to vector<1x2x32xf32>
    %252 = vector.shape_cast %138 : vector<2x32xf32> to vector<1x2x32xf32>
    %253 = vector.shape_cast %113 : vector<2x32xf32> to vector<1x2x32xf32>
    %254 = vector.shape_cast %88 : vector<2x32xf32> to vector<1x2x32xf32>
    %255 = vector.shape_cast %63 : vector<2x32xf32> to vector<1x2x32xf32>
    %256 = tpu.concatenate %248, %249, %250, %251, %252, %253, %254, %255 in 0 : vector<1x2x32xf32>, vector<1x2x32xf32>, vector<1x2x32xf32>, vector<1x2x32xf32>, vector<1x2x32xf32>, vector<1x2x32xf32>, vector<1x2x32xf32>, vector<1x2x32xf32> -> vector<8x2x32xf32>
    %257 = tpu.concatenate %247, %256 in 2 : vector<8x2x32xf32>, vector<8x2x32xf32> -> vector<8x2x64xf32>
    %c0_36 = arith.constant 0 : index
    %c0_37 = arith.constant 0 : index
    %c0_38 = arith.constant 0 : index
    %258 = vector.load %arg6[%c0_36, %c0_37, %c0_38] : memref<8x2x64xf32, #tpu.memory_space<vmem>>, vector<8x2x64xf32>
    tpu.vector_store %arg6[%c0_36, %c0_37, %c0_38], %257 {strides = array<i32>} : memref<8x2x64xf32, #tpu.memory_space<vmem>>, vector<8x2x64xf32>,
    %259 = vector.extract_strided_slice %236 {offsets = [0, 0], sizes = [2, 32], strides = [1, 1]} : vector<4x32xf32> to vector<2x32xf32>
    %260 = vector.extract_strided_slice %236 {offsets = [2, 0], sizes = [2, 32], strides = [1, 1]} : vector<4x32xf32> to vector<2x32xf32>
    %261 = tpu.concatenate %259, %260 in 1 : vector<2x32xf32>, vector<2x32xf32> -> vector<2x64xf32>
    %c0_39 = arith.constant 0 : index
    %c0_40 = arith.constant 0 : index
    %262 = vector.load %arg7[%c0_39, %c0_40] : memref<2x64xf32, #tpu.memory_space<vmem>>, vector<2x64xf32>
    tpu.vector_store %arg7[%c0_39, %c0_40], %261 {strides = array<i32>} : memref<2x64xf32, #tpu.memory_space<vmem>>, vector<2x64xf32>,
    %263 = vector.extract_strided_slice %233 {offsets = [0, 0], sizes = [2, 32], strides = [1, 1]} : vector<4x32xf32> to vector<2x32xf32>
    %264 = vector.extract_strided_slice %233 {offsets = [2, 0], sizes = [2, 32], strides = [1, 1]} : vector<4x32xf32> to vector<2x32xf32>
    %265 = tpu.concatenate %263, %264 in 1 : vector<2x32xf32>, vector<2x32xf32> -> vector<2x64xf32>
    %c0_41 = arith.constant 0 : index
    %c0_42 = arith.constant 0 : index
    %266 = vector.load %arg8[%c0_41, %c0_42] : memref<2x64xf32, #tpu.memory_space<vmem>>, vector<2x64xf32>
    tpu.vector_store %arg8[%c0_41, %c0_42], %265 {strides = array<i32>} : memref<2x64xf32, #tpu.memory_space<vmem>>, vector<2x64xf32>,
    return
  }
}

module attributes {stable_mosaic.version = 11 : i64} {
  func.func @kernel(%arg0: memref<16x64xf32, #tpu.memory_space<vmem>>, %arg1: memref<64x256xbf16, #tpu.memory_space<vmem>>, %arg2: memref<64x128xbf16, #tpu.memory_space<vmem>>, %arg3: memref<1x256xf32, #tpu.memory_space<vmem>>, %arg4: memref<2x8x64xf32, #tpu.memory_space<vmem>>, %arg5: memref<2x64xf32, #tpu.memory_space<vmem>>, %arg6: memref<2x64xf32, #tpu.memory_space<vmem>>) attributes {dimension_semantics = [], scalar_prefetch = 0 : i64, scratch_operands = 0 : i64, tpu.core_type = #tpu.core_type<tc>} {
    %c0 = arith.constant 0 : index
    %c0_0 = arith.constant 0 : index
    %0 = vector.load %arg0[%c0, %c0_0] : memref<16x64xf32, #tpu.memory_space<vmem>>, vector<16x64xf32>
    %1 = arith.truncf %0 : vector<16x64xf32> to vector<16x64xbf16>
    %c0_1 = arith.constant 0 : index
    %c0_2 = arith.constant 0 : index
    %2 = vector.load %arg1[%c0_1, %c0_2] : memref<64x256xbf16, #tpu.memory_space<vmem>>, vector<64x256xbf16>
    %cst = arith.constant dense<0.000000e+00> : vector<16x256xf32>
    %3 = tpu.matmul %1, %2, %cst {dimension_numbers = #tpu.dot_dimension_numbers<[1], [0], [0], [1], [0, 0, 1, 1], [], []>} : vector<16x64xbf16>, vector<64x256xbf16>, vector<16x256xf32> -> vector<16x256xf32>
    %c0_3 = arith.constant 0 : index
    %c0_4 = arith.constant 0 : index
    %4 = vector.load %arg3[%c0_3, %c0_4] : memref<1x256xf32, #tpu.memory_space<vmem>>, vector<1x256xf32>
    %5 = vector.broadcast %4 : vector<1x256xf32> to vector<16x256xf32>
    %6 = arith.addf %3, %5 : vector<16x256xf32>
    %c0_5 = arith.constant 0 : index
    %c0_6 = arith.constant 0 : index
    %7 = vector.load %arg2[%c0_5, %c0_6] : memref<64x128xbf16, #tpu.memory_space<vmem>>, vector<64x128xbf16>
    %cst_7 = arith.constant 1.000000e+00 : bf16
    %8 = vector.broadcast %cst_7 : bf16 to vector<2x32xbf16>
    %cst_8 = arith.constant 0.000000e+00 : bf16
    %9 = vector.broadcast %cst_8 : bf16 to vector<2x32xbf16>
    %10 = tpu.concatenate %8, %9 in 1 : vector<2x32xbf16>, vector<2x32xbf16> -> vector<2x64xbf16>
    %11 = tpu.concatenate %9, %8 in 1 : vector<2x32xbf16>, vector<2x32xbf16> -> vector<2x64xbf16>
    %12 = tpu.concatenate %10, %11 in 0 : vector<2x64xbf16>, vector<2x64xbf16> -> vector<4x64xbf16>
    %cst_9 = arith.constant 0.000000e+00 : f32
    %13 = vector.broadcast %cst_9 : f32 to vector<4x32xf32>
    %cst_10 = arith.constant 0.000000e+00 : f32
    %14 = vector.broadcast %cst_10 : f32 to vector<4x32xf32>
    %15 = vector.extract_strided_slice %6 {offsets = [0, 0], sizes = [2, 128], strides = [1, 1]} : vector<16x256xf32> to vector<2x128xf32>
    %16 = vector.extract_strided_slice %6 {offsets = [14, 128], sizes = [2, 128], strides = [1, 1]} : vector<16x256xf32> to vector<2x128xf32>
    %17 = tpu.concatenate %15, %16 in 0 : vector<2x128xf32>, vector<2x128xf32> -> vector<4x128xf32>
    %18 = tpu.concatenate %13, %13 in 1 : vector<4x32xf32>, vector<4x32xf32> -> vector<4x64xf32>
    %19 = arith.truncf %18 : vector<4x64xf32> to vector<4x64xbf16>
    %20 = arith.mulf %19, %12 : vector<4x64xbf16>
    %cst_11 = arith.constant dense<0.000000e+00> : vector<4x128xf32>
    %21 = tpu.matmul %20, %7, %cst_11 {dimension_numbers = #tpu.dot_dimension_numbers<[1], [0], [0], [1], [0, 0, 1, 1], [], []>} : vector<4x64xbf16>, vector<64x128xbf16>, vector<4x128xf32> -> vector<4x128xf32>
    %22 = arith.addf %21, %17 : vector<4x128xf32>
    %23 = arith.negf %22 : vector<4x128xf32>
    %24 = math.exp %23 : vector<4x128xf32>
    %cst_12 = arith.constant 1.000000e+00 : f32
    %25 = vector.broadcast %cst_12 : f32 to vector<4x128xf32>
    %26 = arith.addf %25, %24 : vector<4x128xf32>
    %27 = arith.divf %25, %26 : vector<4x128xf32>
    %28 = math.tanh %22 : vector<4x128xf32>
    %29 = vector.extract_strided_slice %27 {offsets = [0, 32], sizes = [4, 32], strides = [1, 1]} : vector<4x128xf32> to vector<4x32xf32>
    %30 = arith.mulf %29, %14 : vector<4x32xf32>
    %31 = vector.extract_strided_slice %27 {offsets = [0, 0], sizes = [4, 32], strides = [1, 1]} : vector<4x128xf32> to vector<4x32xf32>
    %32 = vector.extract_strided_slice %28 {offsets = [0, 64], sizes = [4, 32], strides = [1, 1]} : vector<4x128xf32> to vector<4x32xf32>
    %33 = arith.mulf %31, %32 : vector<4x32xf32>
    %34 = arith.addf %30, %33 : vector<4x32xf32>
    %35 = vector.extract_strided_slice %27 {offsets = [0, 96], sizes = [4, 32], strides = [1, 1]} : vector<4x128xf32> to vector<4x32xf32>
    %36 = math.tanh %34 : vector<4x32xf32>
    %37 = arith.mulf %35, %36 : vector<4x32xf32>
    %38 = vector.extract_strided_slice %37 {offsets = [0, 0], sizes = [2, 32], strides = [1, 1]} : vector<4x32xf32> to vector<2x32xf32>
    %39 = vector.extract_strided_slice %37 {offsets = [2, 0], sizes = [2, 32], strides = [1, 1]} : vector<4x32xf32> to vector<2x32xf32>
    %40 = vector.extract_strided_slice %6 {offsets = [2, 0], sizes = [2, 128], strides = [1, 1]} : vector<16x256xf32> to vector<2x128xf32>
    %41 = vector.extract_strided_slice %6 {offsets = [12, 128], sizes = [2, 128], strides = [1, 1]} : vector<16x256xf32> to vector<2x128xf32>
    %42 = tpu.concatenate %40, %41 in 0 : vector<2x128xf32>, vector<2x128xf32> -> vector<4x128xf32>
    %43 = tpu.concatenate %37, %37 in 1 : vector<4x32xf32>, vector<4x32xf32> -> vector<4x64xf32>
    %44 = arith.truncf %43 : vector<4x64xf32> to vector<4x64xbf16>
    %45 = arith.mulf %44, %12 : vector<4x64xbf16>
    %cst_13 = arith.constant dense<0.000000e+00> : vector<4x128xf32>
    %46 = tpu.matmul %45, %7, %cst_13 {dimension_numbers = #tpu.dot_dimension_numbers<[1], [0], [0], [1], [0, 0, 1, 1], [], []>} : vector<4x64xbf16>, vector<64x128xbf16>, vector<4x128xf32> -> vector<4x128xf32>
    %47 = arith.addf %46, %42 : vector<4x128xf32>
    %48 = arith.negf %47 : vector<4x128xf32>
    %49 = math.exp %48 : vector<4x128xf32>
    %cst_14 = arith.constant 1.000000e+00 : f32
    %50 = vector.broadcast %cst_14 : f32 to vector<4x128xf32>
    %51 = arith.addf %50, %49 : vector<4x128xf32>
    %52 = arith.divf %50, %51 : vector<4x128xf32>
    %53 = math.tanh %47 : vector<4x128xf32>
    %54 = vector.extract_strided_slice %52 {offsets = [0, 32], sizes = [4, 32], strides = [1, 1]} : vector<4x128xf32> to vector<4x32xf32>
    %55 = arith.mulf %54, %34 : vector<4x32xf32>
    %56 = vector.extract_strided_slice %52 {offsets = [0, 0], sizes = [4, 32], strides = [1, 1]} : vector<4x128xf32> to vector<4x32xf32>
    %57 = vector.extract_strided_slice %53 {offsets = [0, 64], sizes = [4, 32], strides = [1, 1]} : vector<4x128xf32> to vector<4x32xf32>
    %58 = arith.mulf %56, %57 : vector<4x32xf32>
    %59 = arith.addf %55, %58 : vector<4x32xf32>
    %60 = vector.extract_strided_slice %52 {offsets = [0, 96], sizes = [4, 32], strides = [1, 1]} : vector<4x128xf32> to vector<4x32xf32>
    %61 = math.tanh %59 : vector<4x32xf32>
    %62 = arith.mulf %60, %61 : vector<4x32xf32>
    %63 = vector.extract_strided_slice %62 {offsets = [0, 0], sizes = [2, 32], strides = [1, 1]} : vector<4x32xf32> to vector<2x32xf32>
    %64 = vector.extract_strided_slice %62 {offsets = [2, 0], sizes = [2, 32], strides = [1, 1]} : vector<4x32xf32> to vector<2x32xf32>
    %65 = vector.extract_strided_slice %6 {offsets = [4, 0], sizes = [2, 128], strides = [1, 1]} : vector<16x256xf32> to vector<2x128xf32>
    %66 = vector.extract_strided_slice %6 {offsets = [10, 128], sizes = [2, 128], strides = [1, 1]} : vector<16x256xf32> to vector<2x128xf32>
    %67 = tpu.concatenate %65, %66 in 0 : vector<2x128xf32>, vector<2x128xf32> -> vector<4x128xf32>
    %68 = tpu.concatenate %62, %62 in 1 : vector<4x32xf32>, vector<4x32xf32> -> vector<4x64xf32>
    %69 = arith.truncf %68 : vector<4x64xf32> to vector<4x64xbf16>
    %70 = arith.mulf %69, %12 : vector<4x64xbf16>
    %cst_15 = arith.constant dense<0.000000e+00> : vector<4x128xf32>
    %71 = tpu.matmul %70, %7, %cst_15 {dimension_numbers = #tpu.dot_dimension_numbers<[1], [0], [0], [1], [0, 0, 1, 1], [], []>} : vector<4x64xbf16>, vector<64x128xbf16>, vector<4x128xf32> -> vector<4x128xf32>
    %72 = arith.addf %71, %67 : vector<4x128xf32>
    %73 = arith.negf %72 : vector<4x128xf32>
    %74 = math.exp %73 : vector<4x128xf32>
    %cst_16 = arith.constant 1.000000e+00 : f32
    %75 = vector.broadcast %cst_16 : f32 to vector<4x128xf32>
    %76 = arith.addf %75, %74 : vector<4x128xf32>
    %77 = arith.divf %75, %76 : vector<4x128xf32>
    %78 = math.tanh %72 : vector<4x128xf32>
    %79 = vector.extract_strided_slice %77 {offsets = [0, 32], sizes = [4, 32], strides = [1, 1]} : vector<4x128xf32> to vector<4x32xf32>
    %80 = arith.mulf %79, %59 : vector<4x32xf32>
    %81 = vector.extract_strided_slice %77 {offsets = [0, 0], sizes = [4, 32], strides = [1, 1]} : vector<4x128xf32> to vector<4x32xf32>
    %82 = vector.extract_strided_slice %78 {offsets = [0, 64], sizes = [4, 32], strides = [1, 1]} : vector<4x128xf32> to vector<4x32xf32>
    %83 = arith.mulf %81, %82 : vector<4x32xf32>
    %84 = arith.addf %80, %83 : vector<4x32xf32>
    %85 = vector.extract_strided_slice %77 {offsets = [0, 96], sizes = [4, 32], strides = [1, 1]} : vector<4x128xf32> to vector<4x32xf32>
    %86 = math.tanh %84 : vector<4x32xf32>
    %87 = arith.mulf %85, %86 : vector<4x32xf32>
    %88 = vector.extract_strided_slice %87 {offsets = [0, 0], sizes = [2, 32], strides = [1, 1]} : vector<4x32xf32> to vector<2x32xf32>
    %89 = vector.extract_strided_slice %87 {offsets = [2, 0], sizes = [2, 32], strides = [1, 1]} : vector<4x32xf32> to vector<2x32xf32>
    %90 = vector.extract_strided_slice %6 {offsets = [6, 0], sizes = [2, 128], strides = [1, 1]} : vector<16x256xf32> to vector<2x128xf32>
    %91 = vector.extract_strided_slice %6 {offsets = [8, 128], sizes = [2, 128], strides = [1, 1]} : vector<16x256xf32> to vector<2x128xf32>
    %92 = tpu.concatenate %90, %91 in 0 : vector<2x128xf32>, vector<2x128xf32> -> vector<4x128xf32>
    %93 = tpu.concatenate %87, %87 in 1 : vector<4x32xf32>, vector<4x32xf32> -> vector<4x64xf32>
    %94 = arith.truncf %93 : vector<4x64xf32> to vector<4x64xbf16>
    %95 = arith.mulf %94, %12 : vector<4x64xbf16>
    %cst_17 = arith.constant dense<0.000000e+00> : vector<4x128xf32>
    %96 = tpu.matmul %95, %7, %cst_17 {dimension_numbers = #tpu.dot_dimension_numbers<[1], [0], [0], [1], [0, 0, 1, 1], [], []>} : vector<4x64xbf16>, vector<64x128xbf16>, vector<4x128xf32> -> vector<4x128xf32>
    %97 = arith.addf %96, %92 : vector<4x128xf32>
    %98 = arith.negf %97 : vector<4x128xf32>
    %99 = math.exp %98 : vector<4x128xf32>
    %cst_18 = arith.constant 1.000000e+00 : f32
    %100 = vector.broadcast %cst_18 : f32 to vector<4x128xf32>
    %101 = arith.addf %100, %99 : vector<4x128xf32>
    %102 = arith.divf %100, %101 : vector<4x128xf32>
    %103 = math.tanh %97 : vector<4x128xf32>
    %104 = vector.extract_strided_slice %102 {offsets = [0, 32], sizes = [4, 32], strides = [1, 1]} : vector<4x128xf32> to vector<4x32xf32>
    %105 = arith.mulf %104, %84 : vector<4x32xf32>
    %106 = vector.extract_strided_slice %102 {offsets = [0, 0], sizes = [4, 32], strides = [1, 1]} : vector<4x128xf32> to vector<4x32xf32>
    %107 = vector.extract_strided_slice %103 {offsets = [0, 64], sizes = [4, 32], strides = [1, 1]} : vector<4x128xf32> to vector<4x32xf32>
    %108 = arith.mulf %106, %107 : vector<4x32xf32>
    %109 = arith.addf %105, %108 : vector<4x32xf32>
    %110 = vector.extract_strided_slice %102 {offsets = [0, 96], sizes = [4, 32], strides = [1, 1]} : vector<4x128xf32> to vector<4x32xf32>
    %111 = math.tanh %109 : vector<4x32xf32>
    %112 = arith.mulf %110, %111 : vector<4x32xf32>
    %113 = vector.extract_strided_slice %112 {offsets = [0, 0], sizes = [2, 32], strides = [1, 1]} : vector<4x32xf32> to vector<2x32xf32>
    %114 = vector.extract_strided_slice %112 {offsets = [2, 0], sizes = [2, 32], strides = [1, 1]} : vector<4x32xf32> to vector<2x32xf32>
    %115 = vector.extract_strided_slice %6 {offsets = [8, 0], sizes = [2, 128], strides = [1, 1]} : vector<16x256xf32> to vector<2x128xf32>
    %116 = vector.extract_strided_slice %6 {offsets = [6, 128], sizes = [2, 128], strides = [1, 1]} : vector<16x256xf32> to vector<2x128xf32>
    %117 = tpu.concatenate %115, %116 in 0 : vector<2x128xf32>, vector<2x128xf32> -> vector<4x128xf32>
    %118 = tpu.concatenate %112, %112 in 1 : vector<4x32xf32>, vector<4x32xf32> -> vector<4x64xf32>
    %119 = arith.truncf %118 : vector<4x64xf32> to vector<4x64xbf16>
    %120 = arith.mulf %119, %12 : vector<4x64xbf16>
    %cst_19 = arith.constant dense<0.000000e+00> : vector<4x128xf32>
    %121 = tpu.matmul %120, %7, %cst_19 {dimension_numbers = #tpu.dot_dimension_numbers<[1], [0], [0], [1], [0, 0, 1, 1], [], []>} : vector<4x64xbf16>, vector<64x128xbf16>, vector<4x128xf32> -> vector<4x128xf32>
    %122 = arith.addf %121, %117 : vector<4x128xf32>
    %123 = arith.negf %122 : vector<4x128xf32>
    %124 = math.exp %123 : vector<4x128xf32>
    %cst_20 = arith.constant 1.000000e+00 : f32
    %125 = vector.broadcast %cst_20 : f32 to vector<4x128xf32>
    %126 = arith.addf %125, %124 : vector<4x128xf32>
    %127 = arith.divf %125, %126 : vector<4x128xf32>
    %128 = math.tanh %122 : vector<4x128xf32>
    %129 = vector.extract_strided_slice %127 {offsets = [0, 32], sizes = [4, 32], strides = [1, 1]} : vector<4x128xf32> to vector<4x32xf32>
    %130 = arith.mulf %129, %109 : vector<4x32xf32>
    %131 = vector.extract_strided_slice %127 {offsets = [0, 0], sizes = [4, 32], strides = [1, 1]} : vector<4x128xf32> to vector<4x32xf32>
    %132 = vector.extract_strided_slice %128 {offsets = [0, 64], sizes = [4, 32], strides = [1, 1]} : vector<4x128xf32> to vector<4x32xf32>
    %133 = arith.mulf %131, %132 : vector<4x32xf32>
    %134 = arith.addf %130, %133 : vector<4x32xf32>
    %135 = vector.extract_strided_slice %127 {offsets = [0, 96], sizes = [4, 32], strides = [1, 1]} : vector<4x128xf32> to vector<4x32xf32>
    %136 = math.tanh %134 : vector<4x32xf32>
    %137 = arith.mulf %135, %136 : vector<4x32xf32>
    %138 = vector.extract_strided_slice %137 {offsets = [0, 0], sizes = [2, 32], strides = [1, 1]} : vector<4x32xf32> to vector<2x32xf32>
    %139 = vector.extract_strided_slice %137 {offsets = [2, 0], sizes = [2, 32], strides = [1, 1]} : vector<4x32xf32> to vector<2x32xf32>
    %140 = vector.extract_strided_slice %6 {offsets = [10, 0], sizes = [2, 128], strides = [1, 1]} : vector<16x256xf32> to vector<2x128xf32>
    %141 = vector.extract_strided_slice %6 {offsets = [4, 128], sizes = [2, 128], strides = [1, 1]} : vector<16x256xf32> to vector<2x128xf32>
    %142 = tpu.concatenate %140, %141 in 0 : vector<2x128xf32>, vector<2x128xf32> -> vector<4x128xf32>
    %143 = tpu.concatenate %137, %137 in 1 : vector<4x32xf32>, vector<4x32xf32> -> vector<4x64xf32>
    %144 = arith.truncf %143 : vector<4x64xf32> to vector<4x64xbf16>
    %145 = arith.mulf %144, %12 : vector<4x64xbf16>
    %cst_21 = arith.constant dense<0.000000e+00> : vector<4x128xf32>
    %146 = tpu.matmul %145, %7, %cst_21 {dimension_numbers = #tpu.dot_dimension_numbers<[1], [0], [0], [1], [0, 0, 1, 1], [], []>} : vector<4x64xbf16>, vector<64x128xbf16>, vector<4x128xf32> -> vector<4x128xf32>
    %147 = arith.addf %146, %142 : vector<4x128xf32>
    %148 = arith.negf %147 : vector<4x128xf32>
    %149 = math.exp %148 : vector<4x128xf32>
    %cst_22 = arith.constant 1.000000e+00 : f32
    %150 = vector.broadcast %cst_22 : f32 to vector<4x128xf32>
    %151 = arith.addf %150, %149 : vector<4x128xf32>
    %152 = arith.divf %150, %151 : vector<4x128xf32>
    %153 = math.tanh %147 : vector<4x128xf32>
    %154 = vector.extract_strided_slice %152 {offsets = [0, 32], sizes = [4, 32], strides = [1, 1]} : vector<4x128xf32> to vector<4x32xf32>
    %155 = arith.mulf %154, %134 : vector<4x32xf32>
    %156 = vector.extract_strided_slice %152 {offsets = [0, 0], sizes = [4, 32], strides = [1, 1]} : vector<4x128xf32> to vector<4x32xf32>
    %157 = vector.extract_strided_slice %153 {offsets = [0, 64], sizes = [4, 32], strides = [1, 1]} : vector<4x128xf32> to vector<4x32xf32>
    %158 = arith.mulf %156, %157 : vector<4x32xf32>
    %159 = arith.addf %155, %158 : vector<4x32xf32>
    %160 = vector.extract_strided_slice %152 {offsets = [0, 96], sizes = [4, 32], strides = [1, 1]} : vector<4x128xf32> to vector<4x32xf32>
    %161 = math.tanh %159 : vector<4x32xf32>
    %162 = arith.mulf %160, %161 : vector<4x32xf32>
    %163 = vector.extract_strided_slice %162 {offsets = [0, 0], sizes = [2, 32], strides = [1, 1]} : vector<4x32xf32> to vector<2x32xf32>
    %164 = vector.extract_strided_slice %162 {offsets = [2, 0], sizes = [2, 32], strides = [1, 1]} : vector<4x32xf32> to vector<2x32xf32>
    %165 = vector.extract_strided_slice %6 {offsets = [12, 0], sizes = [2, 128], strides = [1, 1]} : vector<16x256xf32> to vector<2x128xf32>
    %166 = vector.extract_strided_slice %6 {offsets = [2, 128], sizes = [2, 128], strides = [1, 1]} : vector<16x256xf32> to vector<2x128xf32>
    %167 = tpu.concatenate %165, %166 in 0 : vector<2x128xf32>, vector<2x128xf32> -> vector<4x128xf32>
    %168 = tpu.concatenate %162, %162 in 1 : vector<4x32xf32>, vector<4x32xf32> -> vector<4x64xf32>
    %169 = arith.truncf %168 : vector<4x64xf32> to vector<4x64xbf16>
    %170 = arith.mulf %169, %12 : vector<4x64xbf16>
    %cst_23 = arith.constant dense<0.000000e+00> : vector<4x128xf32>
    %171 = tpu.matmul %170, %7, %cst_23 {dimension_numbers = #tpu.dot_dimension_numbers<[1], [0], [0], [1], [0, 0, 1, 1], [], []>} : vector<4x64xbf16>, vector<64x128xbf16>, vector<4x128xf32> -> vector<4x128xf32>
    %172 = arith.addf %171, %167 : vector<4x128xf32>
    %173 = arith.negf %172 : vector<4x128xf32>
    %174 = math.exp %173 : vector<4x128xf32>
    %cst_24 = arith.constant 1.000000e+00 : f32
    %175 = vector.broadcast %cst_24 : f32 to vector<4x128xf32>
    %176 = arith.addf %175, %174 : vector<4x128xf32>
    %177 = arith.divf %175, %176 : vector<4x128xf32>
    %178 = math.tanh %172 : vector<4x128xf32>
    %179 = vector.extract_strided_slice %177 {offsets = [0, 32], sizes = [4, 32], strides = [1, 1]} : vector<4x128xf32> to vector<4x32xf32>
    %180 = arith.mulf %179, %159 : vector<4x32xf32>
    %181 = vector.extract_strided_slice %177 {offsets = [0, 0], sizes = [4, 32], strides = [1, 1]} : vector<4x128xf32> to vector<4x32xf32>
    %182 = vector.extract_strided_slice %178 {offsets = [0, 64], sizes = [4, 32], strides = [1, 1]} : vector<4x128xf32> to vector<4x32xf32>
    %183 = arith.mulf %181, %182 : vector<4x32xf32>
    %184 = arith.addf %180, %183 : vector<4x32xf32>
    %185 = vector.extract_strided_slice %177 {offsets = [0, 96], sizes = [4, 32], strides = [1, 1]} : vector<4x128xf32> to vector<4x32xf32>
    %186 = math.tanh %184 : vector<4x32xf32>
    %187 = arith.mulf %185, %186 : vector<4x32xf32>
    %188 = vector.extract_strided_slice %187 {offsets = [0, 0], sizes = [2, 32], strides = [1, 1]} : vector<4x32xf32> to vector<2x32xf32>
    %189 = vector.extract_strided_slice %187 {offsets = [2, 0], sizes = [2, 32], strides = [1, 1]} : vector<4x32xf32> to vector<2x32xf32>
    %190 = vector.extract_strided_slice %6 {offsets = [14, 0], sizes = [2, 128], strides = [1, 1]} : vector<16x256xf32> to vector<2x128xf32>
    %191 = vector.extract_strided_slice %6 {offsets = [0, 128], sizes = [2, 128], strides = [1, 1]} : vector<16x256xf32> to vector<2x128xf32>
    %192 = tpu.concatenate %190, %191 in 0 : vector<2x128xf32>, vector<2x128xf32> -> vector<4x128xf32>
    %193 = tpu.concatenate %187, %187 in 1 : vector<4x32xf32>, vector<4x32xf32> -> vector<4x64xf32>
    %194 = arith.truncf %193 : vector<4x64xf32> to vector<4x64xbf16>
    %195 = arith.mulf %194, %12 : vector<4x64xbf16>
    %cst_25 = arith.constant dense<0.000000e+00> : vector<4x128xf32>
    %196 = tpu.matmul %195, %7, %cst_25 {dimension_numbers = #tpu.dot_dimension_numbers<[1], [0], [0], [1], [0, 0, 1, 1], [], []>} : vector<4x64xbf16>, vector<64x128xbf16>, vector<4x128xf32> -> vector<4x128xf32>
    %197 = arith.addf %196, %192 : vector<4x128xf32>
    %198 = arith.negf %197 : vector<4x128xf32>
    %199 = math.exp %198 : vector<4x128xf32>
    %cst_26 = arith.constant 1.000000e+00 : f32
    %200 = vector.broadcast %cst_26 : f32 to vector<4x128xf32>
    %201 = arith.addf %200, %199 : vector<4x128xf32>
    %202 = arith.divf %200, %201 : vector<4x128xf32>
    %203 = math.tanh %197 : vector<4x128xf32>
    %204 = vector.extract_strided_slice %202 {offsets = [0, 32], sizes = [4, 32], strides = [1, 1]} : vector<4x128xf32> to vector<4x32xf32>
    %205 = arith.mulf %204, %184 : vector<4x32xf32>
    %206 = vector.extract_strided_slice %202 {offsets = [0, 0], sizes = [4, 32], strides = [1, 1]} : vector<4x128xf32> to vector<4x32xf32>
    %207 = vector.extract_strided_slice %203 {offsets = [0, 64], sizes = [4, 32], strides = [1, 1]} : vector<4x128xf32> to vector<4x32xf32>
    %208 = arith.mulf %206, %207 : vector<4x32xf32>
    %209 = arith.addf %205, %208 : vector<4x32xf32>
    %210 = vector.extract_strided_slice %202 {offsets = [0, 96], sizes = [4, 32], strides = [1, 1]} : vector<4x128xf32> to vector<4x32xf32>
    %211 = math.tanh %209 : vector<4x32xf32>
    %212 = arith.mulf %210, %211 : vector<4x32xf32>
    %213 = vector.extract_strided_slice %212 {offsets = [0, 0], sizes = [2, 32], strides = [1, 1]} : vector<4x32xf32> to vector<2x32xf32>
    %214 = vector.extract_strided_slice %212 {offsets = [2, 0], sizes = [2, 32], strides = [1, 1]} : vector<4x32xf32> to vector<2x32xf32>
    %215 = vector.shape_cast %38 : vector<2x32xf32> to vector<2x1x32xf32>
    %216 = vector.shape_cast %63 : vector<2x32xf32> to vector<2x1x32xf32>
    %217 = vector.shape_cast %88 : vector<2x32xf32> to vector<2x1x32xf32>
    %218 = vector.shape_cast %113 : vector<2x32xf32> to vector<2x1x32xf32>
    %219 = vector.shape_cast %138 : vector<2x32xf32> to vector<2x1x32xf32>
    %220 = vector.shape_cast %163 : vector<2x32xf32> to vector<2x1x32xf32>
    %221 = vector.shape_cast %188 : vector<2x32xf32> to vector<2x1x32xf32>
    %222 = vector.shape_cast %213 : vector<2x32xf32> to vector<2x1x32xf32>
    %223 = tpu.concatenate %215, %216, %217, %218, %219, %220, %221, %222 in 1 : vector<2x1x32xf32>, vector<2x1x32xf32>, vector<2x1x32xf32>, vector<2x1x32xf32>, vector<2x1x32xf32>, vector<2x1x32xf32>, vector<2x1x32xf32>, vector<2x1x32xf32> -> vector<2x8x32xf32>
    %224 = vector.shape_cast %214 : vector<2x32xf32> to vector<2x1x32xf32>
    %225 = vector.shape_cast %189 : vector<2x32xf32> to vector<2x1x32xf32>
    %226 = vector.shape_cast %164 : vector<2x32xf32> to vector<2x1x32xf32>
    %227 = vector.shape_cast %139 : vector<2x32xf32> to vector<2x1x32xf32>
    %228 = vector.shape_cast %114 : vector<2x32xf32> to vector<2x1x32xf32>
    %229 = vector.shape_cast %89 : vector<2x32xf32> to vector<2x1x32xf32>
    %230 = vector.shape_cast %64 : vector<2x32xf32> to vector<2x1x32xf32>
    %231 = vector.shape_cast %39 : vector<2x32xf32> to vector<2x1x32xf32>
    %232 = tpu.concatenate %224, %225, %226, %227, %228, %229, %230, %231 in 1 : vector<2x1x32xf32>, vector<2x1x32xf32>, vector<2x1x32xf32>, vector<2x1x32xf32>, vector<2x1x32xf32>, vector<2x1x32xf32>, vector<2x1x32xf32>, vector<2x1x32xf32> -> vector<2x8x32xf32>
    %233 = tpu.concatenate %223, %232 in 2 : vector<2x8x32xf32>, vector<2x8x32xf32> -> vector<2x8x64xf32>
    %c0_27 = arith.constant 0 : index
    %c0_28 = arith.constant 0 : index
    %c0_29 = arith.constant 0 : index
    %234 = vector.load %arg4[%c0_27, %c0_28, %c0_29] : memref<2x8x64xf32, #tpu.memory_space<vmem>>, vector<2x8x64xf32>
    tpu.vector_store %arg4[%c0_27, %c0_28, %c0_29], %233 {strides = array<i32>} : memref<2x8x64xf32, #tpu.memory_space<vmem>>, vector<2x8x64xf32>,
    %235 = vector.extract_strided_slice %212 {offsets = [0, 0], sizes = [2, 32], strides = [1, 1]} : vector<4x32xf32> to vector<2x32xf32>
    %236 = vector.extract_strided_slice %212 {offsets = [2, 0], sizes = [2, 32], strides = [1, 1]} : vector<4x32xf32> to vector<2x32xf32>
    %237 = tpu.concatenate %235, %236 in 1 : vector<2x32xf32>, vector<2x32xf32> -> vector<2x64xf32>
    %c0_30 = arith.constant 0 : index
    %c0_31 = arith.constant 0 : index
    %238 = vector.load %arg5[%c0_30, %c0_31] : memref<2x64xf32, #tpu.memory_space<vmem>>, vector<2x64xf32>
    tpu.vector_store %arg5[%c0_30, %c0_31], %237 {strides = array<i32>} : memref<2x64xf32, #tpu.memory_space<vmem>>, vector<2x64xf32>,
    %239 = vector.extract_strided_slice %209 {offsets = [0, 0], sizes = [2, 32], strides = [1, 1]} : vector<4x32xf32> to vector<2x32xf32>
    %240 = vector.extract_strided_slice %209 {offsets = [2, 0], sizes = [2, 32], strides = [1, 1]} : vector<4x32xf32> to vector<2x32xf32>
    %241 = tpu.concatenate %239, %240 in 1 : vector<2x32xf32>, vector<2x32xf32> -> vector<2x64xf32>
    %c0_32 = arith.constant 0 : index
    %c0_33 = arith.constant 0 : index
    %242 = vector.load %arg6[%c0_32, %c0_33] : memref<2x64xf32, #tpu.memory_space<vmem>>, vector<2x64xf32>
    tpu.vector_store %arg6[%c0_32, %c0_33], %241 {strides = array<i32>} : memref<2x64xf32, #tpu.memory_space<vmem>>, vector<2x64xf32>,
    return
  }
}

module attributes {stable_mosaic.version = 11 : i64} {
  func.func @kernel(%arg0: memref<4x2x64xf32, #tpu.memory_space<vmem>>, %arg1: memref<4x64x32xbf16, #tpu.memory_space<vmem>>, %arg2: memref<4x1x32xf32, #tpu.memory_space<vmem>>, %arg3: memref<1x32xf32, #tpu.memory_space<vmem>>, %arg4: memref<1x32xf32, #tpu.memory_space<vmem>>, %arg5: memref<4x2x32xf32, #tpu.memory_space<vmem>>) attributes {dimension_semantics = [], scalar_prefetch = 0 : i64, scratch_operands = 0 : i64, tpu.core_type = #tpu.core_type<tc>} {
    %c0 = arith.constant 0 : index
    %c0_0 = arith.constant 0 : index
    %0 = vector.load %arg3[%c0, %c0_0] : memref<1x32xf32, #tpu.memory_space<vmem>>, vector<1x32xf32>
    %c0_1 = arith.constant 0 : index
    %c0_2 = arith.constant 0 : index
    %1 = vector.load %arg4[%c0_1, %c0_2] : memref<1x32xf32, #tpu.memory_space<vmem>>, vector<1x32xf32>
    %c0_3 = arith.constant 0 : index
    %c0_4 = arith.constant 0 : index
    %c0_5 = arith.constant 0 : index
    %2 = vector.load %arg0[%c0_3, %c0_4, %c0_5] : memref<4x2x64xf32, #tpu.memory_space<vmem>>, vector<1x2x64xf32>
    %3 = vector.shape_cast %2 : vector<1x2x64xf32> to vector<2x64xf32>
    %4 = arith.truncf %3 : vector<2x64xf32> to vector<2x64xbf16>
    %c0_6 = arith.constant 0 : index
    %c0_7 = arith.constant 0 : index
    %c0_8 = arith.constant 0 : index
    %5 = vector.load %arg1[%c0_6, %c0_7, %c0_8] : memref<4x64x32xbf16, #tpu.memory_space<vmem>>, vector<1x64x32xbf16>
    %6 = vector.shape_cast %5 : vector<1x64x32xbf16> to vector<64x32xbf16>
    %cst = arith.constant dense<0.000000e+00> : vector<2x32xf32>
    %7 = tpu.matmul %4, %6, %cst {dimension_numbers = #tpu.dot_dimension_numbers<[1], [0], [0], [1], [0, 0, 1, 1], [], []>} : vector<2x64xbf16>, vector<64x32xbf16>, vector<2x32xf32> -> vector<2x32xf32>
    %c0_9 = arith.constant 0 : index
    %c0_10 = arith.constant 0 : index
    %c0_11 = arith.constant 0 : index
    %8 = vector.load %arg2[%c0_9, %c0_10, %c0_11] : memref<4x1x32xf32, #tpu.memory_space<vmem>>, vector<1x1x32xf32>
    %9 = vector.shape_cast %8 : vector<1x1x32xf32> to vector<1x32xf32>
    %10 = vector.broadcast %9 : vector<1x32xf32> to vector<2x32xf32>
    %11 = arith.addf %7, %10 : vector<2x32xf32>
    %cst_12 = arith.constant dense<0.000000e+00> : vector<2xf32>
    %12 = vector.multi_reduction <add>, %11, %cst_12 [1] : vector<2x32xf32> to vector<2xf32>
    %13 = vector.shape_cast %12 : vector<2xf32> to vector<2x1xf32>
    %cst_13 = arith.constant 3.200000e+01 : f32
    %14 = vector.broadcast %cst_13 : f32 to vector<2x1xf32>
    %15 = arith.divf %13, %14 : vector<2x1xf32>
    %16 = vector.broadcast %15 : vector<2x1xf32> to vector<2x32xf32>
    %17 = arith.subf %11, %16 : vector<2x32xf32>
    %18 = arith.mulf %17, %17 : vector<2x32xf32>
    %cst_14 = arith.constant dense<0.000000e+00> : vector<2xf32>
    %19 = vector.multi_reduction <add>, %18, %cst_14 [1] : vector<2x32xf32> to vector<2xf32>
    %20 = vector.shape_cast %19 : vector<2xf32> to vector<2x1xf32>
    %cst_15 = arith.constant 3.200000e+01 : f32
    %21 = vector.broadcast %cst_15 : f32 to vector<2x1xf32>
    %22 = arith.divf %20, %21 : vector<2x1xf32>
    %23 = vector.broadcast %15 : vector<2x1xf32> to vector<2x32xf32>
    %24 = arith.subf %11, %23 : vector<2x32xf32>
    %cst_16 = arith.constant 9.99999974E-6 : f32
    %25 = vector.broadcast %cst_16 : f32 to vector<2x1xf32>
    %26 = arith.addf %22, %25 : vector<2x1xf32>
    %27 = math.rsqrt %26 : vector<2x1xf32>
    %28 = vector.broadcast %27 : vector<2x1xf32> to vector<2x32xf32>
    %29 = arith.mulf %24, %28 : vector<2x32xf32>
    %30 = vector.broadcast %0 : vector<1x32xf32> to vector<2x32xf32>
    %31 = arith.mulf %29, %30 : vector<2x32xf32>
    %32 = vector.broadcast %1 : vector<1x32xf32> to vector<2x32xf32>
    %33 = arith.addf %31, %32 : vector<2x32xf32>
    %c0_17 = arith.constant 0 : index
    %c0_18 = arith.constant 0 : index
    %c0_19 = arith.constant 0 : index
    %34 = vector.load %arg5[%c0_17, %c0_18, %c0_19] : memref<4x2x32xf32, #tpu.memory_space<vmem>>, vector<1x2x32xf32>
    %35 = vector.shape_cast %34 : vector<1x2x32xf32> to vector<2x32xf32>
    %36 = vector.shape_cast %33 : vector<2x32xf32> to vector<1x2x32xf32>
    tpu.vector_store %arg5[%c0_17, %c0_18, %c0_19], %36 {strides = array<i32>} : memref<4x2x32xf32, #tpu.memory_space<vmem>>, vector<1x2x32xf32>,
    %c1 = arith.constant 1 : index
    %c0_20 = arith.constant 0 : index
    %c0_21 = arith.constant 0 : index
    %37 = vector.load %arg0[%c1, %c0_20, %c0_21] : memref<4x2x64xf32, #tpu.memory_space<vmem>>, vector<1x2x64xf32>
    %38 = vector.shape_cast %37 : vector<1x2x64xf32> to vector<2x64xf32>
    %39 = arith.truncf %38 : vector<2x64xf32> to vector<2x64xbf16>
    %c1_22 = arith.constant 1 : index
    %c0_23 = arith.constant 0 : index
    %c0_24 = arith.constant 0 : index
    %40 = vector.load %arg1[%c1_22, %c0_23, %c0_24] : memref<4x64x32xbf16, #tpu.memory_space<vmem>>, vector<1x64x32xbf16>
    %41 = vector.shape_cast %40 : vector<1x64x32xbf16> to vector<64x32xbf16>
    %cst_25 = arith.constant dense<0.000000e+00> : vector<2x32xf32>
    %42 = tpu.matmul %39, %41, %cst_25 {dimension_numbers = #tpu.dot_dimension_numbers<[1], [0], [0], [1], [0, 0, 1, 1], [], []>} : vector<2x64xbf16>, vector<64x32xbf16>, vector<2x32xf32> -> vector<2x32xf32>
    %c1_26 = arith.constant 1 : index
    %c0_27 = arith.constant 0 : index
    %c0_28 = arith.constant 0 : index
    %43 = vector.load %arg2[%c1_26, %c0_27, %c0_28] : memref<4x1x32xf32, #tpu.memory_space<vmem>>, vector<1x1x32xf32>
    %44 = vector.shape_cast %43 : vector<1x1x32xf32> to vector<1x32xf32>
    %45 = vector.broadcast %44 : vector<1x32xf32> to vector<2x32xf32>
    %46 = arith.addf %42, %45 : vector<2x32xf32>
    %cst_29 = arith.constant dense<0.000000e+00> : vector<2xf32>
    %47 = vector.multi_reduction <add>, %46, %cst_29 [1] : vector<2x32xf32> to vector<2xf32>
    %48 = vector.shape_cast %47 : vector<2xf32> to vector<2x1xf32>
    %cst_30 = arith.constant 3.200000e+01 : f32
    %49 = vector.broadcast %cst_30 : f32 to vector<2x1xf32>
    %50 = arith.divf %48, %49 : vector<2x1xf32>
    %51 = vector.broadcast %50 : vector<2x1xf32> to vector<2x32xf32>
    %52 = arith.subf %46, %51 : vector<2x32xf32>
    %53 = arith.mulf %52, %52 : vector<2x32xf32>
    %cst_31 = arith.constant dense<0.000000e+00> : vector<2xf32>
    %54 = vector.multi_reduction <add>, %53, %cst_31 [1] : vector<2x32xf32> to vector<2xf32>
    %55 = vector.shape_cast %54 : vector<2xf32> to vector<2x1xf32>
    %cst_32 = arith.constant 3.200000e+01 : f32
    %56 = vector.broadcast %cst_32 : f32 to vector<2x1xf32>
    %57 = arith.divf %55, %56 : vector<2x1xf32>
    %58 = vector.broadcast %50 : vector<2x1xf32> to vector<2x32xf32>
    %59 = arith.subf %46, %58 : vector<2x32xf32>
    %cst_33 = arith.constant 9.99999974E-6 : f32
    %60 = vector.broadcast %cst_33 : f32 to vector<2x1xf32>
    %61 = arith.addf %57, %60 : vector<2x1xf32>
    %62 = math.rsqrt %61 : vector<2x1xf32>
    %63 = vector.broadcast %62 : vector<2x1xf32> to vector<2x32xf32>
    %64 = arith.mulf %59, %63 : vector<2x32xf32>
    %65 = vector.broadcast %0 : vector<1x32xf32> to vector<2x32xf32>
    %66 = arith.mulf %64, %65 : vector<2x32xf32>
    %67 = vector.broadcast %1 : vector<1x32xf32> to vector<2x32xf32>
    %68 = arith.addf %66, %67 : vector<2x32xf32>
    %c1_34 = arith.constant 1 : index
    %c0_35 = arith.constant 0 : index
    %c0_36 = arith.constant 0 : index
    %69 = vector.load %arg5[%c1_34, %c0_35, %c0_36] : memref<4x2x32xf32, #tpu.memory_space<vmem>>, vector<1x2x32xf32>
    %70 = vector.shape_cast %69 : vector<1x2x32xf32> to vector<2x32xf32>
    %71 = vector.shape_cast %68 : vector<2x32xf32> to vector<1x2x32xf32>
    tpu.vector_store %arg5[%c1_34, %c0_35, %c0_36], %71 {strides = array<i32>} : memref<4x2x32xf32, #tpu.memory_space<vmem>>, vector<1x2x32xf32>,
    %c2 = arith.constant 2 : index
    %c0_37 = arith.constant 0 : index
    %c0_38 = arith.constant 0 : index
    %72 = vector.load %arg0[%c2, %c0_37, %c0_38] : memref<4x2x64xf32, #tpu.memory_space<vmem>>, vector<1x2x64xf32>
    %73 = vector.shape_cast %72 : vector<1x2x64xf32> to vector<2x64xf32>
    %74 = arith.truncf %73 : vector<2x64xf32> to vector<2x64xbf16>
    %c2_39 = arith.constant 2 : index
    %c0_40 = arith.constant 0 : index
    %c0_41 = arith.constant 0 : index
    %75 = vector.load %arg1[%c2_39, %c0_40, %c0_41] : memref<4x64x32xbf16, #tpu.memory_space<vmem>>, vector<1x64x32xbf16>
    %76 = vector.shape_cast %75 : vector<1x64x32xbf16> to vector<64x32xbf16>
    %cst_42 = arith.constant dense<0.000000e+00> : vector<2x32xf32>
    %77 = tpu.matmul %74, %76, %cst_42 {dimension_numbers = #tpu.dot_dimension_numbers<[1], [0], [0], [1], [0, 0, 1, 1], [], []>} : vector<2x64xbf16>, vector<64x32xbf16>, vector<2x32xf32> -> vector<2x32xf32>
    %c2_43 = arith.constant 2 : index
    %c0_44 = arith.constant 0 : index
    %c0_45 = arith.constant 0 : index
    %78 = vector.load %arg2[%c2_43, %c0_44, %c0_45] : memref<4x1x32xf32, #tpu.memory_space<vmem>>, vector<1x1x32xf32>
    %79 = vector.shape_cast %78 : vector<1x1x32xf32> to vector<1x32xf32>
    %80 = vector.broadcast %79 : vector<1x32xf32> to vector<2x32xf32>
    %81 = arith.addf %77, %80 : vector<2x32xf32>
    %cst_46 = arith.constant dense<0.000000e+00> : vector<2xf32>
    %82 = vector.multi_reduction <add>, %81, %cst_46 [1] : vector<2x32xf32> to vector<2xf32>
    %83 = vector.shape_cast %82 : vector<2xf32> to vector<2x1xf32>
    %cst_47 = arith.constant 3.200000e+01 : f32
    %84 = vector.broadcast %cst_47 : f32 to vector<2x1xf32>
    %85 = arith.divf %83, %84 : vector<2x1xf32>
    %86 = vector.broadcast %85 : vector<2x1xf32> to vector<2x32xf32>
    %87 = arith.subf %81, %86 : vector<2x32xf32>
    %88 = arith.mulf %87, %87 : vector<2x32xf32>
    %cst_48 = arith.constant dense<0.000000e+00> : vector<2xf32>
    %89 = vector.multi_reduction <add>, %88, %cst_48 [1] : vector<2x32xf32> to vector<2xf32>
    %90 = vector.shape_cast %89 : vector<2xf32> to vector<2x1xf32>
    %cst_49 = arith.constant 3.200000e+01 : f32
    %91 = vector.broadcast %cst_49 : f32 to vector<2x1xf32>
    %92 = arith.divf %90, %91 : vector<2x1xf32>
    %93 = vector.broadcast %85 : vector<2x1xf32> to vector<2x32xf32>
    %94 = arith.subf %81, %93 : vector<2x32xf32>
    %cst_50 = arith.constant 9.99999974E-6 : f32
    %95 = vector.broadcast %cst_50 : f32 to vector<2x1xf32>
    %96 = arith.addf %92, %95 : vector<2x1xf32>
    %97 = math.rsqrt %96 : vector<2x1xf32>
    %98 = vector.broadcast %97 : vector<2x1xf32> to vector<2x32xf32>
    %99 = arith.mulf %94, %98 : vector<2x32xf32>
    %100 = vector.broadcast %0 : vector<1x32xf32> to vector<2x32xf32>
    %101 = arith.mulf %99, %100 : vector<2x32xf32>
    %102 = vector.broadcast %1 : vector<1x32xf32> to vector<2x32xf32>
    %103 = arith.addf %101, %102 : vector<2x32xf32>
    %c2_51 = arith.constant 2 : index
    %c0_52 = arith.constant 0 : index
    %c0_53 = arith.constant 0 : index
    %104 = vector.load %arg5[%c2_51, %c0_52, %c0_53] : memref<4x2x32xf32, #tpu.memory_space<vmem>>, vector<1x2x32xf32>
    %105 = vector.shape_cast %104 : vector<1x2x32xf32> to vector<2x32xf32>
    %106 = vector.shape_cast %103 : vector<2x32xf32> to vector<1x2x32xf32>
    tpu.vector_store %arg5[%c2_51, %c0_52, %c0_53], %106 {strides = array<i32>} : memref<4x2x32xf32, #tpu.memory_space<vmem>>, vector<1x2x32xf32>,
    %c3 = arith.constant 3 : index
    %c0_54 = arith.constant 0 : index
    %c0_55 = arith.constant 0 : index
    %107 = vector.load %arg0[%c3, %c0_54, %c0_55] : memref<4x2x64xf32, #tpu.memory_space<vmem>>, vector<1x2x64xf32>
    %108 = vector.shape_cast %107 : vector<1x2x64xf32> to vector<2x64xf32>
    %109 = arith.truncf %108 : vector<2x64xf32> to vector<2x64xbf16>
    %c3_56 = arith.constant 3 : index
    %c0_57 = arith.constant 0 : index
    %c0_58 = arith.constant 0 : index
    %110 = vector.load %arg1[%c3_56, %c0_57, %c0_58] : memref<4x64x32xbf16, #tpu.memory_space<vmem>>, vector<1x64x32xbf16>
    %111 = vector.shape_cast %110 : vector<1x64x32xbf16> to vector<64x32xbf16>
    %cst_59 = arith.constant dense<0.000000e+00> : vector<2x32xf32>
    %112 = tpu.matmul %109, %111, %cst_59 {dimension_numbers = #tpu.dot_dimension_numbers<[1], [0], [0], [1], [0, 0, 1, 1], [], []>} : vector<2x64xbf16>, vector<64x32xbf16>, vector<2x32xf32> -> vector<2x32xf32>
    %c3_60 = arith.constant 3 : index
    %c0_61 = arith.constant 0 : index
    %c0_62 = arith.constant 0 : index
    %113 = vector.load %arg2[%c3_60, %c0_61, %c0_62] : memref<4x1x32xf32, #tpu.memory_space<vmem>>, vector<1x1x32xf32>
    %114 = vector.shape_cast %113 : vector<1x1x32xf32> to vector<1x32xf32>
    %115 = vector.broadcast %114 : vector<1x32xf32> to vector<2x32xf32>
    %116 = arith.addf %112, %115 : vector<2x32xf32>
    %cst_63 = arith.constant dense<0.000000e+00> : vector<2xf32>
    %117 = vector.multi_reduction <add>, %116, %cst_63 [1] : vector<2x32xf32> to vector<2xf32>
    %118 = vector.shape_cast %117 : vector<2xf32> to vector<2x1xf32>
    %cst_64 = arith.constant 3.200000e+01 : f32
    %119 = vector.broadcast %cst_64 : f32 to vector<2x1xf32>
    %120 = arith.divf %118, %119 : vector<2x1xf32>
    %121 = vector.broadcast %120 : vector<2x1xf32> to vector<2x32xf32>
    %122 = arith.subf %116, %121 : vector<2x32xf32>
    %123 = arith.mulf %122, %122 : vector<2x32xf32>
    %cst_65 = arith.constant dense<0.000000e+00> : vector<2xf32>
    %124 = vector.multi_reduction <add>, %123, %cst_65 [1] : vector<2x32xf32> to vector<2xf32>
    %125 = vector.shape_cast %124 : vector<2xf32> to vector<2x1xf32>
    %cst_66 = arith.constant 3.200000e+01 : f32
    %126 = vector.broadcast %cst_66 : f32 to vector<2x1xf32>
    %127 = arith.divf %125, %126 : vector<2x1xf32>
    %128 = vector.broadcast %120 : vector<2x1xf32> to vector<2x32xf32>
    %129 = arith.subf %116, %128 : vector<2x32xf32>
    %cst_67 = arith.constant 9.99999974E-6 : f32
    %130 = vector.broadcast %cst_67 : f32 to vector<2x1xf32>
    %131 = arith.addf %127, %130 : vector<2x1xf32>
    %132 = math.rsqrt %131 : vector<2x1xf32>
    %133 = vector.broadcast %132 : vector<2x1xf32> to vector<2x32xf32>
    %134 = arith.mulf %129, %133 : vector<2x32xf32>
    %135 = vector.broadcast %0 : vector<1x32xf32> to vector<2x32xf32>
    %136 = arith.mulf %134, %135 : vector<2x32xf32>
    %137 = vector.broadcast %1 : vector<1x32xf32> to vector<2x32xf32>
    %138 = arith.addf %136, %137 : vector<2x32xf32>
    %c3_68 = arith.constant 3 : index
    %c0_69 = arith.constant 0 : index
    %c0_70 = arith.constant 0 : index
    %139 = vector.load %arg5[%c3_68, %c0_69, %c0_70] : memref<4x2x32xf32, #tpu.memory_space<vmem>>, vector<1x2x32xf32>
    %140 = vector.shape_cast %139 : vector<1x2x32xf32> to vector<2x32xf32>
    %141 = vector.shape_cast %138 : vector<2x32xf32> to vector<1x2x32xf32>
    tpu.vector_store %arg5[%c3_68, %c0_69, %c0_70], %141 {strides = array<i32>} : memref<4x2x32xf32, #tpu.memory_space<vmem>>, vector<1x2x32xf32>,
    return
  }
}

module attributes {stable_mosaic.version = 11 : i64} {
  func.func @kernel(%arg0: memref<16x32xf32, #tpu.memory_space<vmem>>, %arg1: memref<1x32xf32, #tpu.memory_space<vmem>>, %arg2: memref<1x32xf32, #tpu.memory_space<vmem>>, %arg3: memref<32x128xbf16, #tpu.memory_space<vmem>>, %arg4: memref<32x128xbf16, #tpu.memory_space<vmem>>, %arg5: memref<1x128xf32, #tpu.memory_space<vmem>>, %arg6: memref<2x32xf32, #tpu.memory_space<vmem>>, %arg7: memref<2x32xf32, #tpu.memory_space<vmem>>, %arg8: memref<8x2x32xf32, #tpu.memory_space<vmem>>) attributes {dimension_semantics = [], scalar_prefetch = 0 : i64, scratch_operands = 0 : i64, tpu.core_type = #tpu.core_type<tc>} {
    %c0 = arith.constant 0 : index
    %c0_0 = arith.constant 0 : index
    %0 = vector.load %arg0[%c0, %c0_0] : memref<16x32xf32, #tpu.memory_space<vmem>>, vector<16x32xf32>
    %c0_1 = arith.constant 0 : index
    %c0_2 = arith.constant 0 : index
    %1 = vector.load %arg1[%c0_1, %c0_2] : memref<1x32xf32, #tpu.memory_space<vmem>>, vector<1x32xf32>
    %c0_3 = arith.constant 0 : index
    %c0_4 = arith.constant 0 : index
    %2 = vector.load %arg2[%c0_3, %c0_4] : memref<1x32xf32, #tpu.memory_space<vmem>>, vector<1x32xf32>
    %cst = arith.constant dense<0.000000e+00> : vector<16xf32>
    %3 = vector.multi_reduction <add>, %0, %cst [1] : vector<16x32xf32> to vector<16xf32>
    %4 = vector.shape_cast %3 : vector<16xf32> to vector<16x1xf32>
    %cst_5 = arith.constant 3.200000e+01 : f32
    %5 = vector.broadcast %cst_5 : f32 to vector<16x1xf32>
    %6 = arith.divf %4, %5 : vector<16x1xf32>
    %7 = vector.broadcast %6 : vector<16x1xf32> to vector<16x32xf32>
    %8 = arith.subf %0, %7 : vector<16x32xf32>
    %9 = arith.mulf %8, %8 : vector<16x32xf32>
    %cst_6 = arith.constant dense<0.000000e+00> : vector<16xf32>
    %10 = vector.multi_reduction <add>, %9, %cst_6 [1] : vector<16x32xf32> to vector<16xf32>
    %11 = vector.shape_cast %10 : vector<16xf32> to vector<16x1xf32>
    %cst_7 = arith.constant 3.200000e+01 : f32
    %12 = vector.broadcast %cst_7 : f32 to vector<16x1xf32>
    %13 = arith.divf %11, %12 : vector<16x1xf32>
    %14 = vector.broadcast %6 : vector<16x1xf32> to vector<16x32xf32>
    %15 = arith.subf %0, %14 : vector<16x32xf32>
    %cst_8 = arith.constant 9.99999974E-6 : f32
    %16 = vector.broadcast %cst_8 : f32 to vector<16x1xf32>
    %17 = arith.addf %13, %16 : vector<16x1xf32>
    %18 = math.rsqrt %17 : vector<16x1xf32>
    %19 = vector.broadcast %18 : vector<16x1xf32> to vector<16x32xf32>
    %20 = arith.mulf %15, %19 : vector<16x32xf32>
    %21 = vector.broadcast %1 : vector<1x32xf32> to vector<16x32xf32>
    %22 = arith.mulf %20, %21 : vector<16x32xf32>
    %23 = vector.broadcast %2 : vector<1x32xf32> to vector<16x32xf32>
    %24 = arith.addf %22, %23 : vector<16x32xf32>
    %25 = arith.truncf %24 : vector<16x32xf32> to vector<16x32xbf16>
    %c0_9 = arith.constant 0 : index
    %c0_10 = arith.constant 0 : index
    %26 = vector.load %arg3[%c0_9, %c0_10] : memref<32x128xbf16, #tpu.memory_space<vmem>>, vector<32x128xbf16>
    %cst_11 = arith.constant dense<0.000000e+00> : vector<16x128xf32>
    %27 = tpu.matmul %25, %26, %cst_11 {dimension_numbers = #tpu.dot_dimension_numbers<[1], [0], [0], [1], [0, 0, 1, 1], [], []>} : vector<16x32xbf16>, vector<32x128xbf16>, vector<16x128xf32> -> vector<16x128xf32>
    %c0_12 = arith.constant 0 : index
    %c0_13 = arith.constant 0 : index
    %28 = vector.load %arg5[%c0_12, %c0_13] : memref<1x128xf32, #tpu.memory_space<vmem>>, vector<1x128xf32>
    %29 = vector.broadcast %28 : vector<1x128xf32> to vector<16x128xf32>
    %30 = arith.addf %27, %29 : vector<16x128xf32>
    %c0_14 = arith.constant 0 : index
    %c0_15 = arith.constant 0 : index
    %31 = vector.load %arg4[%c0_14, %c0_15] : memref<32x128xbf16, #tpu.memory_space<vmem>>, vector<32x128xbf16>
    %c0_16 = arith.constant 0 : index
    %c0_17 = arith.constant 0 : index
    %32 = vector.load %arg6[%c0_16, %c0_17] : memref<2x32xf32, #tpu.memory_space<vmem>>, vector<2x32xf32>
    %c0_18 = arith.constant 0 : index
    %c0_19 = arith.constant 0 : index
    %33 = vector.load %arg7[%c0_18, %c0_19] : memref<2x32xf32, #tpu.memory_space<vmem>>, vector<2x32xf32>
    %34 = arith.truncf %32 : vector<2x32xf32> to vector<2x32xbf16>
    %cst_20 = arith.constant dense<0.000000e+00> : vector<2x128xf32>
    %35 = tpu.matmul %34, %31, %cst_20 {dimension_numbers = #tpu.dot_dimension_numbers<[1], [0], [0], [1], [0, 0, 1, 1], [], []>} : vector<2x32xbf16>, vector<32x128xbf16>, vector<2x128xf32> -> vector<2x128xf32>
    %36 = vector.extract_strided_slice %30 {offsets = [0, 0], sizes = [2, 128], strides = [1, 1]} : vector<16x128xf32> to vector<2x128xf32>
    %37 = arith.addf %35, %36 : vector<2x128xf32>
    %38 = arith.negf %37 : vector<2x128xf32>
    %39 = math.exp %38 : vector<2x128xf32>
    %cst_21 = arith.constant 1.000000e+00 : f32
    %40 = vector.broadcast %cst_21 : f32 to vector<2x128xf32>
    %41 = arith.addf %40, %39 : vector<2x128xf32>
    %42 = arith.divf %40, %41 : vector<2x128xf32>
    %43 = math.tanh %37 : vector<2x128xf32>
    %44 = vector.extract_strided_slice %42 {offsets = [0, 32], sizes = [2, 32], strides = [1, 1]} : vector<2x128xf32> to vector<2x32xf32>
    %45 = arith.mulf %44, %33 : vector<2x32xf32>
    %46 = vector.extract_strided_slice %42 {offsets = [0, 0], sizes = [2, 32], strides = [1, 1]} : vector<2x128xf32> to vector<2x32xf32>
    %47 = vector.extract_strided_slice %43 {offsets = [0, 64], sizes = [2, 32], strides = [1, 1]} : vector<2x128xf32> to vector<2x32xf32>
    %48 = arith.mulf %46, %47 : vector<2x32xf32>
    %49 = arith.addf %45, %48 : vector<2x32xf32>
    %50 = vector.extract_strided_slice %42 {offsets = [0, 96], sizes = [2, 32], strides = [1, 1]} : vector<2x128xf32> to vector<2x32xf32>
    %51 = math.tanh %49 : vector<2x32xf32>
    %52 = arith.mulf %50, %51 : vector<2x32xf32>
    %53 = arith.truncf %52 : vector<2x32xf32> to vector<2x32xbf16>
    %cst_22 = arith.constant dense<0.000000e+00> : vector<2x128xf32>
    %54 = tpu.matmul %53, %31, %cst_22 {dimension_numbers = #tpu.dot_dimension_numbers<[1], [0], [0], [1], [0, 0, 1, 1], [], []>} : vector<2x32xbf16>, vector<32x128xbf16>, vector<2x128xf32> -> vector<2x128xf32>
    %55 = vector.extract_strided_slice %30 {offsets = [2, 0], sizes = [2, 128], strides = [1, 1]} : vector<16x128xf32> to vector<2x128xf32>
    %56 = arith.addf %54, %55 : vector<2x128xf32>
    %57 = arith.negf %56 : vector<2x128xf32>
    %58 = math.exp %57 : vector<2x128xf32>
    %cst_23 = arith.constant 1.000000e+00 : f32
    %59 = vector.broadcast %cst_23 : f32 to vector<2x128xf32>
    %60 = arith.addf %59, %58 : vector<2x128xf32>
    %61 = arith.divf %59, %60 : vector<2x128xf32>
    %62 = math.tanh %56 : vector<2x128xf32>
    %63 = vector.extract_strided_slice %61 {offsets = [0, 32], sizes = [2, 32], strides = [1, 1]} : vector<2x128xf32> to vector<2x32xf32>
    %64 = arith.mulf %63, %49 : vector<2x32xf32>
    %65 = vector.extract_strided_slice %61 {offsets = [0, 0], sizes = [2, 32], strides = [1, 1]} : vector<2x128xf32> to vector<2x32xf32>
    %66 = vector.extract_strided_slice %62 {offsets = [0, 64], sizes = [2, 32], strides = [1, 1]} : vector<2x128xf32> to vector<2x32xf32>
    %67 = arith.mulf %65, %66 : vector<2x32xf32>
    %68 = arith.addf %64, %67 : vector<2x32xf32>
    %69 = vector.extract_strided_slice %61 {offsets = [0, 96], sizes = [2, 32], strides = [1, 1]} : vector<2x128xf32> to vector<2x32xf32>
    %70 = math.tanh %68 : vector<2x32xf32>
    %71 = arith.mulf %69, %70 : vector<2x32xf32>
    %72 = arith.truncf %71 : vector<2x32xf32> to vector<2x32xbf16>
    %cst_24 = arith.constant dense<0.000000e+00> : vector<2x128xf32>
    %73 = tpu.matmul %72, %31, %cst_24 {dimension_numbers = #tpu.dot_dimension_numbers<[1], [0], [0], [1], [0, 0, 1, 1], [], []>} : vector<2x32xbf16>, vector<32x128xbf16>, vector<2x128xf32> -> vector<2x128xf32>
    %74 = vector.extract_strided_slice %30 {offsets = [4, 0], sizes = [2, 128], strides = [1, 1]} : vector<16x128xf32> to vector<2x128xf32>
    %75 = arith.addf %73, %74 : vector<2x128xf32>
    %76 = arith.negf %75 : vector<2x128xf32>
    %77 = math.exp %76 : vector<2x128xf32>
    %cst_25 = arith.constant 1.000000e+00 : f32
    %78 = vector.broadcast %cst_25 : f32 to vector<2x128xf32>
    %79 = arith.addf %78, %77 : vector<2x128xf32>
    %80 = arith.divf %78, %79 : vector<2x128xf32>
    %81 = math.tanh %75 : vector<2x128xf32>
    %82 = vector.extract_strided_slice %80 {offsets = [0, 32], sizes = [2, 32], strides = [1, 1]} : vector<2x128xf32> to vector<2x32xf32>
    %83 = arith.mulf %82, %68 : vector<2x32xf32>
    %84 = vector.extract_strided_slice %80 {offsets = [0, 0], sizes = [2, 32], strides = [1, 1]} : vector<2x128xf32> to vector<2x32xf32>
    %85 = vector.extract_strided_slice %81 {offsets = [0, 64], sizes = [2, 32], strides = [1, 1]} : vector<2x128xf32> to vector<2x32xf32>
    %86 = arith.mulf %84, %85 : vector<2x32xf32>
    %87 = arith.addf %83, %86 : vector<2x32xf32>
    %88 = vector.extract_strided_slice %80 {offsets = [0, 96], sizes = [2, 32], strides = [1, 1]} : vector<2x128xf32> to vector<2x32xf32>
    %89 = math.tanh %87 : vector<2x32xf32>
    %90 = arith.mulf %88, %89 : vector<2x32xf32>
    %91 = arith.truncf %90 : vector<2x32xf32> to vector<2x32xbf16>
    %cst_26 = arith.constant dense<0.000000e+00> : vector<2x128xf32>
    %92 = tpu.matmul %91, %31, %cst_26 {dimension_numbers = #tpu.dot_dimension_numbers<[1], [0], [0], [1], [0, 0, 1, 1], [], []>} : vector<2x32xbf16>, vector<32x128xbf16>, vector<2x128xf32> -> vector<2x128xf32>
    %93 = vector.extract_strided_slice %30 {offsets = [6, 0], sizes = [2, 128], strides = [1, 1]} : vector<16x128xf32> to vector<2x128xf32>
    %94 = arith.addf %92, %93 : vector<2x128xf32>
    %95 = arith.negf %94 : vector<2x128xf32>
    %96 = math.exp %95 : vector<2x128xf32>
    %cst_27 = arith.constant 1.000000e+00 : f32
    %97 = vector.broadcast %cst_27 : f32 to vector<2x128xf32>
    %98 = arith.addf %97, %96 : vector<2x128xf32>
    %99 = arith.divf %97, %98 : vector<2x128xf32>
    %100 = math.tanh %94 : vector<2x128xf32>
    %101 = vector.extract_strided_slice %99 {offsets = [0, 32], sizes = [2, 32], strides = [1, 1]} : vector<2x128xf32> to vector<2x32xf32>
    %102 = arith.mulf %101, %87 : vector<2x32xf32>
    %103 = vector.extract_strided_slice %99 {offsets = [0, 0], sizes = [2, 32], strides = [1, 1]} : vector<2x128xf32> to vector<2x32xf32>
    %104 = vector.extract_strided_slice %100 {offsets = [0, 64], sizes = [2, 32], strides = [1, 1]} : vector<2x128xf32> to vector<2x32xf32>
    %105 = arith.mulf %103, %104 : vector<2x32xf32>
    %106 = arith.addf %102, %105 : vector<2x32xf32>
    %107 = vector.extract_strided_slice %99 {offsets = [0, 96], sizes = [2, 32], strides = [1, 1]} : vector<2x128xf32> to vector<2x32xf32>
    %108 = math.tanh %106 : vector<2x32xf32>
    %109 = arith.mulf %107, %108 : vector<2x32xf32>
    %110 = arith.truncf %109 : vector<2x32xf32> to vector<2x32xbf16>
    %cst_28 = arith.constant dense<0.000000e+00> : vector<2x128xf32>
    %111 = tpu.matmul %110, %31, %cst_28 {dimension_numbers = #tpu.dot_dimension_numbers<[1], [0], [0], [1], [0, 0, 1, 1], [], []>} : vector<2x32xbf16>, vector<32x128xbf16>, vector<2x128xf32> -> vector<2x128xf32>
    %112 = vector.extract_strided_slice %30 {offsets = [8, 0], sizes = [2, 128], strides = [1, 1]} : vector<16x128xf32> to vector<2x128xf32>
    %113 = arith.addf %111, %112 : vector<2x128xf32>
    %114 = arith.negf %113 : vector<2x128xf32>
    %115 = math.exp %114 : vector<2x128xf32>
    %cst_29 = arith.constant 1.000000e+00 : f32
    %116 = vector.broadcast %cst_29 : f32 to vector<2x128xf32>
    %117 = arith.addf %116, %115 : vector<2x128xf32>
    %118 = arith.divf %116, %117 : vector<2x128xf32>
    %119 = math.tanh %113 : vector<2x128xf32>
    %120 = vector.extract_strided_slice %118 {offsets = [0, 32], sizes = [2, 32], strides = [1, 1]} : vector<2x128xf32> to vector<2x32xf32>
    %121 = arith.mulf %120, %106 : vector<2x32xf32>
    %122 = vector.extract_strided_slice %118 {offsets = [0, 0], sizes = [2, 32], strides = [1, 1]} : vector<2x128xf32> to vector<2x32xf32>
    %123 = vector.extract_strided_slice %119 {offsets = [0, 64], sizes = [2, 32], strides = [1, 1]} : vector<2x128xf32> to vector<2x32xf32>
    %124 = arith.mulf %122, %123 : vector<2x32xf32>
    %125 = arith.addf %121, %124 : vector<2x32xf32>
    %126 = vector.extract_strided_slice %118 {offsets = [0, 96], sizes = [2, 32], strides = [1, 1]} : vector<2x128xf32> to vector<2x32xf32>
    %127 = math.tanh %125 : vector<2x32xf32>
    %128 = arith.mulf %126, %127 : vector<2x32xf32>
    %129 = arith.truncf %128 : vector<2x32xf32> to vector<2x32xbf16>
    %cst_30 = arith.constant dense<0.000000e+00> : vector<2x128xf32>
    %130 = tpu.matmul %129, %31, %cst_30 {dimension_numbers = #tpu.dot_dimension_numbers<[1], [0], [0], [1], [0, 0, 1, 1], [], []>} : vector<2x32xbf16>, vector<32x128xbf16>, vector<2x128xf32> -> vector<2x128xf32>
    %131 = vector.extract_strided_slice %30 {offsets = [10, 0], sizes = [2, 128], strides = [1, 1]} : vector<16x128xf32> to vector<2x128xf32>
    %132 = arith.addf %130, %131 : vector<2x128xf32>
    %133 = arith.negf %132 : vector<2x128xf32>
    %134 = math.exp %133 : vector<2x128xf32>
    %cst_31 = arith.constant 1.000000e+00 : f32
    %135 = vector.broadcast %cst_31 : f32 to vector<2x128xf32>
    %136 = arith.addf %135, %134 : vector<2x128xf32>
    %137 = arith.divf %135, %136 : vector<2x128xf32>
    %138 = math.tanh %132 : vector<2x128xf32>
    %139 = vector.extract_strided_slice %137 {offsets = [0, 32], sizes = [2, 32], strides = [1, 1]} : vector<2x128xf32> to vector<2x32xf32>
    %140 = arith.mulf %139, %125 : vector<2x32xf32>
    %141 = vector.extract_strided_slice %137 {offsets = [0, 0], sizes = [2, 32], strides = [1, 1]} : vector<2x128xf32> to vector<2x32xf32>
    %142 = vector.extract_strided_slice %138 {offsets = [0, 64], sizes = [2, 32], strides = [1, 1]} : vector<2x128xf32> to vector<2x32xf32>
    %143 = arith.mulf %141, %142 : vector<2x32xf32>
    %144 = arith.addf %140, %143 : vector<2x32xf32>
    %145 = vector.extract_strided_slice %137 {offsets = [0, 96], sizes = [2, 32], strides = [1, 1]} : vector<2x128xf32> to vector<2x32xf32>
    %146 = math.tanh %144 : vector<2x32xf32>
    %147 = arith.mulf %145, %146 : vector<2x32xf32>
    %148 = arith.truncf %147 : vector<2x32xf32> to vector<2x32xbf16>
    %cst_32 = arith.constant dense<0.000000e+00> : vector<2x128xf32>
    %149 = tpu.matmul %148, %31, %cst_32 {dimension_numbers = #tpu.dot_dimension_numbers<[1], [0], [0], [1], [0, 0, 1, 1], [], []>} : vector<2x32xbf16>, vector<32x128xbf16>, vector<2x128xf32> -> vector<2x128xf32>
    %150 = vector.extract_strided_slice %30 {offsets = [12, 0], sizes = [2, 128], strides = [1, 1]} : vector<16x128xf32> to vector<2x128xf32>
    %151 = arith.addf %149, %150 : vector<2x128xf32>
    %152 = arith.negf %151 : vector<2x128xf32>
    %153 = math.exp %152 : vector<2x128xf32>
    %cst_33 = arith.constant 1.000000e+00 : f32
    %154 = vector.broadcast %cst_33 : f32 to vector<2x128xf32>
    %155 = arith.addf %154, %153 : vector<2x128xf32>
    %156 = arith.divf %154, %155 : vector<2x128xf32>
    %157 = math.tanh %151 : vector<2x128xf32>
    %158 = vector.extract_strided_slice %156 {offsets = [0, 32], sizes = [2, 32], strides = [1, 1]} : vector<2x128xf32> to vector<2x32xf32>
    %159 = arith.mulf %158, %144 : vector<2x32xf32>
    %160 = vector.extract_strided_slice %156 {offsets = [0, 0], sizes = [2, 32], strides = [1, 1]} : vector<2x128xf32> to vector<2x32xf32>
    %161 = vector.extract_strided_slice %157 {offsets = [0, 64], sizes = [2, 32], strides = [1, 1]} : vector<2x128xf32> to vector<2x32xf32>
    %162 = arith.mulf %160, %161 : vector<2x32xf32>
    %163 = arith.addf %159, %162 : vector<2x32xf32>
    %164 = vector.extract_strided_slice %156 {offsets = [0, 96], sizes = [2, 32], strides = [1, 1]} : vector<2x128xf32> to vector<2x32xf32>
    %165 = math.tanh %163 : vector<2x32xf32>
    %166 = arith.mulf %164, %165 : vector<2x32xf32>
    %167 = arith.truncf %166 : vector<2x32xf32> to vector<2x32xbf16>
    %cst_34 = arith.constant dense<0.000000e+00> : vector<2x128xf32>
    %168 = tpu.matmul %167, %31, %cst_34 {dimension_numbers = #tpu.dot_dimension_numbers<[1], [0], [0], [1], [0, 0, 1, 1], [], []>} : vector<2x32xbf16>, vector<32x128xbf16>, vector<2x128xf32> -> vector<2x128xf32>
    %169 = vector.extract_strided_slice %30 {offsets = [14, 0], sizes = [2, 128], strides = [1, 1]} : vector<16x128xf32> to vector<2x128xf32>
    %170 = arith.addf %168, %169 : vector<2x128xf32>
    %171 = arith.negf %170 : vector<2x128xf32>
    %172 = math.exp %171 : vector<2x128xf32>
    %cst_35 = arith.constant 1.000000e+00 : f32
    %173 = vector.broadcast %cst_35 : f32 to vector<2x128xf32>
    %174 = arith.addf %173, %172 : vector<2x128xf32>
    %175 = arith.divf %173, %174 : vector<2x128xf32>
    %176 = math.tanh %170 : vector<2x128xf32>
    %177 = vector.extract_strided_slice %175 {offsets = [0, 32], sizes = [2, 32], strides = [1, 1]} : vector<2x128xf32> to vector<2x32xf32>
    %178 = arith.mulf %177, %163 : vector<2x32xf32>
    %179 = vector.extract_strided_slice %175 {offsets = [0, 0], sizes = [2, 32], strides = [1, 1]} : vector<2x128xf32> to vector<2x32xf32>
    %180 = vector.extract_strided_slice %176 {offsets = [0, 64], sizes = [2, 32], strides = [1, 1]} : vector<2x128xf32> to vector<2x32xf32>
    %181 = arith.mulf %179, %180 : vector<2x32xf32>
    %182 = arith.addf %178, %181 : vector<2x32xf32>
    %183 = vector.extract_strided_slice %175 {offsets = [0, 96], sizes = [2, 32], strides = [1, 1]} : vector<2x128xf32> to vector<2x32xf32>
    %184 = math.tanh %182 : vector<2x32xf32>
    %185 = arith.mulf %183, %184 : vector<2x32xf32>
    %186 = vector.shape_cast %52 : vector<2x32xf32> to vector<1x2x32xf32>
    %187 = vector.shape_cast %71 : vector<2x32xf32> to vector<1x2x32xf32>
    %188 = vector.shape_cast %90 : vector<2x32xf32> to vector<1x2x32xf32>
    %189 = vector.shape_cast %109 : vector<2x32xf32> to vector<1x2x32xf32>
    %190 = vector.shape_cast %128 : vector<2x32xf32> to vector<1x2x32xf32>
    %191 = vector.shape_cast %147 : vector<2x32xf32> to vector<1x2x32xf32>
    %192 = vector.shape_cast %166 : vector<2x32xf32> to vector<1x2x32xf32>
    %193 = vector.shape_cast %185 : vector<2x32xf32> to vector<1x2x32xf32>
    %194 = tpu.concatenate %186, %187, %188, %189, %190, %191, %192, %193 in 0 : vector<1x2x32xf32>, vector<1x2x32xf32>, vector<1x2x32xf32>, vector<1x2x32xf32>, vector<1x2x32xf32>, vector<1x2x32xf32>, vector<1x2x32xf32>, vector<1x2x32xf32> -> vector<8x2x32xf32>
    %c0_36 = arith.constant 0 : index
    %c0_37 = arith.constant 0 : index
    %c0_38 = arith.constant 0 : index
    %195 = vector.load %arg8[%c0_36, %c0_37, %c0_38] : memref<8x2x32xf32, #tpu.memory_space<vmem>>, vector<8x2x32xf32>
    tpu.vector_store %arg8[%c0_36, %c0_37, %c0_38], %194 {strides = array<i32>} : memref<8x2x32xf32, #tpu.memory_space<vmem>>, vector<8x2x32xf32>,
    return
  }
}

module attributes {stable_mosaic.version = 11 : i64} {
  func.func @kernel(%arg0: memref<16x32xf32, #tpu.memory_space<vmem>>, %arg1: memref<32x128xbf16, #tpu.memory_space<vmem>>, %arg2: memref<32x128xbf16, #tpu.memory_space<vmem>>, %arg3: memref<1x128xf32, #tpu.memory_space<vmem>>, %arg4: memref<2x32xf32, #tpu.memory_space<vmem>>, %arg5: memref<2x32xf32, #tpu.memory_space<vmem>>, %arg6: memref<2x8x32xf32, #tpu.memory_space<vmem>>) attributes {dimension_semantics = [], scalar_prefetch = 0 : i64, scratch_operands = 0 : i64, tpu.core_type = #tpu.core_type<tc>} {
    %c0 = arith.constant 0 : index
    %c0_0 = arith.constant 0 : index
    %0 = vector.load %arg0[%c0, %c0_0] : memref<16x32xf32, #tpu.memory_space<vmem>>, vector<16x32xf32>
    %1 = arith.truncf %0 : vector<16x32xf32> to vector<16x32xbf16>
    %c0_1 = arith.constant 0 : index
    %c0_2 = arith.constant 0 : index
    %2 = vector.load %arg1[%c0_1, %c0_2] : memref<32x128xbf16, #tpu.memory_space<vmem>>, vector<32x128xbf16>
    %cst = arith.constant dense<0.000000e+00> : vector<16x128xf32>
    %3 = tpu.matmul %1, %2, %cst {dimension_numbers = #tpu.dot_dimension_numbers<[1], [0], [0], [1], [0, 0, 1, 1], [], []>} : vector<16x32xbf16>, vector<32x128xbf16>, vector<16x128xf32> -> vector<16x128xf32>
    %c0_3 = arith.constant 0 : index
    %c0_4 = arith.constant 0 : index
    %4 = vector.load %arg3[%c0_3, %c0_4] : memref<1x128xf32, #tpu.memory_space<vmem>>, vector<1x128xf32>
    %5 = vector.broadcast %4 : vector<1x128xf32> to vector<16x128xf32>
    %6 = arith.addf %3, %5 : vector<16x128xf32>
    %c0_5 = arith.constant 0 : index
    %c0_6 = arith.constant 0 : index
    %7 = vector.load %arg2[%c0_5, %c0_6] : memref<32x128xbf16, #tpu.memory_space<vmem>>, vector<32x128xbf16>
    %c0_7 = arith.constant 0 : index
    %c0_8 = arith.constant 0 : index
    %8 = vector.load %arg4[%c0_7, %c0_8] : memref<2x32xf32, #tpu.memory_space<vmem>>, vector<2x32xf32>
    %c0_9 = arith.constant 0 : index
    %c0_10 = arith.constant 0 : index
    %9 = vector.load %arg5[%c0_9, %c0_10] : memref<2x32xf32, #tpu.memory_space<vmem>>, vector<2x32xf32>
    %10 = arith.truncf %8 : vector<2x32xf32> to vector<2x32xbf16>
    %cst_11 = arith.constant dense<0.000000e+00> : vector<2x128xf32>
    %11 = tpu.matmul %10, %7, %cst_11 {dimension_numbers = #tpu.dot_dimension_numbers<[1], [0], [0], [1], [0, 0, 1, 1], [], []>} : vector<2x32xbf16>, vector<32x128xbf16>, vector<2x128xf32> -> vector<2x128xf32>
    %12 = vector.extract_strided_slice %6 {offsets = [0, 0], sizes = [2, 128], strides = [1, 1]} : vector<16x128xf32> to vector<2x128xf32>
    %13 = arith.addf %11, %12 : vector<2x128xf32>
    %14 = arith.negf %13 : vector<2x128xf32>
    %15 = math.exp %14 : vector<2x128xf32>
    %cst_12 = arith.constant 1.000000e+00 : f32
    %16 = vector.broadcast %cst_12 : f32 to vector<2x128xf32>
    %17 = arith.addf %16, %15 : vector<2x128xf32>
    %18 = arith.divf %16, %17 : vector<2x128xf32>
    %19 = math.tanh %13 : vector<2x128xf32>
    %20 = vector.extract_strided_slice %18 {offsets = [0, 32], sizes = [2, 32], strides = [1, 1]} : vector<2x128xf32> to vector<2x32xf32>
    %21 = arith.mulf %20, %9 : vector<2x32xf32>
    %22 = vector.extract_strided_slice %18 {offsets = [0, 0], sizes = [2, 32], strides = [1, 1]} : vector<2x128xf32> to vector<2x32xf32>
    %23 = vector.extract_strided_slice %19 {offsets = [0, 64], sizes = [2, 32], strides = [1, 1]} : vector<2x128xf32> to vector<2x32xf32>
    %24 = arith.mulf %22, %23 : vector<2x32xf32>
    %25 = arith.addf %21, %24 : vector<2x32xf32>
    %26 = vector.extract_strided_slice %18 {offsets = [0, 96], sizes = [2, 32], strides = [1, 1]} : vector<2x128xf32> to vector<2x32xf32>
    %27 = math.tanh %25 : vector<2x32xf32>
    %28 = arith.mulf %26, %27 : vector<2x32xf32>
    %29 = arith.truncf %28 : vector<2x32xf32> to vector<2x32xbf16>
    %cst_13 = arith.constant dense<0.000000e+00> : vector<2x128xf32>
    %30 = tpu.matmul %29, %7, %cst_13 {dimension_numbers = #tpu.dot_dimension_numbers<[1], [0], [0], [1], [0, 0, 1, 1], [], []>} : vector<2x32xbf16>, vector<32x128xbf16>, vector<2x128xf32> -> vector<2x128xf32>
    %31 = vector.extract_strided_slice %6 {offsets = [2, 0], sizes = [2, 128], strides = [1, 1]} : vector<16x128xf32> to vector<2x128xf32>
    %32 = arith.addf %30, %31 : vector<2x128xf32>
    %33 = arith.negf %32 : vector<2x128xf32>
    %34 = math.exp %33 : vector<2x128xf32>
    %cst_14 = arith.constant 1.000000e+00 : f32
    %35 = vector.broadcast %cst_14 : f32 to vector<2x128xf32>
    %36 = arith.addf %35, %34 : vector<2x128xf32>
    %37 = arith.divf %35, %36 : vector<2x128xf32>
    %38 = math.tanh %32 : vector<2x128xf32>
    %39 = vector.extract_strided_slice %37 {offsets = [0, 32], sizes = [2, 32], strides = [1, 1]} : vector<2x128xf32> to vector<2x32xf32>
    %40 = arith.mulf %39, %25 : vector<2x32xf32>
    %41 = vector.extract_strided_slice %37 {offsets = [0, 0], sizes = [2, 32], strides = [1, 1]} : vector<2x128xf32> to vector<2x32xf32>
    %42 = vector.extract_strided_slice %38 {offsets = [0, 64], sizes = [2, 32], strides = [1, 1]} : vector<2x128xf32> to vector<2x32xf32>
    %43 = arith.mulf %41, %42 : vector<2x32xf32>
    %44 = arith.addf %40, %43 : vector<2x32xf32>
    %45 = vector.extract_strided_slice %37 {offsets = [0, 96], sizes = [2, 32], strides = [1, 1]} : vector<2x128xf32> to vector<2x32xf32>
    %46 = math.tanh %44 : vector<2x32xf32>
    %47 = arith.mulf %45, %46 : vector<2x32xf32>
    %48 = arith.truncf %47 : vector<2x32xf32> to vector<2x32xbf16>
    %cst_15 = arith.constant dense<0.000000e+00> : vector<2x128xf32>
    %49 = tpu.matmul %48, %7, %cst_15 {dimension_numbers = #tpu.dot_dimension_numbers<[1], [0], [0], [1], [0, 0, 1, 1], [], []>} : vector<2x32xbf16>, vector<32x128xbf16>, vector<2x128xf32> -> vector<2x128xf32>
    %50 = vector.extract_strided_slice %6 {offsets = [4, 0], sizes = [2, 128], strides = [1, 1]} : vector<16x128xf32> to vector<2x128xf32>
    %51 = arith.addf %49, %50 : vector<2x128xf32>
    %52 = arith.negf %51 : vector<2x128xf32>
    %53 = math.exp %52 : vector<2x128xf32>
    %cst_16 = arith.constant 1.000000e+00 : f32
    %54 = vector.broadcast %cst_16 : f32 to vector<2x128xf32>
    %55 = arith.addf %54, %53 : vector<2x128xf32>
    %56 = arith.divf %54, %55 : vector<2x128xf32>
    %57 = math.tanh %51 : vector<2x128xf32>
    %58 = vector.extract_strided_slice %56 {offsets = [0, 32], sizes = [2, 32], strides = [1, 1]} : vector<2x128xf32> to vector<2x32xf32>
    %59 = arith.mulf %58, %44 : vector<2x32xf32>
    %60 = vector.extract_strided_slice %56 {offsets = [0, 0], sizes = [2, 32], strides = [1, 1]} : vector<2x128xf32> to vector<2x32xf32>
    %61 = vector.extract_strided_slice %57 {offsets = [0, 64], sizes = [2, 32], strides = [1, 1]} : vector<2x128xf32> to vector<2x32xf32>
    %62 = arith.mulf %60, %61 : vector<2x32xf32>
    %63 = arith.addf %59, %62 : vector<2x32xf32>
    %64 = vector.extract_strided_slice %56 {offsets = [0, 96], sizes = [2, 32], strides = [1, 1]} : vector<2x128xf32> to vector<2x32xf32>
    %65 = math.tanh %63 : vector<2x32xf32>
    %66 = arith.mulf %64, %65 : vector<2x32xf32>
    %67 = arith.truncf %66 : vector<2x32xf32> to vector<2x32xbf16>
    %cst_17 = arith.constant dense<0.000000e+00> : vector<2x128xf32>
    %68 = tpu.matmul %67, %7, %cst_17 {dimension_numbers = #tpu.dot_dimension_numbers<[1], [0], [0], [1], [0, 0, 1, 1], [], []>} : vector<2x32xbf16>, vector<32x128xbf16>, vector<2x128xf32> -> vector<2x128xf32>
    %69 = vector.extract_strided_slice %6 {offsets = [6, 0], sizes = [2, 128], strides = [1, 1]} : vector<16x128xf32> to vector<2x128xf32>
    %70 = arith.addf %68, %69 : vector<2x128xf32>
    %71 = arith.negf %70 : vector<2x128xf32>
    %72 = math.exp %71 : vector<2x128xf32>
    %cst_18 = arith.constant 1.000000e+00 : f32
    %73 = vector.broadcast %cst_18 : f32 to vector<2x128xf32>
    %74 = arith.addf %73, %72 : vector<2x128xf32>
    %75 = arith.divf %73, %74 : vector<2x128xf32>
    %76 = math.tanh %70 : vector<2x128xf32>
    %77 = vector.extract_strided_slice %75 {offsets = [0, 32], sizes = [2, 32], strides = [1, 1]} : vector<2x128xf32> to vector<2x32xf32>
    %78 = arith.mulf %77, %63 : vector<2x32xf32>
    %79 = vector.extract_strided_slice %75 {offsets = [0, 0], sizes = [2, 32], strides = [1, 1]} : vector<2x128xf32> to vector<2x32xf32>
    %80 = vector.extract_strided_slice %76 {offsets = [0, 64], sizes = [2, 32], strides = [1, 1]} : vector<2x128xf32> to vector<2x32xf32>
    %81 = arith.mulf %79, %80 : vector<2x32xf32>
    %82 = arith.addf %78, %81 : vector<2x32xf32>
    %83 = vector.extract_strided_slice %75 {offsets = [0, 96], sizes = [2, 32], strides = [1, 1]} : vector<2x128xf32> to vector<2x32xf32>
    %84 = math.tanh %82 : vector<2x32xf32>
    %85 = arith.mulf %83, %84 : vector<2x32xf32>
    %86 = arith.truncf %85 : vector<2x32xf32> to vector<2x32xbf16>
    %cst_19 = arith.constant dense<0.000000e+00> : vector<2x128xf32>
    %87 = tpu.matmul %86, %7, %cst_19 {dimension_numbers = #tpu.dot_dimension_numbers<[1], [0], [0], [1], [0, 0, 1, 1], [], []>} : vector<2x32xbf16>, vector<32x128xbf16>, vector<2x128xf32> -> vector<2x128xf32>
    %88 = vector.extract_strided_slice %6 {offsets = [8, 0], sizes = [2, 128], strides = [1, 1]} : vector<16x128xf32> to vector<2x128xf32>
    %89 = arith.addf %87, %88 : vector<2x128xf32>
    %90 = arith.negf %89 : vector<2x128xf32>
    %91 = math.exp %90 : vector<2x128xf32>
    %cst_20 = arith.constant 1.000000e+00 : f32
    %92 = vector.broadcast %cst_20 : f32 to vector<2x128xf32>
    %93 = arith.addf %92, %91 : vector<2x128xf32>
    %94 = arith.divf %92, %93 : vector<2x128xf32>
    %95 = math.tanh %89 : vector<2x128xf32>
    %96 = vector.extract_strided_slice %94 {offsets = [0, 32], sizes = [2, 32], strides = [1, 1]} : vector<2x128xf32> to vector<2x32xf32>
    %97 = arith.mulf %96, %82 : vector<2x32xf32>
    %98 = vector.extract_strided_slice %94 {offsets = [0, 0], sizes = [2, 32], strides = [1, 1]} : vector<2x128xf32> to vector<2x32xf32>
    %99 = vector.extract_strided_slice %95 {offsets = [0, 64], sizes = [2, 32], strides = [1, 1]} : vector<2x128xf32> to vector<2x32xf32>
    %100 = arith.mulf %98, %99 : vector<2x32xf32>
    %101 = arith.addf %97, %100 : vector<2x32xf32>
    %102 = vector.extract_strided_slice %94 {offsets = [0, 96], sizes = [2, 32], strides = [1, 1]} : vector<2x128xf32> to vector<2x32xf32>
    %103 = math.tanh %101 : vector<2x32xf32>
    %104 = arith.mulf %102, %103 : vector<2x32xf32>
    %105 = arith.truncf %104 : vector<2x32xf32> to vector<2x32xbf16>
    %cst_21 = arith.constant dense<0.000000e+00> : vector<2x128xf32>
    %106 = tpu.matmul %105, %7, %cst_21 {dimension_numbers = #tpu.dot_dimension_numbers<[1], [0], [0], [1], [0, 0, 1, 1], [], []>} : vector<2x32xbf16>, vector<32x128xbf16>, vector<2x128xf32> -> vector<2x128xf32>
    %107 = vector.extract_strided_slice %6 {offsets = [10, 0], sizes = [2, 128], strides = [1, 1]} : vector<16x128xf32> to vector<2x128xf32>
    %108 = arith.addf %106, %107 : vector<2x128xf32>
    %109 = arith.negf %108 : vector<2x128xf32>
    %110 = math.exp %109 : vector<2x128xf32>
    %cst_22 = arith.constant 1.000000e+00 : f32
    %111 = vector.broadcast %cst_22 : f32 to vector<2x128xf32>
    %112 = arith.addf %111, %110 : vector<2x128xf32>
    %113 = arith.divf %111, %112 : vector<2x128xf32>
    %114 = math.tanh %108 : vector<2x128xf32>
    %115 = vector.extract_strided_slice %113 {offsets = [0, 32], sizes = [2, 32], strides = [1, 1]} : vector<2x128xf32> to vector<2x32xf32>
    %116 = arith.mulf %115, %101 : vector<2x32xf32>
    %117 = vector.extract_strided_slice %113 {offsets = [0, 0], sizes = [2, 32], strides = [1, 1]} : vector<2x128xf32> to vector<2x32xf32>
    %118 = vector.extract_strided_slice %114 {offsets = [0, 64], sizes = [2, 32], strides = [1, 1]} : vector<2x128xf32> to vector<2x32xf32>
    %119 = arith.mulf %117, %118 : vector<2x32xf32>
    %120 = arith.addf %116, %119 : vector<2x32xf32>
    %121 = vector.extract_strided_slice %113 {offsets = [0, 96], sizes = [2, 32], strides = [1, 1]} : vector<2x128xf32> to vector<2x32xf32>
    %122 = math.tanh %120 : vector<2x32xf32>
    %123 = arith.mulf %121, %122 : vector<2x32xf32>
    %124 = arith.truncf %123 : vector<2x32xf32> to vector<2x32xbf16>
    %cst_23 = arith.constant dense<0.000000e+00> : vector<2x128xf32>
    %125 = tpu.matmul %124, %7, %cst_23 {dimension_numbers = #tpu.dot_dimension_numbers<[1], [0], [0], [1], [0, 0, 1, 1], [], []>} : vector<2x32xbf16>, vector<32x128xbf16>, vector<2x128xf32> -> vector<2x128xf32>
    %126 = vector.extract_strided_slice %6 {offsets = [12, 0], sizes = [2, 128], strides = [1, 1]} : vector<16x128xf32> to vector<2x128xf32>
    %127 = arith.addf %125, %126 : vector<2x128xf32>
    %128 = arith.negf %127 : vector<2x128xf32>
    %129 = math.exp %128 : vector<2x128xf32>
    %cst_24 = arith.constant 1.000000e+00 : f32
    %130 = vector.broadcast %cst_24 : f32 to vector<2x128xf32>
    %131 = arith.addf %130, %129 : vector<2x128xf32>
    %132 = arith.divf %130, %131 : vector<2x128xf32>
    %133 = math.tanh %127 : vector<2x128xf32>
    %134 = vector.extract_strided_slice %132 {offsets = [0, 32], sizes = [2, 32], strides = [1, 1]} : vector<2x128xf32> to vector<2x32xf32>
    %135 = arith.mulf %134, %120 : vector<2x32xf32>
    %136 = vector.extract_strided_slice %132 {offsets = [0, 0], sizes = [2, 32], strides = [1, 1]} : vector<2x128xf32> to vector<2x32xf32>
    %137 = vector.extract_strided_slice %133 {offsets = [0, 64], sizes = [2, 32], strides = [1, 1]} : vector<2x128xf32> to vector<2x32xf32>
    %138 = arith.mulf %136, %137 : vector<2x32xf32>
    %139 = arith.addf %135, %138 : vector<2x32xf32>
    %140 = vector.extract_strided_slice %132 {offsets = [0, 96], sizes = [2, 32], strides = [1, 1]} : vector<2x128xf32> to vector<2x32xf32>
    %141 = math.tanh %139 : vector<2x32xf32>
    %142 = arith.mulf %140, %141 : vector<2x32xf32>
    %143 = arith.truncf %142 : vector<2x32xf32> to vector<2x32xbf16>
    %cst_25 = arith.constant dense<0.000000e+00> : vector<2x128xf32>
    %144 = tpu.matmul %143, %7, %cst_25 {dimension_numbers = #tpu.dot_dimension_numbers<[1], [0], [0], [1], [0, 0, 1, 1], [], []>} : vector<2x32xbf16>, vector<32x128xbf16>, vector<2x128xf32> -> vector<2x128xf32>
    %145 = vector.extract_strided_slice %6 {offsets = [14, 0], sizes = [2, 128], strides = [1, 1]} : vector<16x128xf32> to vector<2x128xf32>
    %146 = arith.addf %144, %145 : vector<2x128xf32>
    %147 = arith.negf %146 : vector<2x128xf32>
    %148 = math.exp %147 : vector<2x128xf32>
    %cst_26 = arith.constant 1.000000e+00 : f32
    %149 = vector.broadcast %cst_26 : f32 to vector<2x128xf32>
    %150 = arith.addf %149, %148 : vector<2x128xf32>
    %151 = arith.divf %149, %150 : vector<2x128xf32>
    %152 = math.tanh %146 : vector<2x128xf32>
    %153 = vector.extract_strided_slice %151 {offsets = [0, 32], sizes = [2, 32], strides = [1, 1]} : vector<2x128xf32> to vector<2x32xf32>
    %154 = arith.mulf %153, %139 : vector<2x32xf32>
    %155 = vector.extract_strided_slice %151 {offsets = [0, 0], sizes = [2, 32], strides = [1, 1]} : vector<2x128xf32> to vector<2x32xf32>
    %156 = vector.extract_strided_slice %152 {offsets = [0, 64], sizes = [2, 32], strides = [1, 1]} : vector<2x128xf32> to vector<2x32xf32>
    %157 = arith.mulf %155, %156 : vector<2x32xf32>
    %158 = arith.addf %154, %157 : vector<2x32xf32>
    %159 = vector.extract_strided_slice %151 {offsets = [0, 96], sizes = [2, 32], strides = [1, 1]} : vector<2x128xf32> to vector<2x32xf32>
    %160 = math.tanh %158 : vector<2x32xf32>
    %161 = arith.mulf %159, %160 : vector<2x32xf32>
    %162 = vector.shape_cast %28 : vector<2x32xf32> to vector<2x1x32xf32>
    %163 = vector.shape_cast %47 : vector<2x32xf32> to vector<2x1x32xf32>
    %164 = vector.shape_cast %66 : vector<2x32xf32> to vector<2x1x32xf32>
    %165 = vector.shape_cast %85 : vector<2x32xf32> to vector<2x1x32xf32>
    %166 = vector.shape_cast %104 : vector<2x32xf32> to vector<2x1x32xf32>
    %167 = vector.shape_cast %123 : vector<2x32xf32> to vector<2x1x32xf32>
    %168 = vector.shape_cast %142 : vector<2x32xf32> to vector<2x1x32xf32>
    %169 = vector.shape_cast %161 : vector<2x32xf32> to vector<2x1x32xf32>
    %170 = tpu.concatenate %162, %163, %164, %165, %166, %167, %168, %169 in 1 : vector<2x1x32xf32>, vector<2x1x32xf32>, vector<2x1x32xf32>, vector<2x1x32xf32>, vector<2x1x32xf32>, vector<2x1x32xf32>, vector<2x1x32xf32>, vector<2x1x32xf32> -> vector<2x8x32xf32>
    %c0_27 = arith.constant 0 : index
    %c0_28 = arith.constant 0 : index
    %c0_29 = arith.constant 0 : index
    %171 = vector.load %arg6[%c0_27, %c0_28, %c0_29] : memref<2x8x32xf32, #tpu.memory_space<vmem>>, vector<2x8x32xf32>
    tpu.vector_store %arg6[%c0_27, %c0_28, %c0_29], %170 {strides = array<i32>} : memref<2x8x32xf32, #tpu.memory_space<vmem>>, vector<2x8x32xf32>,
    return
  }
}

module attributes {stable_mosaic.version = 11 : i64} {
  func.func @_linear_ln_kernel(%arg0: memref<16x64xf32, #tpu.memory_space<vmem>>, %arg1: memref<64x32xbf16, #tpu.memory_space<vmem>>, %arg2: memref<1x32xf32, #tpu.memory_space<vmem>>, %arg3: memref<1x32xf32, #tpu.memory_space<vmem>>, %arg4: memref<1x32xf32, #tpu.memory_space<vmem>>, %arg5: memref<16x32xf32, #tpu.memory_space<vmem>>) attributes {dimension_semantics = [], scalar_prefetch = 0 : i64, scratch_operands = 0 : i64, tpu.core_type = #tpu.core_type<tc>} {
    %c0 = arith.constant 0 : index
    %c0_0 = arith.constant 0 : index
    %0 = vector.load %arg0[%c0, %c0_0] : memref<16x64xf32, #tpu.memory_space<vmem>>, vector<16x64xf32>
    %1 = arith.truncf %0 : vector<16x64xf32> to vector<16x64xbf16>
    %c0_1 = arith.constant 0 : index
    %c0_2 = arith.constant 0 : index
    %2 = vector.load %arg1[%c0_1, %c0_2] : memref<64x32xbf16, #tpu.memory_space<vmem>>, vector<64x32xbf16>
    %cst = arith.constant dense<0.000000e+00> : vector<16x32xf32>
    %3 = tpu.matmul %1, %2, %cst {dimension_numbers = #tpu.dot_dimension_numbers<[1], [0], [0], [1], [0, 0, 1, 1], [], []>} : vector<16x64xbf16>, vector<64x32xbf16>, vector<16x32xf32> -> vector<16x32xf32>
    %c0_3 = arith.constant 0 : index
    %c0_4 = arith.constant 0 : index
    %4 = vector.load %arg2[%c0_3, %c0_4] : memref<1x32xf32, #tpu.memory_space<vmem>>, vector<1x32xf32>
    %5 = vector.broadcast %4 : vector<1x32xf32> to vector<16x32xf32>
    %6 = arith.addf %3, %5 : vector<16x32xf32>
    %c0_5 = arith.constant 0 : index
    %c0_6 = arith.constant 0 : index
    %7 = vector.load %arg3[%c0_5, %c0_6] : memref<1x32xf32, #tpu.memory_space<vmem>>, vector<1x32xf32>
    %c0_7 = arith.constant 0 : index
    %c0_8 = arith.constant 0 : index
    %8 = vector.load %arg4[%c0_7, %c0_8] : memref<1x32xf32, #tpu.memory_space<vmem>>, vector<1x32xf32>
    %cst_9 = arith.constant dense<0.000000e+00> : vector<16xf32>
    %9 = vector.multi_reduction <add>, %6, %cst_9 [1] : vector<16x32xf32> to vector<16xf32>
    %10 = vector.shape_cast %9 : vector<16xf32> to vector<16x1xf32>
    %cst_10 = arith.constant 3.200000e+01 : f32
    %11 = vector.broadcast %cst_10 : f32 to vector<16x1xf32>
    %12 = arith.divf %10, %11 : vector<16x1xf32>
    %13 = vector.broadcast %12 : vector<16x1xf32> to vector<16x32xf32>
    %14 = arith.subf %6, %13 : vector<16x32xf32>
    %15 = arith.mulf %14, %14 : vector<16x32xf32>
    %cst_11 = arith.constant dense<0.000000e+00> : vector<16xf32>
    %16 = vector.multi_reduction <add>, %15, %cst_11 [1] : vector<16x32xf32> to vector<16xf32>
    %17 = vector.shape_cast %16 : vector<16xf32> to vector<16x1xf32>
    %cst_12 = arith.constant 3.200000e+01 : f32
    %18 = vector.broadcast %cst_12 : f32 to vector<16x1xf32>
    %19 = arith.divf %17, %18 : vector<16x1xf32>
    %20 = vector.broadcast %12 : vector<16x1xf32> to vector<16x32xf32>
    %21 = arith.subf %6, %20 : vector<16x32xf32>
    %cst_13 = arith.constant 9.99999974E-6 : f32
    %22 = vector.broadcast %cst_13 : f32 to vector<16x1xf32>
    %23 = arith.addf %19, %22 : vector<16x1xf32>
    %24 = math.rsqrt %23 : vector<16x1xf32>
    %25 = vector.broadcast %24 : vector<16x1xf32> to vector<16x32xf32>
    %26 = arith.mulf %21, %25 : vector<16x32xf32>
    %27 = vector.broadcast %7 : vector<1x32xf32> to vector<16x32xf32>
    %28 = arith.mulf %26, %27 : vector<16x32xf32>
    %29 = vector.broadcast %8 : vector<1x32xf32> to vector<16x32xf32>
    %30 = arith.addf %28, %29 : vector<16x32xf32>
    %c0_14 = arith.constant 0 : index
    %c0_15 = arith.constant 0 : index
    %31 = vector.load %arg5[%c0_14, %c0_15] : memref<16x32xf32, #tpu.memory_space<vmem>>, vector<16x32xf32>
    tpu.vector_store %arg5[%c0_14, %c0_15], %30 {strides = array<i32>} : memref<16x32xf32, #tpu.memory_space<vmem>>, vector<16x32xf32>,
    return
  }
}

module attributes {stable_mosaic.version = 11 : i64} {
  func.func @kernel(%arg0: memref<2x8x32xf32, #tpu.memory_space<vmem>>, %arg1: memref<2x8x32xf32, #tpu.memory_space<vmem>>, %arg2: memref<2x1x8xf32, #tpu.memory_space<vmem>>, %arg3: memref<1x32xf32, #tpu.memory_space<vmem>>, %arg4: memref<1x32xf32, #tpu.memory_space<vmem>>, %arg5: memref<32x128xbf16, #tpu.memory_space<vmem>>, %arg6: memref<32x128xbf16, #tpu.memory_space<vmem>>, %arg7: memref<1x128xf32, #tpu.memory_space<vmem>>, %arg8: memref<2x8x128xf32, #tpu.memory_space<vmem>>) attributes {dimension_semantics = [], scalar_prefetch = 0 : i64, scratch_operands = 0 : i64, tpu.core_type = #tpu.core_type<tc>} {
    %c0 = arith.constant 0 : index
    %c0_0 = arith.constant 0 : index
    %c0_1 = arith.constant 0 : index
    %0 = vector.load %arg0[%c0, %c0_0, %c0_1] : memref<2x8x32xf32, #tpu.memory_space<vmem>>, vector<2x8x32xf32>
    %c0_2 = arith.constant 0 : index
    %c0_3 = arith.constant 0 : index
    %1 = vector.load %arg3[%c0_2, %c0_3] : memref<1x32xf32, #tpu.memory_space<vmem>>, vector<1x32xf32>
    %c0_4 = arith.constant 0 : index
    %c0_5 = arith.constant 0 : index
    %2 = vector.load %arg4[%c0_4, %c0_5] : memref<1x32xf32, #tpu.memory_space<vmem>>, vector<1x32xf32>
    %cst = arith.constant dense<0.000000e+00> : vector<2x8xf32>
    %3 = vector.multi_reduction <add>, %0, %cst [2] : vector<2x8x32xf32> to vector<2x8xf32>
    %4 = vector.shape_cast %3 : vector<2x8xf32> to vector<2x8x1xf32>
    %cst_6 = arith.constant 3.200000e+01 : f32
    %5 = vector.broadcast %cst_6 : f32 to vector<2x8x1xf32>
    %6 = arith.divf %4, %5 : vector<2x8x1xf32>
    %7 = vector.broadcast %6 : vector<2x8x1xf32> to vector<2x8x32xf32>
    %8 = arith.subf %0, %7 : vector<2x8x32xf32>
    %9 = arith.mulf %8, %8 : vector<2x8x32xf32>
    %cst_7 = arith.constant dense<0.000000e+00> : vector<2x8xf32>
    %10 = vector.multi_reduction <add>, %9, %cst_7 [2] : vector<2x8x32xf32> to vector<2x8xf32>
    %11 = vector.shape_cast %10 : vector<2x8xf32> to vector<2x8x1xf32>
    %cst_8 = arith.constant 3.200000e+01 : f32
    %12 = vector.broadcast %cst_8 : f32 to vector<2x8x1xf32>
    %13 = arith.divf %11, %12 : vector<2x8x1xf32>
    %14 = vector.broadcast %6 : vector<2x8x1xf32> to vector<2x8x32xf32>
    %15 = arith.subf %0, %14 : vector<2x8x32xf32>
    %cst_9 = arith.constant 9.99999974E-6 : f32
    %16 = vector.broadcast %cst_9 : f32 to vector<2x8x1xf32>
    %17 = arith.addf %13, %16 : vector<2x8x1xf32>
    %18 = math.rsqrt %17 : vector<2x8x1xf32>
    %19 = vector.broadcast %18 : vector<2x8x1xf32> to vector<2x8x32xf32>
    %20 = arith.mulf %15, %19 : vector<2x8x32xf32>
    %21 = vector.shape_cast %1 : vector<1x32xf32> to vector<1x1x32xf32>
    %22 = vector.broadcast %21 : vector<1x1x32xf32> to vector<2x8x32xf32>
    %23 = arith.mulf %20, %22 : vector<2x8x32xf32>
    %24 = vector.shape_cast %2 : vector<1x32xf32> to vector<1x1x32xf32>
    %25 = vector.broadcast %24 : vector<1x1x32xf32> to vector<2x8x32xf32>
    %26 = arith.addf %23, %25 : vector<2x8x32xf32>
    %c0_10 = arith.constant 0 : index
    %c0_11 = arith.constant 0 : index
    %c0_12 = arith.constant 0 : index
    %27 = vector.load %arg1[%c0_10, %c0_11, %c0_12] : memref<2x8x32xf32, #tpu.memory_space<vmem>>, vector<2x8x32xf32>
    %c0_13 = arith.constant 0 : index
    %c0_14 = arith.constant 0 : index
    %c0_15 = arith.constant 0 : index
    %28 = vector.load %arg2[%c0_13, %c0_14, %c0_15] : memref<2x1x8xf32, #tpu.memory_space<vmem>>, vector<2x1x8xf32>
    %c0_16 = arith.constant 0 : index
    %c0_17 = arith.constant 0 : index
    %29 = vector.load %arg5[%c0_16, %c0_17] : memref<32x128xbf16, #tpu.memory_space<vmem>>, vector<32x128xbf16>
    %c0_18 = arith.constant 0 : index
    %c0_19 = arith.constant 0 : index
    %30 = vector.load %arg6[%c0_18, %c0_19] : memref<32x128xbf16, #tpu.memory_space<vmem>>, vector<32x128xbf16>
    %c0_20 = arith.constant 0 : index
    %c0_21 = arith.constant 0 : index
    %31 = vector.load %arg7[%c0_20, %c0_21] : memref<1x128xf32, #tpu.memory_space<vmem>>, vector<1x128xf32>
    %32 = vector.extract_strided_slice %26 {offsets = [0, 0, 0], sizes = [1, 8, 32], strides = [1, 1, 1]} : vector<2x8x32xf32> to vector<1x8x32xf32>
    %33 = vector.shape_cast %32 : vector<1x8x32xf32> to vector<8x32xf32>
    %34 = vector.extract_strided_slice %27 {offsets = [0, 0, 0], sizes = [1, 8, 32], strides = [1, 1, 1]} : vector<2x8x32xf32> to vector<1x8x32xf32>
    %35 = vector.shape_cast %34 : vector<1x8x32xf32> to vector<8x32xf32>
    %36 = arith.truncf %35 : vector<8x32xf32> to vector<8x32xbf16>
    %37 = arith.truncf %33 : vector<8x32xf32> to vector<8x32xbf16>
    %cst_22 = arith.constant dense<0.000000e+00> : vector<8x8xf32>
    %38 = tpu.matmul %37, %36, %cst_22 {dimension_numbers = #tpu.dot_dimension_numbers<[1], [1], [0], [0], [0, 0, 1, 0], [], []>} : vector<8x32xbf16>, vector<8x32xbf16>, vector<8x8xf32> -> vector<8x8xf32>
    %39 = vector.extract_strided_slice %28 {offsets = [0, 0, 0], sizes = [1, 1, 8], strides = [1, 1, 1]} : vector<2x1x8xf32> to vector<1x1x8xf32>
    %40 = vector.shape_cast %39 : vector<1x1x8xf32> to vector<1x8xf32>
    %cst_23 = arith.constant 5.000000e-01 : f32
    %41 = vector.broadcast %cst_23 : f32 to vector<1x8xf32>
    %42 = arith.cmpf ogt, %40, %41 : vector<1x8xf32>
    %cst_24 = arith.constant -1.000000e+10 : f32
    %43 = vector.shape_cast %42 : vector<1x8xi1> to vector<1x8xi1>
    %44 = vector.broadcast %43 : vector<1x8xi1> to vector<8x8xi1>
    %45 = vector.broadcast %cst_24 : f32 to vector<8x8xf32>
    %46 = arith.select %44, %38, %45 : vector<8x8xi1>, vector<8x8xf32>
    %cst_25 = arith.constant dense<0xFF800000> : vector<8xf32>
    %47 = vector.multi_reduction <maximumf>, %46, %cst_25 [1] : vector<8x8xf32> to vector<8xf32>
    %48 = vector.shape_cast %47 : vector<8xf32> to vector<8x1xf32>
    %49 = vector.broadcast %48 : vector<8x1xf32> to vector<8x8xf32>
    %50 = arith.subf %46, %49 : vector<8x8xf32>
    %51 = math.exp %50 : vector<8x8xf32>
    %cst_26 = arith.constant dense<0.000000e+00> : vector<8xf32>
    %52 = vector.multi_reduction <add>, %51, %cst_26 [1] : vector<8x8xf32> to vector<8xf32>
    %53 = vector.shape_cast %52 : vector<8xf32> to vector<8x1xf32>
    %54 = vector.broadcast %53 : vector<8x1xf32> to vector<8x8xf32>
    %55 = arith.divf %51, %54 : vector<8x8xf32>
    %56 = arith.truncf %55 : vector<8x8xf32> to vector<8x8xbf16>
    %cst_27 = arith.constant dense<0.000000e+00> : vector<8x32xf32>
    %57 = tpu.matmul %56, %36, %cst_27 {dimension_numbers = #tpu.dot_dimension_numbers<[1], [0], [0], [1], [0, 0, 1, 1], [], []>} : vector<8x8xbf16>, vector<8x32xbf16>, vector<8x32xf32> -> vector<8x32xf32>
    %58 = arith.truncf %33 : vector<8x32xf32> to vector<8x32xbf16>
    %cst_28 = arith.constant dense<0.000000e+00> : vector<8x128xf32>
    %59 = tpu.matmul %58, %29, %cst_28 {dimension_numbers = #tpu.dot_dimension_numbers<[1], [0], [0], [1], [0, 0, 1, 1], [], []>} : vector<8x32xbf16>, vector<32x128xbf16>, vector<8x128xf32> -> vector<8x128xf32>
    %60 = arith.truncf %57 : vector<8x32xf32> to vector<8x32xbf16>
    %cst_29 = arith.constant dense<0.000000e+00> : vector<8x128xf32>
    %61 = tpu.matmul %60, %30, %cst_29 {dimension_numbers = #tpu.dot_dimension_numbers<[1], [0], [0], [1], [0, 0, 1, 1], [], []>} : vector<8x32xbf16>, vector<32x128xbf16>, vector<8x128xf32> -> vector<8x128xf32>
    %62 = arith.addf %59, %61 : vector<8x128xf32>
    %63 = vector.broadcast %31 : vector<1x128xf32> to vector<8x128xf32>
    %64 = arith.addf %62, %63 : vector<8x128xf32>
    %c0_30 = arith.constant 0 : index
    %c0_31 = arith.constant 0 : index
    %c0_32 = arith.constant 0 : index
    %65 = vector.load %arg8[%c0_30, %c0_31, %c0_32] : memref<2x8x128xf32, #tpu.memory_space<vmem>>, vector<1x8x128xf32>
    %66 = vector.shape_cast %65 : vector<1x8x128xf32> to vector<8x128xf32>
    %67 = vector.shape_cast %64 : vector<8x128xf32> to vector<1x8x128xf32>
    tpu.vector_store %arg8[%c0_30, %c0_31, %c0_32], %67 {strides = array<i32>} : memref<2x8x128xf32, #tpu.memory_space<vmem>>, vector<1x8x128xf32>,
    %68 = vector.extract_strided_slice %26 {offsets = [1, 0, 0], sizes = [1, 8, 32], strides = [1, 1, 1]} : vector<2x8x32xf32> to vector<1x8x32xf32>
    %69 = vector.shape_cast %68 : vector<1x8x32xf32> to vector<8x32xf32>
    %70 = vector.extract_strided_slice %27 {offsets = [1, 0, 0], sizes = [1, 8, 32], strides = [1, 1, 1]} : vector<2x8x32xf32> to vector<1x8x32xf32>
    %71 = vector.shape_cast %70 : vector<1x8x32xf32> to vector<8x32xf32>
    %72 = arith.truncf %71 : vector<8x32xf32> to vector<8x32xbf16>
    %73 = arith.truncf %69 : vector<8x32xf32> to vector<8x32xbf16>
    %cst_33 = arith.constant dense<0.000000e+00> : vector<8x8xf32>
    %74 = tpu.matmul %73, %72, %cst_33 {dimension_numbers = #tpu.dot_dimension_numbers<[1], [1], [0], [0], [0, 0, 1, 0], [], []>} : vector<8x32xbf16>, vector<8x32xbf16>, vector<8x8xf32> -> vector<8x8xf32>
    %75 = vector.extract_strided_slice %28 {offsets = [1, 0, 0], sizes = [1, 1, 8], strides = [1, 1, 1]} : vector<2x1x8xf32> to vector<1x1x8xf32>
    %76 = vector.shape_cast %75 : vector<1x1x8xf32> to vector<1x8xf32>
    %cst_34 = arith.constant 5.000000e-01 : f32
    %77 = vector.broadcast %cst_34 : f32 to vector<1x8xf32>
    %78 = arith.cmpf ogt, %76, %77 : vector<1x8xf32>
    %cst_35 = arith.constant -1.000000e+10 : f32
    %79 = vector.shape_cast %78 : vector<1x8xi1> to vector<1x8xi1>
    %80 = vector.broadcast %79 : vector<1x8xi1> to vector<8x8xi1>
    %81 = vector.broadcast %cst_35 : f32 to vector<8x8xf32>
    %82 = arith.select %80, %74, %81 : vector<8x8xi1>, vector<8x8xf32>
    %cst_36 = arith.constant dense<0xFF800000> : vector<8xf32>
    %83 = vector.multi_reduction <maximumf>, %82, %cst_36 [1] : vector<8x8xf32> to vector<8xf32>
    %84 = vector.shape_cast %83 : vector<8xf32> to vector<8x1xf32>
    %85 = vector.broadcast %84 : vector<8x1xf32> to vector<8x8xf32>
    %86 = arith.subf %82, %85 : vector<8x8xf32>
    %87 = math.exp %86 : vector<8x8xf32>
    %cst_37 = arith.constant dense<0.000000e+00> : vector<8xf32>
    %88 = vector.multi_reduction <add>, %87, %cst_37 [1] : vector<8x8xf32> to vector<8xf32>
    %89 = vector.shape_cast %88 : vector<8xf32> to vector<8x1xf32>
    %90 = vector.broadcast %89 : vector<8x1xf32> to vector<8x8xf32>
    %91 = arith.divf %87, %90 : vector<8x8xf32>
    %92 = arith.truncf %91 : vector<8x8xf32> to vector<8x8xbf16>
    %cst_38 = arith.constant dense<0.000000e+00> : vector<8x32xf32>
    %93 = tpu.matmul %92, %72, %cst_38 {dimension_numbers = #tpu.dot_dimension_numbers<[1], [0], [0], [1], [0, 0, 1, 1], [], []>} : vector<8x8xbf16>, vector<8x32xbf16>, vector<8x32xf32> -> vector<8x32xf32>
    %94 = arith.truncf %69 : vector<8x32xf32> to vector<8x32xbf16>
    %cst_39 = arith.constant dense<0.000000e+00> : vector<8x128xf32>
    %95 = tpu.matmul %94, %29, %cst_39 {dimension_numbers = #tpu.dot_dimension_numbers<[1], [0], [0], [1], [0, 0, 1, 1], [], []>} : vector<8x32xbf16>, vector<32x128xbf16>, vector<8x128xf32> -> vector<8x128xf32>
    %96 = arith.truncf %93 : vector<8x32xf32> to vector<8x32xbf16>
    %cst_40 = arith.constant dense<0.000000e+00> : vector<8x128xf32>
    %97 = tpu.matmul %96, %30, %cst_40 {dimension_numbers = #tpu.dot_dimension_numbers<[1], [0], [0], [1], [0, 0, 1, 1], [], []>} : vector<8x32xbf16>, vector<32x128xbf16>, vector<8x128xf32> -> vector<8x128xf32>
    %98 = arith.addf %95, %97 : vector<8x128xf32>
    %99 = vector.broadcast %31 : vector<1x128xf32> to vector<8x128xf32>
    %100 = arith.addf %98, %99 : vector<8x128xf32>
    %c1 = arith.constant 1 : index
    %c0_41 = arith.constant 0 : index
    %c0_42 = arith.constant 0 : index
    %101 = vector.load %arg8[%c1, %c0_41, %c0_42] : memref<2x8x128xf32, #tpu.memory_space<vmem>>, vector<1x8x128xf32>
    %102 = vector.shape_cast %101 : vector<1x8x128xf32> to vector<8x128xf32>
    %103 = vector.shape_cast %100 : vector<8x128xf32> to vector<1x8x128xf32>
    tpu.vector_store %arg8[%c1, %c0_41, %c0_42], %103 {strides = array<i32>} : memref<2x8x128xf32, #tpu.memory_space<vmem>>, vector<1x8x128xf32>,
    return
  }
}

</mosaic_0001>

<llo_original>
// kernel: forward.7
$region0: #{forward.7}
  #allocation0 [shape = 'u32[]', space=smem, size = 0x4, offset = 0x4, fixed_abs, tag = 'smem constant byte address 0x4 - core index']
  #allocation1 [shape = 'u32[144,128]{1,0:T(1,128)}', space=vmem, size = 0x12000, scoped, tag = 'internal scratch']
  %s0 = inlined_call_operand.vmem [shape: f32[16,32], index: 0, kind: input, shape index: {}]
  %s1 = inlined_call_operand.vmem [shape: f32[1,32], index: 1, kind: input, shape index: {}]
  %s2 = inlined_call_operand.vmem [shape: f32[1,32], index: 2, kind: input, shape index: {}]
  %s3 = inlined_call_operand.vmem [shape: bf16[32,256], index: 3, kind: input, shape index: {}]
  %s4 = inlined_call_operand.vmem [shape: bf16[64,128], index: 4, kind: input, shape index: {}]
  %s5 = inlined_call_operand.vmem [shape: f32[1,256], index: 5, kind: input, shape index: {}]
  %s6 = inlined_call_operand.vmem [shape: f32[8,2,64], index: 6, kind: output, shape index: {0}]
  %s7 = inlined_call_operand.vmem [shape: f32[2,64], index: 7, kind: output, shape index: {1}]
  %s8 = inlined_call_operand.vmem [shape: f32[2,64], index: 8, kind: output, shape index: {2}]
  %9 = xla_tuple %s6, %s7, %s8
  %s10 = sld [smem:[#allocation0]]
  $region50: #{forward.7} parent=0
    _
  %s12 = ssub.s32 1, %s10
  %s13 = scalar_select 0, %s12, %s10
  // Predicated region
  $region2: #{forward.7} parent=0 // pred_check
    _
  $region3: #{forward.7} parent=0 // pred_check_branch
    %15 = sbr.rel (0) target = $region5
  $region4: #{forward.7} parent=0 // pred_region
    _
  $region5: #{forward.7} parent=0 // pred_fallthru
    _
  // Predicated region
  $region6: #{forward.7} parent=0 // pred_check
    _
  $region7: #{forward.7} parent=0 // pred_check_branch
    %17 = sbr.rel (0) target = $region9
  $region8: #{forward.7} parent=0 // pred_region
    _
  $region9: #{forward.7} parent=0 // pred_fallthru
    _
  // Predicated region
  $region10: #{forward.7} parent=0 // pred_check
    _
  $region11: #{forward.7} parent=0 // pred_check_branch
    %19 = sbr.rel (0) target = $region13
  $region12: #{forward.7} parent=0 // pred_region
    _
  $region13: #{forward.7} parent=0 // pred_fallthru
    _
  // Predicated region
  $region14: #{forward.7} parent=0 // pred_check
    _
  $region15: #{forward.7} parent=0 // pred_check_branch
    %21 = sbr.rel (0) target = $region17
  $region16: #{forward.7} parent=0 // pred_region
    _
  $region17: #{forward.7} parent=0 // pred_fallthru
    _
  // Predicated region
  $region18: #{forward.7} parent=0 // pred_check
    _
  $region19: #{forward.7} parent=0 // pred_check_branch
    %23 = sbr.rel (0) target = $region21
  $region20: #{forward.7} parent=0 // pred_region
    _
  $region21: #{forward.7} parent=0 // pred_fallthru
    _
  // Predicated region
  $region22: #{forward.7} parent=0 // pred_check
    _
  $region23: #{forward.7} parent=0 // pred_check_branch
    %25 = sbr.rel (0) target = $region25
  $region24: #{forward.7} parent=0 // pred_region
    _
  $region25: #{forward.7} parent=0 // pred_fallthru
    _
  %v28 = vld [vmem:[%s0] sm:$0xff]
  %v29 = vld [vmem:[%s0 + $0x8] sm:$0xff]
  %v30 = vld [vmem:[%s1] sm:$0x1]
  %v31 = vld [vmem:[%s2] sm:$0x1]
  %vm32 = vcmask 261120
  %v33 = vsel %vm32, %v28, 0.0
  %34 = vadd.xlane.f32.xlu0 %v33
  %v35 = vpop.xlane.xlu0 %34
  %v36 = vsel %vm32, %v29, 0.0
  %37 = vadd.xlane.f32.xlu0 %v36
  %v38 = vpop.xlane.xlu0 %37
  %v39 = vrcp.pop 32.0
  %v40 = vmul.f32 %v35, %v39
  %v41 = vmul.f32 %v38, %v39
  %v42 = vsub.f32 %v28, %v40
  %v43 = vsub.f32 %v29, %v41
  %v44 = vmul.f32 %v42, %v42
  %v45 = vmul.f32 %v43, %v43
  %v46 = vsel %vm32, %v44, 0.0
  %47 = vadd.xlane.f32.xlu0 %v46
  %v48 = vpop.xlane.xlu0 %47
  %v49 = vsel %vm32, %v45, 0.0
  %50 = vadd.xlane.f32.xlu0 %v49
  %v51 = vpop.xlane.xlu0 %50
  %v52 = vmul.f32 %v48, %v39
  %v53 = vmul.f32 %v51, %v39
  %v54 = vadd.f32 %v52, 1e-05
  %v55 = vadd.f32 %v53, 1e-05
  %v56 = vrsqrt.pop %v54
  %v57 = vrsqrt.pop %v55
  %v58 = vmul.f32 %v42, %v56
  %v59 = vmul.f32 %v43, %v57
  %v61 = vlaneseq
  %v62 = vshrl.u32 %v61, 7
  %v63 = vsub.s32 0, %v62
  %v64 = vrot.slane %v30, %v63
  %v66 = vmul.f32 %v58, %v64
  %v67 = vmul.f32 %v59, %v64
  %v69 = vlaneseq
  %v70 = vshrl.u32 %v69, 7
  %v71 = vsub.s32 0, %v70
  %v72 = vrot.slane %v31, %v71
  %v74 = vadd.f32 %v66, %v72
  %v75 = vadd.f32 %v67, %v72
  %v76 = vpack.c.bf16 %v75, %v74
  %v77 = vld [vmem:[%s3] sm:$0xff]
  %v78 = vld [vmem:[%s3 + $0x8] sm:$0xff]
  %v79 = vld [vmem:[%s3 + $0x10] sm:$0xff]
  %v80 = vld [vmem:[%s3 + $0x18] sm:$0xff]
  %v81 = vld [vmem:[%s5] sm:$0x3]
  %v83 = vlaneseq
  %v84 = vshrl.u32 %v83, 7
  %v85 = vsub.s32 0, %v84
  %v86 = vrot.slane %v81, %v85
  %v87 = vlaneseq
  %v88 = vshrl.u32 %v87, 7
  %v89 = vsub.s32 1, %v88
  %v90 = vrot.slane %v81, %v89
  %v97 = vunpack.c.l.b16 %v77
  %v98 = vunpack.c.h.b16 %v77
  %v99 = vunpack.c.l.b16 %v78
  %v100 = vunpack.c.h.b16 %v78
  %v101 = vunpack.c.l.b16 %v79
  %v102 = vunpack.c.h.b16 %v79
  %v103 = vunpack.c.l.b16 %v80
  %v104 = vunpack.c.h.b16 %v80
  %v105 = vpack.c.b16 %v99, %v97
  %v106 = vpack.c.b16 %v100, %v98
  %v107 = vpack.c.b16 %v103, %v101
  %v108 = vpack.c.b16 %v104, %v102
  %v114 = vsel %vm32, %v76, 0
  %116 = vmatprep.subr.bf16.mxu0 %v106
  %117 = vmatpush1.bf16.msra.mxu0 %v105
  %118 = vmatprep.subr.bf16.mxu0 %v108
  %119 = vmatpush1.bf16.msra.mxu0 %v107
  %120 = vmatprep.subr.bf16.mxu0 0
  %121 = vmatpush1.bf16.msra.mxu0 0
  %122 = vmatprep.subr.bf16.mxu0 0
  %123 = vmatpush1.bf16.msra.mxu0 0
  %124 = vmatprep.subr.bf16.mxu0 0
  %125 = vmatpush1.bf16.msra.mxu0 0
  %126 = vmatprep.subr.bf16.mxu0 0
  %127 = vmatpush1.bf16.msra.mxu0 0
  %128 = vmatprep.subr.bf16.mxu0 0
  %129 = vmatpush1.bf16.msra.mxu0 0
  %130 = vmatprep.subr.bf16.mxu0 0
  %131 = vmatpush1.bf16.msra.mxu0 0
  %132 = vmatprep.subr.bf16.mxu0 0
  %133 = vmatpush1.bf16.msra.mxu0 0
  %134 = vmatprep.subr.bf16.mxu0 0
  %135 = vmatpush1.bf16.msra.mxu0 0
  %136 = vmatprep.subr.bf16.mxu0 0
  %137 = vmatpush1.bf16.msra.mxu0 0
  %138 = vmatprep.subr.bf16.mxu0 0
  %139 = vmatpush1.bf16.msra.mxu0 0
  %140 = vmatprep.subr.bf16.mxu0 0
  %141 = vmatpush1.bf16.msra.mxu0 0
  %142 = vmatprep.subr.bf16.mxu0 0
  %143 = vmatpush1.bf16.msra.mxu0 0
  %144 = vmatprep.subr.bf16.mxu0 0
  %145 = vmatpush1.bf16.msra.mxu0 0
  %146 = vmatprep.subr.bf16.mxu0 0
  %147 = vmatpush1.bf16.msra.mxu0 0
  %148 = vmatprep.mubr.bf16.mxu0 0
  %149 = vmatmul.mubr.bf16.gmra.mrb[0].mxu0 %v114
  %v150 = vpop.f32.mrb[0].mxu0
  %v151 = vadd.f32 %v86, %v150
  %v152 = vpop.f32.mrb[0].mxu0
  %v153 = vadd.f32 %v90, %v152
  %v154 = vpop.f32.mrb[0].mxu0
  %v155 = vadd.f32 %v86, %v154
  %v156 = vpop.f32.mrb[0].mxu0
  %v157 = vadd.f32 %v90, %v156
  %158 = vdwg.mxu0
  %v159 = vld [vmem:[%s4] sm:$0xf]
  %v160 = vld [vmem:[%s4 + $0x4] sm:$0xf]
  %v161 = vld [vmem:[%s4 + $0x8] sm:$0xf]
  %v162 = vld [vmem:[%s4 + $0xc] sm:$0xf]
  %v163 = vld [vmem:[%s4 + $0x10] sm:$0xf]
  %v164 = vld [vmem:[%s4 + $0x14] sm:$0xf]
  %v165 = vld [vmem:[%s4 + $0x18] sm:$0xf]
  %v166 = vld [vmem:[%s4 + $0x1c] sm:$0xf]
  %v169 = vsel %vm32, 1065369472, 0
  %v170 = vsel %vm32, 0, 1065369472
  %v172 = vrot.slane %v170, 7
  %vm173 = vcmask 1040384
  %v175 = vsel %vm173, %v169, %v172
  %v178 = vrot.slane %v157, 4
  %vm180 = vcmask 1041408
  %v181 = vsel %vm180, %v151, %v178
  %v182 = vpack.c.bf16 0.0, 0.0
  %v183 = vmul.bf16 %v182, %v175
  %v192 = vunpack.c.l.b16 %v159
  %v193 = vunpack.c.l.b16 %v160
  %v194 = vunpack.c.l.b16 %v161
  %v195 = vunpack.c.l.b16 %v162
  %v196 = vunpack.c.l.b16 %v163
  %v197 = vunpack.c.l.b16 %v164
  %v198 = vunpack.c.l.b16 %v165
  %v199 = vunpack.c.l.b16 %v166
  %v200 = vpack.c.b16 %v193, %v192
  %v201 = vpack.c.b16 %v195, %v194
  %v202 = vpack.c.b16 %v197, %v196
  %v203 = vpack.c.b16 %v199, %v198
  %vm208 = vcmask 523264
  %v210 = vsel %vm208, %v183, 0
  %212 = vmatprep.subr.bf16.mxu0 0
  %213 = vmatpush1.bf16.msra.mxu0 %v200
  %214 = vmatprep.subr.bf16.mxu0 0
  %215 = vmatpush1.bf16.msra.mxu0 %v201
  %216 = vmatprep.subr.bf16.mxu0 0
  %217 = vmatpush1.bf16.msra.mxu0 %v202
  %218 = vmatprep.subr.bf16.mxu0 0
  %219 = vmatpush1.bf16.msra.mxu0 %v203
  %220 = vmatprep.subr.bf16.mxu0 0
  %221 = vmatpush1.bf16.msra.mxu0 0
  %222 = vmatprep.subr.bf16.mxu0 0
  %223 = vmatpush1.bf16.msra.mxu0 0
  %224 = vmatprep.subr.bf16.mxu0 0
  %225 = vmatpush1.bf16.msra.mxu0 0
  %226 = vmatprep.subr.bf16.mxu0 0
  %227 = vmatpush1.bf16.msra.mxu0 0
  %228 = vmatprep.subr.bf16.mxu0 0
  %229 = vmatpush1.bf16.msra.mxu0 0
  %230 = vmatprep.subr.bf16.mxu0 0
  %231 = vmatpush1.bf16.msra.mxu0 0
  %232 = vmatprep.subr.bf16.mxu0 0
  %233 = vmatpush1.bf16.msra.mxu0 0
  %234 = vmatprep.subr.bf16.mxu0 0
  %235 = vmatpush1.bf16.msra.mxu0 0
  %236 = vmatprep.subr.bf16.mxu0 0
  %237 = vmatpush1.bf16.msra.mxu0 0
  %238 = vmatprep.subr.bf16.mxu0 0
  %239 = vmatpush1.bf16.msra.mxu0 0
  %240 = vmatprep.subr.bf16.mxu0 0
  %241 = vmatpush1.bf16.msra.mxu0 0
  %242 = vmatprep.subr.bf16.mxu0 0
  %243 = vmatpush1.bf16.msra.mxu0 0
  %244 = vmatprep.mubr.bf16.mxu0 0
  %245 = vmatmul.mubr.bf16.gmra.mrb[0].mxu0 %v210
  %v246 = vpop.f32.mrb[0].mxu0
  %v247 = vadd.f32 %v181, %v246
  %v248 = vpop.f32.mrb[0].mxu0
  %v249 = vpop.f32.mrb[0].mxu0
  %v250 = vpop.f32.mrb[0].mxu0
  %251 = vdwg.mxu0
  %v252 = vxor.u32 %v247, 2147483648
  %v253 = vmul.f32 %v252, 1.442695
  %v254 = vpow.pop %v253
  %v255 = vadd.f32 %v254, 1.0
  %v256 = vrcp.pop %v255
  %v257 = vmul.f32 1.0, %v256
  %v258 = vtanh.pop %v247
  %v259 = vmul.f32 %v257, 0.0
  %261 = vrot.lane.b32.xlu0 %v258, 64
  %v262 = vpop.permute.xlu0 %261
  %v264 = vmul.f32 %v257, %v262
  %266 = vrot.lane.b32.xlu0 %v264, 32
  %v267 = vpop.permute.xlu0 %266
  %v269 = vadd.f32 %v259, %v267
  %v270 = vtanh.pop %v269
  %272 = vrot.lane.b32.xlu0 %v270, 64
  %v273 = vpop.permute.xlu0 %272
  %v275 = vmul.f32 %v257, %v273
  %v277 = vrot.slane %v151, 2
  %v279 = vrot.slane %v157, 2
  %v281 = vsel %vm180, %v277, %v279
  %283 = vrot.lane.b32.xlu0 %v275, 32
  %v284 = vpop.permute.xlu0 %283
  %286 = vrot.lane.b32.xlu0 %v275, 64
  %v287 = vpop.permute.xlu0 %286
  %v289 = vsel %vm32, %v284, %v287
  %v290 = vpack.c.bf16 %v289, %v289
  %v291 = vmul.bf16 %v290, %v175
  %v293 = vsel %vm208, %v291, 0
  %295 = vmatprep.subr.bf16.mxu0 0
  %296 = vmatpush1.bf16.msra.mxu0 %v200
  %297 = vmatprep.subr.bf16.mxu0 0
  %298 = vmatpush1.bf16.msra.mxu0 %v201
  %299 = vmatprep.subr.bf16.mxu0 0
  %300 = vmatpush1.bf16.msra.mxu0 %v202
  %301 = vmatprep.subr.bf16.mxu0 0
  %302 = vmatpush1.bf16.msra.mxu0 %v203
  %303 = vmatprep.subr.bf16.mxu0 0
  %304 = vmatpush1.bf16.msra.mxu0 0
  %305 = vmatprep.subr.bf16.mxu0 0
  %306 = vmatpush1.bf16.msra.mxu0 0
  %307 = vmatprep.subr.bf16.mxu0 0
  %308 = vmatpush1.bf16.msra.mxu0 0
  %309 = vmatprep.subr.bf16.mxu0 0
  %310 = vmatpush1.bf16.msra.mxu0 0
  %311 = vmatprep.subr.bf16.mxu0 0
  %312 = vmatpush1.bf16.msra.mxu0 0
  %313 = vmatprep.subr.bf16.mxu0 0
  %314 = vmatpush1.bf16.msra.mxu0 0
  %315 = vmatprep.subr.bf16.mxu0 0
  %316 = vmatpush1.bf16.msra.mxu0 0
  %317 = vmatprep.subr.bf16.mxu0 0
  %318 = vmatpush1.bf16.msra.mxu0 0
  %319 = vmatprep.subr.bf16.mxu0 0
  %320 = vmatpush1.bf16.msra.mxu0 0
  %321 = vmatprep.subr.bf16.mxu0 0
  %322 = vmatpush1.bf16.msra.mxu0 0
  %323 = vmatprep.subr.bf16.mxu0 0
  %324 = vmatpush1.bf16.msra.mxu0 0
  %325 = vmatprep.subr.bf16.mxu0 0
  %326 = vmatpush1.bf16.msra.mxu0 0
  %327 = vmatprep.mubr.bf16.mxu0 0
  %328 = vmatmul.mubr.bf16.gmra.mrb[0].mxu0 %v293
  %v329 = vpop.f32.mrb[0].mxu0
  %v330 = vadd.f32 %v281, %v329
  %v331 = vpop.f32.mrb[0].mxu0
  %v332 = vpop.f32.mrb[0].mxu0
  %v333 = vpop.f32.mrb[0].mxu0
  %334 = vdwg.mxu0
  %v335 = vxor.u32 %v330, 2147483648
  %v336 = vmul.f32 %v335, 1.442695
  %v337 = vpow.pop %v336
  %v338 = vadd.f32 %v337, 1.0
  %v339 = vrcp.pop %v338
  %v340 = vmul.f32 1.0, %v339
  %v341 = vtanh.pop %v330
  %v342 = vmul.f32 %v340, %v269
  %344 = vrot.lane.b32.xlu0 %v341, 64
  %v345 = vpop.permute.xlu0 %344
  %v347 = vmul.f32 %v340, %v345
  %349 = vrot.lane.b32.xlu0 %v347, 32
  %v350 = vpop.permute.xlu0 %349
  %v352 = vadd.f32 %v342, %v350
  %v353 = vtanh.pop %v352
  %355 = vrot.lane.b32.xlu0 %v353, 64
  %v356 = vpop.permute.xlu0 %355
  %v358 = vmul.f32 %v340, %v356
  %v359 = vrot.slane %v151, 4
  %v361 = vsel %vm180, %v359, %v157
  %363 = vrot.lane.b32.xlu0 %v358, 32
  %v364 = vpop.permute.xlu0 %363
  %366 = vrot.lane.b32.xlu0 %v358, 64
  %v367 = vpop.permute.xlu0 %366
  %v369 = vsel %vm32, %v364, %v367
  %v370 = vpack.c.bf16 %v369, %v369
  %v371 = vmul.bf16 %v370, %v175
  %v373 = vsel %vm208, %v371, 0
  %375 = vmatprep.subr.bf16.mxu0 0
  %376 = vmatpush1.bf16.msra.mxu0 %v200
  %377 = vmatprep.subr.bf16.mxu0 0
  %378 = vmatpush1.bf16.msra.mxu0 %v201
  %379 = vmatprep.subr.bf16.mxu0 0
  %380 = vmatpush1.bf16.msra.mxu0 %v202
  %381 = vmatprep.subr.bf16.mxu0 0
  %382 = vmatpush1.bf16.msra.mxu0 %v203
  %383 = vmatprep.subr.bf16.mxu0 0
  %384 = vmatpush1.bf16.msra.mxu0 0
  %385 = vmatprep.subr.bf16.mxu0 0
  %386 = vmatpush1.bf16.msra.mxu0 0
  %387 = vmatprep.subr.bf16.mxu0 0
  %388 = vmatpush1.bf16.msra.mxu0 0
  %389 = vmatprep.subr.bf16.mxu0 0
  %390 = vmatpush1.bf16.msra.mxu0 0
  %391 = vmatprep.subr.bf16.mxu0 0
  %392 = vmatpush1.bf16.msra.mxu0 0
  %393 = vmatprep.subr.bf16.mxu0 0
  %394 = vmatpush1.bf16.msra.mxu0 0
  %395 = vmatprep.subr.bf16.mxu0 0
  %396 = vmatpush1.bf16.msra.mxu0 0
  %397 = vmatprep.subr.bf16.mxu0 0
  %398 = vmatpush1.bf16.msra.mxu0 0
  %399 = vmatprep.subr.bf16.mxu0 0
  %400 = vmatpush1.bf16.msra.mxu0 0
  %401 = vmatprep.subr.bf16.mxu0 0
  %402 = vmatpush1.bf16.msra.mxu0 0
  %403 = vmatprep.subr.bf16.mxu0 0
  %404 = vmatpush1.bf16.msra.mxu0 0
  %405 = vmatprep.subr.bf16.mxu0 0
  %406 = vmatpush1.bf16.msra.mxu0 0
  %407 = vmatprep.mubr.bf16.mxu0 0
  %408 = vmatmul.mubr.bf16.gmra.mrb[0].mxu0 %v373
  %v409 = vpop.f32.mrb[0].mxu0
  %v410 = vadd.f32 %v361, %v409
  %v411 = vpop.f32.mrb[0].mxu0
  %v412 = vpop.f32.mrb[0].mxu0
  %v413 = vpop.f32.mrb[0].mxu0
  %414 = vdwg.mxu0
  %v415 = vxor.u32 %v410, 2147483648
  %v416 = vmul.f32 %v415, 1.442695
  %v417 = vpow.pop %v416
  %v418 = vadd.f32 %v417, 1.0
  %v419 = vrcp.pop %v418
  %v420 = vmul.f32 1.0, %v419
  %v421 = vtanh.pop %v410
  %v422 = vmul.f32 %v420, %v352
  %424 = vrot.lane.b32.xlu0 %v421, 64
  %v425 = vpop.permute.xlu0 %424
  %v427 = vmul.f32 %v420, %v425
  %429 = vrot.lane.b32.xlu0 %v427, 32
  %v430 = vpop.permute.xlu0 %429
  %v432 = vadd.f32 %v422, %v430
  %v433 = vtanh.pop %v432
  %435 = vrot.lane.b32.xlu0 %v433, 64
  %v436 = vpop.permute.xlu0 %435
  %v438 = vmul.f32 %v420, %v436
  %v439 = vrot.slane %v151, 6
  %v441 = vrot.slane %v157, 6
  %v443 = vsel %vm180, %v439, %v441
  %445 = vrot.lane.b32.xlu0 %v438, 32
  %v446 = vpop.permute.xlu0 %445
  %448 = vrot.lane.b32.xlu0 %v438, 64
  %v449 = vpop.permute.xlu0 %448
  %v451 = vsel %vm32, %v446, %v449
  %v452 = vpack.c.bf16 %v451, %v451
  %v453 = vmul.bf16 %v452, %v175
  %v455 = vsel %vm208, %v453, 0
  %457 = vmatprep.subr.bf16.mxu0 0
  %458 = vmatpush1.bf16.msra.mxu0 %v200
  %459 = vmatprep.subr.bf16.mxu0 0
  %460 = vmatpush1.bf16.msra.mxu0 %v201
  %461 = vmatprep.subr.bf16.mxu0 0
  %462 = vmatpush1.bf16.msra.mxu0 %v202
  %463 = vmatprep.subr.bf16.mxu0 0
  %464 = vmatpush1.bf16.msra.mxu0 %v203
  %465 = vmatprep.subr.bf16.mxu0 0
  %466 = vmatpush1.bf16.msra.mxu0 0
  %467 = vmatprep.subr.bf16.mxu0 0
  %468 = vmatpush1.bf16.msra.mxu0 0
  %469 = vmatprep.subr.bf16.mxu0 0
  %470 = vmatpush1.bf16.msra.mxu0 0
  %471 = vmatprep.subr.bf16.mxu0 0
  %472 = vmatpush1.bf16.msra.mxu0 0
  %473 = vmatprep.subr.bf16.mxu0 0
  %474 = vmatpush1.bf16.msra.mxu0 0
  %475 = vmatprep.subr.bf16.mxu0 0
  %476 = vmatpush1.bf16.msra.mxu0 0
  %477 = vmatprep.subr.bf16.mxu0 0
  %478 = vmatpush1.bf16.msra.mxu0 0
  %479 = vmatprep.subr.bf16.mxu0 0
  %480 = vmatpush1.bf16.msra.mxu0 0
  %481 = vmatprep.subr.bf16.mxu0 0
  %482 = vmatpush1.bf16.msra.mxu0 0
  %483 = vmatprep.subr.bf16.mxu0 0
  %484 = vmatpush1.bf16.msra.mxu0 0
  %485 = vmatprep.subr.bf16.mxu0 0
  %486 = vmatpush1.bf16.msra.mxu0 0
  %487 = vmatprep.subr.bf16.mxu0 0
  %488 = vmatpush1.bf16.msra.mxu0 0
  %489 = vmatprep.mubr.bf16.mxu0 0
  %490 = vmatmul.mubr.bf16.gmra.mrb[0].mxu0 %v455
  %v491 = vpop.f32.mrb[0].mxu0
  %v492 = vadd.f32 %v443, %v491
  %v493 = vpop.f32.mrb[0].mxu0
  %v494 = vpop.f32.mrb[0].mxu0
  %v495 = vpop.f32.mrb[0].mxu0
  %496 = vdwg.mxu0
  %v497 = vxor.u32 %v492, 2147483648
  %v498 = vmul.f32 %v497, 1.442695
  %v499 = vpow.pop %v498
  %v500 = vadd.f32 %v499, 1.0
  %v501 = vrcp.pop %v500
  %v502 = vmul.f32 1.0, %v501
  %v503 = vtanh.pop %v492
  %v504 = vmul.f32 %v502, %v432
  %506 = vrot.lane.b32.xlu0 %v503, 64
  %v507 = vpop.permute.xlu0 %506
  %v509 = vmul.f32 %v502, %v507
  %511 = vrot.lane.b32.xlu0 %v509, 32
  %v512 = vpop.permute.xlu0 %511
  %v514 = vadd.f32 %v504, %v512
  %v515 = vtanh.pop %v514
  %517 = vrot.lane.b32.xlu0 %v515, 64
  %v518 = vpop.permute.xlu0 %517
  %v520 = vmul.f32 %v502, %v518
  %v522 = vrot.slane %v153, 4
  %v524 = vsel %vm180, %v155, %v522
  %526 = vrot.lane.b32.xlu0 %v520, 32
  %v527 = vpop.permute.xlu0 %526
  %529 = vrot.lane.b32.xlu0 %v520, 64
  %v530 = vpop.permute.xlu0 %529
  %v532 = vsel %vm32, %v527, %v530
  %v533 = vpack.c.bf16 %v532, %v532
  %v534 = vmul.bf16 %v533, %v175
  %v536 = vsel %vm208, %v534, 0
  %538 = vmatprep.subr.bf16.mxu0 0
  %539 = vmatpush1.bf16.msra.mxu0 %v200
  %540 = vmatprep.subr.bf16.mxu0 0
  %541 = vmatpush1.bf16.msra.mxu0 %v201
  %542 = vmatprep.subr.bf16.mxu0 0
  %543 = vmatpush1.bf16.msra.mxu0 %v202
  %544 = vmatprep.subr.bf16.mxu0 0
  %545 = vmatpush1.bf16.msra.mxu0 %v203
  %546 = vmatprep.subr.bf16.mxu0 0
  %547 = vmatpush1.bf16.msra.mxu0 0
  %548 = vmatprep.subr.bf16.mxu0 0
  %549 = vmatpush1.bf16.msra.mxu0 0
  %550 = vmatprep.subr.bf16.mxu0 0
  %551 = vmatpush1.bf16.msra.mxu0 0
  %552 = vmatprep.subr.bf16.mxu0 0
  %553 = vmatpush1.bf16.msra.mxu0 0
  %554 = vmatprep.subr.bf16.mxu0 0
  %555 = vmatpush1.bf16.msra.mxu0 0
  %556 = vmatprep.subr.bf16.mxu0 0
  %557 = vmatpush1.bf16.msra.mxu0 0
  %558 = vmatprep.subr.bf16.mxu0 0
  %559 = vmatpush1.bf16.msra.mxu0 0
  %560 = vmatprep.subr.bf16.mxu0 0
  %561 = vmatpush1.bf16.msra.mxu0 0
  %562 = vmatprep.subr.bf16.mxu0 0
  %563 = vmatpush1.bf16.msra.mxu0 0
  %564 = vmatprep.subr.bf16.mxu0 0
  %565 = vmatpush1.bf16.msra.mxu0 0
  %566 = vmatprep.subr.bf16.mxu0 0
  %567 = vmatpush1.bf16.msra.mxu0 0
  %568 = vmatprep.subr.bf16.mxu0 0
  %569 = vmatpush1.bf16.msra.mxu0 0
  %570 = vmatprep.mubr.bf16.mxu0 0
  %571 = vmatmul.mubr.bf16.gmra.mrb[0].mxu0 %v536
  %v572 = vpop.f32.mrb[0].mxu0
  %v573 = vadd.f32 %v524, %v572
  %v574 = vpop.f32.mrb[0].mxu0
  %v575 = vpop.f32.mrb[0].mxu0
  %v576 = vpop.f32.mrb[0].mxu0
  %577 = vdwg.mxu0
  %v578 = vxor.u32 %v573, 2147483648
  %v579 = vmul.f32 %v578, 1.442695
  %v580 = vpow.pop %v579
  %v581 = vadd.f32 %v580, 1.0
  %v582 = vrcp.pop %v581
  %v583 = vmul.f32 1.0, %v582
  %v584 = vtanh.pop %v573
  %v585 = vmul.f32 %v583, %v514
  %587 = vrot.lane.b32.xlu0 %v584, 64
  %v588 = vpop.permute.xlu0 %587
  %v590 = vmul.f32 %v583, %v588
  %592 = vrot.lane.b32.xlu0 %v590, 32
  %v593 = vpop.permute.xlu0 %592
  %v595 = vadd.f32 %v585, %v593
  %v596 = vtanh.pop %v595
  %598 = vrot.lane.b32.xlu0 %v596, 64
  %v599 = vpop.permute.xlu0 %598
  %v601 = vmul.f32 %v583, %v599
  %v603 = vrot.slane %v155, 2
  %v605 = vrot.slane %v153, 2
  %v607 = vsel %vm180, %v603, %v605
  %609 = vrot.lane.b32.xlu0 %v601, 32
  %v610 = vpop.permute.xlu0 %609
  %612 = vrot.lane.b32.xlu0 %v601, 64
  %v613 = vpop.permute.xlu0 %612
  %v615 = vsel %vm32, %v610, %v613
  %v616 = vpack.c.bf16 %v615, %v615
  %v617 = vmul.bf16 %v616, %v175
  %v619 = vsel %vm208, %v617, 0
  %621 = vmatprep.subr.bf16.mxu0 0
  %622 = vmatpush1.bf16.msra.mxu0 %v200
  %623 = vmatprep.subr.bf16.mxu0 0
  %624 = vmatpush1.bf16.msra.mxu0 %v201
  %625 = vmatprep.subr.bf16.mxu0 0
  %626 = vmatpush1.bf16.msra.mxu0 %v202
  %627 = vmatprep.subr.bf16.mxu0 0
  %628 = vmatpush1.bf16.msra.mxu0 %v203
  %629 = vmatprep.subr.bf16.mxu0 0
  %630 = vmatpush1.bf16.msra.mxu0 0
  %631 = vmatprep.subr.bf16.mxu0 0
  %632 = vmatpush1.bf16.msra.mxu0 0
  %633 = vmatprep.subr.bf16.mxu0 0
  %634 = vmatpush1.bf16.msra.mxu0 0
  %635 = vmatprep.subr.bf16.mxu0 0
  %636 = vmatpush1.bf16.msra.mxu0 0
  %637 = vmatprep.subr.bf16.mxu0 0
  %638 = vmatpush1.bf16.msra.mxu0 0
  %639 = vmatprep.subr.bf16.mxu0 0
  %640 = vmatpush1.bf16.msra.mxu0 0
  %641 = vmatprep.subr.bf16.mxu0 0
  %642 = vmatpush1.bf16.msra.mxu0 0
  %643 = vmatprep.subr.bf16.mxu0 0
  %644 = vmatpush1.bf16.msra.mxu0 0
  %645 = vmatprep.subr.bf16.mxu0 0
  %646 = vmatpush1.bf16.msra.mxu0 0
  %647 = vmatprep.subr.bf16.mxu0 0
  %648 = vmatpush1.bf16.msra.mxu0 0
  %649 = vmatprep.subr.bf16.mxu0 0
  %650 = vmatpush1.bf16.msra.mxu0 0
  %651 = vmatprep.subr.bf16.mxu0 0
  %652 = vmatpush1.bf16.msra.mxu0 0
  %653 = vmatprep.mubr.bf16.mxu0 0
  %654 = vmatmul.mubr.bf16.gmra.mrb[0].mxu0 %v619
  %v655 = vpop.f32.mrb[0].mxu0
  %v656 = vadd.f32 %v607, %v655
  %v657 = vpop.f32.mrb[0].mxu0
  %v658 = vpop.f32.mrb[0].mxu0
  %v659 = vpop.f32.mrb[0].mxu0
  %660 = vdwg.mxu0
  %v661 = vxor.u32 %v656, 2147483648
  %v662 = vmul.f32 %v661, 1.442695
  %v663 = vpow.pop %v662
  %v664 = vadd.f32 %v663, 1.0
  %v665 = vrcp.pop %v664
  %v666 = vmul.f32 1.0, %v665
  %v667 = vtanh.pop %v656
  %v668 = vmul.f32 %v666, %v595
  %670 = vrot.lane.b32.xlu0 %v667, 64
  %v671 = vpop.permute.xlu0 %670
  %v673 = vmul.f32 %v666, %v671
  %675 = vrot.lane.b32.xlu0 %v673, 32
  %v676 = vpop.permute.xlu0 %675
  %v678 = vadd.f32 %v668, %v676
  %v679 = vtanh.pop %v678
  %681 = vrot.lane.b32.xlu0 %v679, 64
  %v682 = vpop.permute.xlu0 %681
  %v684 = vmul.f32 %v666, %v682
  %v685 = vrot.slane %v155, 4
  %v687 = vsel %vm180, %v685, %v153
  %689 = vrot.lane.b32.xlu0 %v684, 32
  %v690 = vpop.permute.xlu0 %689
  %692 = vrot.lane.b32.xlu0 %v684, 64
  %v693 = vpop.permute.xlu0 %692
  %v695 = vsel %vm32, %v690, %v693
  %v696 = vpack.c.bf16 %v695, %v695
  %v697 = vmul.bf16 %v696, %v175
  %v699 = vsel %vm208, %v697, 0
  %701 = vmatprep.subr.bf16.mxu0 0
  %702 = vmatpush1.bf16.msra.mxu0 %v200
  %703 = vmatprep.subr.bf16.mxu0 0
  %704 = vmatpush1.bf16.msra.mxu0 %v201
  %705 = vmatprep.subr.bf16.mxu0 0
  %706 = vmatpush1.bf16.msra.mxu0 %v202
  %707 = vmatprep.subr.bf16.mxu0 0
  %708 = vmatpush1.bf16.msra.mxu0 %v203
  %709 = vmatprep.subr.bf16.mxu0 0
  %710 = vmatpush1.bf16.msra.mxu0 0
  %711 = vmatprep.subr.bf16.mxu0 0
  %712 = vmatpush1.bf16.msra.mxu0 0
  %713 = vmatprep.subr.bf16.mxu0 0
  %714 = vmatpush1.bf16.msra.mxu0 0
  %715 = vmatprep.subr.bf16.mxu0 0
  %716 = vmatpush1.bf16.msra.mxu0 0
  %717 = vmatprep.subr.bf16.mxu0 0
  %718 = vmatpush1.bf16.msra.mxu0 0
  %719 = vmatprep.subr.bf16.mxu0 0
  %720 = vmatpush1.bf16.msra.mxu0 0
  %721 = vmatprep.subr.bf16.mxu0 0
  %722 = vmatpush1.bf16.msra.mxu0 0
  %723 = vmatprep.subr.bf16.mxu0 0
  %724 = vmatpush1.bf16.msra.mxu0 0
  %725 = vmatprep.subr.bf16.mxu0 0
  %726 = vmatpush1.bf16.msra.mxu0 0
  %727 = vmatprep.subr.bf16.mxu0 0
  %728 = vmatpush1.bf16.msra.mxu0 0
  %729 = vmatprep.subr.bf16.mxu0 0
  %730 = vmatpush1.bf16.msra.mxu0 0
  %731 = vmatprep.subr.bf16.mxu0 0
  %732 = vmatpush1.bf16.msra.mxu0 0
  %733 = vmatprep.mubr.bf16.mxu0 0
  %734 = vmatmul.mubr.bf16.gmra.mrb[0].mxu0 %v699
  %v735 = vpop.f32.mrb[0].mxu0
  %v736 = vadd.f32 %v687, %v735
  %v737 = vpop.f32.mrb[0].mxu0
  %v738 = vpop.f32.mrb[0].mxu0
  %v739 = vpop.f32.mrb[0].mxu0
  %740 = vdwg.mxu0
  %v741 = vxor.u32 %v736, 2147483648
  %v742 = vmul.f32 %v741, 1.442695
  %v743 = vpow.pop %v742
  %v744 = vadd.f32 %v743, 1.0
  %v745 = vrcp.pop %v744
  %v746 = vmul.f32 1.0, %v745
  %v747 = vtanh.pop %v736
  %v748 = vmul.f32 %v746, %v678
  %750 = vrot.lane.b32.xlu0 %v747, 64
  %v751 = vpop.permute.xlu0 %750
  %v753 = vmul.f32 %v746, %v751
  %755 = vrot.lane.b32.xlu0 %v753, 32
  %v756 = vpop.permute.xlu0 %755
  %v758 = vadd.f32 %v748, %v756
  %v759 = vtanh.pop %v758
  %761 = vrot.lane.b32.xlu0 %v759, 64
  %v762 = vpop.permute.xlu0 %761
  %v764 = vmul.f32 %v746, %v762
  %v765 = vrot.slane %v155, 6
  %v767 = vrot.slane %v153, 6
  %v769 = vsel %vm180, %v765, %v767
  %771 = vrot.lane.b32.xlu0 %v764, 32
  %v772 = vpop.permute.xlu0 %771
  %774 = vrot.lane.b32.xlu0 %v764, 64
  %v775 = vpop.permute.xlu0 %774
  %v777 = vsel %vm32, %v772, %v775
  %v778 = vpack.c.bf16 %v777, %v777
  %v779 = vmul.bf16 %v778, %v175
  %v781 = vsel %vm208, %v779, 0
  %783 = vmatprep.subr.bf16.mxu0 0
  %784 = vmatpush1.bf16.msra.mxu0 %v200
  %785 = vmatprep.subr.bf16.mxu0 0
  %786 = vmatpush1.bf16.msra.mxu0 %v201
  %787 = vmatprep.subr.bf16.mxu0 0
  %788 = vmatpush1.bf16.msra.mxu0 %v202
  %789 = vmatprep.subr.bf16.mxu0 0
  %790 = vmatpush1.bf16.msra.mxu0 %v203
  %791 = vmatprep.subr.bf16.mxu0 0
  %792 = vmatpush1.bf16.msra.mxu0 0
  %793 = vmatprep.subr.bf16.mxu0 0
  %794 = vmatpush1.bf16.msra.mxu0 0
  %795 = vmatprep.subr.bf16.mxu0 0
  %796 = vmatpush1.bf16.msra.mxu0 0
  %797 = vmatprep.subr.bf16.mxu0 0
  %798 = vmatpush1.bf16.msra.mxu0 0
  %799 = vmatprep.subr.bf16.mxu0 0
  %800 = vmatpush1.bf16.msra.mxu0 0
  %801 = vmatprep.subr.bf16.mxu0 0
  %802 = vmatpush1.bf16.msra.mxu0 0
  %803 = vmatprep.subr.bf16.mxu0 0
  %804 = vmatpush1.bf16.msra.mxu0 0
  %805 = vmatprep.subr.bf16.mxu0 0
  %806 = vmatpush1.bf16.msra.mxu0 0
  %807 = vmatprep.subr.bf16.mxu0 0
  %808 = vmatpush1.bf16.msra.mxu0 0
  %809 = vmatprep.subr.bf16.mxu0 0
  %810 = vmatpush1.bf16.msra.mxu0 0
  %811 = vmatprep.subr.bf16.mxu0 0
  %812 = vmatpush1.bf16.msra.mxu0 0
  %813 = vmatprep.subr.bf16.mxu0 0
  %814 = vmatpush1.bf16.msra.mxu0 0
  %815 = vmatprep.mubr.bf16.mxu0 0
  %816 = vmatmul.mubr.bf16.gmra.mrb[0].mxu0 %v781
  %v817 = vpop.f32.mrb[0].mxu0
  %v818 = vadd.f32 %v769, %v817
  %v819 = vpop.f32.mrb[0].mxu0
  %v820 = vpop.f32.mrb[0].mxu0
  %v821 = vpop.f32.mrb[0].mxu0
  %822 = vdwg.mxu0
  %v823 = vxor.u32 %v818, 2147483648
  %v824 = vmul.f32 %v823, 1.442695
  %v825 = vpow.pop %v824
  %v826 = vadd.f32 %v825, 1.0
  %v827 = vrcp.pop %v826
  %v828 = vmul.f32 1.0, %v827
  %v829 = vtanh.pop %v818
  %v830 = vmul.f32 %v828, %v758
  %832 = vrot.lane.b32.xlu0 %v829, 64
  %v833 = vpop.permute.xlu0 %832
  %v835 = vmul.f32 %v828, %v833
  %837 = vrot.lane.b32.xlu0 %v835, 32
  %v838 = vpop.permute.xlu0 %837
  %v840 = vadd.f32 %v830, %v838
  %v841 = vtanh.pop %v840
  %843 = vrot.lane.b32.xlu0 %v841, 64
  %v844 = vpop.permute.xlu0 %843
  %v846 = vmul.f32 %v828, %v844
  %848 = vrot.lane.b32.xlu0 %v846, 32
  %v849 = vpop.permute.xlu0 %848
  %v851 = vrot.slane %v846, 2
  %v852 = vrot.slane %v764, 2
  %v853 = vrot.slane %v684, 2
  %v854 = vrot.slane %v601, 2
  %v855 = vrot.slane %v520, 2
  %v856 = vrot.slane %v438, 2
  %v857 = vrot.slane %v358, 2
  %v858 = vrot.slane %v275, 2
  %859 = vrot.lane.b32.xlu0 %v851, 64
  %v860 = vpop.permute.xlu0 %859
  %861 = vrot.lane.b32.xlu0 %v852, 64
  %v862 = vpop.permute.xlu0 %861
  %863 = vrot.lane.b32.xlu0 %v853, 64
  %v864 = vpop.permute.xlu0 %863
  %865 = vrot.lane.b32.xlu0 %v854, 64
  %v866 = vpop.permute.xlu0 %865
  %867 = vrot.lane.b32.xlu0 %v855, 64
  %v868 = vpop.permute.xlu0 %867
  %869 = vrot.lane.b32.xlu0 %v856, 64
  %v870 = vpop.permute.xlu0 %869
  %871 = vrot.lane.b32.xlu0 %v857, 64
  %v872 = vpop.permute.xlu0 %871
  %873 = vrot.lane.b32.xlu0 %v858, 64
  %v874 = vpop.permute.xlu0 %873
  %v883 = vsel %vm32, %v284, %v860
  %v884 = vsel %vm32, %v364, %v862
  %v885 = vsel %vm32, %v446, %v864
  %v886 = vsel %vm32, %v527, %v866
  %v887 = vsel %vm32, %v610, %v868
  %v888 = vsel %vm32, %v690, %v870
  %v889 = vsel %vm32, %v772, %v872
  %v890 = vsel %vm32, %v849, %v874
  %vm891 = vcmask 517120
  %892 = vst.msk [vmem:[%s6] sm:$0x3] %vm891, %v883
  %893 = vst.msk [vmem:[%s6 + $0x2] sm:$0x3] %vm891, %v884
  %894 = vst.msk [vmem:[%s6 + $0x4] sm:$0x3] %vm891, %v885
  %895 = vst.msk [vmem:[%s6 + $0x6] sm:$0x3] %vm891, %v886
  %896 = vst.msk [vmem:[%s6 + $0x8] sm:$0x3] %vm891, %v887
  %897 = vst.msk [vmem:[%s6 + $0xa] sm:$0x3] %vm891, %v888
  %898 = vst.msk [vmem:[%s6 + $0xc] sm:$0x3] %vm891, %v889
  %899 = vst.msk [vmem:[%s6 + $0xe] sm:$0x3] %vm891, %v890
  %v900 = vsel %vm32, %v849, %v860
  %901 = vst.msk [vmem:[%s7] sm:$0x3] %vm891, %v900
  %903 = vrot.lane.b32.xlu0 %v840, 96
  %v904 = vpop.permute.xlu0 %903
  %v906 = vrot.slane %v840, 2
  %v908 = vsel %vm32, %v904, %v906
  %909 = vst.msk [vmem:[%s8] sm:$0x3] %vm891, %v908
  // Predicated region
  $region26: #{forward.7} parent=0 // pred_check
    _
  $region27: #{forward.7} parent=0 // pred_check_branch
    %911 = sbr.rel (0) target = $region29
  $region28: #{forward.7} parent=0 // pred_region
    _
  $region29: #{forward.7} parent=0 // pred_fallthru
    _
  // Predicated region
  $region30: #{forward.7} parent=0 // pred_check
    _
  $region31: #{forward.7} parent=0 // pred_check_branch
    %913 = sbr.rel (0) target = $region33
  $region32: #{forward.7} parent=0 // pred_region
    _
  $region33: #{forward.7} parent=0 // pred_fallthru
    _
  // Predicated region
  $region34: #{forward.7} parent=0 // pred_check
    _
  $region35: #{forward.7} parent=0 // pred_check_branch
    %915 = sbr.rel (0) target = $region37
  $region36: #{forward.7} parent=0 // pred_region
    _
  $region37: #{forward.7} parent=0 // pred_fallthru
    _
  // Predicated region
  $region38: #{forward.7} parent=0 // pred_check
    _
  $region39: #{forward.7} parent=0 // pred_check_branch
    %917 = sbr.rel (0) target = $region41
  $region40: #{forward.7} parent=0 // pred_region
    _
  $region41: #{forward.7} parent=0 // pred_fallthru
    _
  // Predicated region
  $region42: #{forward.7} parent=0 // pred_check
    _
  $region43: #{forward.7} parent=0 // pred_check_branch
    %919 = sbr.rel (0) target = $region45
  $region44: #{forward.7} parent=0 // pred_region
    _
  $region45: #{forward.7} parent=0 // pred_fallthru
    _
  // Predicated region
  $region46: #{forward.7} parent=0 // pred_check
    _
  $region47: #{forward.7} parent=0 // pred_check_branch
    %921 = sbr.rel (0) target = $region49
  $region48: #{forward.7} parent=0 // pred_region
    _
  $region49: #{forward.7} parent=0 // pred_fallthru
    _

// kernel: forward.10
$region0: #{forward.10}
  #allocation0 [shape = 'u32[]', space=smem, size = 0x4, offset = 0x4, fixed_abs, tag = 'smem constant byte address 0x4 - core index']
  #allocation1 [shape = 'u32[144,128]{1,0:T(1,128)}', space=vmem, size = 0x12000, scoped, tag = 'internal scratch']
  %s0 = inlined_call_operand.vmem [shape: f32[4,2,64], index: 0, kind: input, shape index: {}]
  %s1 = inlined_call_operand.vmem [shape: bf16[4,64,32], index: 1, kind: input, shape index: {}]
  %s2 = inlined_call_operand.vmem [shape: f32[4,1,32], index: 2, kind: input, shape index: {}]
  %s3 = inlined_call_operand.vmem [shape: f32[1,32], index: 3, kind: input, shape index: {}]
  %s4 = inlined_call_operand.vmem [shape: f32[1,32], index: 4, kind: input, shape index: {}]
  %s5 = inlined_call_operand.vmem [shape: f32[4,2,32], index: 5, kind: output, shape index: {}]
  %s6 = sld [smem:[#allocation0]]
  $region30: #{forward.10} parent=0
    _
  %s8 = ssub.s32 1, %s6
  %s9 = scalar_select 0, %s8, %s6
  // Predicated region
  $region2: #{forward.10} parent=0 // pred_check
    _
  $region3: #{forward.10} parent=0 // pred_check_branch
    %11 = sbr.rel (0) target = $region5
  $region4: #{forward.10} parent=0 // pred_region
    _
  $region5: #{forward.10} parent=0 // pred_fallthru
    _
  // Predicated region
  $region6: #{forward.10} parent=0 // pred_check
    _
  $region7: #{forward.10} parent=0 // pred_check_branch
    %13 = sbr.rel (0) target = $region9
  $region8: #{forward.10} parent=0 // pred_region
    _
  $region9: #{forward.10} parent=0 // pred_fallthru
    _
  // Predicated region
  $region10: #{forward.10} parent=0 // pred_check
    _
  $region11: #{forward.10} parent=0 // pred_check_branch
    %15 = sbr.rel (0) target = $region13
  $region12: #{forward.10} parent=0 // pred_region
    _
  $region13: #{forward.10} parent=0 // pred_fallthru
    _
  // Predicated region
  $region14: #{forward.10} parent=0 // pred_check
    _
  $region15: #{forward.10} parent=0 // pred_check_branch
    %17 = sbr.rel (0) target = $region17
  $region16: #{forward.10} parent=0 // pred_region
    _
  $region17: #{forward.10} parent=0 // pred_fallthru
    _
  // Predicated region
  $region18: #{forward.10} parent=0 // pred_check
    _
  $region19: #{forward.10} parent=0 // pred_check_branch
    %19 = sbr.rel (0) target = $region21
  $region20: #{forward.10} parent=0 // pred_region
    _
  $region21: #{forward.10} parent=0 // pred_fallthru
    _
  %v21 = vld [vmem:[%s3] sm:$0x1]
  %v22 = vld [vmem:[%s4] sm:$0x1]
  %v23 = vld [vmem:[%s0] sm:$0x3]
  %v24 = vpack.c.bf16 %v23, %v23
  %v25 = vld [vmem:[%s1] sm:$0xf]
  %v26 = vld [vmem:[%s1 + $0x4] sm:$0xf]
  %v27 = vld [vmem:[%s1 + $0x8] sm:$0xf]
  %v28 = vld [vmem:[%s1 + $0xc] sm:$0xf]
  %v29 = vld [vmem:[%s1 + $0x10] sm:$0xf]
  %v30 = vld [vmem:[%s1 + $0x14] sm:$0xf]
  %v31 = vld [vmem:[%s1 + $0x18] sm:$0xf]
  %v32 = vld [vmem:[%s1 + $0x1c] sm:$0xf]
  %v33 = vld [vmem:[%s2] sm:$0x1]
  %v35 = vlaneseq
  %v36 = vshrl.u32 %v35, 7
  %v37 = vsub.s32 0, %v36
  %v38 = vrot.slane %v33, %v37
  %v48 = vunpack.c.l.b16 %v25
  %v49 = vunpack.c.l.b16 %v26
  %v50 = vunpack.c.l.b16 %v27
  %v51 = vunpack.c.l.b16 %v28
  %v52 = vunpack.c.l.b16 %v29
  %v53 = vunpack.c.l.b16 %v30
  %v54 = vunpack.c.l.b16 %v31
  %v55 = vunpack.c.l.b16 %v32
  %v56 = vpack.c.b16 %v49, %v48
  %v57 = vpack.c.b16 %v51, %v50
  %v58 = vpack.c.b16 %v53, %v52
  %v59 = vpack.c.b16 %v55, %v54
  %vm64 = vcmask 523264
  %v66 = vsel %vm64, %v24, 0
  %68 = vmatprep.subr.bf16.mxu0 0
  %69 = vmatpush1.bf16.msra.mxu0 %v56
  %70 = vmatprep.subr.bf16.mxu0 0
  %71 = vmatpush1.bf16.msra.mxu0 %v57
  %72 = vmatprep.subr.bf16.mxu0 0
  %73 = vmatpush1.bf16.msra.mxu0 %v58
  %74 = vmatprep.subr.bf16.mxu0 0
  %75 = vmatpush1.bf16.msra.mxu0 %v59
  %76 = vmatprep.subr.bf16.mxu0 0
  %77 = vmatpush1.bf16.msra.mxu0 0
  %78 = vmatprep.subr.bf16.mxu0 0
  %79 = vmatpush1.bf16.msra.mxu0 0
  %80 = vmatprep.subr.bf16.mxu0 0
  %81 = vmatpush1.bf16.msra.mxu0 0
  %82 = vmatprep.subr.bf16.mxu0 0
  %83 = vmatpush1.bf16.msra.mxu0 0
  %84 = vmatprep.subr.bf16.mxu0 0
  %85 = vmatpush1.bf16.msra.mxu0 0
  %86 = vmatprep.subr.bf16.mxu0 0
  %87 = vmatpush1.bf16.msra.mxu0 0
  %88 = vmatprep.subr.bf16.mxu0 0
  %89 = vmatpush1.bf16.msra.mxu0 0
  %90 = vmatprep.subr.bf16.mxu0 0
  %91 = vmatpush1.bf16.msra.mxu0 0
  %92 = vmatprep.subr.bf16.mxu0 0
  %93 = vmatpush1.bf16.msra.mxu0 0
  %94 = vmatprep.subr.bf16.mxu0 0
  %95 = vmatpush1.bf16.msra.mxu0 0
  %96 = vmatprep.subr.bf16.mxu0 0
  %97 = vmatpush1.bf16.msra.mxu0 0
  %98 = vmatprep.subr.bf16.mxu0 0
  %99 = vmatpush1.bf16.msra.mxu0 0
  %100 = vmatprep.mubr.bf16.mxu0 0
  %101 = vmatmul.mubr.bf16.gmra.mrb[0].mxu0 %v66
  %v102 = vpop.f32.mrb[0].mxu0
  %v103 = vadd.f32 %v38, %v102
  %v104 = vpop.f32.mrb[0].mxu0
  %v105 = vpop.f32.mrb[0].mxu0
  %v106 = vpop.f32.mrb[0].mxu0
  %107 = vdwg.mxu0
  %vm108 = vcmask 254976
  %v109 = vsel %vm108, %v103, 0.0
  %110 = vadd.xlane.f32.xlu0 %v109
  %v111 = vpop.xlane.xlu0 %110
  %v112 = vrcp.pop 32.0
  %v113 = vmul.f32 %v111, %v112
  %v114 = vsub.f32 %v103, %v113
  %v115 = vmul.f32 %v114, %v114
  %v116 = vsel %vm108, %v115, 0.0
  %117 = vadd.xlane.f32.xlu0 %v116
  %v118 = vpop.xlane.xlu0 %117
  %v119 = vmul.f32 %v118, %v112
  %v120 = vadd.f32 %v119, 1e-05
  %v121 = vrsqrt.pop %v120
  %v122 = vmul.f32 %v114, %v121
  %v124 = vlaneseq
  %v125 = vshrl.u32 %v124, 7
  %v126 = vsub.s32 0, %v125
  %v127 = vrot.slane %v21, %v126
  %v129 = vmul.f32 %v122, %v127
  %v131 = vlaneseq
  %v132 = vshrl.u32 %v131, 7
  %v133 = vsub.s32 0, %v132
  %v134 = vrot.slane %v22, %v133
  %v136 = vadd.f32 %v129, %v134
  %137 = vst.msk [vmem:[%s5] sm:$0x3] %vm108, %v136
  %s138 = scalar_lea.vmem %s0, 2
  %v139 = vld [vmem:[%s138] sm:$0x3]
  %v140 = vpack.c.bf16 %v139, %v139
  %s141 = scalar_lea.vmem %s1, 32
  %v142 = vld [vmem:[%s141] sm:$0xf]
  %v143 = vld [vmem:[%s141 + $0x4] sm:$0xf]
  %v144 = vld [vmem:[%s141 + $0x8] sm:$0xf]
  %v145 = vld [vmem:[%s141 + $0xc] sm:$0xf]
  %v146 = vld [vmem:[%s141 + $0x10] sm:$0xf]
  %v147 = vld [vmem:[%s141 + $0x14] sm:$0xf]
  %v148 = vld [vmem:[%s141 + $0x18] sm:$0xf]
  %v149 = vld [vmem:[%s141 + $0x1c] sm:$0xf]
  %s150 = scalar_lea.vmem %s2, 1
  %v151 = vld [vmem:[%s150] sm:$0x1]
  %v153 = vlaneseq
  %v154 = vshrl.u32 %v153, 7
  %v155 = vsub.s32 0, %v154
  %v156 = vrot.slane %v151, %v155
  %v166 = vunpack.c.l.b16 %v142
  %v167 = vunpack.c.l.b16 %v143
  %v168 = vunpack.c.l.b16 %v144
  %v169 = vunpack.c.l.b16 %v145
  %v170 = vunpack.c.l.b16 %v146
  %v171 = vunpack.c.l.b16 %v147
  %v172 = vunpack.c.l.b16 %v148
  %v173 = vunpack.c.l.b16 %v149
  %v174 = vpack.c.b16 %v167, %v166
  %v175 = vpack.c.b16 %v169, %v168
  %v176 = vpack.c.b16 %v171, %v170
  %v177 = vpack.c.b16 %v173, %v172
  %v183 = vsel %vm64, %v140, 0
  %185 = vmatprep.subr.bf16.mxu0 0
  %186 = vmatpush1.bf16.msra.mxu0 %v174
  %187 = vmatprep.subr.bf16.mxu0 0
  %188 = vmatpush1.bf16.msra.mxu0 %v175
  %189 = vmatprep.subr.bf16.mxu0 0
  %190 = vmatpush1.bf16.msra.mxu0 %v176
  %191 = vmatprep.subr.bf16.mxu0 0
  %192 = vmatpush1.bf16.msra.mxu0 %v177
  %193 = vmatprep.subr.bf16.mxu0 0
  %194 = vmatpush1.bf16.msra.mxu0 0
  %195 = vmatprep.subr.bf16.mxu0 0
  %196 = vmatpush1.bf16.msra.mxu0 0
  %197 = vmatprep.subr.bf16.mxu0 0
  %198 = vmatpush1.bf16.msra.mxu0 0
  %199 = vmatprep.subr.bf16.mxu0 0
  %200 = vmatpush1.bf16.msra.mxu0 0
  %201 = vmatprep.subr.bf16.mxu0 0
  %202 = vmatpush1.bf16.msra.mxu0 0
  %203 = vmatprep.subr.bf16.mxu0 0
  %204 = vmatpush1.bf16.msra.mxu0 0
  %205 = vmatprep.subr.bf16.mxu0 0
  %206 = vmatpush1.bf16.msra.mxu0 0
  %207 = vmatprep.subr.bf16.mxu0 0
  %208 = vmatpush1.bf16.msra.mxu0 0
  %209 = vmatprep.subr.bf16.mxu0 0
  %210 = vmatpush1.bf16.msra.mxu0 0
  %211 = vmatprep.subr.bf16.mxu0 0
  %212 = vmatpush1.bf16.msra.mxu0 0
  %213 = vmatprep.subr.bf16.mxu0 0
  %214 = vmatpush1.bf16.msra.mxu0 0
  %215 = vmatprep.subr.bf16.mxu0 0
  %216 = vmatpush1.bf16.msra.mxu0 0
  %217 = vmatprep.mubr.bf16.mxu0 0
  %218 = vmatmul.mubr.bf16.gmra.mrb[0].mxu0 %v183
  %v219 = vpop.f32.mrb[0].mxu0
  %v220 = vadd.f32 %v156, %v219
  %v221 = vpop.f32.mrb[0].mxu0
  %v222 = vpop.f32.mrb[0].mxu0
  %v223 = vpop.f32.mrb[0].mxu0
  %224 = vdwg.mxu0
  %v225 = vsel %vm108, %v220, 0.0
  %226 = vadd.xlane.f32.xlu0 %v225
  %v227 = vpop.xlane.xlu0 %226
  %v228 = vmul.f32 %v227, %v112
  %v229 = vsub.f32 %v220, %v228
  %v230 = vmul.f32 %v229, %v229
  %v231 = vsel %vm108, %v230, 0.0
  %232 = vadd.xlane.f32.xlu0 %v231
  %v233 = vpop.xlane.xlu0 %232
  %v234 = vmul.f32 %v233, %v112
  %v235 = vadd.f32 %v234, 1e-05
  %v236 = vrsqrt.pop %v235
  %v237 = vmul.f32 %v229, %v236
  %v238 = vmul.f32 %v237, %v127
  %v239 = vadd.f32 %v238, %v134
  %s240 = scalar_lea.vmem %s5, 2
  %241 = vst.msk [vmem:[%s240] sm:$0x3] %vm108, %v239
  %s242 = scalar_lea.vmem %s0, 4
  %v243 = vld [vmem:[%s242] sm:$0x3]
  %v244 = vpack.c.bf16 %v243, %v243
  %s245 = scalar_lea.vmem %s1, 64
  %v246 = vld [vmem:[%s245] sm:$0xf]
  %v247 = vld [vmem:[%s245 + $0x4] sm:$0xf]
  %v248 = vld [vmem:[%s245 + $0x8] sm:$0xf]
  %v249 = vld [vmem:[%s245 + $0xc] sm:$0xf]
  %v250 = vld [vmem:[%s245 + $0x10] sm:$0xf]
  %v251 = vld [vmem:[%s245 + $0x14] sm:$0xf]
  %v252 = vld [vmem:[%s245 + $0x18] sm:$0xf]
  %v253 = vld [vmem:[%s245 + $0x1c] sm:$0xf]
  %s254 = scalar_lea.vmem %s2, 2
  %v255 = vld [vmem:[%s254] sm:$0x1]
  %v257 = vlaneseq
  %v258 = vshrl.u32 %v257, 7
  %v259 = vsub.s32 0, %v258
  %v260 = vrot.slane %v255, %v259
  %v270 = vunpack.c.l.b16 %v246
  %v271 = vunpack.c.l.b16 %v247
  %v272 = vunpack.c.l.b16 %v248
  %v273 = vunpack.c.l.b16 %v249
  %v274 = vunpack.c.l.b16 %v250
  %v275 = vunpack.c.l.b16 %v251
  %v276 = vunpack.c.l.b16 %v252
  %v277 = vunpack.c.l.b16 %v253
  %v278 = vpack.c.b16 %v271, %v270
  %v279 = vpack.c.b16 %v273, %v272
  %v280 = vpack.c.b16 %v275, %v274
  %v281 = vpack.c.b16 %v277, %v276
  %v287 = vsel %vm64, %v244, 0
  %289 = vmatprep.subr.bf16.mxu0 0
  %290 = vmatpush1.bf16.msra.mxu0 %v278
  %291 = vmatprep.subr.bf16.mxu0 0
  %292 = vmatpush1.bf16.msra.mxu0 %v279
  %293 = vmatprep.subr.bf16.mxu0 0
  %294 = vmatpush1.bf16.msra.mxu0 %v280
  %295 = vmatprep.subr.bf16.mxu0 0
  %296 = vmatpush1.bf16.msra.mxu0 %v281
  %297 = vmatprep.subr.bf16.mxu0 0
  %298 = vmatpush1.bf16.msra.mxu0 0
  %299 = vmatprep.subr.bf16.mxu0 0
  %300 = vmatpush1.bf16.msra.mxu0 0
  %301 = vmatprep.subr.bf16.mxu0 0
  %302 = vmatpush1.bf16.msra.mxu0 0
  %303 = vmatprep.subr.bf16.mxu0 0
  %304 = vmatpush1.bf16.msra.mxu0 0
  %305 = vmatprep.subr.bf16.mxu0 0
  %306 = vmatpush1.bf16.msra.mxu0 0
  %307 = vmatprep.subr.bf16.mxu0 0
  %308 = vmatpush1.bf16.msra.mxu0 0
  %309 = vmatprep.subr.bf16.mxu0 0
  %310 = vmatpush1.bf16.msra.mxu0 0
  %311 = vmatprep.subr.bf16.mxu0 0
  %312 = vmatpush1.bf16.msra.mxu0 0
  %313 = vmatprep.subr.bf16.mxu0 0
  %314 = vmatpush1.bf16.msra.mxu0 0
  %315 = vmatprep.subr.bf16.mxu0 0
  %316 = vmatpush1.bf16.msra.mxu0 0
  %317 = vmatprep.subr.bf16.mxu0 0
  %318 = vmatpush1.bf16.msra.mxu0 0
  %319 = vmatprep.subr.bf16.mxu0 0
  %320 = vmatpush1.bf16.msra.mxu0 0
  %321 = vmatprep.mubr.bf16.mxu0 0
  %322 = vmatmul.mubr.bf16.gmra.mrb[0].mxu0 %v287
  %v323 = vpop.f32.mrb[0].mxu0
  %v324 = vadd.f32 %v260, %v323
  %v325 = vpop.f32.mrb[0].mxu0
  %v326 = vpop.f32.mrb[0].mxu0
  %v327 = vpop.f32.mrb[0].mxu0
  %328 = vdwg.mxu0
  %v329 = vsel %vm108, %v324, 0.0
  %330 = vadd.xlane.f32.xlu0 %v329
  %v331 = vpop.xlane.xlu0 %330
  %v332 = vmul.f32 %v331, %v112
  %v333 = vsub.f32 %v324, %v332
  %v334 = vmul.f32 %v333, %v333
  %v335 = vsel %vm108, %v334, 0.0
  %336 = vadd.xlane.f32.xlu0 %v335
  %v337 = vpop.xlane.xlu0 %336
  %v338 = vmul.f32 %v337, %v112
  %v339 = vadd.f32 %v338, 1e-05
  %v340 = vrsqrt.pop %v339
  %v341 = vmul.f32 %v333, %v340
  %v342 = vmul.f32 %v341, %v127
  %v343 = vadd.f32 %v342, %v134
  %s344 = scalar_lea.vmem %s5, 4
  %345 = vst.msk [vmem:[%s344] sm:$0x3] %vm108, %v343
  %s346 = scalar_lea.vmem %s0, 6
  %v347 = vld [vmem:[%s346] sm:$0x3]
  %v348 = vpack.c.bf16 %v347, %v347
  %s349 = scalar_lea.vmem %s1, 96
  %v350 = vld [vmem:[%s349] sm:$0xf]
  %v351 = vld [vmem:[%s349 + $0x4] sm:$0xf]
  %v352 = vld [vmem:[%s349 + $0x8] sm:$0xf]
  %v353 = vld [vmem:[%s349 + $0xc] sm:$0xf]
  %v354 = vld [vmem:[%s349 + $0x10] sm:$0xf]
  %v355 = vld [vmem:[%s349 + $0x14] sm:$0xf]
  %v356 = vld [vmem:[%s349 + $0x18] sm:$0xf]
  %v357 = vld [vmem:[%s349 + $0x1c] sm:$0xf]
  %s358 = scalar_lea.vmem %s2, 3
  %v359 = vld [vmem:[%s358] sm:$0x1]
  %v361 = vlaneseq
  %v362 = vshrl.u32 %v361, 7
  %v363 = vsub.s32 0, %v362
  %v364 = vrot.slane %v359, %v363
  %v374 = vunpack.c.l.b16 %v350
  %v375 = vunpack.c.l.b16 %v351
  %v376 = vunpack.c.l.b16 %v352
  %v377 = vunpack.c.l.b16 %v353
  %v378 = vunpack.c.l.b16 %v354
  %v379 = vunpack.c.l.b16 %v355
  %v380 = vunpack.c.l.b16 %v356
  %v381 = vunpack.c.l.b16 %v357
  %v382 = vpack.c.b16 %v375, %v374
  %v383 = vpack.c.b16 %v377, %v376
  %v384 = vpack.c.b16 %v379, %v378
  %v385 = vpack.c.b16 %v381, %v380
  %v391 = vsel %vm64, %v348, 0
  %393 = vmatprep.subr.bf16.mxu0 0
  %394 = vmatpush1.bf16.msra.mxu0 %v382
  %395 = vmatprep.subr.bf16.mxu0 0
  %396 = vmatpush1.bf16.msra.mxu0 %v383
  %397 = vmatprep.subr.bf16.mxu0 0
  %398 = vmatpush1.bf16.msra.mxu0 %v384
  %399 = vmatprep.subr.bf16.mxu0 0
  %400 = vmatpush1.bf16.msra.mxu0 %v385
  %401 = vmatprep.subr.bf16.mxu0 0
  %402 = vmatpush1.bf16.msra.mxu0 0
  %403 = vmatprep.subr.bf16.mxu0 0
  %404 = vmatpush1.bf16.msra.mxu0 0
  %405 = vmatprep.subr.bf16.mxu0 0
  %406 = vmatpush1.bf16.msra.mxu0 0
  %407 = vmatprep.subr.bf16.mxu0 0
  %408 = vmatpush1.bf16.msra.mxu0 0
  %409 = vmatprep.subr.bf16.mxu0 0
  %410 = vmatpush1.bf16.msra.mxu0 0
  %411 = vmatprep.subr.bf16.mxu0 0
  %412 = vmatpush1.bf16.msra.mxu0 0
  %413 = vmatprep.subr.bf16.mxu0 0
  %414 = vmatpush1.bf16.msra.mxu0 0
  %415 = vmatprep.subr.bf16.mxu0 0
  %416 = vmatpush1.bf16.msra.mxu0 0
  %417 = vmatprep.subr.bf16.mxu0 0
  %418 = vmatpush1.bf16.msra.mxu0 0
  %419 = vmatprep.subr.bf16.mxu0 0
  %420 = vmatpush1.bf16.msra.mxu0 0
  %421 = vmatprep.subr.bf16.mxu0 0
  %422 = vmatpush1.bf16.msra.mxu0 0
  %423 = vmatprep.subr.bf16.mxu0 0
  %424 = vmatpush1.bf16.msra.mxu0 0
  %425 = vmatprep.mubr.bf16.mxu0 0
  %426 = vmatmul.mubr.bf16.gmra.mrb[0].mxu0 %v391
  %v427 = vpop.f32.mrb[0].mxu0
  %v428 = vadd.f32 %v364, %v427
  %v429 = vpop.f32.mrb[0].mxu0
  %v430 = vpop.f32.mrb[0].mxu0
  %v431 = vpop.f32.mrb[0].mxu0
  %432 = vdwg.mxu0
  %v433 = vsel %vm108, %v428, 0.0
  %434 = vadd.xlane.f32.xlu0 %v433
  %v435 = vpop.xlane.xlu0 %434
  %v436 = vmul.f32 %v435, %v112
  %v437 = vsub.f32 %v428, %v436
  %v438 = vmul.f32 %v437, %v437
  %v439 = vsel %vm108, %v438, 0.0
  %440 = vadd.xlane.f32.xlu0 %v439
  %v441 = vpop.xlane.xlu0 %440
  %v442 = vmul.f32 %v441, %v112
  %v443 = vadd.f32 %v442, 1e-05
  %v444 = vrsqrt.pop %v443
  %v445 = vmul.f32 %v437, %v444
  %v446 = vmul.f32 %v445, %v127
  %v447 = vadd.f32 %v446, %v134
  %s448 = scalar_lea.vmem %s5, 6
  %449 = vst.msk [vmem:[%s448] sm:$0x3] %vm108, %v447
  // Predicated region
  $region22: #{forward.10} parent=0 // pred_check
    _
  $region23: #{forward.10} parent=0 // pred_check_branch
    %451 = sbr.rel (0) target = $region25
  $region24: #{forward.10} parent=0 // pred_region
    _
  $region25: #{forward.10} parent=0 // pred_fallthru
    _
  // Predicated region
  $region26: #{forward.10} parent=0 // pred_check
    _
  $region27: #{forward.10} parent=0 // pred_check_branch
    %453 = sbr.rel (0) target = $region29
  $region28: #{forward.10} parent=0 // pred_region
    _
  $region29: #{forward.10} parent=0 // pred_fallthru
    _

// kernel: forward.8
$region0: #{forward.8}
  #allocation0 [shape = 'u32[]', space=smem, size = 0x4, offset = 0x4, fixed_abs, tag = 'smem constant byte address 0x4 - core index']
  #allocation1 [shape = 'u32[144,128]{1,0:T(1,128)}', space=vmem, size = 0x12000, scoped, tag = 'internal scratch']
  %s0 = inlined_call_operand.vmem [shape: f32[16,64], index: 0, kind: input, shape index: {}]
  %s1 = inlined_call_operand.vmem [shape: bf16[64,256], index: 1, kind: input, shape index: {}]
  %s2 = inlined_call_operand.vmem [shape: bf16[64,128], index: 2, kind: input, shape index: {}]
  %s3 = inlined_call_operand.vmem [shape: f32[1,256], index: 3, kind: input, shape index: {}]
  %s4 = inlined_call_operand.vmem [shape: f32[2,8,64], index: 4, kind: output, shape index: {0}]
  %s5 = inlined_call_operand.vmem [shape: f32[2,64], index: 5, kind: output, shape index: {1}]
  %s6 = inlined_call_operand.vmem [shape: f32[2,64], index: 6, kind: output, shape index: {2}]
  %7 = xla_tuple %s4, %s5, %s6
  %s8 = sld [smem:[#allocation0]]
  $region42: #{forward.8} parent=0
    _
  %s10 = ssub.s32 1, %s8
  %s11 = scalar_select 0, %s10, %s8
  // Predicated region
  $region2: #{forward.8} parent=0 // pred_check
    _
  $region3: #{forward.8} parent=0 // pred_check_branch
    %13 = sbr.rel (0) target = $region5
  $region4: #{forward.8} parent=0 // pred_region
    _
  $region5: #{forward.8} parent=0 // pred_fallthru
    _
  // Predicated region
  $region6: #{forward.8} parent=0 // pred_check
    _
  $region7: #{forward.8} parent=0 // pred_check_branch
    %15 = sbr.rel (0) target = $region9
  $region8: #{forward.8} parent=0 // pred_region
    _
  $region9: #{forward.8} parent=0 // pred_fallthru
    _
  // Predicated region
  $region10: #{forward.8} parent=0 // pred_check
    _
  $region11: #{forward.8} parent=0 // pred_check_branch
    %17 = sbr.rel (0) target = $region13
  $region12: #{forward.8} parent=0 // pred_region
    _
  $region13: #{forward.8} parent=0 // pred_fallthru
    _
  // Predicated region
  $region14: #{forward.8} parent=0 // pred_check
    _
  $region15: #{forward.8} parent=0 // pred_check_branch
    %19 = sbr.rel (0) target = $region17
  $region16: #{forward.8} parent=0 // pred_region
    _
  $region17: #{forward.8} parent=0 // pred_fallthru
    _
  %v22 = vld [vmem:[%s0] sm:$0xff]
  %v23 = vld [vmem:[%s0 + $0x8] sm:$0xff]
  %v24 = vpack.c.bf16 %v23, %v22
  %v25 = vld [vmem:[%s1] sm:$0xff]
  %v26 = vld [vmem:[%s1 + $0x8] sm:$0xff]
  %v27 = vld [vmem:[%s1 + $0x10] sm:$0xff]
  %v28 = vld [vmem:[%s1 + $0x18] sm:$0xff]
  %v29 = vld [vmem:[%s1 + $0x20] sm:$0xff]
  %v30 = vld [vmem:[%s1 + $0x28] sm:$0xff]
  %v31 = vld [vmem:[%s1 + $0x30] sm:$0xff]
  %v32 = vld [vmem:[%s1 + $0x38] sm:$0xff]
  %v33 = vld [vmem:[%s3] sm:$0x3]
  %v35 = vlaneseq
  %v36 = vshrl.u32 %v35, 7
  %v37 = vsub.s32 0, %v36
  %v38 = vrot.slane %v33, %v37
  %v39 = vlaneseq
  %v40 = vshrl.u32 %v39, 7
  %v41 = vsub.s32 1, %v40
  %v42 = vrot.slane %v33, %v41
  %v53 = vunpack.c.l.b16 %v25
  %v54 = vunpack.c.h.b16 %v25
  %v55 = vunpack.c.l.b16 %v26
  %v56 = vunpack.c.h.b16 %v26
  %v57 = vunpack.c.l.b16 %v27
  %v58 = vunpack.c.h.b16 %v27
  %v59 = vunpack.c.l.b16 %v28
  %v60 = vunpack.c.h.b16 %v28
  %v61 = vunpack.c.l.b16 %v29
  %v62 = vunpack.c.h.b16 %v29
  %v63 = vunpack.c.l.b16 %v30
  %v64 = vunpack.c.h.b16 %v30
  %v65 = vunpack.c.l.b16 %v31
  %v66 = vunpack.c.h.b16 %v31
  %v67 = vunpack.c.l.b16 %v32
  %v68 = vunpack.c.h.b16 %v32
  %v69 = vpack.c.b16 %v55, %v53
  %v70 = vpack.c.b16 %v56, %v54
  %v71 = vpack.c.b16 %v59, %v57
  %v72 = vpack.c.b16 %v60, %v58
  %v73 = vpack.c.b16 %v63, %v61
  %v74 = vpack.c.b16 %v64, %v62
  %v75 = vpack.c.b16 %v67, %v65
  %v76 = vpack.c.b16 %v68, %v66
  %vm85 = vcmask 523264
  %v87 = vsel %vm85, %v24, 0
  %89 = vmatprep.subr.bf16.mxu0 %v70
  %90 = vmatpush1.bf16.msra.mxu0 %v69
  %91 = vmatprep.subr.bf16.mxu0 %v72
  %92 = vmatpush1.bf16.msra.mxu0 %v71
  %93 = vmatprep.subr.bf16.mxu0 %v74
  %94 = vmatpush1.bf16.msra.mxu0 %v73
  %95 = vmatprep.subr.bf16.mxu0 %v76
  %96 = vmatpush1.bf16.msra.mxu0 %v75
  %97 = vmatprep.subr.bf16.mxu0 0
  %98 = vmatpush1.bf16.msra.mxu0 0
  %99 = vmatprep.subr.bf16.mxu0 0
  %100 = vmatpush1.bf16.msra.mxu0 0
  %101 = vmatprep.subr.bf16.mxu0 0
  %102 = vmatpush1.bf16.msra.mxu0 0
  %103 = vmatprep.subr.bf16.mxu0 0
  %104 = vmatpush1.bf16.msra.mxu0 0
  %105 = vmatprep.subr.bf16.mxu0 0
  %106 = vmatpush1.bf16.msra.mxu0 0
  %107 = vmatprep.subr.bf16.mxu0 0
  %108 = vmatpush1.bf16.msra.mxu0 0
  %109 = vmatprep.subr.bf16.mxu0 0
  %110 = vmatpush1.bf16.msra.mxu0 0
  %111 = vmatprep.subr.bf16.mxu0 0
  %112 = vmatpush1.bf16.msra.mxu0 0
  %113 = vmatprep.subr.bf16.mxu0 0
  %114 = vmatpush1.bf16.msra.mxu0 0
  %115 = vmatprep.subr.bf16.mxu0 0
  %116 = vmatpush1.bf16.msra.mxu0 0
  %117 = vmatprep.subr.bf16.mxu0 0
  %118 = vmatpush1.bf16.msra.mxu0 0
  %119 = vmatprep.subr.bf16.mxu0 0
  %120 = vmatpush1.bf16.msra.mxu0 0
  %121 = vmatprep.mubr.bf16.mxu0 0
  %122 = vmatmul.mubr.bf16.gmra.mrb[0].mxu0 %v87
  %v123 = vpop.f32.mrb[0].mxu0
  %v124 = vadd.f32 %v38, %v123
  %v125 = vpop.f32.mrb[0].mxu0
  %v126 = vadd.f32 %v42, %v125
  %v127 = vpop.f32.mrb[0].mxu0
  %v128 = vadd.f32 %v38, %v127
  %v129 = vpop.f32.mrb[0].mxu0
  %v130 = vadd.f32 %v42, %v129
  %131 = vdwg.mxu0
  %v132 = vld [vmem:[%s2] sm:$0xf]
  %v133 = vld [vmem:[%s2 + $0x4] sm:$0xf]
  %v134 = vld [vmem:[%s2 + $0x8] sm:$0xf]
  %v135 = vld [vmem:[%s2 + $0xc] sm:$0xf]
  %v136 = vld [vmem:[%s2 + $0x10] sm:$0xf]
  %v137 = vld [vmem:[%s2 + $0x14] sm:$0xf]
  %v138 = vld [vmem:[%s2 + $0x18] sm:$0xf]
  %v139 = vld [vmem:[%s2 + $0x1c] sm:$0xf]
  %vm140 = vcmask 261120
  %v143 = vsel %vm140, 1065369472, 0
  %v144 = vsel %vm140, 0, 1065369472
  %v146 = vrot.slane %v144, 7
  %vm147 = vcmask 1040384
  %v149 = vsel %vm147, %v143, %v146
  %v152 = vrot.slane %v130, 4
  %vm154 = vcmask 1041408
  %v155 = vsel %vm154, %v124, %v152
  %v156 = vpack.c.bf16 0.0, 0.0
  %v157 = vmul.bf16 %v156, %v149
  %v166 = vunpack.c.l.b16 %v132
  %v167 = vunpack.c.l.b16 %v133
  %v168 = vunpack.c.l.b16 %v134
  %v169 = vunpack.c.l.b16 %v135
  %v170 = vunpack.c.l.b16 %v136
  %v171 = vunpack.c.l.b16 %v137
  %v172 = vunpack.c.l.b16 %v138
  %v173 = vunpack.c.l.b16 %v139
  %v174 = vpack.c.b16 %v167, %v166
  %v175 = vpack.c.b16 %v169, %v168
  %v176 = vpack.c.b16 %v171, %v170
  %v177 = vpack.c.b16 %v173, %v172
  %v183 = vsel %vm85, %v157, 0
  %185 = vmatprep.subr.bf16.mxu0 0
  %186 = vmatpush1.bf16.msra.mxu0 %v174
  %187 = vmatprep.subr.bf16.mxu0 0
  %188 = vmatpush1.bf16.msra.mxu0 %v175
  %189 = vmatprep.subr.bf16.mxu0 0
  %190 = vmatpush1.bf16.msra.mxu0 %v176
  %191 = vmatprep.subr.bf16.mxu0 0
  %192 = vmatpush1.bf16.msra.mxu0 %v177
  %193 = vmatprep.subr.bf16.mxu0 0
  %194 = vmatpush1.bf16.msra.mxu0 0
  %195 = vmatprep.subr.bf16.mxu0 0
  %196 = vmatpush1.bf16.msra.mxu0 0
  %197 = vmatprep.subr.bf16.mxu0 0
  %198 = vmatpush1.bf16.msra.mxu0 0
  %199 = vmatprep.subr.bf16.mxu0 0
  %200 = vmatpush1.bf16.msra.mxu0 0
  %201 = vmatprep.subr.bf16.mxu0 0
  %202 = vmatpush1.bf16.msra.mxu0 0
  %203 = vmatprep.subr.bf16.mxu0 0
  %204 = vmatpush1.bf16.msra.mxu0 0
  %205 = vmatprep.subr.bf16.mxu0 0
  %206 = vmatpush1.bf16.msra.mxu0 0
  %207 = vmatprep.subr.bf16.mxu0 0
  %208 = vmatpush1.bf16.msra.mxu0 0
  %209 = vmatprep.subr.bf16.mxu0 0
  %210 = vmatpush1.bf16.msra.mxu0 0
  %211 = vmatprep.subr.bf16.mxu0 0
  %212 = vmatpush1.bf16.msra.mxu0 0
  %213 = vmatprep.subr.bf16.mxu0 0
  %214 = vmatpush1.bf16.msra.mxu0 0
  %215 = vmatprep.subr.bf16.mxu0 0
  %216 = vmatpush1.bf16.msra.mxu0 0
  %217 = vmatprep.mubr.bf16.mxu0 0
  %218 = vmatmul.mubr.bf16.gmra.mrb[0].mxu0 %v183
  %v219 = vpop.f32.mrb[0].mxu0
  %v220 = vadd.f32 %v155, %v219
  %v221 = vpop.f32.mrb[0].mxu0
  %v222 = vpop.f32.mrb[0].mxu0
  %v223 = vpop.f32.mrb[0].mxu0
  %224 = vdwg.mxu0
  %v225 = vxor.u32 %v220, 2147483648
  %v226 = vmul.f32 %v225, 1.442695
  %v227 = vpow.pop %v226
  %v228 = vadd.f32 %v227, 1.0
  %v229 = vrcp.pop %v228
  %v230 = vmul.f32 1.0, %v229
  %v231 = vtanh.pop %v220
  %v232 = vmul.f32 %v230, 0.0
  %234 = vrot.lane.b32.xlu0 %v231, 64
  %v235 = vpop.permute.xlu0 %234
  %v237 = vmul.f32 %v230, %v235
  %239 = vrot.lane.b32.xlu0 %v237, 32
  %v240 = vpop.permute.xlu0 %239
  %v242 = vadd.f32 %v232, %v240
  %v243 = vtanh.pop %v242
  %245 = vrot.lane.b32.xlu0 %v243, 64
  %v246 = vpop.permute.xlu0 %245
  %v248 = vmul.f32 %v230, %v246
  %v250 = vrot.slane %v124, 2
  %v252 = vrot.slane %v130, 2
  %v254 = vsel %vm154, %v250, %v252
  %256 = vrot.lane.b32.xlu0 %v248, 32
  %v257 = vpop.permute.xlu0 %256
  %259 = vrot.lane.b32.xlu0 %v248, 64
  %v260 = vpop.permute.xlu0 %259
  %v262 = vsel %vm140, %v257, %v260
  %v263 = vpack.c.bf16 %v262, %v262
  %v264 = vmul.bf16 %v263, %v149
  %v266 = vsel %vm85, %v264, 0
  %268 = vmatprep.subr.bf16.mxu0 0
  %269 = vmatpush1.bf16.msra.mxu0 %v174
  %270 = vmatprep.subr.bf16.mxu0 0
  %271 = vmatpush1.bf16.msra.mxu0 %v175
  %272 = vmatprep.subr.bf16.mxu0 0
  %273 = vmatpush1.bf16.msra.mxu0 %v176
  %274 = vmatprep.subr.bf16.mxu0 0
  %275 = vmatpush1.bf16.msra.mxu0 %v177
  %276 = vmatprep.subr.bf16.mxu0 0
  %277 = vmatpush1.bf16.msra.mxu0 0
  %278 = vmatprep.subr.bf16.mxu0 0
  %279 = vmatpush1.bf16.msra.mxu0 0
  %280 = vmatprep.subr.bf16.mxu0 0
  %281 = vmatpush1.bf16.msra.mxu0 0
  %282 = vmatprep.subr.bf16.mxu0 0
  %283 = vmatpush1.bf16.msra.mxu0 0
  %284 = vmatprep.subr.bf16.mxu0 0
  %285 = vmatpush1.bf16.msra.mxu0 0
  %286 = vmatprep.subr.bf16.mxu0 0
  %287 = vmatpush1.bf16.msra.mxu0 0
  %288 = vmatprep.subr.bf16.mxu0 0
  %289 = vmatpush1.bf16.msra.mxu0 0
  %290 = vmatprep.subr.bf16.mxu0 0
  %291 = vmatpush1.bf16.msra.mxu0 0
  %292 = vmatprep.subr.bf16.mxu0 0
  %293 = vmatpush1.bf16.msra.mxu0 0
  %294 = vmatprep.subr.bf16.mxu0 0
  %295 = vmatpush1.bf16.msra.mxu0 0
  %296 = vmatprep.subr.bf16.mxu0 0
  %297 = vmatpush1.bf16.msra.mxu0 0
  %298 = vmatprep.subr.bf16.mxu0 0
  %299 = vmatpush1.bf16.msra.mxu0 0
  %300 = vmatprep.mubr.bf16.mxu0 0
  %301 = vmatmul.mubr.bf16.gmra.mrb[0].mxu0 %v266
  %v302 = vpop.f32.mrb[0].mxu0
  %v303 = vadd.f32 %v254, %v302
  %v304 = vpop.f32.mrb[0].mxu0
  %v305 = vpop.f32.mrb[0].mxu0
  %v306 = vpop.f32.mrb[0].mxu0
  %307 = vdwg.mxu0
  %v308 = vxor.u32 %v303, 2147483648
  %v309 = vmul.f32 %v308, 1.442695
  %v310 = vpow.pop %v309
  %v311 = vadd.f32 %v310, 1.0
  %v312 = vrcp.pop %v311
  %v313 = vmul.f32 1.0, %v312
  %v314 = vtanh.pop %v303
  %v315 = vmul.f32 %v313, %v242
  %317 = vrot.lane.b32.xlu0 %v314, 64
  %v318 = vpop.permute.xlu0 %317
  %v320 = vmul.f32 %v313, %v318
  %322 = vrot.lane.b32.xlu0 %v320, 32
  %v323 = vpop.permute.xlu0 %322
  %v325 = vadd.f32 %v315, %v323
  %v326 = vtanh.pop %v325
  %328 = vrot.lane.b32.xlu0 %v326, 64
  %v329 = vpop.permute.xlu0 %328
  %v331 = vmul.f32 %v313, %v329
  %v332 = vrot.slane %v124, 4
  %v334 = vsel %vm154, %v332, %v130
  %336 = vrot.lane.b32.xlu0 %v331, 32
  %v337 = vpop.permute.xlu0 %336
  %339 = vrot.lane.b32.xlu0 %v331, 64
  %v340 = vpop.permute.xlu0 %339
  %v342 = vsel %vm140, %v337, %v340
  %v343 = vpack.c.bf16 %v342, %v342
  %v344 = vmul.bf16 %v343, %v149
  %v346 = vsel %vm85, %v344, 0
  %348 = vmatprep.subr.bf16.mxu0 0
  %349 = vmatpush1.bf16.msra.mxu0 %v174
  %350 = vmatprep.subr.bf16.mxu0 0
  %351 = vmatpush1.bf16.msra.mxu0 %v175
  %352 = vmatprep.subr.bf16.mxu0 0
  %353 = vmatpush1.bf16.msra.mxu0 %v176
  %354 = vmatprep.subr.bf16.mxu0 0
  %355 = vmatpush1.bf16.msra.mxu0 %v177
  %356 = vmatprep.subr.bf16.mxu0 0
  %357 = vmatpush1.bf16.msra.mxu0 0
  %358 = vmatprep.subr.bf16.mxu0 0
  %359 = vmatpush1.bf16.msra.mxu0 0
  %360 = vmatprep.subr.bf16.mxu0 0
  %361 = vmatpush1.bf16.msra.mxu0 0
  %362 = vmatprep.subr.bf16.mxu0 0
  %363 = vmatpush1.bf16.msra.mxu0 0
  %364 = vmatprep.subr.bf16.mxu0 0
  %365 = vmatpush1.bf16.msra.mxu0 0
  %366 = vmatprep.subr.bf16.mxu0 0
  %367 = vmatpush1.bf16.msra.mxu0 0
  %368 = vmatprep.subr.bf16.mxu0 0
  %369 = vmatpush1.bf16.msra.mxu0 0
  %370 = vmatprep.subr.bf16.mxu0 0
  %371 = vmatpush1.bf16.msra.mxu0 0
  %372 = vmatprep.subr.bf16.mxu0 0
  %373 = vmatpush1.bf16.msra.mxu0 0
  %374 = vmatprep.subr.bf16.mxu0 0
  %375 = vmatpush1.bf16.msra.mxu0 0
  %376 = vmatprep.subr.bf16.mxu0 0
  %377 = vmatpush1.bf16.msra.mxu0 0
  %378 = vmatprep.subr.bf16.mxu0 0
  %379 = vmatpush1.bf16.msra.mxu0 0
  %380 = vmatprep.mubr.bf16.mxu0 0
  %381 = vmatmul.mubr.bf16.gmra.mrb[0].mxu0 %v346
  %v382 = vpop.f32.mrb[0].mxu0
  %v383 = vadd.f32 %v334, %v382
  %v384 = vpop.f32.mrb[0].mxu0
  %v385 = vpop.f32.mrb[0].mxu0
  %v386 = vpop.f32.mrb[0].mxu0
  %387 = vdwg.mxu0
  %v388 = vxor.u32 %v383, 2147483648
  %v389 = vmul.f32 %v388, 1.442695
  %v390 = vpow.pop %v389
  %v391 = vadd.f32 %v390, 1.0
  %v392 = vrcp.pop %v391
  %v393 = vmul.f32 1.0, %v392
  %v394 = vtanh.pop %v383
  %v395 = vmul.f32 %v393, %v325
  %397 = vrot.lane.b32.xlu0 %v394, 64
  %v398 = vpop.permute.xlu0 %397
  %v400 = vmul.f32 %v393, %v398
  %402 = vrot.lane.b32.xlu0 %v400, 32
  %v403 = vpop.permute.xlu0 %402
  %v405 = vadd.f32 %v395, %v403
  %v406 = vtanh.pop %v405
  %408 = vrot.lane.b32.xlu0 %v406, 64
  %v409 = vpop.permute.xlu0 %408
  %v411 = vmul.f32 %v393, %v409
  %v412 = vrot.slane %v124, 6
  %v414 = vrot.slane %v130, 6
  %v416 = vsel %vm154, %v412, %v414
  %418 = vrot.lane.b32.xlu0 %v411, 32
  %v419 = vpop.permute.xlu0 %418
  %421 = vrot.lane.b32.xlu0 %v411, 64
  %v422 = vpop.permute.xlu0 %421
  %v424 = vsel %vm140, %v419, %v422
  %v425 = vpack.c.bf16 %v424, %v424
  %v426 = vmul.bf16 %v425, %v149
  %v428 = vsel %vm85, %v426, 0
  %430 = vmatprep.subr.bf16.mxu0 0
  %431 = vmatpush1.bf16.msra.mxu0 %v174
  %432 = vmatprep.subr.bf16.mxu0 0
  %433 = vmatpush1.bf16.msra.mxu0 %v175
  %434 = vmatprep.subr.bf16.mxu0 0
  %435 = vmatpush1.bf16.msra.mxu0 %v176
  %436 = vmatprep.subr.bf16.mxu0 0
  %437 = vmatpush1.bf16.msra.mxu0 %v177
  %438 = vmatprep.subr.bf16.mxu0 0
  %439 = vmatpush1.bf16.msra.mxu0 0
  %440 = vmatprep.subr.bf16.mxu0 0
  %441 = vmatpush1.bf16.msra.mxu0 0
  %442 = vmatprep.subr.bf16.mxu0 0
  %443 = vmatpush1.bf16.msra.mxu0 0
  %444 = vmatprep.subr.bf16.mxu0 0
  %445 = vmatpush1.bf16.msra.mxu0 0
  %446 = vmatprep.subr.bf16.mxu0 0
  %447 = vmatpush1.bf16.msra.mxu0 0
  %448 = vmatprep.subr.bf16.mxu0 0
  %449 = vmatpush1.bf16.msra.mxu0 0
  %450 = vmatprep.subr.bf16.mxu0 0
  %451 = vmatpush1.bf16.msra.mxu0 0
  %452 = vmatprep.subr.bf16.mxu0 0
  %453 = vmatpush1.bf16.msra.mxu0 0
  %454 = vmatprep.subr.bf16.mxu0 0
  %455 = vmatpush1.bf16.msra.mxu0 0
  %456 = vmatprep.subr.bf16.mxu0 0
  %457 = vmatpush1.bf16.msra.mxu0 0
  %458 = vmatprep.subr.bf16.mxu0 0
  %459 = vmatpush1.bf16.msra.mxu0 0
  %460 = vmatprep.subr.bf16.mxu0 0
  %461 = vmatpush1.bf16.msra.mxu0 0
  %462 = vmatprep.mubr.bf16.mxu0 0
  %463 = vmatmul.mubr.bf16.gmra.mrb[0].mxu0 %v428
  %v464 = vpop.f32.mrb[0].mxu0
  %v465 = vadd.f32 %v416, %v464
  %v466 = vpop.f32.mrb[0].mxu0
  %v467 = vpop.f32.mrb[0].mxu0
  %v468 = vpop.f32.mrb[0].mxu0
  %469 = vdwg.mxu0
  %v470 = vxor.u32 %v465, 2147483648
  %v471 = vmul.f32 %v470, 1.442695
  %v472 = vpow.pop %v471
  %v473 = vadd.f32 %v472, 1.0
  %v474 = vrcp.pop %v473
  %v475 = vmul.f32 1.0, %v474
  %v476 = vtanh.pop %v465
  %v477 = vmul.f32 %v475, %v405
  %479 = vrot.lane.b32.xlu0 %v476, 64
  %v480 = vpop.permute.xlu0 %479
  %v482 = vmul.f32 %v475, %v480
  %484 = vrot.lane.b32.xlu0 %v482, 32
  %v485 = vpop.permute.xlu0 %484
  %v487 = vadd.f32 %v477, %v485
  %v488 = vtanh.pop %v487
  %490 = vrot.lane.b32.xlu0 %v488, 64
  %v491 = vpop.permute.xlu0 %490
  %v493 = vmul.f32 %v475, %v491
  %v495 = vrot.slane %v126, 4
  %v497 = vsel %vm154, %v128, %v495
  %499 = vrot.lane.b32.xlu0 %v493, 32
  %v500 = vpop.permute.xlu0 %499
  %502 = vrot.lane.b32.xlu0 %v493, 64
  %v503 = vpop.permute.xlu0 %502
  %v505 = vsel %vm140, %v500, %v503
  %v506 = vpack.c.bf16 %v505, %v505
  %v507 = vmul.bf16 %v506, %v149
  %v509 = vsel %vm85, %v507, 0
  %511 = vmatprep.subr.bf16.mxu0 0
  %512 = vmatpush1.bf16.msra.mxu0 %v174
  %513 = vmatprep.subr.bf16.mxu0 0
  %514 = vmatpush1.bf16.msra.mxu0 %v175
  %515 = vmatprep.subr.bf16.mxu0 0
  %516 = vmatpush1.bf16.msra.mxu0 %v176
  %517 = vmatprep.subr.bf16.mxu0 0
  %518 = vmatpush1.bf16.msra.mxu0 %v177
  %519 = vmatprep.subr.bf16.mxu0 0
  %520 = vmatpush1.bf16.msra.mxu0 0
  %521 = vmatprep.subr.bf16.mxu0 0
  %522 = vmatpush1.bf16.msra.mxu0 0
  %523 = vmatprep.subr.bf16.mxu0 0
  %524 = vmatpush1.bf16.msra.mxu0 0
  %525 = vmatprep.subr.bf16.mxu0 0
  %526 = vmatpush1.bf16.msra.mxu0 0
  %527 = vmatprep.subr.bf16.mxu0 0
  %528 = vmatpush1.bf16.msra.mxu0 0
  %529 = vmatprep.subr.bf16.mxu0 0
  %530 = vmatpush1.bf16.msra.mxu0 0
  %531 = vmatprep.subr.bf16.mxu0 0
  %532 = vmatpush1.bf16.msra.mxu0 0
  %533 = vmatprep.subr.bf16.mxu0 0
  %534 = vmatpush1.bf16.msra.mxu0 0
  %535 = vmatprep.subr.bf16.mxu0 0
  %536 = vmatpush1.bf16.msra.mxu0 0
  %537 = vmatprep.subr.bf16.mxu0 0
  %538 = vmatpush1.bf16.msra.mxu0 0
  %539 = vmatprep.subr.bf16.mxu0 0
  %540 = vmatpush1.bf16.msra.mxu0 0
  %541 = vmatprep.subr.bf16.mxu0 0
  %542 = vmatpush1.bf16.msra.mxu0 0
  %543 = vmatprep.mubr.bf16.mxu0 0
  %544 = vmatmul.mubr.bf16.gmra.mrb[0].mxu0 %v509
  %v545 = vpop.f32.mrb[0].mxu0
  %v546 = vadd.f32 %v497, %v545
  %v547 = vpop.f32.mrb[0].mxu0
  %v548 = vpop.f32.mrb[0].mxu0
  %v549 = vpop.f32.mrb[0].mxu0
  %550 = vdwg.mxu0
  %v551 = vxor.u32 %v546, 2147483648
  %v552 = vmul.f32 %v551, 1.442695
  %v553 = vpow.pop %v552
  %v554 = vadd.f32 %v553, 1.0
  %v555 = vrcp.pop %v554
  %v556 = vmul.f32 1.0, %v555
  %v557 = vtanh.pop %v546
  %v558 = vmul.f32 %v556, %v487
  %560 = vrot.lane.b32.xlu0 %v557, 64
  %v561 = vpop.permute.xlu0 %560
  %v563 = vmul.f32 %v556, %v561
  %565 = vrot.lane.b32.xlu0 %v563, 32
  %v566 = vpop.permute.xlu0 %565
  %v568 = vadd.f32 %v558, %v566
  %v569 = vtanh.pop %v568
  %571 = vrot.lane.b32.xlu0 %v569, 64
  %v572 = vpop.permute.xlu0 %571
  %v574 = vmul.f32 %v556, %v572
  %v576 = vrot.slane %v128, 2
  %v578 = vrot.slane %v126, 2
  %v580 = vsel %vm154, %v576, %v578
  %582 = vrot.lane.b32.xlu0 %v574, 32
  %v583 = vpop.permute.xlu0 %582
  %585 = vrot.lane.b32.xlu0 %v574, 64
  %v586 = vpop.permute.xlu0 %585
  %v588 = vsel %vm140, %v583, %v586
  %v589 = vpack.c.bf16 %v588, %v588
  %v590 = vmul.bf16 %v589, %v149
  %v592 = vsel %vm85, %v590, 0
  %594 = vmatprep.subr.bf16.mxu0 0
  %595 = vmatpush1.bf16.msra.mxu0 %v174
  %596 = vmatprep.subr.bf16.mxu0 0
  %597 = vmatpush1.bf16.msra.mxu0 %v175
  %598 = vmatprep.subr.bf16.mxu0 0
  %599 = vmatpush1.bf16.msra.mxu0 %v176
  %600 = vmatprep.subr.bf16.mxu0 0
  %601 = vmatpush1.bf16.msra.mxu0 %v177
  %602 = vmatprep.subr.bf16.mxu0 0
  %603 = vmatpush1.bf16.msra.mxu0 0
  %604 = vmatprep.subr.bf16.mxu0 0
  %605 = vmatpush1.bf16.msra.mxu0 0
  %606 = vmatprep.subr.bf16.mxu0 0
  %607 = vmatpush1.bf16.msra.mxu0 0
  %608 = vmatprep.subr.bf16.mxu0 0
  %609 = vmatpush1.bf16.msra.mxu0 0
  %610 = vmatprep.subr.bf16.mxu0 0
  %611 = vmatpush1.bf16.msra.mxu0 0
  %612 = vmatprep.subr.bf16.mxu0 0
  %613 = vmatpush1.bf16.msra.mxu0 0
  %614 = vmatprep.subr.bf16.mxu0 0
  %615 = vmatpush1.bf16.msra.mxu0 0
  %616 = vmatprep.subr.bf16.mxu0 0
  %617 = vmatpush1.bf16.msra.mxu0 0
  %618 = vmatprep.subr.bf16.mxu0 0
  %619 = vmatpush1.bf16.msra.mxu0 0
  %620 = vmatprep.subr.bf16.mxu0 0
  %621 = vmatpush1.bf16.msra.mxu0 0
  %622 = vmatprep.subr.bf16.mxu0 0
  %623 = vmatpush1.bf16.msra.mxu0 0
  %624 = vmatprep.subr.bf16.mxu0 0
  %625 = vmatpush1.bf16.msra.mxu0 0
  %626 = vmatprep.mubr.bf16.mxu0 0
  %627 = vmatmul.mubr.bf16.gmra.mrb[0].mxu0 %v592
  %v628 = vpop.f32.mrb[0].mxu0
  %v629 = vadd.f32 %v580, %v628
  %v630 = vpop.f32.mrb[0].mxu0
  %v631 = vpop.f32.mrb[0].mxu0
  %v632 = vpop.f32.mrb[0].mxu0
  %633 = vdwg.mxu0
  %v634 = vxor.u32 %v629, 2147483648
  %v635 = vmul.f32 %v634, 1.442695
  %v636 = vpow.pop %v635
  %v637 = vadd.f32 %v636, 1.0
  %v638 = vrcp.pop %v637
  %v639 = vmul.f32 1.0, %v638
  %v640 = vtanh.pop %v629
  %v641 = vmul.f32 %v639, %v568
  %643 = vrot.lane.b32.xlu0 %v640, 64
  %v644 = vpop.permute.xlu0 %643
  %v646 = vmul.f32 %v639, %v644
  %648 = vrot.lane.b32.xlu0 %v646, 32
  %v649 = vpop.permute.xlu0 %648
  %v651 = vadd.f32 %v641, %v649
  %v652 = vtanh.pop %v651
  %654 = vrot.lane.b32.xlu0 %v652, 64
  %v655 = vpop.permute.xlu0 %654
  %v657 = vmul.f32 %v639, %v655
  %v658 = vrot.slane %v128, 4
  %v660 = vsel %vm154, %v658, %v126
  %662 = vrot.lane.b32.xlu0 %v657, 32
  %v663 = vpop.permute.xlu0 %662
  %665 = vrot.lane.b32.xlu0 %v657, 64
  %v666 = vpop.permute.xlu0 %665
  %v668 = vsel %vm140, %v663, %v666
  %v669 = vpack.c.bf16 %v668, %v668
  %v670 = vmul.bf16 %v669, %v149
  %v672 = vsel %vm85, %v670, 0
  %674 = vmatprep.subr.bf16.mxu0 0
  %675 = vmatpush1.bf16.msra.mxu0 %v174
  %676 = vmatprep.subr.bf16.mxu0 0
  %677 = vmatpush1.bf16.msra.mxu0 %v175
  %678 = vmatprep.subr.bf16.mxu0 0
  %679 = vmatpush1.bf16.msra.mxu0 %v176
  %680 = vmatprep.subr.bf16.mxu0 0
  %681 = vmatpush1.bf16.msra.mxu0 %v177
  %682 = vmatprep.subr.bf16.mxu0 0
  %683 = vmatpush1.bf16.msra.mxu0 0
  %684 = vmatprep.subr.bf16.mxu0 0
  %685 = vmatpush1.bf16.msra.mxu0 0
  %686 = vmatprep.subr.bf16.mxu0 0
  %687 = vmatpush1.bf16.msra.mxu0 0
  %688 = vmatprep.subr.bf16.mxu0 0
  %689 = vmatpush1.bf16.msra.mxu0 0
  %690 = vmatprep.subr.bf16.mxu0 0
  %691 = vmatpush1.bf16.msra.mxu0 0
  %692 = vmatprep.subr.bf16.mxu0 0
  %693 = vmatpush1.bf16.msra.mxu0 0
  %694 = vmatprep.subr.bf16.mxu0 0
  %695 = vmatpush1.bf16.msra.mxu0 0
  %696 = vmatprep.subr.bf16.mxu0 0
  %697 = vmatpush1.bf16.msra.mxu0 0
  %698 = vmatprep.subr.bf16.mxu0 0
  %699 = vmatpush1.bf16.msra.mxu0 0
  %700 = vmatprep.subr.bf16.mxu0 0
  %701 = vmatpush1.bf16.msra.mxu0 0
  %702 = vmatprep.subr.bf16.mxu0 0
  %703 = vmatpush1.bf16.msra.mxu0 0
  %704 = vmatprep.subr.bf16.mxu0 0
  %705 = vmatpush1.bf16.msra.mxu0 0
  %706 = vmatprep.mubr.bf16.mxu0 0
  %707 = vmatmul.mubr.bf16.gmra.mrb[0].mxu0 %v672
  %v708 = vpop.f32.mrb[0].mxu0
  %v709 = vadd.f32 %v660, %v708
  %v710 = vpop.f32.mrb[0].mxu0
  %v711 = vpop.f32.mrb[0].mxu0
  %v712 = vpop.f32.mrb[0].mxu0
  %713 = vdwg.mxu0
  %v714 = vxor.u32 %v709, 2147483648
  %v715 = vmul.f32 %v714, 1.442695
  %v716 = vpow.pop %v715
  %v717 = vadd.f32 %v716, 1.0
  %v718 = vrcp.pop %v717
  %v719 = vmul.f32 1.0, %v718
  %v720 = vtanh.pop %v709
  %v721 = vmul.f32 %v719, %v651
  %723 = vrot.lane.b32.xlu0 %v720, 64
  %v724 = vpop.permute.xlu0 %723
  %v726 = vmul.f32 %v719, %v724
  %728 = vrot.lane.b32.xlu0 %v726, 32
  %v729 = vpop.permute.xlu0 %728
  %v731 = vadd.f32 %v721, %v729
  %v732 = vtanh.pop %v731
  %734 = vrot.lane.b32.xlu0 %v732, 64
  %v735 = vpop.permute.xlu0 %734
  %v737 = vmul.f32 %v719, %v735
  %v738 = vrot.slane %v128, 6
  %v740 = vrot.slane %v126, 6
  %v742 = vsel %vm154, %v738, %v740
  %744 = vrot.lane.b32.xlu0 %v737, 32
  %v745 = vpop.permute.xlu0 %744
  %747 = vrot.lane.b32.xlu0 %v737, 64
  %v748 = vpop.permute.xlu0 %747
  %v750 = vsel %vm140, %v745, %v748
  %v751 = vpack.c.bf16 %v750, %v750
  %v752 = vmul.bf16 %v751, %v149
  %v754 = vsel %vm85, %v752, 0
  %756 = vmatprep.subr.bf16.mxu0 0
  %757 = vmatpush1.bf16.msra.mxu0 %v174
  %758 = vmatprep.subr.bf16.mxu0 0
  %759 = vmatpush1.bf16.msra.mxu0 %v175
  %760 = vmatprep.subr.bf16.mxu0 0
  %761 = vmatpush1.bf16.msra.mxu0 %v176
  %762 = vmatprep.subr.bf16.mxu0 0
  %763 = vmatpush1.bf16.msra.mxu0 %v177
  %764 = vmatprep.subr.bf16.mxu0 0
  %765 = vmatpush1.bf16.msra.mxu0 0
  %766 = vmatprep.subr.bf16.mxu0 0
  %767 = vmatpush1.bf16.msra.mxu0 0
  %768 = vmatprep.subr.bf16.mxu0 0
  %769 = vmatpush1.bf16.msra.mxu0 0
  %770 = vmatprep.subr.bf16.mxu0 0
  %771 = vmatpush1.bf16.msra.mxu0 0
  %772 = vmatprep.subr.bf16.mxu0 0
  %773 = vmatpush1.bf16.msra.mxu0 0
  %774 = vmatprep.subr.bf16.mxu0 0
  %775 = vmatpush1.bf16.msra.mxu0 0
  %776 = vmatprep.subr.bf16.mxu0 0
  %777 = vmatpush1.bf16.msra.mxu0 0
  %778 = vmatprep.subr.bf16.mxu0 0
  %779 = vmatpush1.bf16.msra.mxu0 0
  %780 = vmatprep.subr.bf16.mxu0 0
  %781 = vmatpush1.bf16.msra.mxu0 0
  %782 = vmatprep.subr.bf16.mxu0 0
  %783 = vmatpush1.bf16.msra.mxu0 0
  %784 = vmatprep.subr.bf16.mxu0 0
  %785 = vmatpush1.bf16.msra.mxu0 0
  %786 = vmatprep.subr.bf16.mxu0 0
  %787 = vmatpush1.bf16.msra.mxu0 0
  %788 = vmatprep.mubr.bf16.mxu0 0
  %789 = vmatmul.mubr.bf16.gmra.mrb[0].mxu0 %v754
  %v790 = vpop.f32.mrb[0].mxu0
  %v791 = vadd.f32 %v742, %v790
  %v792 = vpop.f32.mrb[0].mxu0
  %v793 = vpop.f32.mrb[0].mxu0
  %v794 = vpop.f32.mrb[0].mxu0
  %795 = vdwg.mxu0
  %v796 = vxor.u32 %v791, 2147483648
  %v797 = vmul.f32 %v796, 1.442695
  %v798 = vpow.pop %v797
  %v799 = vadd.f32 %v798, 1.0
  %v800 = vrcp.pop %v799
  %v801 = vmul.f32 1.0, %v800
  %v802 = vtanh.pop %v791
  %v803 = vmul.f32 %v801, %v731
  %805 = vrot.lane.b32.xlu0 %v802, 64
  %v806 = vpop.permute.xlu0 %805
  %v808 = vmul.f32 %v801, %v806
  %810 = vrot.lane.b32.xlu0 %v808, 32
  %v811 = vpop.permute.xlu0 %810
  %v813 = vadd.f32 %v803, %v811
  %v814 = vtanh.pop %v813
  %816 = vrot.lane.b32.xlu0 %v814, 64
  %v817 = vpop.permute.xlu0 %816
  %v819 = vmul.f32 %v801, %v817
  %v821 = vunpack.c.l.s4 1966171168
  %v822 = vunpack.c.0.s8 %v821
  %v823 = vlaneseq
  %v824 = vshrl.u32 %v823, 7
  %v825 = vsub.s32 %v822, %v824
  %v826 = vrot.slane %v248, %v825
  %v827 = vcombine.high %v826, %v826
  %v829 = vunpack.c.l.s4 1966171168
  %v830 = vunpack.c.0.s8 %v829
  %v831 = vlaneseq
  %v832 = vshrl.u32 %v831, 7
  %v833 = vsub.s32 %v830, %v832
  %v834 = vrot.slane %v826, %v833
  %v836 = vunpack.c.l.s4 1966171168
  %v837 = vunpack.c.0.s8 %v836
  %v838 = vlaneseq
  %v839 = vshrl.u32 %v838, 7
  %v840 = vsub.s32 %v837, %v839
  %v841 = vrot.slane %v827, %v840
  %v845 = vunpack.c.l.s4 1966171168
  %v846 = vunpack.c.0.s8 %v845
  %v847 = vlaneseq
  %v848 = vshrl.u32 %v847, 7
  %v849 = vsub.s32 %v846, %v848
  %v850 = vrot.slane %v331, %v849
  %v851 = vcombine.high %v850, %v850
  %v853 = vunpack.c.l.s4 1966171168
  %v854 = vunpack.c.0.s8 %v853
  %v855 = vlaneseq
  %v856 = vshrl.u32 %v855, 7
  %v857 = vsub.s32 %v854, %v856
  %v858 = vrot.slane %v850, %v857
  %v860 = vunpack.c.l.s4 1966171168
  %v861 = vunpack.c.0.s8 %v860
  %v862 = vlaneseq
  %v863 = vshrl.u32 %v862, 7
  %v864 = vsub.s32 %v861, %v863
  %v865 = vrot.slane %v851, %v864
  %v867 = vunpack.c.l.s4 1966171168
  %v868 = vunpack.c.0.s8 %v867
  %v869 = vlaneseq
  %v870 = vshrl.u32 %v869, 7
  %v871 = vsub.s32 %v868, %v870
  %v872 = vrot.slane %v411, %v871
  %v873 = vcombine.high %v872, %v872
  %v875 = vunpack.c.l.s4 1966171168
  %v876 = vunpack.c.0.s8 %v875
  %v877 = vlaneseq
  %v878 = vshrl.u32 %v877, 7
  %v879 = vsub.s32 %v876, %v878
  %v880 = vrot.slane %v872, %v879
  %v882 = vunpack.c.l.s4 1966171168
  %v883 = vunpack.c.0.s8 %v882
  %v884 = vlaneseq
  %v885 = vshrl.u32 %v884, 7
  %v886 = vsub.s32 %v883, %v885
  %v887 = vrot.slane %v873, %v886
  %v889 = vunpack.c.l.s4 1966171168
  %v890 = vunpack.c.0.s8 %v889
  %v891 = vlaneseq
  %v892 = vshrl.u32 %v891, 7
  %v893 = vsub.s32 %v890, %v892
  %v894 = vrot.slane %v493, %v893
  %v895 = vcombine.high %v894, %v894
  %v897 = vunpack.c.l.s4 1966171168
  %v898 = vunpack.c.0.s8 %v897
  %v899 = vlaneseq
  %v900 = vshrl.u32 %v899, 7
  %v901 = vsub.s32 %v898, %v900
  %v902 = vrot.slane %v894, %v901
  %v904 = vunpack.c.l.s4 1966171168
  %v905 = vunpack.c.0.s8 %v904
  %v906 = vlaneseq
  %v907 = vshrl.u32 %v906, 7
  %v908 = vsub.s32 %v905, %v907
  %v909 = vrot.slane %v895, %v908
  %v911 = vunpack.c.l.s4 1966171168
  %v912 = vunpack.c.0.s8 %v911
  %v913 = vlaneseq
  %v914 = vshrl.u32 %v913, 7
  %v915 = vsub.s32 %v912, %v914
  %v916 = vrot.slane %v574, %v915
  %v917 = vcombine.high %v916, %v916
  %v919 = vunpack.c.l.s4 1966171168
  %v920 = vunpack.c.0.s8 %v919
  %v921 = vlaneseq
  %v922 = vshrl.u32 %v921, 7
  %v923 = vsub.s32 %v920, %v922
  %v924 = vrot.slane %v916, %v923
  %v926 = vunpack.c.l.s4 1966171168
  %v927 = vunpack.c.0.s8 %v926
  %v928 = vlaneseq
  %v929 = vshrl.u32 %v928, 7
  %v930 = vsub.s32 %v927, %v929
  %v931 = vrot.slane %v917, %v930
  %v933 = vunpack.c.l.s4 1966171168
  %v934 = vunpack.c.0.s8 %v933
  %v935 = vlaneseq
  %v936 = vshrl.u32 %v935, 7
  %v937 = vsub.s32 %v934, %v936
  %v938 = vrot.slane %v657, %v937
  %v939 = vcombine.high %v938, %v938
  %v941 = vunpack.c.l.s4 1966171168
  %v942 = vunpack.c.0.s8 %v941
  %v943 = vlaneseq
  %v944 = vshrl.u32 %v943, 7
  %v945 = vsub.s32 %v942, %v944
  %v946 = vrot.slane %v938, %v945
  %v948 = vunpack.c.l.s4 1966171168
  %v949 = vunpack.c.0.s8 %v948
  %v950 = vlaneseq
  %v951 = vshrl.u32 %v950, 7
  %v952 = vsub.s32 %v949, %v951
  %v953 = vrot.slane %v939, %v952
  %v955 = vunpack.c.l.s4 1966171168
  %v956 = vunpack.c.0.s8 %v955
  %v957 = vlaneseq
  %v958 = vshrl.u32 %v957, 7
  %v959 = vsub.s32 %v956, %v958
  %v960 = vrot.slane %v737, %v959
  %v961 = vcombine.high %v960, %v960
  %v963 = vunpack.c.l.s4 1966171168
  %v964 = vunpack.c.0.s8 %v963
  %v965 = vlaneseq
  %v966 = vshrl.u32 %v965, 7
  %v967 = vsub.s32 %v964, %v966
  %v968 = vrot.slane %v960, %v967
  %v970 = vunpack.c.l.s4 1966171168
  %v971 = vunpack.c.0.s8 %v970
  %v972 = vlaneseq
  %v973 = vshrl.u32 %v972, 7
  %v974 = vsub.s32 %v971, %v973
  %v975 = vrot.slane %v961, %v974
  %v978 = vunpack.c.l.s4 1966171168
  %v979 = vunpack.c.0.s8 %v978
  %v980 = vlaneseq
  %v981 = vshrl.u32 %v980, 7
  %v982 = vsub.s32 %v979, %v981
  %v983 = vrot.slane %v819, %v982
  %v984 = vcombine.high %v983, %v983
  %v986 = vunpack.c.l.s4 1966171168
  %v987 = vunpack.c.0.s8 %v986
  %v988 = vlaneseq
  %v989 = vshrl.u32 %v988, 7
  %v990 = vsub.s32 %v987, %v989
  %v991 = vrot.slane %v983, %v990
  %v993 = vunpack.c.l.s4 1966171168
  %v994 = vunpack.c.0.s8 %v993
  %v995 = vlaneseq
  %v996 = vshrl.u32 %v995, 7
  %v997 = vsub.s32 %v994, %v996
  %v998 = vrot.slane %v984, %v997
  %v999 = vlaneseq
  %v1000 = vshrl.u32 %v999, 7
  %v1001 = vsub.s32 0, %v1000
  %v1002 = vrot.slane %v858, %v1001
  %v1003 = vlaneseq
  %v1004 = vshrl.u32 %v1003, 7
  %v1005 = vsub.s32 0, %v1004
  %v1006 = vrot.slane %v865, %v1005
  %v1009 = vlaneseq
  %v1010 = vshrl.u32 %v1009, 7
  %v1011 = vsub.s32 0, %v1010
  %v1012 = vrot.slane %v880, %v1011
  %v1013 = vlaneseq
  %v1014 = vshrl.u32 %v1013, 7
  %v1015 = vsub.s32 0, %v1014
  %v1016 = vrot.slane %v887, %v1015
  %v1019 = vlaneseq
  %v1020 = vshrl.u32 %v1019, 7
  %v1021 = vsub.s32 0, %v1020
  %v1022 = vrot.slane %v902, %v1021
  %v1023 = vlaneseq
  %v1024 = vshrl.u32 %v1023, 7
  %v1025 = vsub.s32 0, %v1024
  %v1026 = vrot.slane %v909, %v1025
  %v1029 = vlaneseq
  %v1030 = vshrl.u32 %v1029, 7
  %v1031 = vsub.s32 0, %v1030
  %v1032 = vrot.slane %v924, %v1031
  %v1033 = vlaneseq
  %v1034 = vshrl.u32 %v1033, 7
  %v1035 = vsub.s32 0, %v1034
  %v1036 = vrot.slane %v931, %v1035
  %v1039 = vlaneseq
  %v1040 = vshrl.u32 %v1039, 7
  %v1041 = vsub.s32 0, %v1040
  %v1042 = vrot.slane %v946, %v1041
  %v1043 = vlaneseq
  %v1044 = vshrl.u32 %v1043, 7
  %v1045 = vsub.s32 0, %v1044
  %v1046 = vrot.slane %v953, %v1045
  %v1049 = vlaneseq
  %v1050 = vshrl.u32 %v1049, 7
  %v1051 = vsub.s32 0, %v1050
  %v1052 = vrot.slane %v968, %v1051
  %v1053 = vlaneseq
  %v1054 = vshrl.u32 %v1053, 7
  %v1055 = vsub.s32 0, %v1054
  %v1056 = vrot.slane %v975, %v1055
  %v1059 = vlaneseq
  %v1060 = vshrl.u32 %v1059, 7
  %v1061 = vsub.s32 0, %v1060
  %v1062 = vrot.slane %v991, %v1061
  %v1063 = vlaneseq
  %v1064 = vshrl.u32 %v1063, 7
  %v1065 = vsub.s32 0, %v1064
  %v1066 = vrot.slane %v998, %v1065
  %v1069 = vsel %vm147, %v834, %v1002
  %v1070 = vsel %vm147, %v841, %v1006
  %v1071 = vsel %vm154, %v1069, %v1012
  %v1072 = vsel %vm154, %v1070, %v1016
  %vm1073 = vcmask 1042432
  %v1074 = vsel %vm1073, %v1071, %v1022
  %v1075 = vsel %vm1073, %v1072, %v1026
  %vm1076 = vcmask 1043456
  %v1077 = vsel %vm1076, %v1074, %v1032
  %v1078 = vsel %vm1076, %v1075, %v1036
  %vm1079 = vcmask 1044480
  %v1080 = vsel %vm1079, %v1077, %v1042
  %v1081 = vsel %vm1079, %v1078, %v1046
  %vm1082 = vcmask 1045504
  %v1083 = vsel %vm1082, %v1080, %v1052
  %v1084 = vsel %vm1082, %v1081, %v1056
  %vm1085 = vcmask 1046528
  %v1086 = vsel %vm1085, %v1083, %v1062
  %v1087 = vsel %vm1085, %v1084, %v1066
  %v1088 = vcombine.high %v991, %v991
  %v1089 = vcombine.high %v998, %v998
  %v1092 = vcombine.high %v968, %v968
  %v1093 = vcombine.high %v975, %v975
  %v1094 = vcombine.high %v946, %v946
  %v1095 = vcombine.high %v953, %v953
  %v1096 = vcombine.high %v924, %v924
  %v1097 = vcombine.high %v931, %v931
  %v1098 = vcombine.high %v902, %v902
  %v1099 = vcombine.high %v909, %v909
  %v1100 = vcombine.high %v880, %v880
  %v1101 = vcombine.high %v887, %v887
  %v1102 = vcombine.high %v858, %v858
  %v1103 = vcombine.high %v865, %v865
  %v1104 = vcombine.high %v834, %v834
  %v1105 = vcombine.high %v841, %v841
  %v1106 = vlaneseq
  %v1107 = vshrl.u32 %v1106, 7
  %v1108 = vsub.s32 0, %v1107
  %v1109 = vrot.slane %v1092, %v1108
  %v1110 = vlaneseq
  %v1111 = vshrl.u32 %v1110, 7
  %v1112 = vsub.s32 0, %v1111
  %v1113 = vrot.slane %v1093, %v1112
  %v1116 = vlaneseq
  %v1117 = vshrl.u32 %v1116, 7
  %v1118 = vsub.s32 0, %v1117
  %v1119 = vrot.slane %v1094, %v1118
  %v1120 = vlaneseq
  %v1121 = vshrl.u32 %v1120, 7
  %v1122 = vsub.s32 0, %v1121
  %v1123 = vrot.slane %v1095, %v1122
  %v1126 = vlaneseq
  %v1127 = vshrl.u32 %v1126, 7
  %v1128 = vsub.s32 0, %v1127
  %v1129 = vrot.slane %v1096, %v1128
  %v1130 = vlaneseq
  %v1131 = vshrl.u32 %v1130, 7
  %v1132 = vsub.s32 0, %v1131
  %v1133 = vrot.slane %v1097, %v1132
  %v1136 = vlaneseq
  %v1137 = vshrl.u32 %v1136, 7
  %v1138 = vsub.s32 0, %v1137
  %v1139 = vrot.slane %v1098, %v1138
  %v1140 = vlaneseq
  %v1141 = vshrl.u32 %v1140, 7
  %v1142 = vsub.s32 0, %v1141
  %v1143 = vrot.slane %v1099, %v1142
  %v1146 = vlaneseq
  %v1147 = vshrl.u32 %v1146, 7
  %v1148 = vsub.s32 0, %v1147
  %v1149 = vrot.slane %v1100, %v1148
  %v1150 = vlaneseq
  %v1151 = vshrl.u32 %v1150, 7
  %v1152 = vsub.s32 0, %v1151
  %v1153 = vrot.slane %v1101, %v1152
  %v1156 = vlaneseq
  %v1157 = vshrl.u32 %v1156, 7
  %v1158 = vsub.s32 0, %v1157
  %v1159 = vrot.slane %v1102, %v1158
  %v1160 = vlaneseq
  %v1161 = vshrl.u32 %v1160, 7
  %v1162 = vsub.s32 0, %v1161
  %v1163 = vrot.slane %v1103, %v1162
  %v1166 = vlaneseq
  %v1167 = vshrl.u32 %v1166, 7
  %v1168 = vsub.s32 0, %v1167
  %v1169 = vrot.slane %v1104, %v1168
  %v1170 = vlaneseq
  %v1171 = vshrl.u32 %v1170, 7
  %v1172 = vsub.s32 0, %v1171
  %v1173 = vrot.slane %v1105, %v1172
  %v1176 = vsel %vm147, %v1088, %v1109
  %v1177 = vsel %vm147, %v1089, %v1113
  %v1178 = vsel %vm154, %v1176, %v1119
  %v1179 = vsel %vm154, %v1177, %v1123
  %v1180 = vsel %vm1073, %v1178, %v1129
  %v1181 = vsel %vm1073, %v1179, %v1133
  %v1182 = vsel %vm1076, %v1180, %v1139
  %v1183 = vsel %vm1076, %v1181, %v1143
  %v1184 = vsel %vm1079, %v1182, %v1149
  %v1185 = vsel %vm1079, %v1183, %v1153
  %v1186 = vsel %vm1082, %v1184, %v1159
  %v1187 = vsel %vm1082, %v1185, %v1163
  %v1188 = vsel %vm1085, %v1186, %v1169
  %v1189 = vsel %vm1085, %v1187, %v1173
  %1192 = vrot.lane.b32.xlu0 %v1086, 32
  %v1193 = vpop.permute.xlu0 %1192
  %1194 = vrot.lane.b32.xlu0 %v1087, 32
  %v1195 = vpop.permute.xlu0 %1194
  %1200 = vrot.lane.b32.xlu0 %v1188, 64
  %v1201 = vpop.permute.xlu0 %1200
  %1202 = vrot.lane.b32.xlu0 %v1189, 64
  %v1203 = vpop.permute.xlu0 %1202
  %v1206 = vsel %vm140, %v1193, %v1201
  %v1207 = vsel %vm140, %v1195, %v1203
  %1208 = vst.msk [vmem:[%s4] sm:$0xff] %vm85, %v1206
  %1209 = vst.msk [vmem:[%s4 + $0x8] sm:$0xff] %vm85, %v1207
  %1210 = vrot.lane.b32.xlu0 %v819, 32
  %v1211 = vpop.permute.xlu0 %1210
  %v1213 = vrot.slane %v819, 2
  %1214 = vrot.lane.b32.xlu0 %v1213, 64
  %v1215 = vpop.permute.xlu0 %1214
  %v1217 = vsel %vm140, %v1211, %v1215
  %vm1218 = vcmask 517120
  %1219 = vst.msk [vmem:[%s5] sm:$0x3] %vm1218, %v1217
  %1221 = vrot.lane.b32.xlu0 %v813, 96
  %v1222 = vpop.permute.xlu0 %1221
  %v1224 = vrot.slane %v813, 2
  %v1226 = vsel %vm140, %v1222, %v1224
  %1227 = vst.msk [vmem:[%s6] sm:$0x3] %vm1218, %v1226
  // Predicated region
  $region18: #{forward.8} parent=0 // pred_check
    _
  $region19: #{forward.8} parent=0 // pred_check_branch
    %1229 = sbr.rel (0) target = $region21
  $region20: #{forward.8} parent=0 // pred_region
    _
  $region21: #{forward.8} parent=0 // pred_fallthru
    _
  // Predicated region
  $region22: #{forward.8} parent=0 // pred_check
    _
  $region23: #{forward.8} parent=0 // pred_check_branch
    %1231 = sbr.rel (0) target = $region25
  $region24: #{forward.8} parent=0 // pred_region
    _
  $region25: #{forward.8} parent=0 // pred_fallthru
    _
  // Predicated region
  $region26: #{forward.8} parent=0 // pred_check
    _
  $region27: #{forward.8} parent=0 // pred_check_branch
    %1233 = sbr.rel (0) target = $region29
  $region28: #{forward.8} parent=0 // pred_region
    _
  $region29: #{forward.8} parent=0 // pred_fallthru
    _
  // Predicated region
  $region30: #{forward.8} parent=0 // pred_check
    _
  $region31: #{forward.8} parent=0 // pred_check_branch
    %1235 = sbr.rel (0) target = $region33
  $region32: #{forward.8} parent=0 // pred_region
    _
  $region33: #{forward.8} parent=0 // pred_fallthru
    _
  // Predicated region
  $region34: #{forward.8} parent=0 // pred_check
    _
  $region35: #{forward.8} parent=0 // pred_check_branch
    %1237 = sbr.rel (0) target = $region37
  $region36: #{forward.8} parent=0 // pred_region
    _
  $region37: #{forward.8} parent=0 // pred_fallthru
    _
  // Predicated region
  $region38: #{forward.8} parent=0 // pred_check
    _
  $region39: #{forward.8} parent=0 // pred_check_branch
    %1239 = sbr.rel (0) target = $region41
  $region40: #{forward.8} parent=0 // pred_region
    _
  $region41: #{forward.8} parent=0 // pred_fallthru
    _

// kernel: forward.11
$region0: #{forward.11}
  #allocation0 [shape = 'u32[]', space=smem, size = 0x4, offset = 0x4, fixed_abs, tag = 'smem constant byte address 0x4 - core index']
  #allocation1 [shape = 'u32[144,128]{1,0:T(1,128)}', space=vmem, size = 0x12000, scoped, tag = 'internal scratch']
  %s0 = inlined_call_operand.vmem [shape: f32[16,32], index: 0, kind: input, shape index: {}]
  %s1 = inlined_call_operand.vmem [shape: f32[1,32], index: 1, kind: input, shape index: {}]
  %s2 = inlined_call_operand.vmem [shape: f32[1,32], index: 2, kind: input, shape index: {}]
  %s3 = inlined_call_operand.vmem [shape: bf16[32,128], index: 3, kind: input, shape index: {}]
  %s4 = inlined_call_operand.vmem [shape: bf16[32,128], index: 4, kind: input, shape index: {}]
  %s5 = inlined_call_operand.vmem [shape: f32[1,128], index: 5, kind: input, shape index: {}]
  %s6 = inlined_call_operand.vmem [shape: f32[2,32], index: 6, kind: input, shape index: {}]
  %s7 = inlined_call_operand.vmem [shape: f32[2,32], index: 7, kind: input, shape index: {}]
  %s8 = inlined_call_operand.vmem [shape: f32[8,2,32], index: 8, kind: output, shape index: {}]
  %s9 = sld [smem:[#allocation0]]
  $region42: #{forward.11} parent=0
    _
  %s11 = ssub.s32 1, %s9
  %s12 = scalar_select 0, %s11, %s9
  // Predicated region
  $region2: #{forward.11} parent=0 // pred_check
    _
  $region3: #{forward.11} parent=0 // pred_check_branch
    %14 = sbr.rel (0) target = $region5
  $region4: #{forward.11} parent=0 // pred_region
    _
  $region5: #{forward.11} parent=0 // pred_fallthru
    _
  // Predicated region
  $region6: #{forward.11} parent=0 // pred_check
    _
  $region7: #{forward.11} parent=0 // pred_check_branch
    %16 = sbr.rel (0) target = $region9
  $region8: #{forward.11} parent=0 // pred_region
    _
  $region9: #{forward.11} parent=0 // pred_fallthru
    _
  // Predicated region
  $region10: #{forward.11} parent=0 // pred_check
    _
  $region11: #{forward.11} parent=0 // pred_check_branch
    %18 = sbr.rel (0) target = $region13
  $region12: #{forward.11} parent=0 // pred_region
    _
  $region13: #{forward.11} parent=0 // pred_fallthru
    _
  // Predicated region
  $region14: #{forward.11} parent=0 // pred_check
    _
  $region15: #{forward.11} parent=0 // pred_check_branch
    %20 = sbr.rel (0) target = $region17
  $region16: #{forward.11} parent=0 // pred_region
    _
  $region17: #{forward.11} parent=0 // pred_fallthru
    _
  // Predicated region
  $region18: #{forward.11} parent=0 // pred_check
    _
  $region19: #{forward.11} parent=0 // pred_check_branch
    %22 = sbr.rel (0) target = $region21
  $region20: #{forward.11} parent=0 // pred_region
    _
  $region21: #{forward.11} parent=0 // pred_fallthru
    _
  // Predicated region
  $region22: #{forward.11} parent=0 // pred_check
    _
  $region23: #{forward.11} parent=0 // pred_check_branch
    %24 = sbr.rel (0) target = $region25
  $region24: #{forward.11} parent=0 // pred_region
    _
  $region25: #{forward.11} parent=0 // pred_fallthru
    _
  // Predicated region
  $region26: #{forward.11} parent=0 // pred_check
    _
  $region27: #{forward.11} parent=0 // pred_check_branch
    %26 = sbr.rel (0) target = $region29
  $region28: #{forward.11} parent=0 // pred_region
    _
  $region29: #{forward.11} parent=0 // pred_fallthru
    _
  // Predicated region
  $region30: #{forward.11} parent=0 // pred_check
    _
  $region31: #{forward.11} parent=0 // pred_check_branch
    %28 = sbr.rel (0) target = $region33
  $region32: #{forward.11} parent=0 // pred_region
    _
  $region33: #{forward.11} parent=0 // pred_fallthru
    _
  %v30 = vld [vmem:[%s0] sm:$0xff]
  %v31 = vld [vmem:[%s0 + $0x8] sm:$0xff]
  %v32 = vld [vmem:[%s1] sm:$0x1]
  %v33 = vld [vmem:[%s2] sm:$0x1]
  %vm34 = vcmask 261120
  %v35 = vsel %vm34, %v30, 0.0
  %36 = vadd.xlane.f32.xlu0 %v35
  %v37 = vpop.xlane.xlu0 %36
  %v38 = vsel %vm34, %v31, 0.0
  %39 = vadd.xlane.f32.xlu0 %v38
  %v40 = vpop.xlane.xlu0 %39
  %v41 = vrcp.pop 32.0
  %v42 = vmul.f32 %v37, %v41
  %v43 = vmul.f32 %v40, %v41
  %v44 = vsub.f32 %v30, %v42
  %v45 = vsub.f32 %v31, %v43
  %v46 = vmul.f32 %v44, %v44
  %v47 = vmul.f32 %v45, %v45
  %v48 = vsel %vm34, %v46, 0.0
  %49 = vadd.xlane.f32.xlu0 %v48
  %v50 = vpop.xlane.xlu0 %49
  %v51 = vsel %vm34, %v47, 0.0
  %52 = vadd.xlane.f32.xlu0 %v51
  %v53 = vpop.xlane.xlu0 %52
  %v54 = vmul.f32 %v50, %v41
  %v55 = vmul.f32 %v53, %v41
  %v56 = vadd.f32 %v54, 1e-05
  %v57 = vadd.f32 %v55, 1e-05
  %v58 = vrsqrt.pop %v56
  %v59 = vrsqrt.pop %v57
  %v60 = vmul.f32 %v44, %v58
  %v61 = vmul.f32 %v45, %v59
  %v63 = vlaneseq
  %v64 = vshrl.u32 %v63, 7
  %v65 = vsub.s32 0, %v64
  %v66 = vrot.slane %v32, %v65
  %v68 = vmul.f32 %v60, %v66
  %v69 = vmul.f32 %v61, %v66
  %v71 = vlaneseq
  %v72 = vshrl.u32 %v71, 7
  %v73 = vsub.s32 0, %v72
  %v74 = vrot.slane %v33, %v73
  %v76 = vadd.f32 %v68, %v74
  %v77 = vadd.f32 %v69, %v74
  %v78 = vpack.c.bf16 %v77, %v76
  %v79 = vld [vmem:[%s3] sm:$0xf]
  %v80 = vld [vmem:[%s3 + $0x4] sm:$0xf]
  %v81 = vld [vmem:[%s3 + $0x8] sm:$0xf]
  %v82 = vld [vmem:[%s3 + $0xc] sm:$0xf]
  %v83 = vld [vmem:[%s5] sm:$0x1]
  %v85 = vlaneseq
  %v86 = vshrl.u32 %v85, 7
  %v87 = vsub.s32 0, %v86
  %v88 = vrot.slane %v83, %v87
  %v94 = vunpack.c.l.b16 %v79
  %v95 = vunpack.c.l.b16 %v80
  %v96 = vunpack.c.l.b16 %v81
  %v97 = vunpack.c.l.b16 %v82
  %v98 = vpack.c.b16 %v95, %v94
  %v99 = vpack.c.b16 %v97, %v96
  %v103 = vsel %vm34, %v78, 0
  %105 = vmatprep.subr.bf16.mxu0 0
  %106 = vmatpush1.bf16.msra.mxu0 %v98
  %107 = vmatprep.subr.bf16.mxu0 0
  %108 = vmatpush1.bf16.msra.mxu0 %v99
  %109 = vmatprep.subr.bf16.mxu0 0
  %110 = vmatpush1.bf16.msra.mxu0 0
  %111 = vmatprep.subr.bf16.mxu0 0
  %112 = vmatpush1.bf16.msra.mxu0 0
  %113 = vmatprep.subr.bf16.mxu0 0
  %114 = vmatpush1.bf16.msra.mxu0 0
  %115 = vmatprep.subr.bf16.mxu0 0
  %116 = vmatpush1.bf16.msra.mxu0 0
  %117 = vmatprep.subr.bf16.mxu0 0
  %118 = vmatpush1.bf16.msra.mxu0 0
  %119 = vmatprep.subr.bf16.mxu0 0
  %120 = vmatpush1.bf16.msra.mxu0 0
  %121 = vmatprep.subr.bf16.mxu0 0
  %122 = vmatpush1.bf16.msra.mxu0 0
  %123 = vmatprep.subr.bf16.mxu0 0
  %124 = vmatpush1.bf16.msra.mxu0 0
  %125 = vmatprep.subr.bf16.mxu0 0
  %126 = vmatpush1.bf16.msra.mxu0 0
  %127 = vmatprep.subr.bf16.mxu0 0
  %128 = vmatpush1.bf16.msra.mxu0 0
  %129 = vmatprep.subr.bf16.mxu0 0
  %130 = vmatpush1.bf16.msra.mxu0 0
  %131 = vmatprep.subr.bf16.mxu0 0
  %132 = vmatpush1.bf16.msra.mxu0 0
  %133 = vmatprep.subr.bf16.mxu0 0
  %134 = vmatpush1.bf16.msra.mxu0 0
  %135 = vmatprep.subr.bf16.mxu0 0
  %136 = vmatpush1.bf16.msra.mxu0 0
  %137 = vmatprep.mubr.bf16.mxu0 0
  %138 = vmatmul.mubr.bf16.gmra.mrb[0].mxu0 %v103
  %v139 = vpop.f32.mrb[0].mxu0
  %v140 = vadd.f32 %v88, %v139
  %v141 = vpop.f32.mrb[0].mxu0
  %v142 = vpop.f32.mrb[0].mxu0
  %v143 = vadd.f32 %v88, %v142
  %v144 = vpop.f32.mrb[0].mxu0
  %145 = vdwg.mxu0
  %v146 = vld [vmem:[%s4] sm:$0xf]
  %v147 = vld [vmem:[%s4 + $0x4] sm:$0xf]
  %v148 = vld [vmem:[%s4 + $0x8] sm:$0xf]
  %v149 = vld [vmem:[%s4 + $0xc] sm:$0xf]
  %v150 = vld [vmem:[%s6] sm:$0x3]
  %v151 = vld [vmem:[%s7] sm:$0x3]
  %v152 = vpack.c.bf16 %v150, %v150
  %v157 = vunpack.c.l.b16 %v146
  %v158 = vunpack.c.l.b16 %v147
  %v159 = vunpack.c.l.b16 %v148
  %v160 = vunpack.c.l.b16 %v149
  %v161 = vpack.c.b16 %v158, %v157
  %v162 = vpack.c.b16 %v160, %v159
  %v166 = vsel %vm34, %v152, 0
  %168 = vmatprep.subr.bf16.mxu0 0
  %169 = vmatpush1.bf16.msra.mxu0 %v161
  %170 = vmatprep.subr.bf16.mxu0 0
  %171 = vmatpush1.bf16.msra.mxu0 %v162
  %172 = vmatprep.subr.bf16.mxu0 0
  %173 = vmatpush1.bf16.msra.mxu0 0
  %174 = vmatprep.subr.bf16.mxu0 0
  %175 = vmatpush1.bf16.msra.mxu0 0
  %176 = vmatprep.subr.bf16.mxu0 0
  %177 = vmatpush1.bf16.msra.mxu0 0
  %178 = vmatprep.subr.bf16.mxu0 0
  %179 = vmatpush1.bf16.msra.mxu0 0
  %180 = vmatprep.subr.bf16.mxu0 0
  %181 = vmatpush1.bf16.msra.mxu0 0
  %182 = vmatprep.subr.bf16.mxu0 0
  %183 = vmatpush1.bf16.msra.mxu0 0
  %184 = vmatprep.subr.bf16.mxu0 0
  %185 = vmatpush1.bf16.msra.mxu0 0
  %186 = vmatprep.subr.bf16.mxu0 0
  %187 = vmatpush1.bf16.msra.mxu0 0
  %188 = vmatprep.subr.bf16.mxu0 0
  %189 = vmatpush1.bf16.msra.mxu0 0
  %190 = vmatprep.subr.bf16.mxu0 0
  %191 = vmatpush1.bf16.msra.mxu0 0
  %192 = vmatprep.subr.bf16.mxu0 0
  %193 = vmatpush1.bf16.msra.mxu0 0
  %194 = vmatprep.subr.bf16.mxu0 0
  %195 = vmatpush1.bf16.msra.mxu0 0
  %196 = vmatprep.subr.bf16.mxu0 0
  %197 = vmatpush1.bf16.msra.mxu0 0
  %198 = vmatprep.subr.bf16.mxu0 0
  %199 = vmatpush1.bf16.msra.mxu0 0
  %200 = vmatprep.mubr.bf16.mxu0 0
  %201 = vmatmul.mubr.bf16.gmra.mrb[0].mxu0 %v166
  %v202 = vpop.f32.mrb[0].mxu0
  %v203 = vadd.f32 %v140, %v202
  %v204 = vpop.f32.mrb[0].mxu0
  %v205 = vpop.f32.mrb[0].mxu0
  %v206 = vpop.f32.mrb[0].mxu0
  %207 = vdwg.mxu0
  %v208 = vxor.u32 %v203, 2147483648
  %v209 = vmul.f32 %v208, 1.442695
  %v210 = vpow.pop %v209
  %v211 = vadd.f32 %v210, 1.0
  %v212 = vrcp.pop %v211
  %v213 = vmul.f32 1.0, %v212
  %v214 = vtanh.pop %v203
  %216 = vrot.lane.b32.xlu0 %v151, 32
  %v217 = vpop.permute.xlu0 %216
  %v219 = vmul.f32 %v213, %v217
  %221 = vrot.lane.b32.xlu0 %v214, 64
  %v222 = vpop.permute.xlu0 %221
  %v224 = vmul.f32 %v213, %v222
  %226 = vrot.lane.b32.xlu0 %v224, 32
  %v227 = vpop.permute.xlu0 %226
  %v229 = vadd.f32 %v219, %v227
  %v230 = vtanh.pop %v229
  %232 = vrot.lane.b32.xlu0 %v230, 64
  %v233 = vpop.permute.xlu0 %232
  %v235 = vmul.f32 %v213, %v233
  %v236 = vpack.c.bf16 %v235, %v235
  %238 = vrot.lane.b32.xlu0 %v236, 32
  %v239 = vpop.permute.xlu0 %238
  %v241 = vrot.slane %v140, 2
  %v244 = vsel %vm34, %v239, 0
  %246 = vmatprep.subr.bf16.mxu0 0
  %247 = vmatpush1.bf16.msra.mxu0 %v161
  %248 = vmatprep.subr.bf16.mxu0 0
  %249 = vmatpush1.bf16.msra.mxu0 %v162
  %250 = vmatprep.subr.bf16.mxu0 0
  %251 = vmatpush1.bf16.msra.mxu0 0
  %252 = vmatprep.subr.bf16.mxu0 0
  %253 = vmatpush1.bf16.msra.mxu0 0
  %254 = vmatprep.subr.bf16.mxu0 0
  %255 = vmatpush1.bf16.msra.mxu0 0
  %256 = vmatprep.subr.bf16.mxu0 0
  %257 = vmatpush1.bf16.msra.mxu0 0
  %258 = vmatprep.subr.bf16.mxu0 0
  %259 = vmatpush1.bf16.msra.mxu0 0
  %260 = vmatprep.subr.bf16.mxu0 0
  %261 = vmatpush1.bf16.msra.mxu0 0
  %262 = vmatprep.subr.bf16.mxu0 0
  %263 = vmatpush1.bf16.msra.mxu0 0
  %264 = vmatprep.subr.bf16.mxu0 0
  %265 = vmatpush1.bf16.msra.mxu0 0
  %266 = vmatprep.subr.bf16.mxu0 0
  %267 = vmatpush1.bf16.msra.mxu0 0
  %268 = vmatprep.subr.bf16.mxu0 0
  %269 = vmatpush1.bf16.msra.mxu0 0
  %270 = vmatprep.subr.bf16.mxu0 0
  %271 = vmatpush1.bf16.msra.mxu0 0
  %272 = vmatprep.subr.bf16.mxu0 0
  %273 = vmatpush1.bf16.msra.mxu0 0
  %274 = vmatprep.subr.bf16.mxu0 0
  %275 = vmatpush1.bf16.msra.mxu0 0
  %276 = vmatprep.subr.bf16.mxu0 0
  %277 = vmatpush1.bf16.msra.mxu0 0
  %278 = vmatprep.mubr.bf16.mxu0 0
  %279 = vmatmul.mubr.bf16.gmra.mrb[0].mxu0 %v244
  %v280 = vpop.f32.mrb[0].mxu0
  %v281 = vadd.f32 %v241, %v280
  %v282 = vpop.f32.mrb[0].mxu0
  %v283 = vpop.f32.mrb[0].mxu0
  %v284 = vpop.f32.mrb[0].mxu0
  %285 = vdwg.mxu0
  %v286 = vxor.u32 %v281, 2147483648
  %v287 = vmul.f32 %v286, 1.442695
  %v288 = vpow.pop %v287
  %v289 = vadd.f32 %v288, 1.0
  %v290 = vrcp.pop %v289
  %v291 = vmul.f32 1.0, %v290
  %v292 = vtanh.pop %v281
  %v293 = vmul.f32 %v291, %v229
  %295 = vrot.lane.b32.xlu0 %v292, 64
  %v296 = vpop.permute.xlu0 %295
  %v298 = vmul.f32 %v291, %v296
  %300 = vrot.lane.b32.xlu0 %v298, 32
  %v301 = vpop.permute.xlu0 %300
  %v303 = vadd.f32 %v293, %v301
  %v304 = vtanh.pop %v303
  %306 = vrot.lane.b32.xlu0 %v304, 64
  %v307 = vpop.permute.xlu0 %306
  %v309 = vmul.f32 %v291, %v307
  %v310 = vpack.c.bf16 %v309, %v309
  %312 = vrot.lane.b32.xlu0 %v310, 32
  %v313 = vpop.permute.xlu0 %312
  %v314 = vrot.slane %v140, 4
  %v317 = vsel %vm34, %v313, 0
  %319 = vmatprep.subr.bf16.mxu0 0
  %320 = vmatpush1.bf16.msra.mxu0 %v161
  %321 = vmatprep.subr.bf16.mxu0 0
  %322 = vmatpush1.bf16.msra.mxu0 %v162
  %323 = vmatprep.subr.bf16.mxu0 0
  %324 = vmatpush1.bf16.msra.mxu0 0
  %325 = vmatprep.subr.bf16.mxu0 0
  %326 = vmatpush1.bf16.msra.mxu0 0
  %327 = vmatprep.subr.bf16.mxu0 0
  %328 = vmatpush1.bf16.msra.mxu0 0
  %329 = vmatprep.subr.bf16.mxu0 0
  %330 = vmatpush1.bf16.msra.mxu0 0
  %331 = vmatprep.subr.bf16.mxu0 0
  %332 = vmatpush1.bf16.msra.mxu0 0
  %333 = vmatprep.subr.bf16.mxu0 0
  %334 = vmatpush1.bf16.msra.mxu0 0
  %335 = vmatprep.subr.bf16.mxu0 0
  %336 = vmatpush1.bf16.msra.mxu0 0
  %337 = vmatprep.subr.bf16.mxu0 0
  %338 = vmatpush1.bf16.msra.mxu0 0
  %339 = vmatprep.subr.bf16.mxu0 0
  %340 = vmatpush1.bf16.msra.mxu0 0
  %341 = vmatprep.subr.bf16.mxu0 0
  %342 = vmatpush1.bf16.msra.mxu0 0
  %343 = vmatprep.subr.bf16.mxu0 0
  %344 = vmatpush1.bf16.msra.mxu0 0
  %345 = vmatprep.subr.bf16.mxu0 0
  %346 = vmatpush1.bf16.msra.mxu0 0
  %347 = vmatprep.subr.bf16.mxu0 0
  %348 = vmatpush1.bf16.msra.mxu0 0
  %349 = vmatprep.subr.bf16.mxu0 0
  %350 = vmatpush1.bf16.msra.mxu0 0
  %351 = vmatprep.mubr.bf16.mxu0 0
  %352 = vmatmul.mubr.bf16.gmra.mrb[0].mxu0 %v317
  %v353 = vpop.f32.mrb[0].mxu0
  %v354 = vadd.f32 %v314, %v353
  %v355 = vpop.f32.mrb[0].mxu0
  %v356 = vpop.f32.mrb[0].mxu0
  %v357 = vpop.f32.mrb[0].mxu0
  %358 = vdwg.mxu0
  %v359 = vxor.u32 %v354, 2147483648
  %v360 = vmul.f32 %v359, 1.442695
  %v361 = vpow.pop %v360
  %v362 = vadd.f32 %v361, 1.0
  %v363 = vrcp.pop %v362
  %v364 = vmul.f32 1.0, %v363
  %v365 = vtanh.pop %v354
  %v366 = vmul.f32 %v364, %v303
  %368 = vrot.lane.b32.xlu0 %v365, 64
  %v369 = vpop.permute.xlu0 %368
  %v371 = vmul.f32 %v364, %v369
  %373 = vrot.lane.b32.xlu0 %v371, 32
  %v374 = vpop.permute.xlu0 %373
  %v376 = vadd.f32 %v366, %v374
  %v377 = vtanh.pop %v376
  %379 = vrot.lane.b32.xlu0 %v377, 64
  %v380 = vpop.permute.xlu0 %379
  %v382 = vmul.f32 %v364, %v380
  %v383 = vpack.c.bf16 %v382, %v382
  %385 = vrot.lane.b32.xlu0 %v383, 32
  %v386 = vpop.permute.xlu0 %385
  %v387 = vrot.slane %v140, 6
  %v390 = vsel %vm34, %v386, 0
  %392 = vmatprep.subr.bf16.mxu0 0
  %393 = vmatpush1.bf16.msra.mxu0 %v161
  %394 = vmatprep.subr.bf16.mxu0 0
  %395 = vmatpush1.bf16.msra.mxu0 %v162
  %396 = vmatprep.subr.bf16.mxu0 0
  %397 = vmatpush1.bf16.msra.mxu0 0
  %398 = vmatprep.subr.bf16.mxu0 0
  %399 = vmatpush1.bf16.msra.mxu0 0
  %400 = vmatprep.subr.bf16.mxu0 0
  %401 = vmatpush1.bf16.msra.mxu0 0
  %402 = vmatprep.subr.bf16.mxu0 0
  %403 = vmatpush1.bf16.msra.mxu0 0
  %404 = vmatprep.subr.bf16.mxu0 0
  %405 = vmatpush1.bf16.msra.mxu0 0
  %406 = vmatprep.subr.bf16.mxu0 0
  %407 = vmatpush1.bf16.msra.mxu0 0
  %408 = vmatprep.subr.bf16.mxu0 0
  %409 = vmatpush1.bf16.msra.mxu0 0
  %410 = vmatprep.subr.bf16.mxu0 0
  %411 = vmatpush1.bf16.msra.mxu0 0
  %412 = vmatprep.subr.bf16.mxu0 0
  %413 = vmatpush1.bf16.msra.mxu0 0
  %414 = vmatprep.subr.bf16.mxu0 0
  %415 = vmatpush1.bf16.msra.mxu0 0
  %416 = vmatprep.subr.bf16.mxu0 0
  %417 = vmatpush1.bf16.msra.mxu0 0
  %418 = vmatprep.subr.bf16.mxu0 0
  %419 = vmatpush1.bf16.msra.mxu0 0
  %420 = vmatprep.subr.bf16.mxu0 0
  %421 = vmatpush1.bf16.msra.mxu0 0
  %422 = vmatprep.subr.bf16.mxu0 0
  %423 = vmatpush1.bf16.msra.mxu0 0
  %424 = vmatprep.mubr.bf16.mxu0 0
  %425 = vmatmul.mubr.bf16.gmra.mrb[0].mxu0 %v390
  %v426 = vpop.f32.mrb[0].mxu0
  %v427 = vadd.f32 %v387, %v426
  %v428 = vpop.f32.mrb[0].mxu0
  %v429 = vpop.f32.mrb[0].mxu0
  %v430 = vpop.f32.mrb[0].mxu0
  %431 = vdwg.mxu0
  %v432 = vxor.u32 %v427, 2147483648
  %v433 = vmul.f32 %v432, 1.442695
  %v434 = vpow.pop %v433
  %v435 = vadd.f32 %v434, 1.0
  %v436 = vrcp.pop %v435
  %v437 = vmul.f32 1.0, %v436
  %v438 = vtanh.pop %v427
  %v439 = vmul.f32 %v437, %v376
  %441 = vrot.lane.b32.xlu0 %v438, 64
  %v442 = vpop.permute.xlu0 %441
  %v444 = vmul.f32 %v437, %v442
  %446 = vrot.lane.b32.xlu0 %v444, 32
  %v447 = vpop.permute.xlu0 %446
  %v449 = vadd.f32 %v439, %v447
  %v450 = vtanh.pop %v449
  %452 = vrot.lane.b32.xlu0 %v450, 64
  %v453 = vpop.permute.xlu0 %452
  %v455 = vmul.f32 %v437, %v453
  %v456 = vpack.c.bf16 %v455, %v455
  %458 = vrot.lane.b32.xlu0 %v456, 32
  %v459 = vpop.permute.xlu0 %458
  %v461 = vsel %vm34, %v459, 0
  %463 = vmatprep.subr.bf16.mxu0 0
  %464 = vmatpush1.bf16.msra.mxu0 %v161
  %465 = vmatprep.subr.bf16.mxu0 0
  %466 = vmatpush1.bf16.msra.mxu0 %v162
  %467 = vmatprep.subr.bf16.mxu0 0
  %468 = vmatpush1.bf16.msra.mxu0 0
  %469 = vmatprep.subr.bf16.mxu0 0
  %470 = vmatpush1.bf16.msra.mxu0 0
  %471 = vmatprep.subr.bf16.mxu0 0
  %472 = vmatpush1.bf16.msra.mxu0 0
  %473 = vmatprep.subr.bf16.mxu0 0
  %474 = vmatpush1.bf16.msra.mxu0 0
  %475 = vmatprep.subr.bf16.mxu0 0
  %476 = vmatpush1.bf16.msra.mxu0 0
  %477 = vmatprep.subr.bf16.mxu0 0
  %478 = vmatpush1.bf16.msra.mxu0 0
  %479 = vmatprep.subr.bf16.mxu0 0
  %480 = vmatpush1.bf16.msra.mxu0 0
  %481 = vmatprep.subr.bf16.mxu0 0
  %482 = vmatpush1.bf16.msra.mxu0 0
  %483 = vmatprep.subr.bf16.mxu0 0
  %484 = vmatpush1.bf16.msra.mxu0 0
  %485 = vmatprep.subr.bf16.mxu0 0
  %486 = vmatpush1.bf16.msra.mxu0 0
  %487 = vmatprep.subr.bf16.mxu0 0
  %488 = vmatpush1.bf16.msra.mxu0 0
  %489 = vmatprep.subr.bf16.mxu0 0
  %490 = vmatpush1.bf16.msra.mxu0 0
  %491 = vmatprep.subr.bf16.mxu0 0
  %492 = vmatpush1.bf16.msra.mxu0 0
  %493 = vmatprep.subr.bf16.mxu0 0
  %494 = vmatpush1.bf16.msra.mxu0 0
  %495 = vmatprep.mubr.bf16.mxu0 0
  %496 = vmatmul.mubr.bf16.gmra.mrb[0].mxu0 %v461
  %v497 = vpop.f32.mrb[0].mxu0
  %v498 = vadd.f32 %v143, %v497
  %v499 = vpop.f32.mrb[0].mxu0
  %v500 = vpop.f32.mrb[0].mxu0
  %v501 = vpop.f32.mrb[0].mxu0
  %502 = vdwg.mxu0
  %v503 = vxor.u32 %v498, 2147483648
  %v504 = vmul.f32 %v503, 1.442695
  %v505 = vpow.pop %v504
  %v506 = vadd.f32 %v505, 1.0
  %v507 = vrcp.pop %v506
  %v508 = vmul.f32 1.0, %v507
  %v509 = vtanh.pop %v498
  %v510 = vmul.f32 %v508, %v449
  %512 = vrot.lane.b32.xlu0 %v509, 64
  %v513 = vpop.permute.xlu0 %512
  %v515 = vmul.f32 %v508, %v513
  %517 = vrot.lane.b32.xlu0 %v515, 32
  %v518 = vpop.permute.xlu0 %517
  %v520 = vadd.f32 %v510, %v518
  %v521 = vtanh.pop %v520
  %523 = vrot.lane.b32.xlu0 %v521, 64
  %v524 = vpop.permute.xlu0 %523
  %v526 = vmul.f32 %v508, %v524
  %v527 = vpack.c.bf16 %v526, %v526
  %529 = vrot.lane.b32.xlu0 %v527, 32
  %v530 = vpop.permute.xlu0 %529
  %v532 = vrot.slane %v143, 2
  %v535 = vsel %vm34, %v530, 0
  %537 = vmatprep.subr.bf16.mxu0 0
  %538 = vmatpush1.bf16.msra.mxu0 %v161
  %539 = vmatprep.subr.bf16.mxu0 0
  %540 = vmatpush1.bf16.msra.mxu0 %v162
  %541 = vmatprep.subr.bf16.mxu0 0
  %542 = vmatpush1.bf16.msra.mxu0 0
  %543 = vmatprep.subr.bf16.mxu0 0
  %544 = vmatpush1.bf16.msra.mxu0 0
  %545 = vmatprep.subr.bf16.mxu0 0
  %546 = vmatpush1.bf16.msra.mxu0 0
  %547 = vmatprep.subr.bf16.mxu0 0
  %548 = vmatpush1.bf16.msra.mxu0 0
  %549 = vmatprep.subr.bf16.mxu0 0
  %550 = vmatpush1.bf16.msra.mxu0 0
  %551 = vmatprep.subr.bf16.mxu0 0
  %552 = vmatpush1.bf16.msra.mxu0 0
  %553 = vmatprep.subr.bf16.mxu0 0
  %554 = vmatpush1.bf16.msra.mxu0 0
  %555 = vmatprep.subr.bf16.mxu0 0
  %556 = vmatpush1.bf16.msra.mxu0 0
  %557 = vmatprep.subr.bf16.mxu0 0
  %558 = vmatpush1.bf16.msra.mxu0 0
  %559 = vmatprep.subr.bf16.mxu0 0
  %560 = vmatpush1.bf16.msra.mxu0 0
  %561 = vmatprep.subr.bf16.mxu0 0
  %562 = vmatpush1.bf16.msra.mxu0 0
  %563 = vmatprep.subr.bf16.mxu0 0
  %564 = vmatpush1.bf16.msra.mxu0 0
  %565 = vmatprep.subr.bf16.mxu0 0
  %566 = vmatpush1.bf16.msra.mxu0 0
  %567 = vmatprep.subr.bf16.mxu0 0
  %568 = vmatpush1.bf16.msra.mxu0 0
  %569 = vmatprep.mubr.bf16.mxu0 0
  %570 = vmatmul.mubr.bf16.gmra.mrb[0].mxu0 %v535
  %v571 = vpop.f32.mrb[0].mxu0
  %v572 = vadd.f32 %v532, %v571
  %v573 = vpop.f32.mrb[0].mxu0
  %v574 = vpop.f32.mrb[0].mxu0
  %v575 = vpop.f32.mrb[0].mxu0
  %576 = vdwg.mxu0
  %v577 = vxor.u32 %v572, 2147483648
  %v578 = vmul.f32 %v577, 1.442695
  %v579 = vpow.pop %v578
  %v580 = vadd.f32 %v579, 1.0
  %v581 = vrcp.pop %v580
  %v582 = vmul.f32 1.0, %v581
  %v583 = vtanh.pop %v572
  %v584 = vmul.f32 %v582, %v520
  %586 = vrot.lane.b32.xlu0 %v583, 64
  %v587 = vpop.permute.xlu0 %586
  %v589 = vmul.f32 %v582, %v587
  %591 = vrot.lane.b32.xlu0 %v589, 32
  %v592 = vpop.permute.xlu0 %591
  %v594 = vadd.f32 %v584, %v592
  %v595 = vtanh.pop %v594
  %597 = vrot.lane.b32.xlu0 %v595, 64
  %v598 = vpop.permute.xlu0 %597
  %v600 = vmul.f32 %v582, %v598
  %v601 = vpack.c.bf16 %v600, %v600
  %603 = vrot.lane.b32.xlu0 %v601, 32
  %v604 = vpop.permute.xlu0 %603
  %v605 = vrot.slane %v143, 4
  %v608 = vsel %vm34, %v604, 0
  %610 = vmatprep.subr.bf16.mxu0 0
  %611 = vmatpush1.bf16.msra.mxu0 %v161
  %612 = vmatprep.subr.bf16.mxu0 0
  %613 = vmatpush1.bf16.msra.mxu0 %v162
  %614 = vmatprep.subr.bf16.mxu0 0
  %615 = vmatpush1.bf16.msra.mxu0 0
  %616 = vmatprep.subr.bf16.mxu0 0
  %617 = vmatpush1.bf16.msra.mxu0 0
  %618 = vmatprep.subr.bf16.mxu0 0
  %619 = vmatpush1.bf16.msra.mxu0 0
  %620 = vmatprep.subr.bf16.mxu0 0
  %621 = vmatpush1.bf16.msra.mxu0 0
  %622 = vmatprep.subr.bf16.mxu0 0
  %623 = vmatpush1.bf16.msra.mxu0 0
  %624 = vmatprep.subr.bf16.mxu0 0
  %625 = vmatpush1.bf16.msra.mxu0 0
  %626 = vmatprep.subr.bf16.mxu0 0
  %627 = vmatpush1.bf16.msra.mxu0 0
  %628 = vmatprep.subr.bf16.mxu0 0
  %629 = vmatpush1.bf16.msra.mxu0 0
  %630 = vmatprep.subr.bf16.mxu0 0
  %631 = vmatpush1.bf16.msra.mxu0 0
  %632 = vmatprep.subr.bf16.mxu0 0
  %633 = vmatpush1.bf16.msra.mxu0 0
  %634 = vmatprep.subr.bf16.mxu0 0
  %635 = vmatpush1.bf16.msra.mxu0 0
  %636 = vmatprep.subr.bf16.mxu0 0
  %637 = vmatpush1.bf16.msra.mxu0 0
  %638 = vmatprep.subr.bf16.mxu0 0
  %639 = vmatpush1.bf16.msra.mxu0 0
  %640 = vmatprep.subr.bf16.mxu0 0
  %641 = vmatpush1.bf16.msra.mxu0 0
  %642 = vmatprep.mubr.bf16.mxu0 0
  %643 = vmatmul.mubr.bf16.gmra.mrb[0].mxu0 %v608
  %v644 = vpop.f32.mrb[0].mxu0
  %v645 = vadd.f32 %v605, %v644
  %v646 = vpop.f32.mrb[0].mxu0
  %v647 = vpop.f32.mrb[0].mxu0
  %v648 = vpop.f32.mrb[0].mxu0
  %649 = vdwg.mxu0
  %v650 = vxor.u32 %v645, 2147483648
  %v651 = vmul.f32 %v650, 1.442695
  %v652 = vpow.pop %v651
  %v653 = vadd.f32 %v652, 1.0
  %v654 = vrcp.pop %v653
  %v655 = vmul.f32 1.0, %v654
  %v656 = vtanh.pop %v645
  %v657 = vmul.f32 %v655, %v594
  %659 = vrot.lane.b32.xlu0 %v656, 64
  %v660 = vpop.permute.xlu0 %659
  %v662 = vmul.f32 %v655, %v660
  %664 = vrot.lane.b32.xlu0 %v662, 32
  %v665 = vpop.permute.xlu0 %664
  %v667 = vadd.f32 %v657, %v665
  %v668 = vtanh.pop %v667
  %670 = vrot.lane.b32.xlu0 %v668, 64
  %v671 = vpop.permute.xlu0 %670
  %v673 = vmul.f32 %v655, %v671
  %v674 = vpack.c.bf16 %v673, %v673
  %676 = vrot.lane.b32.xlu0 %v674, 32
  %v677 = vpop.permute.xlu0 %676
  %v678 = vrot.slane %v143, 6
  %v681 = vsel %vm34, %v677, 0
  %683 = vmatprep.subr.bf16.mxu0 0
  %684 = vmatpush1.bf16.msra.mxu0 %v161
  %685 = vmatprep.subr.bf16.mxu0 0
  %686 = vmatpush1.bf16.msra.mxu0 %v162
  %687 = vmatprep.subr.bf16.mxu0 0
  %688 = vmatpush1.bf16.msra.mxu0 0
  %689 = vmatprep.subr.bf16.mxu0 0
  %690 = vmatpush1.bf16.msra.mxu0 0
  %691 = vmatprep.subr.bf16.mxu0 0
  %692 = vmatpush1.bf16.msra.mxu0 0
  %693 = vmatprep.subr.bf16.mxu0 0
  %694 = vmatpush1.bf16.msra.mxu0 0
  %695 = vmatprep.subr.bf16.mxu0 0
  %696 = vmatpush1.bf16.msra.mxu0 0
  %697 = vmatprep.subr.bf16.mxu0 0
  %698 = vmatpush1.bf16.msra.mxu0 0
  %699 = vmatprep.subr.bf16.mxu0 0
  %700 = vmatpush1.bf16.msra.mxu0 0
  %701 = vmatprep.subr.bf16.mxu0 0
  %702 = vmatpush1.bf16.msra.mxu0 0
  %703 = vmatprep.subr.bf16.mxu0 0
  %704 = vmatpush1.bf16.msra.mxu0 0
  %705 = vmatprep.subr.bf16.mxu0 0
  %706 = vmatpush1.bf16.msra.mxu0 0
  %707 = vmatprep.subr.bf16.mxu0 0
  %708 = vmatpush1.bf16.msra.mxu0 0
  %709 = vmatprep.subr.bf16.mxu0 0
  %710 = vmatpush1.bf16.msra.mxu0 0
  %711 = vmatprep.subr.bf16.mxu0 0
  %712 = vmatpush1.bf16.msra.mxu0 0
  %713 = vmatprep.subr.bf16.mxu0 0
  %714 = vmatpush1.bf16.msra.mxu0 0
  %715 = vmatprep.mubr.bf16.mxu0 0
  %716 = vmatmul.mubr.bf16.gmra.mrb[0].mxu0 %v681
  %v717 = vpop.f32.mrb[0].mxu0
  %v718 = vadd.f32 %v678, %v717
  %v719 = vpop.f32.mrb[0].mxu0
  %v720 = vpop.f32.mrb[0].mxu0
  %v721 = vpop.f32.mrb[0].mxu0
  %722 = vdwg.mxu0
  %v723 = vxor.u32 %v718, 2147483648
  %v724 = vmul.f32 %v723, 1.442695
  %v725 = vpow.pop %v724
  %v726 = vadd.f32 %v725, 1.0
  %v727 = vrcp.pop %v726
  %v728 = vmul.f32 1.0, %v727
  %v729 = vtanh.pop %v718
  %v730 = vmul.f32 %v728, %v667
  %732 = vrot.lane.b32.xlu0 %v729, 64
  %v733 = vpop.permute.xlu0 %732
  %v735 = vmul.f32 %v728, %v733
  %737 = vrot.lane.b32.xlu0 %v735, 32
  %v738 = vpop.permute.xlu0 %737
  %v740 = vadd.f32 %v730, %v738
  %v741 = vtanh.pop %v740
  %743 = vrot.lane.b32.xlu0 %v741, 64
  %v744 = vpop.permute.xlu0 %743
  %v746 = vmul.f32 %v728, %v744
  %755 = vrot.lane.b32.xlu0 %v235, 32
  %v756 = vpop.permute.xlu0 %755
  %757 = vrot.lane.b32.xlu0 %v309, 32
  %v758 = vpop.permute.xlu0 %757
  %759 = vrot.lane.b32.xlu0 %v382, 32
  %v760 = vpop.permute.xlu0 %759
  %761 = vrot.lane.b32.xlu0 %v455, 32
  %v762 = vpop.permute.xlu0 %761
  %763 = vrot.lane.b32.xlu0 %v526, 32
  %v764 = vpop.permute.xlu0 %763
  %765 = vrot.lane.b32.xlu0 %v600, 32
  %v766 = vpop.permute.xlu0 %765
  %767 = vrot.lane.b32.xlu0 %v673, 32
  %v768 = vpop.permute.xlu0 %767
  %769 = vrot.lane.b32.xlu0 %v746, 32
  %v770 = vpop.permute.xlu0 %769
  %vm779 = vcmask 254976
  %780 = vst.msk [vmem:[%s8] sm:$0x3] %vm779, %v756
  %781 = vst.msk [vmem:[%s8 + $0x2] sm:$0x3] %vm779, %v758
  %782 = vst.msk [vmem:[%s8 + $0x4] sm:$0x3] %vm779, %v760
  %783 = vst.msk [vmem:[%s8 + $0x6] sm:$0x3] %vm779, %v762
  %784 = vst.msk [vmem:[%s8 + $0x8] sm:$0x3] %vm779, %v764
  %785 = vst.msk [vmem:[%s8 + $0xa] sm:$0x3] %vm779, %v766
  %786 = vst.msk [vmem:[%s8 + $0xc] sm:$0x3] %vm779, %v768
  %787 = vst.msk [vmem:[%s8 + $0xe] sm:$0x3] %vm779, %v770
  // Predicated region
  $region34: #{forward.11} parent=0 // pred_check
    _
  $region35: #{forward.11} parent=0 // pred_check_branch
    %789 = sbr.rel (0) target = $region37
  $region36: #{forward.11} parent=0 // pred_region
    _
  $region37: #{forward.11} parent=0 // pred_fallthru
    _
  // Predicated region
  $region38: #{forward.11} parent=0 // pred_check
    _
  $region39: #{forward.11} parent=0 // pred_check_branch
    %791 = sbr.rel (0) target = $region41
  $region40: #{forward.11} parent=0 // pred_region
    _
  $region41: #{forward.11} parent=0 // pred_fallthru
    _

// kernel: forward.9
$region0: #{forward.9}
  #allocation0 [shape = 'u32[]', space=smem, size = 0x4, offset = 0x4, fixed_abs, tag = 'smem constant byte address 0x4 - core index']
  #allocation1 [shape = 'u32[144,128]{1,0:T(1,128)}', space=vmem, size = 0x12000, scoped, tag = 'internal scratch']
  %s0 = inlined_call_operand.vmem [shape: f32[16,64], index: 0, kind: input, shape index: {}]
  %s1 = inlined_call_operand.vmem [shape: bf16[64,32], index: 1, kind: input, shape index: {}]
  %s2 = inlined_call_operand.vmem [shape: f32[1,32], index: 2, kind: input, shape index: {}]
  %s3 = inlined_call_operand.vmem [shape: f32[1,32], index: 3, kind: input, shape index: {}]
  %s4 = inlined_call_operand.vmem [shape: f32[1,32], index: 4, kind: input, shape index: {}]
  %s5 = inlined_call_operand.vmem [shape: f32[16,32], index: 5, kind: output, shape index: {}]
  %s6 = sld [smem:[#allocation0]]
  $region30: #{forward.9} parent=0
    _
  %s8 = ssub.s32 1, %s6
  %s9 = scalar_select 0, %s8, %s6
  // Predicated region
  $region2: #{forward.9} parent=0 // pred_check
    _
  $region3: #{forward.9} parent=0 // pred_check_branch
    %11 = sbr.rel (0) target = $region5
  $region4: #{forward.9} parent=0 // pred_region
    _
  $region5: #{forward.9} parent=0 // pred_fallthru
    _
  // Predicated region
  $region6: #{forward.9} parent=0 // pred_check
    _
  $region7: #{forward.9} parent=0 // pred_check_branch
    %13 = sbr.rel (0) target = $region9
  $region8: #{forward.9} parent=0 // pred_region
    _
  $region9: #{forward.9} parent=0 // pred_fallthru
    _
  // Predicated region
  $region10: #{forward.9} parent=0 // pred_check
    _
  $region11: #{forward.9} parent=0 // pred_check_branch
    %15 = sbr.rel (0) target = $region13
  $region12: #{forward.9} parent=0 // pred_region
    _
  $region13: #{forward.9} parent=0 // pred_fallthru
    _
  // Predicated region
  $region14: #{forward.9} parent=0 // pred_check
    _
  $region15: #{forward.9} parent=0 // pred_check_branch
    %17 = sbr.rel (0) target = $region17
  $region16: #{forward.9} parent=0 // pred_region
    _
  $region17: #{forward.9} parent=0 // pred_fallthru
    _
  // Predicated region
  $region18: #{forward.9} parent=0 // pred_check
    _
  $region19: #{forward.9} parent=0 // pred_check_branch
    %19 = sbr.rel (0) target = $region21
  $region20: #{forward.9} parent=0 // pred_region
    _
  $region21: #{forward.9} parent=0 // pred_fallthru
    _
  %v21 = vld [vmem:[%s0] sm:$0xff]
  %v22 = vld [vmem:[%s0 + $0x8] sm:$0xff]
  %v23 = vpack.c.bf16 %v22, %v21
  %v24 = vld [vmem:[%s1] sm:$0xf]
  %v25 = vld [vmem:[%s1 + $0x4] sm:$0xf]
  %v26 = vld [vmem:[%s1 + $0x8] sm:$0xf]
  %v27 = vld [vmem:[%s1 + $0xc] sm:$0xf]
  %v28 = vld [vmem:[%s1 + $0x10] sm:$0xf]
  %v29 = vld [vmem:[%s1 + $0x14] sm:$0xf]
  %v30 = vld [vmem:[%s1 + $0x18] sm:$0xf]
  %v31 = vld [vmem:[%s1 + $0x1c] sm:$0xf]
  %v32 = vld [vmem:[%s2] sm:$0x1]
  %v34 = vlaneseq
  %v35 = vshrl.u32 %v34, 7
  %v36 = vsub.s32 0, %v35
  %v37 = vrot.slane %v32, %v36
  %v47 = vunpack.c.l.b16 %v24
  %v48 = vunpack.c.l.b16 %v25
  %v49 = vunpack.c.l.b16 %v26
  %v50 = vunpack.c.l.b16 %v27
  %v51 = vunpack.c.l.b16 %v28
  %v52 = vunpack.c.l.b16 %v29
  %v53 = vunpack.c.l.b16 %v30
  %v54 = vunpack.c.l.b16 %v31
  %v55 = vpack.c.b16 %v48, %v47
  %v56 = vpack.c.b16 %v50, %v49
  %v57 = vpack.c.b16 %v52, %v51
  %v58 = vpack.c.b16 %v54, %v53
  %vm63 = vcmask 523264
  %v65 = vsel %vm63, %v23, 0
  %67 = vmatprep.subr.bf16.mxu0 0
  %68 = vmatpush1.bf16.msra.mxu0 %v55
  %69 = vmatprep.subr.bf16.mxu0 0
  %70 = vmatpush1.bf16.msra.mxu0 %v56
  %71 = vmatprep.subr.bf16.mxu0 0
  %72 = vmatpush1.bf16.msra.mxu0 %v57
  %73 = vmatprep.subr.bf16.mxu0 0
  %74 = vmatpush1.bf16.msra.mxu0 %v58
  %75 = vmatprep.subr.bf16.mxu0 0
  %76 = vmatpush1.bf16.msra.mxu0 0
  %77 = vmatprep.subr.bf16.mxu0 0
  %78 = vmatpush1.bf16.msra.mxu0 0
  %79 = vmatprep.subr.bf16.mxu0 0
  %80 = vmatpush1.bf16.msra.mxu0 0
  %81 = vmatprep.subr.bf16.mxu0 0
  %82 = vmatpush1.bf16.msra.mxu0 0
  %83 = vmatprep.subr.bf16.mxu0 0
  %84 = vmatpush1.bf16.msra.mxu0 0
  %85 = vmatprep.subr.bf16.mxu0 0
  %86 = vmatpush1.bf16.msra.mxu0 0
  %87 = vmatprep.subr.bf16.mxu0 0
  %88 = vmatpush1.bf16.msra.mxu0 0
  %89 = vmatprep.subr.bf16.mxu0 0
  %90 = vmatpush1.bf16.msra.mxu0 0
  %91 = vmatprep.subr.bf16.mxu0 0
  %92 = vmatpush1.bf16.msra.mxu0 0
  %93 = vmatprep.subr.bf16.mxu0 0
  %94 = vmatpush1.bf16.msra.mxu0 0
  %95 = vmatprep.subr.bf16.mxu0 0
  %96 = vmatpush1.bf16.msra.mxu0 0
  %97 = vmatprep.subr.bf16.mxu0 0
  %98 = vmatpush1.bf16.msra.mxu0 0
  %99 = vmatprep.mubr.bf16.mxu0 0
  %100 = vmatmul.mubr.bf16.gmra.mrb[0].mxu0 %v65
  %v101 = vpop.f32.mrb[0].mxu0
  %v102 = vadd.f32 %v37, %v101
  %v103 = vpop.f32.mrb[0].mxu0
  %v104 = vpop.f32.mrb[0].mxu0
  %v105 = vadd.f32 %v37, %v104
  %v106 = vpop.f32.mrb[0].mxu0
  %107 = vdwg.mxu0
  %v108 = vld [vmem:[%s3] sm:$0x1]
  %v109 = vld [vmem:[%s4] sm:$0x1]
  %vm110 = vcmask 261120
  %v111 = vsel %vm110, %v102, 0.0
  %112 = vadd.xlane.f32.xlu0 %v111
  %v113 = vpop.xlane.xlu0 %112
  %v114 = vsel %vm110, %v105, 0.0
  %115 = vadd.xlane.f32.xlu0 %v114
  %v116 = vpop.xlane.xlu0 %115
  %v117 = vrcp.pop 32.0
  %v118 = vmul.f32 %v113, %v117
  %v119 = vmul.f32 %v116, %v117
  %v120 = vsub.f32 %v102, %v118
  %v121 = vsub.f32 %v105, %v119
  %v122 = vmul.f32 %v120, %v120
  %v123 = vmul.f32 %v121, %v121
  %v124 = vsel %vm110, %v122, 0.0
  %125 = vadd.xlane.f32.xlu0 %v124
  %v126 = vpop.xlane.xlu0 %125
  %v127 = vsel %vm110, %v123, 0.0
  %128 = vadd.xlane.f32.xlu0 %v127
  %v129 = vpop.xlane.xlu0 %128
  %v130 = vmul.f32 %v126, %v117
  %v131 = vmul.f32 %v129, %v117
  %v132 = vadd.f32 %v130, 1e-05
  %v133 = vadd.f32 %v131, 1e-05
  %v134 = vrsqrt.pop %v132
  %v135 = vrsqrt.pop %v133
  %v136 = vmul.f32 %v120, %v134
  %v137 = vmul.f32 %v121, %v135
  %v139 = vlaneseq
  %v140 = vshrl.u32 %v139, 7
  %v141 = vsub.s32 0, %v140
  %v142 = vrot.slane %v108, %v141
  %v144 = vmul.f32 %v136, %v142
  %v145 = vmul.f32 %v137, %v142
  %v147 = vlaneseq
  %v148 = vshrl.u32 %v147, 7
  %v149 = vsub.s32 0, %v148
  %v150 = vrot.slane %v109, %v149
  %v152 = vadd.f32 %v144, %v150
  %v153 = vadd.f32 %v145, %v150
  %154 = vst.msk [vmem:[%s5] sm:$0xff] %vm110, %v152
  %155 = vst.msk [vmem:[%s5 + $0x8] sm:$0xff] %vm110, %v153
  // Predicated region
  $region22: #{forward.9} parent=0 // pred_check
    _
  $region23: #{forward.9} parent=0 // pred_check_branch
    %157 = sbr.rel (0) target = $region25
  $region24: #{forward.9} parent=0 // pred_region
    _
  $region25: #{forward.9} parent=0 // pred_fallthru
    _
  // Predicated region
  $region26: #{forward.9} parent=0 // pred_check
    _
  $region27: #{forward.9} parent=0 // pred_check_branch
    %159 = sbr.rel (0) target = $region29
  $region28: #{forward.9} parent=0 // pred_region
    _
  $region29: #{forward.9} parent=0 // pred_fallthru
    _

// kernel: forward.12
$region0: #{forward.12}
  #allocation0 [shape = 'u32[]', space=smem, size = 0x4, offset = 0x4, fixed_abs, tag = 'smem constant byte address 0x4 - core index']
  #allocation1 [shape = 'u32[144,128]{1,0:T(1,128)}', space=vmem, size = 0x12000, scoped, tag = 'internal scratch']
  %s0 = inlined_call_operand.vmem [shape: f32[16,32], index: 0, kind: input, shape index: {}]
  %s1 = inlined_call_operand.vmem [shape: bf16[32,128], index: 1, kind: input, shape index: {}]
  %s2 = inlined_call_operand.vmem [shape: bf16[32,128], index: 2, kind: input, shape index: {}]
  %s3 = inlined_call_operand.vmem [shape: f32[1,128], index: 3, kind: input, shape index: {}]
  %s4 = inlined_call_operand.vmem [shape: f32[2,32], index: 4, kind: input, shape index: {}]
  %s5 = inlined_call_operand.vmem [shape: f32[2,32], index: 5, kind: input, shape index: {}]
  %s6 = inlined_call_operand.vmem [shape: f32[2,8,32], index: 6, kind: output, shape index: {}]
  %s7 = sld [smem:[#allocation0]]
  $region34: #{forward.12} parent=0
    _
  %s9 = ssub.s32 1, %s7
  %s10 = scalar_select 0, %s9, %s7
  // Predicated region
  $region2: #{forward.12} parent=0 // pred_check
    _
  $region3: #{forward.12} parent=0 // pred_check_branch
    %12 = sbr.rel (0) target = $region5
  $region4: #{forward.12} parent=0 // pred_region
    _
  $region5: #{forward.12} parent=0 // pred_fallthru
    _
  // Predicated region
  $region6: #{forward.12} parent=0 // pred_check
    _
  $region7: #{forward.12} parent=0 // pred_check_branch
    %14 = sbr.rel (0) target = $region9
  $region8: #{forward.12} parent=0 // pred_region
    _
  $region9: #{forward.12} parent=0 // pred_fallthru
    _
  // Predicated region
  $region10: #{forward.12} parent=0 // pred_check
    _
  $region11: #{forward.12} parent=0 // pred_check_branch
    %16 = sbr.rel (0) target = $region13
  $region12: #{forward.12} parent=0 // pred_region
    _
  $region13: #{forward.12} parent=0 // pred_fallthru
    _
  // Predicated region
  $region14: #{forward.12} parent=0 // pred_check
    _
  $region15: #{forward.12} parent=0 // pred_check_branch
    %18 = sbr.rel (0) target = $region17
  $region16: #{forward.12} parent=0 // pred_region
    _
  $region17: #{forward.12} parent=0 // pred_fallthru
    _
  // Predicated region
  $region18: #{forward.12} parent=0 // pred_check
    _
  $region19: #{forward.12} parent=0 // pred_check_branch
    %20 = sbr.rel (0) target = $region21
  $region20: #{forward.12} parent=0 // pred_region
    _
  $region21: #{forward.12} parent=0 // pred_fallthru
    _
  // Predicated region
  $region22: #{forward.12} parent=0 // pred_check
    _
  $region23: #{forward.12} parent=0 // pred_check_branch
    %22 = sbr.rel (0) target = $region25
  $region24: #{forward.12} parent=0 // pred_region
    _
  $region25: #{forward.12} parent=0 // pred_fallthru
    _
  %v24 = vld [vmem:[%s0] sm:$0xff]
  %v25 = vld [vmem:[%s0 + $0x8] sm:$0xff]
  %v26 = vpack.c.bf16 %v25, %v24
  %v27 = vld [vmem:[%s1] sm:$0xf]
  %v28 = vld [vmem:[%s1 + $0x4] sm:$0xf]
  %v29 = vld [vmem:[%s1 + $0x8] sm:$0xf]
  %v30 = vld [vmem:[%s1 + $0xc] sm:$0xf]
  %v31 = vld [vmem:[%s3] sm:$0x1]
  %v33 = vlaneseq
  %v34 = vshrl.u32 %v33, 7
  %v35 = vsub.s32 0, %v34
  %v36 = vrot.slane %v31, %v35
  %v42 = vunpack.c.l.b16 %v27
  %v43 = vunpack.c.l.b16 %v28
  %v44 = vunpack.c.l.b16 %v29
  %v45 = vunpack.c.l.b16 %v30
  %v46 = vpack.c.b16 %v43, %v42
  %v47 = vpack.c.b16 %v45, %v44
  %vm50 = vcmask 261120
  %v52 = vsel %vm50, %v26, 0
  %54 = vmatprep.subr.bf16.mxu0 0
  %55 = vmatpush1.bf16.msra.mxu0 %v46
  %56 = vmatprep.subr.bf16.mxu0 0
  %57 = vmatpush1.bf16.msra.mxu0 %v47
  %58 = vmatprep.subr.bf16.mxu0 0
  %59 = vmatpush1.bf16.msra.mxu0 0
  %60 = vmatprep.subr.bf16.mxu0 0
  %61 = vmatpush1.bf16.msra.mxu0 0
  %62 = vmatprep.subr.bf16.mxu0 0
  %63 = vmatpush1.bf16.msra.mxu0 0
  %64 = vmatprep.subr.bf16.mxu0 0
  %65 = vmatpush1.bf16.msra.mxu0 0
  %66 = vmatprep.subr.bf16.mxu0 0
  %67 = vmatpush1.bf16.msra.mxu0 0
  %68 = vmatprep.subr.bf16.mxu0 0
  %69 = vmatpush1.bf16.msra.mxu0 0
  %70 = vmatprep.subr.bf16.mxu0 0
  %71 = vmatpush1.bf16.msra.mxu0 0
  %72 = vmatprep.subr.bf16.mxu0 0
  %73 = vmatpush1.bf16.msra.mxu0 0
  %74 = vmatprep.subr.bf16.mxu0 0
  %75 = vmatpush1.bf16.msra.mxu0 0
  %76 = vmatprep.subr.bf16.mxu0 0
  %77 = vmatpush1.bf16.msra.mxu0 0
  %78 = vmatprep.subr.bf16.mxu0 0
  %79 = vmatpush1.bf16.msra.mxu0 0
  %80 = vmatprep.subr.bf16.mxu0 0
  %81 = vmatpush1.bf16.msra.mxu0 0
  %82 = vmatprep.subr.bf16.mxu0 0
  %83 = vmatpush1.bf16.msra.mxu0 0
  %84 = vmatprep.subr.bf16.mxu0 0
  %85 = vmatpush1.bf16.msra.mxu0 0
  %86 = vmatprep.mubr.bf16.mxu0 0
  %87 = vmatmul.mubr.bf16.gmra.mrb[0].mxu0 %v52
  %v88 = vpop.f32.mrb[0].mxu0
  %v89 = vadd.f32 %v36, %v88
  %v90 = vpop.f32.mrb[0].mxu0
  %v91 = vpop.f32.mrb[0].mxu0
  %v92 = vadd.f32 %v36, %v91
  %v93 = vpop.f32.mrb[0].mxu0
  %94 = vdwg.mxu0
  %v95 = vld [vmem:[%s2] sm:$0xf]
  %v96 = vld [vmem:[%s2 + $0x4] sm:$0xf]
  %v97 = vld [vmem:[%s2 + $0x8] sm:$0xf]
  %v98 = vld [vmem:[%s2 + $0xc] sm:$0xf]
  %v99 = vld [vmem:[%s4] sm:$0x3]
  %v100 = vld [vmem:[%s5] sm:$0x3]
  %v101 = vpack.c.bf16 %v99, %v99
  %v106 = vunpack.c.l.b16 %v95
  %v107 = vunpack.c.l.b16 %v96
  %v108 = vunpack.c.l.b16 %v97
  %v109 = vunpack.c.l.b16 %v98
  %v110 = vpack.c.b16 %v107, %v106
  %v111 = vpack.c.b16 %v109, %v108
  %v115 = vsel %vm50, %v101, 0
  %117 = vmatprep.subr.bf16.mxu0 0
  %118 = vmatpush1.bf16.msra.mxu0 %v110
  %119 = vmatprep.subr.bf16.mxu0 0
  %120 = vmatpush1.bf16.msra.mxu0 %v111
  %121 = vmatprep.subr.bf16.mxu0 0
  %122 = vmatpush1.bf16.msra.mxu0 0
  %123 = vmatprep.subr.bf16.mxu0 0
  %124 = vmatpush1.bf16.msra.mxu0 0
  %125 = vmatprep.subr.bf16.mxu0 0
  %126 = vmatpush1.bf16.msra.mxu0 0
  %127 = vmatprep.subr.bf16.mxu0 0
  %128 = vmatpush1.bf16.msra.mxu0 0
  %129 = vmatprep.subr.bf16.mxu0 0
  %130 = vmatpush1.bf16.msra.mxu0 0
  %131 = vmatprep.subr.bf16.mxu0 0
  %132 = vmatpush1.bf16.msra.mxu0 0
  %133 = vmatprep.subr.bf16.mxu0 0
  %134 = vmatpush1.bf16.msra.mxu0 0
  %135 = vmatprep.subr.bf16.mxu0 0
  %136 = vmatpush1.bf16.msra.mxu0 0
  %137 = vmatprep.subr.bf16.mxu0 0
  %138 = vmatpush1.bf16.msra.mxu0 0
  %139 = vmatprep.subr.bf16.mxu0 0
  %140 = vmatpush1.bf16.msra.mxu0 0
  %141 = vmatprep.subr.bf16.mxu0 0
  %142 = vmatpush1.bf16.msra.mxu0 0
  %143 = vmatprep.subr.bf16.mxu0 0
  %144 = vmatpush1.bf16.msra.mxu0 0
  %145 = vmatprep.subr.bf16.mxu0 0
  %146 = vmatpush1.bf16.msra.mxu0 0
  %147 = vmatprep.subr.bf16.mxu0 0
  %148 = vmatpush1.bf16.msra.mxu0 0
  %149 = vmatprep.mubr.bf16.mxu0 0
  %150 = vmatmul.mubr.bf16.gmra.mrb[0].mxu0 %v115
  %v151 = vpop.f32.mrb[0].mxu0
  %v152 = vadd.f32 %v89, %v151
  %v153 = vpop.f32.mrb[0].mxu0
  %v154 = vpop.f32.mrb[0].mxu0
  %v155 = vpop.f32.mrb[0].mxu0
  %156 = vdwg.mxu0
  %v157 = vxor.u32 %v152, 2147483648
  %v158 = vmul.f32 %v157, 1.442695
  %v159 = vpow.pop %v158
  %v160 = vadd.f32 %v159, 1.0
  %v161 = vrcp.pop %v160
  %v162 = vmul.f32 1.0, %v161
  %v163 = vtanh.pop %v152
  %165 = vrot.lane.b32.xlu0 %v100, 32
  %v166 = vpop.permute.xlu0 %165
  %v168 = vmul.f32 %v162, %v166
  %170 = vrot.lane.b32.xlu0 %v163, 64
  %v171 = vpop.permute.xlu0 %170
  %v173 = vmul.f32 %v162, %v171
  %175 = vrot.lane.b32.xlu0 %v173, 32
  %v176 = vpop.permute.xlu0 %175
  %v178 = vadd.f32 %v168, %v176
  %v179 = vtanh.pop %v178
  %181 = vrot.lane.b32.xlu0 %v179, 64
  %v182 = vpop.permute.xlu0 %181
  %v184 = vmul.f32 %v162, %v182
  %v185 = vpack.c.bf16 %v184, %v184
  %187 = vrot.lane.b32.xlu0 %v185, 32
  %v188 = vpop.permute.xlu0 %187
  %v190 = vrot.slane %v89, 2
  %v193 = vsel %vm50, %v188, 0
  %195 = vmatprep.subr.bf16.mxu0 0
  %196 = vmatpush1.bf16.msra.mxu0 %v110
  %197 = vmatprep.subr.bf16.mxu0 0
  %198 = vmatpush1.bf16.msra.mxu0 %v111
  %199 = vmatprep.subr.bf16.mxu0 0
  %200 = vmatpush1.bf16.msra.mxu0 0
  %201 = vmatprep.subr.bf16.mxu0 0
  %202 = vmatpush1.bf16.msra.mxu0 0
  %203 = vmatprep.subr.bf16.mxu0 0
  %204 = vmatpush1.bf16.msra.mxu0 0
  %205 = vmatprep.subr.bf16.mxu0 0
  %206 = vmatpush1.bf16.msra.mxu0 0
  %207 = vmatprep.subr.bf16.mxu0 0
  %208 = vmatpush1.bf16.msra.mxu0 0
  %209 = vmatprep.subr.bf16.mxu0 0
  %210 = vmatpush1.bf16.msra.mxu0 0
  %211 = vmatprep.subr.bf16.mxu0 0
  %212 = vmatpush1.bf16.msra.mxu0 0
  %213 = vmatprep.subr.bf16.mxu0 0
  %214 = vmatpush1.bf16.msra.mxu0 0
  %215 = vmatprep.subr.bf16.mxu0 0
  %216 = vmatpush1.bf16.msra.mxu0 0
  %217 = vmatprep.subr.bf16.mxu0 0
  %218 = vmatpush1.bf16.msra.mxu0 0
  %219 = vmatprep.subr.bf16.mxu0 0
  %220 = vmatpush1.bf16.msra.mxu0 0
  %221 = vmatprep.subr.bf16.mxu0 0
  %222 = vmatpush1.bf16.msra.mxu0 0
  %223 = vmatprep.subr.bf16.mxu0 0
  %224 = vmatpush1.bf16.msra.mxu0 0
  %225 = vmatprep.subr.bf16.mxu0 0
  %226 = vmatpush1.bf16.msra.mxu0 0
  %227 = vmatprep.mubr.bf16.mxu0 0
  %228 = vmatmul.mubr.bf16.gmra.mrb[0].mxu0 %v193
  %v229 = vpop.f32.mrb[0].mxu0
  %v230 = vadd.f32 %v190, %v229
  %v231 = vpop.f32.mrb[0].mxu0
  %v232 = vpop.f32.mrb[0].mxu0
  %v233 = vpop.f32.mrb[0].mxu0
  %234 = vdwg.mxu0
  %v235 = vxor.u32 %v230, 2147483648
  %v236 = vmul.f32 %v235, 1.442695
  %v237 = vpow.pop %v236
  %v238 = vadd.f32 %v237, 1.0
  %v239 = vrcp.pop %v238
  %v240 = vmul.f32 1.0, %v239
  %v241 = vtanh.pop %v230
  %v242 = vmul.f32 %v240, %v178
  %244 = vrot.lane.b32.xlu0 %v241, 64
  %v245 = vpop.permute.xlu0 %244
  %v247 = vmul.f32 %v240, %v245
  %249 = vrot.lane.b32.xlu0 %v247, 32
  %v250 = vpop.permute.xlu0 %249
  %v252 = vadd.f32 %v242, %v250
  %v253 = vtanh.pop %v252
  %255 = vrot.lane.b32.xlu0 %v253, 64
  %v256 = vpop.permute.xlu0 %255
  %v258 = vmul.f32 %v240, %v256
  %v259 = vpack.c.bf16 %v258, %v258
  %261 = vrot.lane.b32.xlu0 %v259, 32
  %v262 = vpop.permute.xlu0 %261
  %v263 = vrot.slane %v89, 4
  %v266 = vsel %vm50, %v262, 0
  %268 = vmatprep.subr.bf16.mxu0 0
  %269 = vmatpush1.bf16.msra.mxu0 %v110
  %270 = vmatprep.subr.bf16.mxu0 0
  %271 = vmatpush1.bf16.msra.mxu0 %v111
  %272 = vmatprep.subr.bf16.mxu0 0
  %273 = vmatpush1.bf16.msra.mxu0 0
  %274 = vmatprep.subr.bf16.mxu0 0
  %275 = vmatpush1.bf16.msra.mxu0 0
  %276 = vmatprep.subr.bf16.mxu0 0
  %277 = vmatpush1.bf16.msra.mxu0 0
  %278 = vmatprep.subr.bf16.mxu0 0
  %279 = vmatpush1.bf16.msra.mxu0 0
  %280 = vmatprep.subr.bf16.mxu0 0
  %281 = vmatpush1.bf16.msra.mxu0 0
  %282 = vmatprep.subr.bf16.mxu0 0
  %283 = vmatpush1.bf16.msra.mxu0 0
  %284 = vmatprep.subr.bf16.mxu0 0
  %285 = vmatpush1.bf16.msra.mxu0 0
  %286 = vmatprep.subr.bf16.mxu0 0
  %287 = vmatpush1.bf16.msra.mxu0 0
  %288 = vmatprep.subr.bf16.mxu0 0
  %289 = vmatpush1.bf16.msra.mxu0 0
  %290 = vmatprep.subr.bf16.mxu0 0
  %291 = vmatpush1.bf16.msra.mxu0 0
  %292 = vmatprep.subr.bf16.mxu0 0
  %293 = vmatpush1.bf16.msra.mxu0 0
  %294 = vmatprep.subr.bf16.mxu0 0
  %295 = vmatpush1.bf16.msra.mxu0 0
  %296 = vmatprep.subr.bf16.mxu0 0
  %297 = vmatpush1.bf16.msra.mxu0 0
  %298 = vmatprep.subr.bf16.mxu0 0
  %299 = vmatpush1.bf16.msra.mxu0 0
  %300 = vmatprep.mubr.bf16.mxu0 0
  %301 = vmatmul.mubr.bf16.gmra.mrb[0].mxu0 %v266
  %v302 = vpop.f32.mrb[0].mxu0
  %v303 = vadd.f32 %v263, %v302
  %v304 = vpop.f32.mrb[0].mxu0
  %v305 = vpop.f32.mrb[0].mxu0
  %v306 = vpop.f32.mrb[0].mxu0
  %307 = vdwg.mxu0
  %v308 = vxor.u32 %v303, 2147483648
  %v309 = vmul.f32 %v308, 1.442695
  %v310 = vpow.pop %v309
  %v311 = vadd.f32 %v310, 1.0
  %v312 = vrcp.pop %v311
  %v313 = vmul.f32 1.0, %v312
  %v314 = vtanh.pop %v303
  %v315 = vmul.f32 %v313, %v252
  %317 = vrot.lane.b32.xlu0 %v314, 64
  %v318 = vpop.permute.xlu0 %317
  %v320 = vmul.f32 %v313, %v318
  %322 = vrot.lane.b32.xlu0 %v320, 32
  %v323 = vpop.permute.xlu0 %322
  %v325 = vadd.f32 %v315, %v323
  %v326 = vtanh.pop %v325
  %328 = vrot.lane.b32.xlu0 %v326, 64
  %v329 = vpop.permute.xlu0 %328
  %v331 = vmul.f32 %v313, %v329
  %v332 = vpack.c.bf16 %v331, %v331
  %334 = vrot.lane.b32.xlu0 %v332, 32
  %v335 = vpop.permute.xlu0 %334
  %v336 = vrot.slane %v89, 6
  %v339 = vsel %vm50, %v335, 0
  %341 = vmatprep.subr.bf16.mxu0 0
  %342 = vmatpush1.bf16.msra.mxu0 %v110
  %343 = vmatprep.subr.bf16.mxu0 0
  %344 = vmatpush1.bf16.msra.mxu0 %v111
  %345 = vmatprep.subr.bf16.mxu0 0
  %346 = vmatpush1.bf16.msra.mxu0 0
  %347 = vmatprep.subr.bf16.mxu0 0
  %348 = vmatpush1.bf16.msra.mxu0 0
  %349 = vmatprep.subr.bf16.mxu0 0
  %350 = vmatpush1.bf16.msra.mxu0 0
  %351 = vmatprep.subr.bf16.mxu0 0
  %352 = vmatpush1.bf16.msra.mxu0 0
  %353 = vmatprep.subr.bf16.mxu0 0
  %354 = vmatpush1.bf16.msra.mxu0 0
  %355 = vmatprep.subr.bf16.mxu0 0
  %356 = vmatpush1.bf16.msra.mxu0 0
  %357 = vmatprep.subr.bf16.mxu0 0
  %358 = vmatpush1.bf16.msra.mxu0 0
  %359 = vmatprep.subr.bf16.mxu0 0
  %360 = vmatpush1.bf16.msra.mxu0 0
  %361 = vmatprep.subr.bf16.mxu0 0
  %362 = vmatpush1.bf16.msra.mxu0 0
  %363 = vmatprep.subr.bf16.mxu0 0
  %364 = vmatpush1.bf16.msra.mxu0 0
  %365 = vmatprep.subr.bf16.mxu0 0
  %366 = vmatpush1.bf16.msra.mxu0 0
  %367 = vmatprep.subr.bf16.mxu0 0
  %368 = vmatpush1.bf16.msra.mxu0 0
  %369 = vmatprep.subr.bf16.mxu0 0
  %370 = vmatpush1.bf16.msra.mxu0 0
  %371 = vmatprep.subr.bf16.mxu0 0
  %372 = vmatpush1.bf16.msra.mxu0 0
  %373 = vmatprep.mubr.bf16.mxu0 0
  %374 = vmatmul.mubr.bf16.gmra.mrb[0].mxu0 %v339
  %v375 = vpop.f32.mrb[0].mxu0
  %v376 = vadd.f32 %v336, %v375
  %v377 = vpop.f32.mrb[0].mxu0
  %v378 = vpop.f32.mrb[0].mxu0
  %v379 = vpop.f32.mrb[0].mxu0
  %380 = vdwg.mxu0
  %v381 = vxor.u32 %v376, 2147483648
  %v382 = vmul.f32 %v381, 1.442695
  %v383 = vpow.pop %v382
  %v384 = vadd.f32 %v383, 1.0
  %v385 = vrcp.pop %v384
  %v386 = vmul.f32 1.0, %v385
  %v387 = vtanh.pop %v376
  %v388 = vmul.f32 %v386, %v325
  %390 = vrot.lane.b32.xlu0 %v387, 64
  %v391 = vpop.permute.xlu0 %390
  %v393 = vmul.f32 %v386, %v391
  %395 = vrot.lane.b32.xlu0 %v393, 32
  %v396 = vpop.permute.xlu0 %395
  %v398 = vadd.f32 %v388, %v396
  %v399 = vtanh.pop %v398
  %401 = vrot.lane.b32.xlu0 %v399, 64
  %v402 = vpop.permute.xlu0 %401
  %v404 = vmul.f32 %v386, %v402
  %v405 = vpack.c.bf16 %v404, %v404
  %407 = vrot.lane.b32.xlu0 %v405, 32
  %v408 = vpop.permute.xlu0 %407
  %v410 = vsel %vm50, %v408, 0
  %412 = vmatprep.subr.bf16.mxu0 0
  %413 = vmatpush1.bf16.msra.mxu0 %v110
  %414 = vmatprep.subr.bf16.mxu0 0
  %415 = vmatpush1.bf16.msra.mxu0 %v111
  %416 = vmatprep.subr.bf16.mxu0 0
  %417 = vmatpush1.bf16.msra.mxu0 0
  %418 = vmatprep.subr.bf16.mxu0 0
  %419 = vmatpush1.bf16.msra.mxu0 0
  %420 = vmatprep.subr.bf16.mxu0 0
  %421 = vmatpush1.bf16.msra.mxu0 0
  %422 = vmatprep.subr.bf16.mxu0 0
  %423 = vmatpush1.bf16.msra.mxu0 0
  %424 = vmatprep.subr.bf16.mxu0 0
  %425 = vmatpush1.bf16.msra.mxu0 0
  %426 = vmatprep.subr.bf16.mxu0 0
  %427 = vmatpush1.bf16.msra.mxu0 0
  %428 = vmatprep.subr.bf16.mxu0 0
  %429 = vmatpush1.bf16.msra.mxu0 0
  %430 = vmatprep.subr.bf16.mxu0 0
  %431 = vmatpush1.bf16.msra.mxu0 0
  %432 = vmatprep.subr.bf16.mxu0 0
  %433 = vmatpush1.bf16.msra.mxu0 0
  %434 = vmatprep.subr.bf16.mxu0 0
  %435 = vmatpush1.bf16.msra.mxu0 0
  %436 = vmatprep.subr.bf16.mxu0 0
  %437 = vmatpush1.bf16.msra.mxu0 0
  %438 = vmatprep.subr.bf16.mxu0 0
  %439 = vmatpush1.bf16.msra.mxu0 0
  %440 = vmatprep.subr.bf16.mxu0 0
  %441 = vmatpush1.bf16.msra.mxu0 0
  %442 = vmatprep.subr.bf16.mxu0 0
  %443 = vmatpush1.bf16.msra.mxu0 0
  %444 = vmatprep.mubr.bf16.mxu0 0
  %445 = vmatmul.mubr.bf16.gmra.mrb[0].mxu0 %v410
  %v446 = vpop.f32.mrb[0].mxu0
  %v447 = vadd.f32 %v92, %v446
  %v448 = vpop.f32.mrb[0].mxu0
  %v449 = vpop.f32.mrb[0].mxu0
  %v450 = vpop.f32.mrb[0].mxu0
  %451 = vdwg.mxu0
  %v452 = vxor.u32 %v447, 2147483648
  %v453 = vmul.f32 %v452, 1.442695
  %v454 = vpow.pop %v453
  %v455 = vadd.f32 %v454, 1.0
  %v456 = vrcp.pop %v455
  %v457 = vmul.f32 1.0, %v456
  %v458 = vtanh.pop %v447
  %v459 = vmul.f32 %v457, %v398
  %461 = vrot.lane.b32.xlu0 %v458, 64
  %v462 = vpop.permute.xlu0 %461
  %v464 = vmul.f32 %v457, %v462
  %466 = vrot.lane.b32.xlu0 %v464, 32
  %v467 = vpop.permute.xlu0 %466
  %v469 = vadd.f32 %v459, %v467
  %v470 = vtanh.pop %v469
  %472 = vrot.lane.b32.xlu0 %v470, 64
  %v473 = vpop.permute.xlu0 %472
  %v475 = vmul.f32 %v457, %v473
  %v476 = vpack.c.bf16 %v475, %v475
  %478 = vrot.lane.b32.xlu0 %v476, 32
  %v479 = vpop.permute.xlu0 %478
  %v481 = vrot.slane %v92, 2
  %v484 = vsel %vm50, %v479, 0
  %486 = vmatprep.subr.bf16.mxu0 0
  %487 = vmatpush1.bf16.msra.mxu0 %v110
  %488 = vmatprep.subr.bf16.mxu0 0
  %489 = vmatpush1.bf16.msra.mxu0 %v111
  %490 = vmatprep.subr.bf16.mxu0 0
  %491 = vmatpush1.bf16.msra.mxu0 0
  %492 = vmatprep.subr.bf16.mxu0 0
  %493 = vmatpush1.bf16.msra.mxu0 0
  %494 = vmatprep.subr.bf16.mxu0 0
  %495 = vmatpush1.bf16.msra.mxu0 0
  %496 = vmatprep.subr.bf16.mxu0 0
  %497 = vmatpush1.bf16.msra.mxu0 0
  %498 = vmatprep.subr.bf16.mxu0 0
  %499 = vmatpush1.bf16.msra.mxu0 0
  %500 = vmatprep.subr.bf16.mxu0 0
  %501 = vmatpush1.bf16.msra.mxu0 0
  %502 = vmatprep.subr.bf16.mxu0 0
  %503 = vmatpush1.bf16.msra.mxu0 0
  %504 = vmatprep.subr.bf16.mxu0 0
  %505 = vmatpush1.bf16.msra.mxu0 0
  %506 = vmatprep.subr.bf16.mxu0 0
  %507 = vmatpush1.bf16.msra.mxu0 0
  %508 = vmatprep.subr.bf16.mxu0 0
  %509 = vmatpush1.bf16.msra.mxu0 0
  %510 = vmatprep.subr.bf16.mxu0 0
  %511 = vmatpush1.bf16.msra.mxu0 0
  %512 = vmatprep.subr.bf16.mxu0 0
  %513 = vmatpush1.bf16.msra.mxu0 0
  %514 = vmatprep.subr.bf16.mxu0 0
  %515 = vmatpush1.bf16.msra.mxu0 0
  %516 = vmatprep.subr.bf16.mxu0 0
  %517 = vmatpush1.bf16.msra.mxu0 0
  %518 = vmatprep.mubr.bf16.mxu0 0
  %519 = vmatmul.mubr.bf16.gmra.mrb[0].mxu0 %v484
  %v520 = vpop.f32.mrb[0].mxu0
  %v521 = vadd.f32 %v481, %v520
  %v522 = vpop.f32.mrb[0].mxu0
  %v523 = vpop.f32.mrb[0].mxu0
  %v524 = vpop.f32.mrb[0].mxu0
  %525 = vdwg.mxu0
  %v526 = vxor.u32 %v521, 2147483648
  %v527 = vmul.f32 %v526, 1.442695
  %v528 = vpow.pop %v527
  %v529 = vadd.f32 %v528, 1.0
  %v530 = vrcp.pop %v529
  %v531 = vmul.f32 1.0, %v530
  %v532 = vtanh.pop %v521
  %v533 = vmul.f32 %v531, %v469
  %535 = vrot.lane.b32.xlu0 %v532, 64
  %v536 = vpop.permute.xlu0 %535
  %v538 = vmul.f32 %v531, %v536
  %540 = vrot.lane.b32.xlu0 %v538, 32
  %v541 = vpop.permute.xlu0 %540
  %v543 = vadd.f32 %v533, %v541
  %v544 = vtanh.pop %v543
  %546 = vrot.lane.b32.xlu0 %v544, 64
  %v547 = vpop.permute.xlu0 %546
  %v549 = vmul.f32 %v531, %v547
  %v550 = vpack.c.bf16 %v549, %v549
  %552 = vrot.lane.b32.xlu0 %v550, 32
  %v553 = vpop.permute.xlu0 %552
  %v554 = vrot.slane %v92, 4
  %v557 = vsel %vm50, %v553, 0
  %559 = vmatprep.subr.bf16.mxu0 0
  %560 = vmatpush1.bf16.msra.mxu0 %v110
  %561 = vmatprep.subr.bf16.mxu0 0
  %562 = vmatpush1.bf16.msra.mxu0 %v111
  %563 = vmatprep.subr.bf16.mxu0 0
  %564 = vmatpush1.bf16.msra.mxu0 0
  %565 = vmatprep.subr.bf16.mxu0 0
  %566 = vmatpush1.bf16.msra.mxu0 0
  %567 = vmatprep.subr.bf16.mxu0 0
  %568 = vmatpush1.bf16.msra.mxu0 0
  %569 = vmatprep.subr.bf16.mxu0 0
  %570 = vmatpush1.bf16.msra.mxu0 0
  %571 = vmatprep.subr.bf16.mxu0 0
  %572 = vmatpush1.bf16.msra.mxu0 0
  %573 = vmatprep.subr.bf16.mxu0 0
  %574 = vmatpush1.bf16.msra.mxu0 0
  %575 = vmatprep.subr.bf16.mxu0 0
  %576 = vmatpush1.bf16.msra.mxu0 0
  %577 = vmatprep.subr.bf16.mxu0 0
  %578 = vmatpush1.bf16.msra.mxu0 0
  %579 = vmatprep.subr.bf16.mxu0 0
  %580 = vmatpush1.bf16.msra.mxu0 0
  %581 = vmatprep.subr.bf16.mxu0 0
  %582 = vmatpush1.bf16.msra.mxu0 0
  %583 = vmatprep.subr.bf16.mxu0 0
  %584 = vmatpush1.bf16.msra.mxu0 0
  %585 = vmatprep.subr.bf16.mxu0 0
  %586 = vmatpush1.bf16.msra.mxu0 0
  %587 = vmatprep.subr.bf16.mxu0 0
  %588 = vmatpush1.bf16.msra.mxu0 0
  %589 = vmatprep.subr.bf16.mxu0 0
  %590 = vmatpush1.bf16.msra.mxu0 0
  %591 = vmatprep.mubr.bf16.mxu0 0
  %592 = vmatmul.mubr.bf16.gmra.mrb[0].mxu0 %v557
  %v593 = vpop.f32.mrb[0].mxu0
  %v594 = vadd.f32 %v554, %v593
  %v595 = vpop.f32.mrb[0].mxu0
  %v596 = vpop.f32.mrb[0].mxu0
  %v597 = vpop.f32.mrb[0].mxu0
  %598 = vdwg.mxu0
  %v599 = vxor.u32 %v594, 2147483648
  %v600 = vmul.f32 %v599, 1.442695
  %v601 = vpow.pop %v600
  %v602 = vadd.f32 %v601, 1.0
  %v603 = vrcp.pop %v602
  %v604 = vmul.f32 1.0, %v603
  %v605 = vtanh.pop %v594
  %v606 = vmul.f32 %v604, %v543
  %608 = vrot.lane.b32.xlu0 %v605, 64
  %v609 = vpop.permute.xlu0 %608
  %v611 = vmul.f32 %v604, %v609
  %613 = vrot.lane.b32.xlu0 %v611, 32
  %v614 = vpop.permute.xlu0 %613
  %v616 = vadd.f32 %v606, %v614
  %v617 = vtanh.pop %v616
  %619 = vrot.lane.b32.xlu0 %v617, 64
  %v620 = vpop.permute.xlu0 %619
  %v622 = vmul.f32 %v604, %v620
  %v623 = vpack.c.bf16 %v622, %v622
  %625 = vrot.lane.b32.xlu0 %v623, 32
  %v626 = vpop.permute.xlu0 %625
  %v627 = vrot.slane %v92, 6
  %v630 = vsel %vm50, %v626, 0
  %632 = vmatprep.subr.bf16.mxu0 0
  %633 = vmatpush1.bf16.msra.mxu0 %v110
  %634 = vmatprep.subr.bf16.mxu0 0
  %635 = vmatpush1.bf16.msra.mxu0 %v111
  %636 = vmatprep.subr.bf16.mxu0 0
  %637 = vmatpush1.bf16.msra.mxu0 0
  %638 = vmatprep.subr.bf16.mxu0 0
  %639 = vmatpush1.bf16.msra.mxu0 0
  %640 = vmatprep.subr.bf16.mxu0 0
  %641 = vmatpush1.bf16.msra.mxu0 0
  %642 = vmatprep.subr.bf16.mxu0 0
  %643 = vmatpush1.bf16.msra.mxu0 0
  %644 = vmatprep.subr.bf16.mxu0 0
  %645 = vmatpush1.bf16.msra.mxu0 0
  %646 = vmatprep.subr.bf16.mxu0 0
  %647 = vmatpush1.bf16.msra.mxu0 0
  %648 = vmatprep.subr.bf16.mxu0 0
  %649 = vmatpush1.bf16.msra.mxu0 0
  %650 = vmatprep.subr.bf16.mxu0 0
  %651 = vmatpush1.bf16.msra.mxu0 0
  %652 = vmatprep.subr.bf16.mxu0 0
  %653 = vmatpush1.bf16.msra.mxu0 0
  %654 = vmatprep.subr.bf16.mxu0 0
  %655 = vmatpush1.bf16.msra.mxu0 0
  %656 = vmatprep.subr.bf16.mxu0 0
  %657 = vmatpush1.bf16.msra.mxu0 0
  %658 = vmatprep.subr.bf16.mxu0 0
  %659 = vmatpush1.bf16.msra.mxu0 0
  %660 = vmatprep.subr.bf16.mxu0 0
  %661 = vmatpush1.bf16.msra.mxu0 0
  %662 = vmatprep.subr.bf16.mxu0 0
  %663 = vmatpush1.bf16.msra.mxu0 0
  %664 = vmatprep.mubr.bf16.mxu0 0
  %665 = vmatmul.mubr.bf16.gmra.mrb[0].mxu0 %v630
  %v666 = vpop.f32.mrb[0].mxu0
  %v667 = vadd.f32 %v627, %v666
  %v668 = vpop.f32.mrb[0].mxu0
  %v669 = vpop.f32.mrb[0].mxu0
  %v670 = vpop.f32.mrb[0].mxu0
  %671 = vdwg.mxu0
  %v672 = vxor.u32 %v667, 2147483648
  %v673 = vmul.f32 %v672, 1.442695
  %v674 = vpow.pop %v673
  %v675 = vadd.f32 %v674, 1.0
  %v676 = vrcp.pop %v675
  %v677 = vmul.f32 1.0, %v676
  %v678 = vtanh.pop %v667
  %v679 = vmul.f32 %v677, %v616
  %681 = vrot.lane.b32.xlu0 %v678, 64
  %v682 = vpop.permute.xlu0 %681
  %v684 = vmul.f32 %v677, %v682
  %686 = vrot.lane.b32.xlu0 %v684, 32
  %v687 = vpop.permute.xlu0 %686
  %v689 = vadd.f32 %v679, %v687
  %v690 = vtanh.pop %v689
  %692 = vrot.lane.b32.xlu0 %v690, 64
  %v693 = vpop.permute.xlu0 %692
  %v695 = vmul.f32 %v677, %v693
  %v698 = vunpack.c.l.s4 1966171168
  %v699 = vunpack.c.0.s8 %v698
  %v700 = vlaneseq
  %v701 = vshrl.u32 %v700, 7
  %v702 = vsub.s32 %v699, %v701
  %v703 = vrot.slane %v184, %v702
  %v704 = vcombine.high %v703, %v703
  %v706 = vunpack.c.l.s4 1966171168
  %v707 = vunpack.c.0.s8 %v706
  %v708 = vlaneseq
  %v709 = vshrl.u32 %v708, 7
  %v710 = vsub.s32 %v707, %v709
  %v711 = vrot.slane %v703, %v710
  %v713 = vunpack.c.l.s4 1966171168
  %v714 = vunpack.c.0.s8 %v713
  %v715 = vlaneseq
  %v716 = vshrl.u32 %v715, 7
  %v717 = vsub.s32 %v714, %v716
  %v718 = vrot.slane %v704, %v717
  %v723 = vunpack.c.l.s4 1966171168
  %v724 = vunpack.c.0.s8 %v723
  %v725 = vlaneseq
  %v726 = vshrl.u32 %v725, 7
  %v727 = vsub.s32 %v724, %v726
  %v728 = vrot.slane %v258, %v727
  %v729 = vcombine.high %v728, %v728
  %v731 = vunpack.c.l.s4 1966171168
  %v732 = vunpack.c.0.s8 %v731
  %v733 = vlaneseq
  %v734 = vshrl.u32 %v733, 7
  %v735 = vsub.s32 %v732, %v734
  %v736 = vrot.slane %v728, %v735
  %v738 = vunpack.c.l.s4 1966171168
  %v739 = vunpack.c.0.s8 %v738
  %v740 = vlaneseq
  %v741 = vshrl.u32 %v740, 7
  %v742 = vsub.s32 %v739, %v741
  %v743 = vrot.slane %v729, %v742
  %v746 = vunpack.c.l.s4 1966171168
  %v747 = vunpack.c.0.s8 %v746
  %v748 = vlaneseq
  %v749 = vshrl.u32 %v748, 7
  %v750 = vsub.s32 %v747, %v749
  %v751 = vrot.slane %v331, %v750
  %v752 = vcombine.high %v751, %v751
  %v754 = vunpack.c.l.s4 1966171168
  %v755 = vunpack.c.0.s8 %v754
  %v756 = vlaneseq
  %v757 = vshrl.u32 %v756, 7
  %v758 = vsub.s32 %v755, %v757
  %v759 = vrot.slane %v751, %v758
  %v761 = vunpack.c.l.s4 1966171168
  %v762 = vunpack.c.0.s8 %v761
  %v763 = vlaneseq
  %v764 = vshrl.u32 %v763, 7
  %v765 = vsub.s32 %v762, %v764
  %v766 = vrot.slane %v752, %v765
  %v769 = vunpack.c.l.s4 1966171168
  %v770 = vunpack.c.0.s8 %v769
  %v771 = vlaneseq
  %v772 = vshrl.u32 %v771, 7
  %v773 = vsub.s32 %v770, %v772
  %v774 = vrot.slane %v404, %v773
  %v775 = vcombine.high %v774, %v774
  %v777 = vunpack.c.l.s4 1966171168
  %v778 = vunpack.c.0.s8 %v777
  %v779 = vlaneseq
  %v780 = vshrl.u32 %v779, 7
  %v781 = vsub.s32 %v778, %v780
  %v782 = vrot.slane %v774, %v781
  %v784 = vunpack.c.l.s4 1966171168
  %v785 = vunpack.c.0.s8 %v784
  %v786 = vlaneseq
  %v787 = vshrl.u32 %v786, 7
  %v788 = vsub.s32 %v785, %v787
  %v789 = vrot.slane %v775, %v788
  %v792 = vunpack.c.l.s4 1966171168
  %v793 = vunpack.c.0.s8 %v792
  %v794 = vlaneseq
  %v795 = vshrl.u32 %v794, 7
  %v796 = vsub.s32 %v793, %v795
  %v797 = vrot.slane %v475, %v796
  %v798 = vcombine.high %v797, %v797
  %v800 = vunpack.c.l.s4 1966171168
  %v801 = vunpack.c.0.s8 %v800
  %v802 = vlaneseq
  %v803 = vshrl.u32 %v802, 7
  %v804 = vsub.s32 %v801, %v803
  %v805 = vrot.slane %v797, %v804
  %v807 = vunpack.c.l.s4 1966171168
  %v808 = vunpack.c.0.s8 %v807
  %v809 = vlaneseq
  %v810 = vshrl.u32 %v809, 7
  %v811 = vsub.s32 %v808, %v810
  %v812 = vrot.slane %v798, %v811
  %v815 = vunpack.c.l.s4 1966171168
  %v816 = vunpack.c.0.s8 %v815
  %v817 = vlaneseq
  %v818 = vshrl.u32 %v817, 7
  %v819 = vsub.s32 %v816, %v818
  %v820 = vrot.slane %v549, %v819
  %v821 = vcombine.high %v820, %v820
  %v823 = vunpack.c.l.s4 1966171168
  %v824 = vunpack.c.0.s8 %v823
  %v825 = vlaneseq
  %v826 = vshrl.u32 %v825, 7
  %v827 = vsub.s32 %v824, %v826
  %v828 = vrot.slane %v820, %v827
  %v830 = vunpack.c.l.s4 1966171168
  %v831 = vunpack.c.0.s8 %v830
  %v832 = vlaneseq
  %v833 = vshrl.u32 %v832, 7
  %v834 = vsub.s32 %v831, %v833
  %v835 = vrot.slane %v821, %v834
  %v838 = vunpack.c.l.s4 1966171168
  %v839 = vunpack.c.0.s8 %v838
  %v840 = vlaneseq
  %v841 = vshrl.u32 %v840, 7
  %v842 = vsub.s32 %v839, %v841
  %v843 = vrot.slane %v622, %v842
  %v844 = vcombine.high %v843, %v843
  %v846 = vunpack.c.l.s4 1966171168
  %v847 = vunpack.c.0.s8 %v846
  %v848 = vlaneseq
  %v849 = vshrl.u32 %v848, 7
  %v850 = vsub.s32 %v847, %v849
  %v851 = vrot.slane %v843, %v850
  %v853 = vunpack.c.l.s4 1966171168
  %v854 = vunpack.c.0.s8 %v853
  %v855 = vlaneseq
  %v856 = vshrl.u32 %v855, 7
  %v857 = vsub.s32 %v854, %v856
  %v858 = vrot.slane %v844, %v857
  %v861 = vunpack.c.l.s4 1966171168
  %v862 = vunpack.c.0.s8 %v861
  %v863 = vlaneseq
  %v864 = vshrl.u32 %v863, 7
  %v865 = vsub.s32 %v862, %v864
  %v866 = vrot.slane %v695, %v865
  %v867 = vcombine.high %v866, %v866
  %v869 = vunpack.c.l.s4 1966171168
  %v870 = vunpack.c.0.s8 %v869
  %v871 = vlaneseq
  %v872 = vshrl.u32 %v871, 7
  %v873 = vsub.s32 %v870, %v872
  %v874 = vrot.slane %v866, %v873
  %v876 = vunpack.c.l.s4 1966171168
  %v877 = vunpack.c.0.s8 %v876
  %v878 = vlaneseq
  %v879 = vshrl.u32 %v878, 7
  %v880 = vsub.s32 %v877, %v879
  %v881 = vrot.slane %v867, %v880
  %v882 = vlaneseq
  %v883 = vshrl.u32 %v882, 7
  %v884 = vsub.s32 0, %v883
  %v885 = vrot.slane %v736, %v884
  %v886 = vlaneseq
  %v887 = vshrl.u32 %v886, 7
  %v888 = vsub.s32 0, %v887
  %v889 = vrot.slane %v743, %v888
  %v892 = vlaneseq
  %v893 = vshrl.u32 %v892, 7
  %v894 = vsub.s32 0, %v893
  %v895 = vrot.slane %v759, %v894
  %v896 = vlaneseq
  %v897 = vshrl.u32 %v896, 7
  %v898 = vsub.s32 0, %v897
  %v899 = vrot.slane %v766, %v898
  %v902 = vlaneseq
  %v903 = vshrl.u32 %v902, 7
  %v904 = vsub.s32 0, %v903
  %v905 = vrot.slane %v782, %v904
  %v906 = vlaneseq
  %v907 = vshrl.u32 %v906, 7
  %v908 = vsub.s32 0, %v907
  %v909 = vrot.slane %v789, %v908
  %v912 = vlaneseq
  %v913 = vshrl.u32 %v912, 7
  %v914 = vsub.s32 0, %v913
  %v915 = vrot.slane %v805, %v914
  %v916 = vlaneseq
  %v917 = vshrl.u32 %v916, 7
  %v918 = vsub.s32 0, %v917
  %v919 = vrot.slane %v812, %v918
  %v922 = vlaneseq
  %v923 = vshrl.u32 %v922, 7
  %v924 = vsub.s32 0, %v923
  %v925 = vrot.slane %v828, %v924
  %v926 = vlaneseq
  %v927 = vshrl.u32 %v926, 7
  %v928 = vsub.s32 0, %v927
  %v929 = vrot.slane %v835, %v928
  %v932 = vlaneseq
  %v933 = vshrl.u32 %v932, 7
  %v934 = vsub.s32 0, %v933
  %v935 = vrot.slane %v851, %v934
  %v936 = vlaneseq
  %v937 = vshrl.u32 %v936, 7
  %v938 = vsub.s32 0, %v937
  %v939 = vrot.slane %v858, %v938
  %v942 = vlaneseq
  %v943 = vshrl.u32 %v942, 7
  %v944 = vsub.s32 0, %v943
  %v945 = vrot.slane %v874, %v944
  %v946 = vlaneseq
  %v947 = vshrl.u32 %v946, 7
  %v948 = vsub.s32 0, %v947
  %v949 = vrot.slane %v881, %v948
  %vm952 = vcmask 1040384
  %v953 = vsel %vm952, %v711, %v885
  %v954 = vsel %vm952, %v718, %v889
  %vm955 = vcmask 1041408
  %v956 = vsel %vm955, %v953, %v895
  %v957 = vsel %vm955, %v954, %v899
  %vm958 = vcmask 1042432
  %v959 = vsel %vm958, %v956, %v905
  %v960 = vsel %vm958, %v957, %v909
  %vm961 = vcmask 1043456
  %v962 = vsel %vm961, %v959, %v915
  %v963 = vsel %vm961, %v960, %v919
  %vm964 = vcmask 1044480
  %v965 = vsel %vm964, %v962, %v925
  %v966 = vsel %vm964, %v963, %v929
  %vm967 = vcmask 1045504
  %v968 = vsel %vm967, %v965, %v935
  %v969 = vsel %vm967, %v966, %v939
  %vm970 = vcmask 1046528
  %v971 = vsel %vm970, %v968, %v945
  %v972 = vsel %vm970, %v969, %v949
  %975 = vrot.lane.b32.xlu0 %v971, 32
  %v976 = vpop.permute.xlu0 %975
  %977 = vrot.lane.b32.xlu0 %v972, 32
  %v978 = vpop.permute.xlu0 %977
  %981 = vst.msk [vmem:[%s6] sm:$0xff] %vm50, %v976
  %982 = vst.msk [vmem:[%s6 + $0x8] sm:$0xff] %vm50, %v978
  // Predicated region
  $region26: #{forward.12} parent=0 // pred_check
    _
  $region27: #{forward.12} parent=0 // pred_check_branch
    %984 = sbr.rel (0) target = $region29
  $region28: #{forward.12} parent=0 // pred_region
    _
  $region29: #{forward.12} parent=0 // pred_fallthru
    _
  // Predicated region
  $region30: #{forward.12} parent=0 // pred_check
    _
  $region31: #{forward.12} parent=0 // pred_check_branch
    %986 = sbr.rel (0) target = $region33
  $region32: #{forward.12} parent=0 // pred_region
    _
  $region33: #{forward.12} parent=0 // pred_fallthru
    _

// kernel: forward.13
$region0: #{forward.13}
  #allocation0 [shape = 'u32[]', space=smem, size = 0x4, offset = 0x4, fixed_abs, tag = 'smem constant byte address 0x4 - core index']
  #allocation1 [shape = 'u32[144,128]{1,0:T(1,128)}', space=vmem, size = 0x12000, scoped, tag = 'internal scratch']
  %s0 = inlined_call_operand.vmem [shape: f32[2,8,32], index: 0, kind: input, shape index: {}]
  %s1 = inlined_call_operand.vmem [shape: f32[2,8,32], index: 1, kind: input, shape index: {}]
  %s2 = inlined_call_operand.vmem [shape: f32[2,1,8], index: 2, kind: input, shape index: {}]
  %s3 = inlined_call_operand.vmem [shape: f32[1,32], index: 3, kind: input, shape index: {}]
  %s4 = inlined_call_operand.vmem [shape: f32[1,32], index: 4, kind: input, shape index: {}]
  %s5 = inlined_call_operand.vmem [shape: bf16[32,128], index: 5, kind: input, shape index: {}]
  %s6 = inlined_call_operand.vmem [shape: bf16[32,128], index: 6, kind: input, shape index: {}]
  %s7 = inlined_call_operand.vmem [shape: f32[1,128], index: 7, kind: input, shape index: {}]
  %s8 = inlined_call_operand.hbm [shape: f32[2,8,128], index: 8, kind: output, shape index: {}]
  %s9 = sld [smem:[#allocation0]]
  $region42: #{forward.13} parent=0
    _
  %s11 = ssub.s32 1, %s9
  %s12 = scalar_select 0, %s11, %s9
  $region1: #{forward.13} parent=0
    #allocation2 [shape = 'u8[8192]{0}', space=vmem, size = 0x2000, scoped, tag = 'output window, operand 0, single buffered']
    #allocation3 [shape = 's32[1]{0}', space=sflag, size = 0x4, scoped, tag = 'scoped memory for forward.13']
    %13 = vsyncpa [#allocation3], 0
    // Predicated region
    $region2: #{forward.13} parent=1 // pred_check
      _
    $region3: #{forward.13} parent=1 // pred_check_branch
      %15 = sbr.rel (0) target = $region5
    $region4: #{forward.13} parent=1 // pred_region
      _
    $region5: #{forward.13} parent=1 // pred_fallthru
      _
    // Predicated region
    $region6: #{forward.13} parent=1 // pred_check
      _
    $region7: #{forward.13} parent=1 // pred_check_branch
      %17 = sbr.rel (0) target = $region9
    $region8: #{forward.13} parent=1 // pred_region
      _
    $region9: #{forward.13} parent=1 // pred_fallthru
      _
    // Predicated region
    $region10: #{forward.13} parent=1 // pred_check
      _
    $region11: #{forward.13} parent=1 // pred_check_branch
      %19 = sbr.rel (0) target = $region13
    $region12: #{forward.13} parent=1 // pred_region
      _
    $region13: #{forward.13} parent=1 // pred_fallthru
      _
    // Predicated region
    $region14: #{forward.13} parent=1 // pred_check
      _
    $region15: #{forward.13} parent=1 // pred_check_branch
      %21 = sbr.rel (0) target = $region17
    $region16: #{forward.13} parent=1 // pred_region
      _
    $region17: #{forward.13} parent=1 // pred_fallthru
      _
    // Predicated region
    $region18: #{forward.13} parent=1 // pred_check
      _
    $region19: #{forward.13} parent=1 // pred_check_branch
      %23 = sbr.rel (0) target = $region21
    $region20: #{forward.13} parent=1 // pred_region
      _
    $region21: #{forward.13} parent=1 // pred_fallthru
      _
    // Predicated region
    $region22: #{forward.13} parent=1 // pred_check
      _
    $region23: #{forward.13} parent=1 // pred_check_branch
      %25 = sbr.rel (0) target = $region25
    $region24: #{forward.13} parent=1 // pred_region
      _
    $region25: #{forward.13} parent=1 // pred_fallthru
      _
    // Predicated region
    $region26: #{forward.13} parent=1 // pred_check
      _
    $region27: #{forward.13} parent=1 // pred_check_branch
      %27 = sbr.rel (0) target = $region29
    $region28: #{forward.13} parent=1 // pred_region
      _
    $region29: #{forward.13} parent=1 // pred_fallthru
      _
    // Predicated region
    $region30: #{forward.13} parent=1 // pred_check
      _
    $region31: #{forward.13} parent=1 // pred_check_branch
      %29 = sbr.rel (0) target = $region33
    $region32: #{forward.13} parent=1 // pred_region
      _
    $region33: #{forward.13} parent=1 // pred_fallthru
      _
    %v31 = vld [vmem:[%s0] sm:$0xff]
    %v32 = vld [vmem:[%s0 + $0x8] sm:$0xff]
    %v33 = vld [vmem:[%s3] sm:$0x1]
    %v34 = vld [vmem:[%s4] sm:$0x1]
    %vm35 = vcmask 261120
    %v36 = vsel %vm35, %v31, 0.0
    %37 = vadd.xlane.f32.xlu0 %v36
    %v38 = vpop.xlane.xlu0 %37
    %v39 = vsel %vm35, %v32, 0.0
    %40 = vadd.xlane.f32.xlu0 %v39
    %v41 = vpop.xlane.xlu0 %40
    %v42 = vrcp.pop 32.0
    %v43 = vmul.f32 %v38, %v42
    %v44 = vmul.f32 %v41, %v42
    %v45 = vsub.f32 %v31, %v43
    %v46 = vsub.f32 %v32, %v44
    %v47 = vmul.f32 %v45, %v45
    %v48 = vmul.f32 %v46, %v46
    %v49 = vsel %vm35, %v47, 0.0
    %50 = vadd.xlane.f32.xlu0 %v49
    %v51 = vpop.xlane.xlu0 %50
    %v52 = vsel %vm35, %v48, 0.0
    %53 = vadd.xlane.f32.xlu0 %v52
    %v54 = vpop.xlane.xlu0 %53
    %v55 = vmul.f32 %v51, %v42
    %v56 = vmul.f32 %v54, %v42
    %v57 = vadd.f32 %v55, 1e-05
    %v58 = vadd.f32 %v56, 1e-05
    %v59 = vrsqrt.pop %v57
    %v60 = vrsqrt.pop %v58
    %v61 = vmul.f32 %v45, %v59
    %v62 = vmul.f32 %v46, %v60
    %v64 = vlaneseq
    %v65 = vshrl.u32 %v64, 7
    %v66 = vsub.s32 0, %v65
    %v67 = vrot.slane %v33, %v66
    %v69 = vmul.f32 %v61, %v67
    %v70 = vmul.f32 %v62, %v67
    %v72 = vlaneseq
    %v73 = vshrl.u32 %v72, 7
    %v74 = vsub.s32 0, %v73
    %v75 = vrot.slane %v34, %v74
    %v77 = vadd.f32 %v69, %v75
    %v78 = vadd.f32 %v70, %v75
    %v79 = vld [vmem:[%s1] sm:$0xff]
    %v80 = vld [vmem:[%s1 + $0x8] sm:$0xff]
    %v81 = vld [vmem:[%s2] sm:$0x1]
    %v82 = vld [vmem:[%s2 + $0x1] sm:$0x1]
    %v83 = vld [vmem:[%s5] sm:$0xf]
    %v84 = vld [vmem:[%s5 + $0x4] sm:$0xf]
    %v85 = vld [vmem:[%s5 + $0x8] sm:$0xf]
    %v86 = vld [vmem:[%s5 + $0xc] sm:$0xf]
    %v87 = vld [vmem:[%s6] sm:$0xf]
    %v88 = vld [vmem:[%s6 + $0x4] sm:$0xf]
    %v89 = vld [vmem:[%s6 + $0x8] sm:$0xf]
    %v90 = vld [vmem:[%s6 + $0xc] sm:$0xf]
    %v91 = vld [vmem:[%s7] sm:$0x1]
    %v92 = vpack.c.bf16 %v79, %v79
    %v93 = vpack.c.bf16 %v77, %v77
    %v95 = vsel %vm35, %v93, 0
    %v98 = vsel %vm35, %v92, 0
    %100 = vmatprep.subr.bf16.mxu0 0
    %101 = vmatpush1.bf16.xpose.msra.mxu0 %v98
    %102 = vmatprep.subr.bf16.mxu0 0
    %103 = vmatpush1.bf16.xpose.msra.mxu0 0
    %104 = vmatprep.subr.bf16.mxu0 0
    %105 = vmatpush1.bf16.xpose.msra.mxu0 0
    %106 = vmatprep.subr.bf16.mxu0 0
    %107 = vmatpush1.bf16.xpose.msra.mxu0 0
    %108 = vmatprep.subr.bf16.mxu0 0
    %109 = vmatpush1.bf16.xpose.msra.mxu0 0
    %110 = vmatprep.subr.bf16.mxu0 0
    %111 = vmatpush1.bf16.xpose.msra.mxu0 0
    %112 = vmatprep.subr.bf16.mxu0 0
    %113 = vmatpush1.bf16.xpose.msra.mxu0 0
    %114 = vmatprep.subr.bf16.mxu0 0
    %115 = vmatpush1.bf16.xpose.msra.mxu0 0
    %116 = vmatprep.subr.bf16.mxu0 0
    %117 = vmatpush1.bf16.xpose.msra.mxu0 0
    %118 = vmatprep.subr.bf16.mxu0 0
    %119 = vmatpush1.bf16.xpose.msra.mxu0 0
    %120 = vmatprep.subr.bf16.mxu0 0
    %121 = vmatpush1.bf16.xpose.msra.mxu0 0
    %122 = vmatprep.subr.bf16.mxu0 0
    %123 = vmatpush1.bf16.xpose.msra.mxu0 0
    %124 = vmatprep.subr.bf16.mxu0 0
    %125 = vmatpush1.bf16.xpose.msra.mxu0 0
    %126 = vmatprep.subr.bf16.mxu0 0
    %127 = vmatpush1.bf16.xpose.msra.mxu0 0
    %128 = vmatprep.subr.bf16.mxu0 0
    %129 = vmatpush1.bf16.xpose.msra.mxu0 0
    %130 = vmatprep.subr.bf16.mxu0 0
    %131 = vmatpush1.bf16.xpose.msra.mxu0 0
    %132 = vmatprep.mubr.bf16.mxu0 0
    %133 = vmatmul.mubr.bf16.gmra.mrb[0].mxu0 %v95
    %v134 = vpop.f32.mrb[0].mxu0
    %v135 = vadd.f32 0.0, %v134
    %v136 = vpop.f32.mrb[0].mxu0
    %v137 = vpop.f32.mrb[0].mxu0
    %v138 = vpop.f32.mrb[0].mxu0
    %139 = vdwg.mxu0
    %vm140 = vcmp.gt.f32.partialorder %v81, 0.5
    %v141 = vsel %vm140, 1, 0
    %v142 = vlaneseq
    %v143 = vshrl.u32 %v142, 7
    %v144 = vsub.s32 0, %v143
    %v145 = vrot.slane %v141, %v144
    %vm146 = vcmp.eq.s32.totalorder %v145, 1
    %v147 = vsel %vm146, %v135, -1e+10
    %vm148 = vcmask 64512
    %v149 = vsel %vm148, %v147, -inf
    %150 = vmax.xlane.f32.xlu0 %v149
    %v151 = vpop.xlane.xlu0 %150
    %v152 = vsub.f32 %v147, %v151
    %v153 = vmul.f32 %v152, 1.442695
    %v154 = vpow.pop %v153
    %v155 = vsel %vm148, %v154, 0.0
    %156 = vadd.xlane.f32.xlu0 %v155
    %v157 = vpop.xlane.xlu0 %156
    %v158 = vrcp.pop %v157
    %v159 = vmul.f32 %v154, %v158
    %v160 = vpack.c.bf16 %v159, %v159
    %v162 = vsel %vm148, %v160, 0
    %vm164 = vcmask 1043456
    %v165 = vsel %vm164, %v92, 0
    %167 = vmatprep.subr.bf16.mxu0 0
    %168 = vmatpush1.bf16.msra.mxu0 %v165
    %169 = vmatprep.subr.bf16.mxu0 0
    %170 = vmatpush1.bf16.msra.mxu0 0
    %171 = vmatprep.subr.bf16.mxu0 0
    %172 = vmatpush1.bf16.msra.mxu0 0
    %173 = vmatprep.subr.bf16.mxu0 0
    %174 = vmatpush1.bf16.msra.mxu0 0
    %175 = vmatprep.subr.bf16.mxu0 0
    %176 = vmatpush1.bf16.msra.mxu0 0
    %177 = vmatprep.subr.bf16.mxu0 0
    %178 = vmatpush1.bf16.msra.mxu0 0
    %179 = vmatprep.subr.bf16.mxu0 0
    %180 = vmatpush1.bf16.msra.mxu0 0
    %181 = vmatprep.subr.bf16.mxu0 0
    %182 = vmatpush1.bf16.msra.mxu0 0
    %183 = vmatprep.subr.bf16.mxu0 0
    %184 = vmatpush1.bf16.msra.mxu0 0
    %185 = vmatprep.subr.bf16.mxu0 0
    %186 = vmatpush1.bf16.msra.mxu0 0
    %187 = vmatprep.subr.bf16.mxu0 0
    %188 = vmatpush1.bf16.msra.mxu0 0
    %189 = vmatprep.subr.bf16.mxu0 0
    %190 = vmatpush1.bf16.msra.mxu0 0
    %191 = vmatprep.subr.bf16.mxu0 0
    %192 = vmatpush1.bf16.msra.mxu0 0
    %193 = vmatprep.subr.bf16.mxu0 0
    %194 = vmatpush1.bf16.msra.mxu0 0
    %195 = vmatprep.subr.bf16.mxu0 0
    %196 = vmatpush1.bf16.msra.mxu0 0
    %197 = vmatprep.subr.bf16.mxu0 0
    %198 = vmatpush1.bf16.msra.mxu0 0
    %199 = vmatprep.mubr.bf16.mxu0 0
    %200 = vmatmul.mubr.bf16.gmra.mrb[0].mxu0 %v162
    %v201 = vpop.f32.mrb[0].mxu0
    %v202 = vadd.f32 0.0, %v201
    %v203 = vpop.f32.mrb[0].mxu0
    %v204 = vpop.f32.mrb[0].mxu0
    %v205 = vpop.f32.mrb[0].mxu0
    %206 = vdwg.mxu0
    %v207 = vpack.c.bf16 %v202, %v202
    %v212 = vunpack.c.l.b16 %v87
    %v213 = vunpack.c.l.b16 %v88
    %v214 = vunpack.c.l.b16 %v89
    %v215 = vunpack.c.l.b16 %v90
    %v216 = vpack.c.b16 %v213, %v212
    %v217 = vpack.c.b16 %v215, %v214
    %v221 = vsel %vm35, %v207, 0
    %223 = vmatprep.subr.bf16.mxu0 0
    %224 = vmatpush1.bf16.msra.mxu0 %v216
    %225 = vmatprep.subr.bf16.mxu0 0
    %226 = vmatpush1.bf16.msra.mxu0 %v217
    %227 = vmatprep.subr.bf16.mxu0 0
    %228 = vmatpush1.bf16.msra.mxu0 0
    %229 = vmatprep.subr.bf16.mxu0 0
    %230 = vmatpush1.bf16.msra.mxu0 0
    %231 = vmatprep.subr.bf16.mxu0 0
    %232 = vmatpush1.bf16.msra.mxu0 0
    %233 = vmatprep.subr.bf16.mxu0 0
    %234 = vmatpush1.bf16.msra.mxu0 0
    %235 = vmatprep.subr.bf16.mxu0 0
    %236 = vmatpush1.bf16.msra.mxu0 0
    %237 = vmatprep.subr.bf16.mxu0 0
    %238 = vmatpush1.bf16.msra.mxu0 0
    %239 = vmatprep.subr.bf16.mxu0 0
    %240 = vmatpush1.bf16.msra.mxu0 0
    %241 = vmatprep.subr.bf16.mxu0 0
    %242 = vmatpush1.bf16.msra.mxu0 0
    %243 = vmatprep.subr.bf16.mxu0 0
    %244 = vmatpush1.bf16.msra.mxu0 0
    %245 = vmatprep.subr.bf16.mxu0 0
    %246 = vmatpush1.bf16.msra.mxu0 0
    %247 = vmatprep.subr.bf16.mxu0 0
    %248 = vmatpush1.bf16.msra.mxu0 0
    %249 = vmatprep.subr.bf16.mxu0 0
    %250 = vmatpush1.bf16.msra.mxu0 0
    %251 = vmatprep.subr.bf16.mxu0 0
    %252 = vmatpush1.bf16.msra.mxu0 0
    %253 = vmatprep.subr.bf16.mxu0 0
    %254 = vmatpush1.bf16.msra.mxu0 0
    %255 = vmatprep.mubr.bf16.mxu0 0
    %256 = vmatmul.mubr.bf16.gmra.mrb[0].mxu0 %v221
    %v257 = vpop.f32.mrb[0].mxu0
    %v258 = vadd.f32 0.0, %v257
    %v259 = vpop.f32.mrb[0].mxu0
    %v260 = vpop.f32.mrb[0].mxu0
    %v261 = vpop.f32.mrb[0].mxu0
    %262 = vdwg.mxu0
    %v267 = vunpack.c.l.b16 %v83
    %v268 = vunpack.c.l.b16 %v84
    %v269 = vunpack.c.l.b16 %v85
    %v270 = vunpack.c.l.b16 %v86
    %v271 = vpack.c.b16 %v268, %v267
    %v272 = vpack.c.b16 %v270, %v269
    %275 = vmatprep.subr.bf16.mxu0 0
    %276 = vmatpush1.bf16.msra.mxu0 %v271
    %277 = vmatprep.subr.bf16.mxu0 0
    %278 = vmatpush1.bf16.msra.mxu0 %v272
    %279 = vmatprep.subr.bf16.mxu0 0
    %280 = vmatpush1.bf16.msra.mxu0 0
    %281 = vmatprep.subr.bf16.mxu0 0
    %282 = vmatpush1.bf16.msra.mxu0 0
    %283 = vmatprep.subr.bf16.mxu0 0
    %284 = vmatpush1.bf16.msra.mxu0 0
    %285 = vmatprep.subr.bf16.mxu0 0
    %286 = vmatpush1.bf16.msra.mxu0 0
    %287 = vmatprep.subr.bf16.mxu0 0
    %288 = vmatpush1.bf16.msra.mxu0 0
    %289 = vmatprep.subr.bf16.mxu0 0
    %290 = vmatpush1.bf16.msra.mxu0 0
    %291 = vmatprep.subr.bf16.mxu0 0
    %292 = vmatpush1.bf16.msra.mxu0 0
    %293 = vmatprep.subr.bf16.mxu0 0
    %294 = vmatpush1.bf16.msra.mxu0 0
    %295 = vmatprep.subr.bf16.mxu0 0
    %296 = vmatpush1.bf16.msra.mxu0 0
    %297 = vmatprep.subr.bf16.mxu0 0
    %298 = vmatpush1.bf16.msra.mxu0 0
    %299 = vmatprep.subr.bf16.mxu0 0
    %300 = vmatpush1.bf16.msra.mxu0 0
    %301 = vmatprep.subr.bf16.mxu0 0
    %302 = vmatpush1.bf16.msra.mxu0 0
    %303 = vmatprep.subr.bf16.mxu0 0
    %304 = vmatpush1.bf16.msra.mxu0 0
    %305 = vmatprep.subr.bf16.mxu0 0
    %306 = vmatpush1.bf16.msra.mxu0 0
    %307 = vmatprep.mubr.bf16.mxu0 0
    %308 = vmatmul.mubr.bf16.gmra.mrb[0].mxu0 %v95
    %v309 = vpop.f32.mrb[0].mxu0
    %v310 = vadd.f32 %v258, %v309
    %v311 = vpop.f32.mrb[0].mxu0
    %v312 = vpop.f32.mrb[0].mxu0
    %v313 = vpop.f32.mrb[0].mxu0
    %314 = vdwg.mxu0
    %v316 = vlaneseq
    %v317 = vshrl.u32 %v316, 7
    %v318 = vsub.s32 0, %v317
    %v319 = vrot.slane %v91, %v318
    %v321 = vadd.f32 %v310, %v319
    %322 = vst [vmem:[#allocation2] sm:$0xff] %v321
    %v323 = vpack.c.bf16 %v80, %v80
    %v324 = vpack.c.bf16 %v78, %v78
    %v326 = vsel %vm35, %v324, 0
    %v329 = vsel %vm35, %v323, 0
    %331 = vmatprep.subr.bf16.mxu0 0
    %332 = vmatpush1.bf16.xpose.msra.mxu0 %v329
    %333 = vmatprep.subr.bf16.mxu0 0
    %334 = vmatpush1.bf16.xpose.msra.mxu0 0
    %335 = vmatprep.subr.bf16.mxu0 0
    %336 = vmatpush1.bf16.xpose.msra.mxu0 0
    %337 = vmatprep.subr.bf16.mxu0 0
    %338 = vmatpush1.bf16.xpose.msra.mxu0 0
    %339 = vmatprep.subr.bf16.mxu0 0
    %340 = vmatpush1.bf16.xpose.msra.mxu0 0
    %341 = vmatprep.subr.bf16.mxu0 0
    %342 = vmatpush1.bf16.xpose.msra.mxu0 0
    %343 = vmatprep.subr.bf16.mxu0 0
    %344 = vmatpush1.bf16.xpose.msra.mxu0 0
    %345 = vmatprep.subr.bf16.mxu0 0
    %346 = vmatpush1.bf16.xpose.msra.mxu0 0
    %347 = vmatprep.subr.bf16.mxu0 0
    %348 = vmatpush1.bf16.xpose.msra.mxu0 0
    %349 = vmatprep.subr.bf16.mxu0 0
    %350 = vmatpush1.bf16.xpose.msra.mxu0 0
    %351 = vmatprep.subr.bf16.mxu0 0
    %352 = vmatpush1.bf16.xpose.msra.mxu0 0
    %353 = vmatprep.subr.bf16.mxu0 0
    %354 = vmatpush1.bf16.xpose.msra.mxu0 0
    %355 = vmatprep.subr.bf16.mxu0 0
    %356 = vmatpush1.bf16.xpose.msra.mxu0 0
    %357 = vmatprep.subr.bf16.mxu0 0
    %358 = vmatpush1.bf16.xpose.msra.mxu0 0
    %359 = vmatprep.subr.bf16.mxu0 0
    %360 = vmatpush1.bf16.xpose.msra.mxu0 0
    %361 = vmatprep.subr.bf16.mxu0 0
    %362 = vmatpush1.bf16.xpose.msra.mxu0 0
    %363 = vmatprep.mubr.bf16.mxu0 0
    %364 = vmatmul.mubr.bf16.gmra.mrb[0].mxu0 %v326
    %v365 = vpop.f32.mrb[0].mxu0
    %v366 = vadd.f32 0.0, %v365
    %v367 = vpop.f32.mrb[0].mxu0
    %v368 = vpop.f32.mrb[0].mxu0
    %v369 = vpop.f32.mrb[0].mxu0
    %370 = vdwg.mxu0
    %vm371 = vcmp.gt.f32.partialorder %v82, 0.5
    %v372 = vsel %vm371, 1, 0
    %v373 = vlaneseq
    %v374 = vshrl.u32 %v373, 7
    %v375 = vsub.s32 0, %v374
    %v376 = vrot.slane %v372, %v375
    %vm377 = vcmp.eq.s32.totalorder %v376, 1
    %v378 = vsel %vm377, %v366, -1e+10
    %v379 = vsel %vm148, %v378, -inf
    %380 = vmax.xlane.f32.xlu0 %v379
    %v381 = vpop.xlane.xlu0 %380
    %v382 = vsub.f32 %v378, %v381
    %v383 = vmul.f32 %v382, 1.442695
    %v384 = vpow.pop %v383
    %v385 = vsel %vm148, %v384, 0.0
    %386 = vadd.xlane.f32.xlu0 %v385
    %v387 = vpop.xlane.xlu0 %386
    %v388 = vrcp.pop %v387
    %v389 = vmul.f32 %v384, %v388
    %v390 = vpack.c.bf16 %v389, %v389
    %v392 = vsel %vm148, %v390, 0
    %v394 = vsel %vm164, %v323, 0
    %396 = vmatprep.subr.bf16.mxu0 0
    %397 = vmatpush1.bf16.msra.mxu0 %v394
    %398 = vmatprep.subr.bf16.mxu0 0
    %399 = vmatpush1.bf16.msra.mxu0 0
    %400 = vmatprep.subr.bf16.mxu0 0
    %401 = vmatpush1.bf16.msra.mxu0 0
    %402 = vmatprep.subr.bf16.mxu0 0
    %403 = vmatpush1.bf16.msra.mxu0 0
    %404 = vmatprep.subr.bf16.mxu0 0
    %405 = vmatpush1.bf16.msra.mxu0 0
    %406 = vmatprep.subr.bf16.mxu0 0
    %407 = vmatpush1.bf16.msra.mxu0 0
    %408 = vmatprep.subr.bf16.mxu0 0
    %409 = vmatpush1.bf16.msra.mxu0 0
    %410 = vmatprep.subr.bf16.mxu0 0
    %411 = vmatpush1.bf16.msra.mxu0 0
    %412 = vmatprep.subr.bf16.mxu0 0
    %413 = vmatpush1.bf16.msra.mxu0 0
    %414 = vmatprep.subr.bf16.mxu0 0
    %415 = vmatpush1.bf16.msra.mxu0 0
    %416 = vmatprep.subr.bf16.mxu0 0
    %417 = vmatpush1.bf16.msra.mxu0 0
    %418 = vmatprep.subr.bf16.mxu0 0
    %419 = vmatpush1.bf16.msra.mxu0 0
    %420 = vmatprep.subr.bf16.mxu0 0
    %421 = vmatpush1.bf16.msra.mxu0 0
    %422 = vmatprep.subr.bf16.mxu0 0
    %423 = vmatpush1.bf16.msra.mxu0 0
    %424 = vmatprep.subr.bf16.mxu0 0
    %425 = vmatpush1.bf16.msra.mxu0 0
    %426 = vmatprep.subr.bf16.mxu0 0
    %427 = vmatpush1.bf16.msra.mxu0 0
    %428 = vmatprep.mubr.bf16.mxu0 0
    %429 = vmatmul.mubr.bf16.gmra.mrb[0].mxu0 %v392
    %v430 = vpop.f32.mrb[0].mxu0
    %v431 = vadd.f32 0.0, %v430
    %v432 = vpop.f32.mrb[0].mxu0
    %v433 = vpop.f32.mrb[0].mxu0
    %v434 = vpop.f32.mrb[0].mxu0
    %435 = vdwg.mxu0
    %v436 = vpack.c.bf16 %v431, %v431
    %v438 = vsel %vm35, %v436, 0
    %440 = vmatprep.subr.bf16.mxu0 0
    %441 = vmatpush1.bf16.msra.mxu0 %v216
    %442 = vmatprep.subr.bf16.mxu0 0
    %443 = vmatpush1.bf16.msra.mxu0 %v217
    %444 = vmatprep.subr.bf16.mxu0 0
    %445 = vmatpush1.bf16.msra.mxu0 0
    %446 = vmatprep.subr.bf16.mxu0 0
    %447 = vmatpush1.bf16.msra.mxu0 0
    %448 = vmatprep.subr.bf16.mxu0 0
    %449 = vmatpush1.bf16.msra.mxu0 0
    %450 = vmatprep.subr.bf16.mxu0 0
    %451 = vmatpush1.bf16.msra.mxu0 0
    %452 = vmatprep.subr.bf16.mxu0 0
    %453 = vmatpush1.bf16.msra.mxu0 0
    %454 = vmatprep.subr.bf16.mxu0 0
    %455 = vmatpush1.bf16.msra.mxu0 0
    %456 = vmatprep.subr.bf16.mxu0 0
    %457 = vmatpush1.bf16.msra.mxu0 0
    %458 = vmatprep.subr.bf16.mxu0 0
    %459 = vmatpush1.bf16.msra.mxu0 0
    %460 = vmatprep.subr.bf16.mxu0 0
    %461 = vmatpush1.bf16.msra.mxu0 0
    %462 = vmatprep.subr.bf16.mxu0 0
    %463 = vmatpush1.bf16.msra.mxu0 0
    %464 = vmatprep.subr.bf16.mxu0 0
    %465 = vmatpush1.bf16.msra.mxu0 0
    %466 = vmatprep.subr.bf16.mxu0 0
    %467 = vmatpush1.bf16.msra.mxu0 0
    %468 = vmatprep.subr.bf16.mxu0 0
    %469 = vmatpush1.bf16.msra.mxu0 0
    %470 = vmatprep.subr.bf16.mxu0 0
    %471 = vmatpush1.bf16.msra.mxu0 0
    %472 = vmatprep.mubr.bf16.mxu0 0
    %473 = vmatmul.mubr.bf16.gmra.mrb[0].mxu0 %v438
    %v474 = vpop.f32.mrb[0].mxu0
    %v475 = vadd.f32 0.0, %v474
    %v476 = vpop.f32.mrb[0].mxu0
    %v477 = vpop.f32.mrb[0].mxu0
    %v478 = vpop.f32.mrb[0].mxu0
    %479 = vdwg.mxu0
    %480 = vmatprep.subr.bf16.mxu0 0
    %481 = vmatpush1.bf16.msra.mxu0 %v271
    %482 = vmatprep.subr.bf16.mxu0 0
    %483 = vmatpush1.bf16.msra.mxu0 %v272
    %484 = vmatprep.subr.bf16.mxu0 0
    %485 = vmatpush1.bf16.msra.mxu0 0
    %486 = vmatprep.subr.bf16.mxu0 0
    %487 = vmatpush1.bf16.msra.mxu0 0
    %488 = vmatprep.subr.bf16.mxu0 0
    %489 = vmatpush1.bf16.msra.mxu0 0
    %490 = vmatprep.subr.bf16.mxu0 0
    %491 = vmatpush1.bf16.msra.mxu0 0
    %492 = vmatprep.subr.bf16.mxu0 0
    %493 = vmatpush1.bf16.msra.mxu0 0
    %494 = vmatprep.subr.bf16.mxu0 0
    %495 = vmatpush1.bf16.msra.mxu0 0
    %496 = vmatprep.subr.bf16.mxu0 0
    %497 = vmatpush1.bf16.msra.mxu0 0
    %498 = vmatprep.subr.bf16.mxu0 0
    %499 = vmatpush1.bf16.msra.mxu0 0
    %500 = vmatprep.subr.bf16.mxu0 0
    %501 = vmatpush1.bf16.msra.mxu0 0
    %502 = vmatprep.subr.bf16.mxu0 0
    %503 = vmatpush1.bf16.msra.mxu0 0
    %504 = vmatprep.subr.bf16.mxu0 0
    %505 = vmatpush1.bf16.msra.mxu0 0
    %506 = vmatprep.subr.bf16.mxu0 0
    %507 = vmatpush1.bf16.msra.mxu0 0
    %508 = vmatprep.subr.bf16.mxu0 0
    %509 = vmatpush1.bf16.msra.mxu0 0
    %510 = vmatprep.subr.bf16.mxu0 0
    %511 = vmatpush1.bf16.msra.mxu0 0
    %512 = vmatprep.mubr.bf16.mxu0 0
    %513 = vmatmul.mubr.bf16.gmra.mrb[0].mxu0 %v326
    %v514 = vpop.f32.mrb[0].mxu0
    %v515 = vadd.f32 %v475, %v514
    %v516 = vpop.f32.mrb[0].mxu0
    %v517 = vpop.f32.mrb[0].mxu0
    %v518 = vpop.f32.mrb[0].mxu0
    %519 = vdwg.mxu0
    %v520 = vadd.f32 %v515, %v319
    %s521 = scalar_lea.vmem [#allocation2], 8
    %522 = vst [vmem:[%s521] sm:$0xff] %v520
    // Predicated region
    $region34: #{forward.13} parent=1 // pred_check
      _
    $region35: #{forward.13} parent=1 // pred_check_branch
      %524 = sbr.rel (0) target = $region37
    $region36: #{forward.13} parent=1 // pred_region
      %s526 = ssub.s32 256, 256
      %527 = vsyncadd [#allocation3], %s526
      %s528 = sshll.u32 [#allocation2], 4
      %s529 = int_to_ptr.vmem [resolvable:$true] %s528
      %534 = dma.vmem_to_hbm [thread:$0]  %s529, 256, %s8, [#allocation3], 128, 128, 8
    $region37: #{forward.13} parent=1 // pred_fallthru
      _
    // Predicated region
    $region38: #{forward.13} parent=1 // pred_check
      _
    $region39: #{forward.13} parent=1 // pred_check_branch
      %536 = sbr.rel (0) target = $region41
    $region40: #{forward.13} parent=1 // pred_region
      %537 = dma.done [#allocation3], 256
    $region41: #{forward.13} parent=1 // pred_fallthru
      _
    %538 = vsyncpa [#allocation3], 1

</llo_original>
